<compile_context>
chip_gen: v5e
topology: v5e:2x2
jax: 0.10.0
libtpu: 0.0.40
codegen_flags: <defaults>
</compile_context>

<pallas_src>
import math
from functools import partial

import jax
import jax.numpy as jnp
from jax.experimental import pallas as pl
from jax.experimental.pallas import tpu as pltpu

EPS = 1e-5


def _round_up(x, m):
    return ((x + m - 1) // m) * m


def _pick_tile_m(M):
    """Largest M-tile <= 512 dividing M; prefer >= 2 grid steps (v7x dual TC)."""
    for tm in (512, 256, 128, 64):
        if M % tm == 0 and M // tm >= 2:
            return tm
    for tm in (512, 256, 128):
        if M % tm == 0:
            return tm
    return 128  # general fallback: pad M up to a multiple of 128


# ----------------------------------------------------------------------------
# Pallas kernels
# ----------------------------------------------------------------------------
def _matmul_bn_kernel(a_ref, b_ref, scale_ref, bias_ref, o_ref, *, relu):
    # (TM, K) bf16 @ (K, N) bf16 on the MXU -> f32 acc, fused BN scale/bias (+ReLU).
    acc = jnp.dot(a_ref[...], b_ref[...], preferred_element_type=jnp.float32)
    out = acc * scale_ref[...] + bias_ref[...]
    if relu:
        out = jnp.maximum(out, 0.0)
    o_ref[...] = out.astype(o_ref.dtype)


def _matmul_bn_res_kernel(a_ref, b_ref, scale_ref, bias_ref, res_ref, o_ref, *, relu):
    acc = jnp.dot(a_ref[...], b_ref[...], preferred_element_type=jnp.float32)
    out = acc * scale_ref[...] + bias_ref[...] + res_ref[...].astype(jnp.float32)
    if relu:
        out = jnp.maximum(out, 0.0)
    o_ref[...] = out.astype(o_ref.dtype)


def _pool_fc_kernel(x_ref, w_ref, b_ref, o_ref):
    # mean over flattened spatial axis (== AvgPool2d(8) on an 8x8 map) + Linear.
    pooled = jnp.mean(x_ref[...].astype(jnp.float32), axis=1)           # (N, C)
    o_ref[...] = (jnp.dot(pooled, w_ref[...], preferred_element_type=jnp.float32)
                  + b_ref[...])


# ----------------------------------------------------------------------------
# Wrappers
# ----------------------------------------------------------------------------
def fused_conv_matmul(a, b, scale, bias, res=None, relu=True,
                      out_dtype=jnp.bfloat16):
    """out = maybe_relu((a @ b) * scale + bias [+ res]); a/b/res bf16, epilogue f32."""
    M, K = a.shape
    Kb, N = b.shape
    assert K == Kb
    TM = _pick_tile_m(M)
    Mp = _round_up(M, TM)

    a = a.astype(jnp.bfloat16)
    b = b.astype(jnp.bfloat16)
    if Mp != M:  # never hit at the shapes used here
        a = jnp.zeros((Mp, K), jnp.bfloat16).at[:M].set(a)
    scale2 = scale.reshape(1, N).astype(jnp.float32)
    bias2 = bias.reshape(1, N).astype(jnp.float32)

    grid = (Mp // TM,)
    a_spec = pl.BlockSpec((TM, K), lambda i: (i, 0))     # patches tile (true K)
    b_spec = pl.BlockSpec((K, N), lambda i: (0, 0))      # full weight matrix
    s_spec = pl.BlockSpec((1, N), lambda i: (0, 0))      # bn scale
    bi_spec = pl.BlockSpec((1, N), lambda i: (0, 0))     # bn bias
    out_spec = pl.BlockSpec((TM, N), lambda i: (i, 0))   # true-N output (no slicing)
    cparams = pltpu.CompilerParams(dimension_semantics=("parallel",))

    if res is None:
        out = pl.pallas_call(
            partial(_matmul_bn_kernel, relu=relu),
            out_shape=jax.ShapeDtypeStruct((Mp, N), out_dtype),
            grid=grid,
            in_specs=[a_spec, b_spec, s_spec, bi_spec],
            out_specs=out_spec,
            compiler_params=cparams,
        )(a, b, scale2, bias2)
    else:
        r = res.astype(jnp.bfloat16)
        if Mp != M:
            r = jnp.zeros((Mp, N), jnp.bfloat16).at[:M].set(r)
        out = pl.pallas_call(
            partial(_matmul_bn_res_kernel, relu=relu),
            out_shape=jax.ShapeDtypeStruct((Mp, N), out_dtype),
            grid=grid,
            in_specs=[a_spec, b_spec, s_spec, bi_spec,
                      pl.BlockSpec((TM, N), lambda i: (i, 0))],
            out_specs=out_spec,
            compiler_params=cparams,
        )(a, b, scale2, bias2, r)

    if Mp != M:
        out = out[:M]
    return out


def avgpool_fc(x_nhwc, fc_w, fc_b):
    """AvgPool2d(H) + flatten + Linear fused in one tiny kernel."""
    N, H, W, C = x_nhwc.shape
    x = x_nhwc.reshape(N, H * W, C)
    num_classes = fc_w.shape[1]
    return pl.pallas_call(
        _pool_fc_kernel,
        out_shape=jax.ShapeDtypeStruct((N, num_classes), jnp.float32),
    )(x, fc_w.astype(jnp.float32), fc_b.reshape(1, num_classes).astype(jnp.float32))


def im2col(x, ksize, stride, pad):
    """x: (N,H,W,C) -> (N*Ho*Wo, ksize*ksize*C), matching PyTorch conv semantics."""
    N, H, W, C = x.shape
    if pad:
        x = jnp.pad(x, ((0, 0), (pad, pad), (pad, pad), (0, 0)))
    Ho = (H + 2 * pad - ksize) // stride + 1
    Wo = (W + 2 * pad - ksize) // stride + 1
    cols = []
    for i in range(ksize):
        for j in range(ksize):
            cols.append(x[:, i:i + stride * Ho:stride, j:j + stride * Wo:stride, :])
    patches = jnp.concatenate(cols, axis=-1)  # (N, Ho, Wo, k*k*C)
    return patches.reshape(N * Ho * Wo, ksize * ksize * C), (N, Ho, Wo)


def conv_bn(x, w_hwio, gamma, beta, *, stride, pad, residual=None, relu=True):
    """Conv2d(bias=False) + eval-mode BatchNorm2d (+ residual) (+ ReLU), fused."""
    kH, kW, Cin, Cout = w_hwio.shape
    patches, (N, Ho, Wo) = im2col(x, kH, stride, pad)
    wmat = w_hwio.reshape(kH * kW * Cin, Cout)
    # eval-mode BN fold with fresh-init stats: running_mean = 0, running_var = 1
    scale = gamma / jnp.sqrt(1.0 + EPS)
    bias = beta
    res_flat = None if residual is None else residual.reshape(N * Ho * Wo, Cout)
    out = fused_conv_matmul(patches, wmat, scale, bias, res_flat, relu)
    return out.reshape(N, Ho, Wo, Cout)


# ----------------------------------------------------------------------------
# Parameters (deterministic, matching the module's __init__ shapes/init scheme)
# ----------------------------------------------------------------------------
def init_conv(key, kH, kW, cin, cout):
    n = kH * kW * cout  # PyTorch init: normal_(0, sqrt(2/n)), n = kH*kW*out_channels
    return jax.random.normal(key, (kH, kW, cin, cout), jnp.float32) * math.sqrt(2.0 / n)


def make_params(key, num_classes=10):
    keys = iter(jax.random.split(key, 64))
    params = {
        "conv1": init_conv(next(keys), 3, 3, 3, 16),
        "bn1": (jnp.ones(16, jnp.float32), jnp.zeros(16, jnp.float32)),
    }
    inplanes = 16
    layers = []
    for planes, stride, nblocks in [(16, 1, 3), (32, 2, 3), (64, 2, 3)]:
        blocks = []
        for b in range(nblocks):
            s = stride if b == 0 else 1
            blk = {
                "conv1": init_conv(next(keys), 3, 3, inplanes, planes),
                "bn1": (jnp.ones(planes, jnp.float32), jnp.zeros(planes, jnp.float32)),
                "conv2": init_conv(next(keys), 3, 3, planes, planes),
                "bn2": (jnp.ones(planes, jnp.float32), jnp.zeros(planes, jnp.float32)),
                "stride": s,
            }
            if s != 1 or inplanes != planes:  # downsample: conv1x1(stride) + bn
                blk["down_conv"] = init_conv(next(keys), 1, 1, inplanes, planes)
                blk["down_bn"] = (jnp.ones(planes, jnp.float32),
                                  jnp.zeros(planes, jnp.float32))
            blocks.append(blk)
            inplanes = planes
        layers.append(blocks)
    params["layers"] = layers
    params["fc_w"] = jax.random.normal(next(keys), (64, num_classes),
                                       jnp.float32) * (1.0 / math.sqrt(64))
    params["fc_b"] = jnp.zeros((num_classes,), jnp.float32)
    return params


# ----------------------------------------------------------------------------
# Forward pass (matches ResNet.forward, residual_len == 3 branch)
# ----------------------------------------------------------------------------
def basic_block(x, blk):
    s = blk["stride"]
    out = conv_bn(x, blk["conv1"], *blk["bn1"], stride=s, pad=1, relu=True)
    if "down_conv" in blk:
        identity = conv_bn(x, blk["down_conv"], *blk["down_bn"],
                           stride=s, pad=0, relu=False)
    else:
        identity = x
    # conv2 + bn2 + residual add + final ReLU, fused in one kernel
    out = conv_bn(out, blk["conv2"], *blk["bn2"], stride=1, pad=1,
                  residual=identity, relu=True)
    return out


def resnet_forward(params, x_nchw):
    x = jnp.transpose(x_nchw, (0, 2, 3, 1)).astype(jnp.bfloat16)  # NCHW -> NHWC, bf16
    out = conv_bn(x, params["conv1"], *params["bn1"], stride=1, pad=1, relu=True)
    for blocks in params["layers"]:
        for blk in blocks:
            out = basic_block(out, blk)
    # AvgPool2d(8) on the 8x8 map + flatten + Linear(64, num_classes), fused
    logits = avgpool_fc(out, params["fc_w"], params["fc_b"])
    return logits


if __name__ == "__main__":
    key = jax.random.PRNGKey(0)
    pkey, xkey = jax.random.split(key)
    params = make_params(pkey, num_classes=10)
    # CIFAR-sized NCHW input (the resnet20 / residual_len==3 path of the module)
    x = jax.random.normal(xkey, (2, 3, 32, 32), jnp.float32)

    fwd = jax.jit(lambda inp: resnet_forward(params, inp))
    out = fwd(x)
    jax.block_until_ready(out)
    assert out.shape == (2, 10), out.shape
    print("KERNEL_OK")
</pallas_src>

<mosaic_0001>
module attributes {stable_mosaic.version = 11 : i64} {
  func.func @_matmul_bn_kernel(%arg0: i32, %arg1: memref<512x27xbf16, #tpu.memory_space<vmem>>, %arg2: memref<27x16xbf16, #tpu.memory_space<vmem>>, %arg3: memref<1x16xf32, #tpu.memory_space<vmem>>, %arg4: memref<1x16xf32, #tpu.memory_space<vmem>>, %arg5: memref<512x16xbf16, #tpu.memory_space<vmem>>) attributes {dimension_semantics = [#tpu.dimension_semantics<parallel>], iteration_bounds = array<i64: 4>, scalar_prefetch = 0 : i64, scratch_operands = 0 : i64, tpu.core_type = #tpu.core_type<tc>, window_params = [{transform_indices = @transform_0, window_bounds = array<i64: 512, 27>}, {pipeline_mode = #tpu.pipeline_mode<synchronous>, transform_indices = @transform_1, window_bounds = array<i64: 27, 16>}, {pipeline_mode = #tpu.pipeline_mode<synchronous>, transform_indices = @transform_2, window_bounds = array<i64: 1, 16>}, {pipeline_mode = #tpu.pipeline_mode<synchronous>, transform_indices = @transform_3, window_bounds = array<i64: 1, 16>}, {transform_indices = @transform_4, window_bounds = array<i64: 512, 16>}]} {
    %c0 = arith.constant 0 : index
    %c0_0 = arith.constant 0 : index
    %0 = vector.load %arg1[%c0, %c0_0] : memref<512x27xbf16, #tpu.memory_space<vmem>>, vector<512x27xbf16>
    %c0_1 = arith.constant 0 : index
    %c0_2 = arith.constant 0 : index
    %1 = vector.load %arg2[%c0_1, %c0_2] : memref<27x16xbf16, #tpu.memory_space<vmem>>, vector<27x16xbf16>
    %cst = arith.constant dense<0.000000e+00> : vector<512x16xf32>
    %2 = tpu.matmul %0, %1, %cst {dimension_numbers = #tpu.dot_dimension_numbers<[1], [0], [0], [1], [0, 0, 1, 1], [], []>} : vector<512x27xbf16>, vector<27x16xbf16>, vector<512x16xf32> -> vector<512x16xf32>
    %c0_3 = arith.constant 0 : index
    %c0_4 = arith.constant 0 : index
    %3 = vector.load %arg3[%c0_3, %c0_4] : memref<1x16xf32, #tpu.memory_space<vmem>>, vector<1x16xf32>
    %4 = vector.broadcast %3 : vector<1x16xf32> to vector<512x16xf32>
    %5 = arith.mulf %2, %4 : vector<512x16xf32>
    %c0_5 = arith.constant 0 : index
    %c0_6 = arith.constant 0 : index
    %6 = vector.load %arg4[%c0_5, %c0_6] : memref<1x16xf32, #tpu.memory_space<vmem>>, vector<1x16xf32>
    %7 = vector.broadcast %6 : vector<1x16xf32> to vector<512x16xf32>
    %8 = arith.addf %5, %7 : vector<512x16xf32>
    %cst_7 = arith.constant 0.000000e+00 : f32
    %9 = vector.broadcast %cst_7 : f32 to vector<512x16xf32>
    %10 = arith.maximumf %8, %9 : vector<512x16xf32>
    %11 = arith.truncf %10 : vector<512x16xf32> to vector<512x16xbf16>
    %c0_8 = arith.constant 0 : index
    %c0_9 = arith.constant 0 : index
    %12 = vector.load %arg5[%c0_8, %c0_9] : memref<512x16xbf16, #tpu.memory_space<vmem>>, vector<512x16xbf16>
    tpu.vector_store %arg5[%c0_8, %c0_9], %11 {strides = array<i32>} : memref<512x16xbf16, #tpu.memory_space<vmem>>, vector<512x16xbf16>,
    return
  }
  func.func @transform_0(%arg0: i32) -> (i32, i32) {
    %c0_i32 = arith.constant 0 : i32
    %c0_i32_0 = arith.constant 0 : i32
    return %arg0, %c0_i32 : i32, i32
  }
  func.func @transform_1(%arg0: i32) -> (i32, i32) {
    %c0_i32 = arith.constant 0 : i32
    %c0_i32_0 = arith.constant 0 : i32
    %c0_i32_1 = arith.constant 0 : i32
    return %c0_i32, %c0_i32_0 : i32, i32
  }
  func.func @transform_2(%arg0: i32) -> (i32, i32) {
    %c0_i32 = arith.constant 0 : i32
    %c0_i32_0 = arith.constant 0 : i32
    %c0_i32_1 = arith.constant 0 : i32
    return %c0_i32, %c0_i32_0 : i32, i32
  }
  func.func @transform_3(%arg0: i32) -> (i32, i32) {
    %c0_i32 = arith.constant 0 : i32
    %c0_i32_0 = arith.constant 0 : i32
    %c0_i32_1 = arith.constant 0 : i32
    return %c0_i32, %c0_i32_0 : i32, i32
  }
  func.func @transform_4(%arg0: i32) -> (i32, i32) {
    %c0_i32 = arith.constant 0 : i32
    %c0_i32_0 = arith.constant 0 : i32
    return %arg0, %c0_i32 : i32, i32
  }
}

module attributes {stable_mosaic.version = 11 : i64} {
  func.func @_matmul_bn_kernel(%arg0: i32, %arg1: memref<512x144xbf16, #tpu.memory_space<vmem>>, %arg2: memref<144x16xbf16, #tpu.memory_space<vmem>>, %arg3: memref<1x16xf32, #tpu.memory_space<vmem>>, %arg4: memref<1x16xf32, #tpu.memory_space<vmem>>, %arg5: memref<512x16xbf16, #tpu.memory_space<vmem>>) attributes {dimension_semantics = [#tpu.dimension_semantics<parallel>], iteration_bounds = array<i64: 4>, scalar_prefetch = 0 : i64, scratch_operands = 0 : i64, tpu.core_type = #tpu.core_type<tc>, window_params = [{transform_indices = @transform_0, window_bounds = array<i64: 512, 144>}, {pipeline_mode = #tpu.pipeline_mode<synchronous>, transform_indices = @transform_1, window_bounds = array<i64: 144, 16>}, {pipeline_mode = #tpu.pipeline_mode<synchronous>, transform_indices = @transform_2, window_bounds = array<i64: 1, 16>}, {pipeline_mode = #tpu.pipeline_mode<synchronous>, transform_indices = @transform_3, window_bounds = array<i64: 1, 16>}, {transform_indices = @transform_4, window_bounds = array<i64: 512, 16>}]} {
    %c0 = arith.constant 0 : index
    %c0_0 = arith.constant 0 : index
    %0 = vector.load %arg1[%c0, %c0_0] : memref<512x144xbf16, #tpu.memory_space<vmem>>, vector<512x144xbf16>
    %c0_1 = arith.constant 0 : index
    %c0_2 = arith.constant 0 : index
    %1 = vector.load %arg2[%c0_1, %c0_2] : memref<144x16xbf16, #tpu.memory_space<vmem>>, vector<144x16xbf16>
    %cst = arith.constant dense<0.000000e+00> : vector<512x16xf32>
    %2 = tpu.matmul %0, %1, %cst {dimension_numbers = #tpu.dot_dimension_numbers<[1], [0], [0], [1], [0, 0, 1, 1], [], []>} : vector<512x144xbf16>, vector<144x16xbf16>, vector<512x16xf32> -> vector<512x16xf32>
    %c0_3 = arith.constant 0 : index
    %c0_4 = arith.constant 0 : index
    %3 = vector.load %arg3[%c0_3, %c0_4] : memref<1x16xf32, #tpu.memory_space<vmem>>, vector<1x16xf32>
    %4 = vector.broadcast %3 : vector<1x16xf32> to vector<512x16xf32>
    %5 = arith.mulf %2, %4 : vector<512x16xf32>
    %c0_5 = arith.constant 0 : index
    %c0_6 = arith.constant 0 : index
    %6 = vector.load %arg4[%c0_5, %c0_6] : memref<1x16xf32, #tpu.memory_space<vmem>>, vector<1x16xf32>
    %7 = vector.broadcast %6 : vector<1x16xf32> to vector<512x16xf32>
    %8 = arith.addf %5, %7 : vector<512x16xf32>
    %cst_7 = arith.constant 0.000000e+00 : f32
    %9 = vector.broadcast %cst_7 : f32 to vector<512x16xf32>
    %10 = arith.maximumf %8, %9 : vector<512x16xf32>
    %11 = arith.truncf %10 : vector<512x16xf32> to vector<512x16xbf16>
    %c0_8 = arith.constant 0 : index
    %c0_9 = arith.constant 0 : index
    %12 = vector.load %arg5[%c0_8, %c0_9] : memref<512x16xbf16, #tpu.memory_space<vmem>>, vector<512x16xbf16>
    tpu.vector_store %arg5[%c0_8, %c0_9], %11 {strides = array<i32>} : memref<512x16xbf16, #tpu.memory_space<vmem>>, vector<512x16xbf16>,
    return
  }
  func.func @transform_0(%arg0: i32) -> (i32, i32) {
    %c0_i32 = arith.constant 0 : i32
    %c0_i32_0 = arith.constant 0 : i32
    return %arg0, %c0_i32 : i32, i32
  }
  func.func @transform_1(%arg0: i32) -> (i32, i32) {
    %c0_i32 = arith.constant 0 : i32
    %c0_i32_0 = arith.constant 0 : i32
    %c0_i32_1 = arith.constant 0 : i32
    return %c0_i32, %c0_i32_0 : i32, i32
  }
  func.func @transform_2(%arg0: i32) -> (i32, i32) {
    %c0_i32 = arith.constant 0 : i32
    %c0_i32_0 = arith.constant 0 : i32
    %c0_i32_1 = arith.constant 0 : i32
    return %c0_i32, %c0_i32_0 : i32, i32
  }
  func.func @transform_3(%arg0: i32) -> (i32, i32) {
    %c0_i32 = arith.constant 0 : i32
    %c0_i32_0 = arith.constant 0 : i32
    %c0_i32_1 = arith.constant 0 : i32
    return %c0_i32, %c0_i32_0 : i32, i32
  }
  func.func @transform_4(%arg0: i32) -> (i32, i32) {
    %c0_i32 = arith.constant 0 : i32
    %c0_i32_0 = arith.constant 0 : i32
    return %arg0, %c0_i32 : i32, i32
  }
}

module attributes {stable_mosaic.version = 11 : i64} {
  func.func @_matmul_bn_res_kernel(%arg0: i32, %arg1: memref<512x144xbf16, #tpu.memory_space<vmem>>, %arg2: memref<144x16xbf16, #tpu.memory_space<vmem>>, %arg3: memref<1x16xf32, #tpu.memory_space<vmem>>, %arg4: memref<1x16xf32, #tpu.memory_space<vmem>>, %arg5: memref<512x16xbf16, #tpu.memory_space<vmem>>, %arg6: memref<512x16xbf16, #tpu.memory_space<vmem>>) attributes {dimension_semantics = [#tpu.dimension_semantics<parallel>], iteration_bounds = array<i64: 4>, scalar_prefetch = 0 : i64, scratch_operands = 0 : i64, tpu.core_type = #tpu.core_type<tc>, window_params = [{transform_indices = @transform_0, window_bounds = array<i64: 512, 144>}, {pipeline_mode = #tpu.pipeline_mode<synchronous>, transform_indices = @transform_1, window_bounds = array<i64: 144, 16>}, {pipeline_mode = #tpu.pipeline_mode<synchronous>, transform_indices = @transform_2, window_bounds = array<i64: 1, 16>}, {pipeline_mode = #tpu.pipeline_mode<synchronous>, transform_indices = @transform_3, window_bounds = array<i64: 1, 16>}, {transform_indices = @transform_4, window_bounds = array<i64: 512, 16>}, {transform_indices = @transform_5, window_bounds = array<i64: 512, 16>}]} {
    %c0 = arith.constant 0 : index
    %c0_0 = arith.constant 0 : index
    %0 = vector.load %arg1[%c0, %c0_0] : memref<512x144xbf16, #tpu.memory_space<vmem>>, vector<512x144xbf16>
    %c0_1 = arith.constant 0 : index
    %c0_2 = arith.constant 0 : index
    %1 = vector.load %arg2[%c0_1, %c0_2] : memref<144x16xbf16, #tpu.memory_space<vmem>>, vector<144x16xbf16>
    %cst = arith.constant dense<0.000000e+00> : vector<512x16xf32>
    %2 = tpu.matmul %0, %1, %cst {dimension_numbers = #tpu.dot_dimension_numbers<[1], [0], [0], [1], [0, 0, 1, 1], [], []>} : vector<512x144xbf16>, vector<144x16xbf16>, vector<512x16xf32> -> vector<512x16xf32>
    %c0_3 = arith.constant 0 : index
    %c0_4 = arith.constant 0 : index
    %3 = vector.load %arg3[%c0_3, %c0_4] : memref<1x16xf32, #tpu.memory_space<vmem>>, vector<1x16xf32>
    %4 = vector.broadcast %3 : vector<1x16xf32> to vector<512x16xf32>
    %5 = arith.mulf %2, %4 : vector<512x16xf32>
    %c0_5 = arith.constant 0 : index
    %c0_6 = arith.constant 0 : index
    %6 = vector.load %arg4[%c0_5, %c0_6] : memref<1x16xf32, #tpu.memory_space<vmem>>, vector<1x16xf32>
    %7 = vector.broadcast %6 : vector<1x16xf32> to vector<512x16xf32>
    %8 = arith.addf %5, %7 : vector<512x16xf32>
    %c0_7 = arith.constant 0 : index
    %c0_8 = arith.constant 0 : index
    %9 = vector.load %arg5[%c0_7, %c0_8] : memref<512x16xbf16, #tpu.memory_space<vmem>>, vector<512x16xbf16>
    %10 = arith.extf %9 : vector<512x16xbf16> to vector<512x16xf32>
    %11 = arith.addf %8, %10 : vector<512x16xf32>
    %cst_9 = arith.constant 0.000000e+00 : f32
    %12 = vector.broadcast %cst_9 : f32 to vector<512x16xf32>
    %13 = arith.maximumf %11, %12 : vector<512x16xf32>
    %14 = arith.truncf %13 : vector<512x16xf32> to vector<512x16xbf16>
    %c0_10 = arith.constant 0 : index
    %c0_11 = arith.constant 0 : index
    %15 = vector.load %arg6[%c0_10, %c0_11] : memref<512x16xbf16, #tpu.memory_space<vmem>>, vector<512x16xbf16>
    tpu.vector_store %arg6[%c0_10, %c0_11], %14 {strides = array<i32>} : memref<512x16xbf16, #tpu.memory_space<vmem>>, vector<512x16xbf16>,
    return
  }
  func.func @transform_0(%arg0: i32) -> (i32, i32) {
    %c0_i32 = arith.constant 0 : i32
    %c0_i32_0 = arith.constant 0 : i32
    return %arg0, %c0_i32 : i32, i32
  }
  func.func @transform_1(%arg0: i32) -> (i32, i32) {
    %c0_i32 = arith.constant 0 : i32
    %c0_i32_0 = arith.constant 0 : i32
    %c0_i32_1 = arith.constant 0 : i32
    return %c0_i32, %c0_i32_0 : i32, i32
  }
  func.func @transform_2(%arg0: i32) -> (i32, i32) {
    %c0_i32 = arith.constant 0 : i32
    %c0_i32_0 = arith.constant 0 : i32
    %c0_i32_1 = arith.constant 0 : i32
    return %c0_i32, %c0_i32_0 : i32, i32
  }
  func.func @transform_3(%arg0: i32) -> (i32, i32) {
    %c0_i32 = arith.constant 0 : i32
    %c0_i32_0 = arith.constant 0 : i32
    %c0_i32_1 = arith.constant 0 : i32
    return %c0_i32, %c0_i32_0 : i32, i32
  }
  func.func @transform_4(%arg0: i32) -> (i32, i32) {
    %c0_i32 = arith.constant 0 : i32
    %c0_i32_0 = arith.constant 0 : i32
    return %arg0, %c0_i32 : i32, i32
  }
  func.func @transform_5(%arg0: i32) -> (i32, i32) {
    %c0_i32 = arith.constant 0 : i32
    %c0_i32_0 = arith.constant 0 : i32
    return %arg0, %c0_i32 : i32, i32
  }
}

module attributes {stable_mosaic.version = 11 : i64} {
  func.func @_matmul_bn_kernel(%arg0: i32, %arg1: memref<256x144xbf16, #tpu.memory_space<vmem>>, %arg2: memref<144x32xbf16, #tpu.memory_space<vmem>>, %arg3: memref<1x32xf32, #tpu.memory_space<vmem>>, %arg4: memref<1x32xf32, #tpu.memory_space<vmem>>, %arg5: memref<256x32xbf16, #tpu.memory_space<vmem>>) attributes {dimension_semantics = [#tpu.dimension_semantics<parallel>], iteration_bounds = array<i64: 2>, scalar_prefetch = 0 : i64, scratch_operands = 0 : i64, tpu.core_type = #tpu.core_type<tc>, window_params = [{transform_indices = @transform_0, window_bounds = array<i64: 256, 144>}, {pipeline_mode = #tpu.pipeline_mode<synchronous>, transform_indices = @transform_1, window_bounds = array<i64: 144, 32>}, {pipeline_mode = #tpu.pipeline_mode<synchronous>, transform_indices = @transform_2, window_bounds = array<i64: 1, 32>}, {pipeline_mode = #tpu.pipeline_mode<synchronous>, transform_indices = @transform_3, window_bounds = array<i64: 1, 32>}, {transform_indices = @transform_4, window_bounds = array<i64: 256, 32>}]} {
    %c0 = arith.constant 0 : index
    %c0_0 = arith.constant 0 : index
    %0 = vector.load %arg1[%c0, %c0_0] : memref<256x144xbf16, #tpu.memory_space<vmem>>, vector<256x144xbf16>
    %c0_1 = arith.constant 0 : index
    %c0_2 = arith.constant 0 : index
    %1 = vector.load %arg2[%c0_1, %c0_2] : memref<144x32xbf16, #tpu.memory_space<vmem>>, vector<144x32xbf16>
    %cst = arith.constant dense<0.000000e+00> : vector<256x32xf32>
    %2 = tpu.matmul %0, %1, %cst {dimension_numbers = #tpu.dot_dimension_numbers<[1], [0], [0], [1], [0, 0, 1, 1], [], []>} : vector<256x144xbf16>, vector<144x32xbf16>, vector<256x32xf32> -> vector<256x32xf32>
    %c0_3 = arith.constant 0 : index
    %c0_4 = arith.constant 0 : index
    %3 = vector.load %arg3[%c0_3, %c0_4] : memref<1x32xf32, #tpu.memory_space<vmem>>, vector<1x32xf32>
    %4 = vector.broadcast %3 : vector<1x32xf32> to vector<256x32xf32>
    %5 = arith.mulf %2, %4 : vector<256x32xf32>
    %c0_5 = arith.constant 0 : index
    %c0_6 = arith.constant 0 : index
    %6 = vector.load %arg4[%c0_5, %c0_6] : memref<1x32xf32, #tpu.memory_space<vmem>>, vector<1x32xf32>
    %7 = vector.broadcast %6 : vector<1x32xf32> to vector<256x32xf32>
    %8 = arith.addf %5, %7 : vector<256x32xf32>
    %cst_7 = arith.constant 0.000000e+00 : f32
    %9 = vector.broadcast %cst_7 : f32 to vector<256x32xf32>
    %10 = arith.maximumf %8, %9 : vector<256x32xf32>
    %11 = arith.truncf %10 : vector<256x32xf32> to vector<256x32xbf16>
    %c0_8 = arith.constant 0 : index
    %c0_9 = arith.constant 0 : index
    %12 = vector.load %arg5[%c0_8, %c0_9] : memref<256x32xbf16, #tpu.memory_space<vmem>>, vector<256x32xbf16>
    tpu.vector_store %arg5[%c0_8, %c0_9], %11 {strides = array<i32>} : memref<256x32xbf16, #tpu.memory_space<vmem>>, vector<256x32xbf16>,
    return
  }
  func.func @transform_0(%arg0: i32) -> (i32, i32) {
    %c0_i32 = arith.constant 0 : i32
    %c0_i32_0 = arith.constant 0 : i32
    return %arg0, %c0_i32 : i32, i32
  }
  func.func @transform_1(%arg0: i32) -> (i32, i32) {
    %c0_i32 = arith.constant 0 : i32
    %c0_i32_0 = arith.constant 0 : i32
    %c0_i32_1 = arith.constant 0 : i32
    return %c0_i32, %c0_i32_0 : i32, i32
  }
  func.func @transform_2(%arg0: i32) -> (i32, i32) {
    %c0_i32 = arith.constant 0 : i32
    %c0_i32_0 = arith.constant 0 : i32
    %c0_i32_1 = arith.constant 0 : i32
    return %c0_i32, %c0_i32_0 : i32, i32
  }
  func.func @transform_3(%arg0: i32) -> (i32, i32) {
    %c0_i32 = arith.constant 0 : i32
    %c0_i32_0 = arith.constant 0 : i32
    %c0_i32_1 = arith.constant 0 : i32
    return %c0_i32, %c0_i32_0 : i32, i32
  }
  func.func @transform_4(%arg0: i32) -> (i32, i32) {
    %c0_i32 = arith.constant 0 : i32
    %c0_i32_0 = arith.constant 0 : i32
    return %arg0, %c0_i32 : i32, i32
  }
}

module attributes {stable_mosaic.version = 11 : i64} {
  func.func @_matmul_bn_kernel(%arg0: i32, %arg1: memref<256x16xbf16, #tpu.memory_space<vmem>>, %arg2: memref<16x32xbf16, #tpu.memory_space<vmem>>, %arg3: memref<1x32xf32, #tpu.memory_space<vmem>>, %arg4: memref<1x32xf32, #tpu.memory_space<vmem>>, %arg5: memref<256x32xbf16, #tpu.memory_space<vmem>>) attributes {dimension_semantics = [#tpu.dimension_semantics<parallel>], iteration_bounds = array<i64: 2>, scalar_prefetch = 0 : i64, scratch_operands = 0 : i64, tpu.core_type = #tpu.core_type<tc>, window_params = [{transform_indices = @transform_0, window_bounds = array<i64: 256, 16>}, {pipeline_mode = #tpu.pipeline_mode<synchronous>, transform_indices = @transform_1, window_bounds = array<i64: 16, 32>}, {pipeline_mode = #tpu.pipeline_mode<synchronous>, transform_indices = @transform_2, window_bounds = array<i64: 1, 32>}, {pipeline_mode = #tpu.pipeline_mode<synchronous>, transform_indices = @transform_3, window_bounds = array<i64: 1, 32>}, {transform_indices = @transform_4, window_bounds = array<i64: 256, 32>}]} {
    %c0 = arith.constant 0 : index
    %c0_0 = arith.constant 0 : index
    %0 = vector.load %arg1[%c0, %c0_0] : memref<256x16xbf16, #tpu.memory_space<vmem>>, vector<256x16xbf16>
    %c0_1 = arith.constant 0 : index
    %c0_2 = arith.constant 0 : index
    %1 = vector.load %arg2[%c0_1, %c0_2] : memref<16x32xbf16, #tpu.memory_space<vmem>>, vector<16x32xbf16>
    %cst = arith.constant dense<0.000000e+00> : vector<256x32xf32>
    %2 = tpu.matmul %0, %1, %cst {dimension_numbers = #tpu.dot_dimension_numbers<[1], [0], [0], [1], [0, 0, 1, 1], [], []>} : vector<256x16xbf16>, vector<16x32xbf16>, vector<256x32xf32> -> vector<256x32xf32>
    %c0_3 = arith.constant 0 : index
    %c0_4 = arith.constant 0 : index
    %3 = vector.load %arg3[%c0_3, %c0_4] : memref<1x32xf32, #tpu.memory_space<vmem>>, vector<1x32xf32>
    %4 = vector.broadcast %3 : vector<1x32xf32> to vector<256x32xf32>
    %5 = arith.mulf %2, %4 : vector<256x32xf32>
    %c0_5 = arith.constant 0 : index
    %c0_6 = arith.constant 0 : index
    %6 = vector.load %arg4[%c0_5, %c0_6] : memref<1x32xf32, #tpu.memory_space<vmem>>, vector<1x32xf32>
    %7 = vector.broadcast %6 : vector<1x32xf32> to vector<256x32xf32>
    %8 = arith.addf %5, %7 : vector<256x32xf32>
    %9 = arith.truncf %8 : vector<256x32xf32> to vector<256x32xbf16>
    %c0_7 = arith.constant 0 : index
    %c0_8 = arith.constant 0 : index
    %10 = vector.load %arg5[%c0_7, %c0_8] : memref<256x32xbf16, #tpu.memory_space<vmem>>, vector<256x32xbf16>
    tpu.vector_store %arg5[%c0_7, %c0_8], %9 {strides = array<i32>} : memref<256x32xbf16, #tpu.memory_space<vmem>>, vector<256x32xbf16>,
    return
  }
  func.func @transform_0(%arg0: i32) -> (i32, i32) {
    %c0_i32 = arith.constant 0 : i32
    %c0_i32_0 = arith.constant 0 : i32
    return %arg0, %c0_i32 : i32, i32
  }
  func.func @transform_1(%arg0: i32) -> (i32, i32) {
    %c0_i32 = arith.constant 0 : i32
    %c0_i32_0 = arith.constant 0 : i32
    %c0_i32_1 = arith.constant 0 : i32
    return %c0_i32, %c0_i32_0 : i32, i32
  }
  func.func @transform_2(%arg0: i32) -> (i32, i32) {
    %c0_i32 = arith.constant 0 : i32
    %c0_i32_0 = arith.constant 0 : i32
    %c0_i32_1 = arith.constant 0 : i32
    return %c0_i32, %c0_i32_0 : i32, i32
  }
  func.func @transform_3(%arg0: i32) -> (i32, i32) {
    %c0_i32 = arith.constant 0 : i32
    %c0_i32_0 = arith.constant 0 : i32
    %c0_i32_1 = arith.constant 0 : i32
    return %c0_i32, %c0_i32_0 : i32, i32
  }
  func.func @transform_4(%arg0: i32) -> (i32, i32) {
    %c0_i32 = arith.constant 0 : i32
    %c0_i32_0 = arith.constant 0 : i32
    return %arg0, %c0_i32 : i32, i32
  }
}

module attributes {stable_mosaic.version = 11 : i64} {
  func.func @_matmul_bn_kernel(%arg0: i32, %arg1: memref<256x288xbf16, #tpu.memory_space<vmem>>, %arg2: memref<288x32xbf16, #tpu.memory_space<vmem>>, %arg3: memref<1x32xf32, #tpu.memory_space<vmem>>, %arg4: memref<1x32xf32, #tpu.memory_space<vmem>>, %arg5: memref<256x32xbf16, #tpu.memory_space<vmem>>) attributes {dimension_semantics = [#tpu.dimension_semantics<parallel>], iteration_bounds = array<i64: 2>, scalar_prefetch = 0 : i64, scratch_operands = 0 : i64, tpu.core_type = #tpu.core_type<tc>, window_params = [{transform_indices = @transform_0, window_bounds = array<i64: 256, 288>}, {pipeline_mode = #tpu.pipeline_mode<synchronous>, transform_indices = @transform_1, window_bounds = array<i64: 288, 32>}, {pipeline_mode = #tpu.pipeline_mode<synchronous>, transform_indices = @transform_2, window_bounds = array<i64: 1, 32>}, {pipeline_mode = #tpu.pipeline_mode<synchronous>, transform_indices = @transform_3, window_bounds = array<i64: 1, 32>}, {transform_indices = @transform_4, window_bounds = array<i64: 256, 32>}]} {
    %c0 = arith.constant 0 : index
    %c0_0 = arith.constant 0 : index
    %0 = vector.load %arg1[%c0, %c0_0] : memref<256x288xbf16, #tpu.memory_space<vmem>>, vector<256x288xbf16>
    %c0_1 = arith.constant 0 : index
    %c0_2 = arith.constant 0 : index
    %1 = vector.load %arg2[%c0_1, %c0_2] : memref<288x32xbf16, #tpu.memory_space<vmem>>, vector<288x32xbf16>
    %cst = arith.constant dense<0.000000e+00> : vector<256x32xf32>
    %2 = tpu.matmul %0, %1, %cst {dimension_numbers = #tpu.dot_dimension_numbers<[1], [0], [0], [1], [0, 0, 1, 1], [], []>} : vector<256x288xbf16>, vector<288x32xbf16>, vector<256x32xf32> -> vector<256x32xf32>
    %c0_3 = arith.constant 0 : index
    %c0_4 = arith.constant 0 : index
    %3 = vector.load %arg3[%c0_3, %c0_4] : memref<1x32xf32, #tpu.memory_space<vmem>>, vector<1x32xf32>
    %4 = vector.broadcast %3 : vector<1x32xf32> to vector<256x32xf32>
    %5 = arith.mulf %2, %4 : vector<256x32xf32>
    %c0_5 = arith.constant 0 : index
    %c0_6 = arith.constant 0 : index
    %6 = vector.load %arg4[%c0_5, %c0_6] : memref<1x32xf32, #tpu.memory_space<vmem>>, vector<1x32xf32>
    %7 = vector.broadcast %6 : vector<1x32xf32> to vector<256x32xf32>
    %8 = arith.addf %5, %7 : vector<256x32xf32>
    %cst_7 = arith.constant 0.000000e+00 : f32
    %9 = vector.broadcast %cst_7 : f32 to vector<256x32xf32>
    %10 = arith.maximumf %8, %9 : vector<256x32xf32>
    %11 = arith.truncf %10 : vector<256x32xf32> to vector<256x32xbf16>
    %c0_8 = arith.constant 0 : index
    %c0_9 = arith.constant 0 : index
    %12 = vector.load %arg5[%c0_8, %c0_9] : memref<256x32xbf16, #tpu.memory_space<vmem>>, vector<256x32xbf16>
    tpu.vector_store %arg5[%c0_8, %c0_9], %11 {strides = array<i32>} : memref<256x32xbf16, #tpu.memory_space<vmem>>, vector<256x32xbf16>,
    return
  }
  func.func @transform_0(%arg0: i32) -> (i32, i32) {
    %c0_i32 = arith.constant 0 : i32
    %c0_i32_0 = arith.constant 0 : i32
    return %arg0, %c0_i32 : i32, i32
  }
  func.func @transform_1(%arg0: i32) -> (i32, i32) {
    %c0_i32 = arith.constant 0 : i32
    %c0_i32_0 = arith.constant 0 : i32
    %c0_i32_1 = arith.constant 0 : i32
    return %c0_i32, %c0_i32_0 : i32, i32
  }
  func.func @transform_2(%arg0: i32) -> (i32, i32) {
    %c0_i32 = arith.constant 0 : i32
    %c0_i32_0 = arith.constant 0 : i32
    %c0_i32_1 = arith.constant 0 : i32
    return %c0_i32, %c0_i32_0 : i32, i32
  }
  func.func @transform_3(%arg0: i32) -> (i32, i32) {
    %c0_i32 = arith.constant 0 : i32
    %c0_i32_0 = arith.constant 0 : i32
    %c0_i32_1 = arith.constant 0 : i32
    return %c0_i32, %c0_i32_0 : i32, i32
  }
  func.func @transform_4(%arg0: i32) -> (i32, i32) {
    %c0_i32 = arith.constant 0 : i32
    %c0_i32_0 = arith.constant 0 : i32
    return %arg0, %c0_i32 : i32, i32
  }
}

module attributes {stable_mosaic.version = 11 : i64} {
  func.func @_matmul_bn_res_kernel(%arg0: i32, %arg1: memref<256x288xbf16, #tpu.memory_space<vmem>>, %arg2: memref<288x32xbf16, #tpu.memory_space<vmem>>, %arg3: memref<1x32xf32, #tpu.memory_space<vmem>>, %arg4: memref<1x32xf32, #tpu.memory_space<vmem>>, %arg5: memref<256x32xbf16, #tpu.memory_space<vmem>>, %arg6: memref<256x32xbf16, #tpu.memory_space<vmem>>) attributes {dimension_semantics = [#tpu.dimension_semantics<parallel>], iteration_bounds = array<i64: 2>, scalar_prefetch = 0 : i64, scratch_operands = 0 : i64, tpu.core_type = #tpu.core_type<tc>, window_params = [{transform_indices = @transform_0, window_bounds = array<i64: 256, 288>}, {pipeline_mode = #tpu.pipeline_mode<synchronous>, transform_indices = @transform_1, window_bounds = array<i64: 288, 32>}, {pipeline_mode = #tpu.pipeline_mode<synchronous>, transform_indices = @transform_2, window_bounds = array<i64: 1, 32>}, {pipeline_mode = #tpu.pipeline_mode<synchronous>, transform_indices = @transform_3, window_bounds = array<i64: 1, 32>}, {transform_indices = @transform_4, window_bounds = array<i64: 256, 32>}, {transform_indices = @transform_5, window_bounds = array<i64: 256, 32>}]} {
    %c0 = arith.constant 0 : index
    %c0_0 = arith.constant 0 : index
    %0 = vector.load %arg1[%c0, %c0_0] : memref<256x288xbf16, #tpu.memory_space<vmem>>, vector<256x288xbf16>
    %c0_1 = arith.constant 0 : index
    %c0_2 = arith.constant 0 : index
    %1 = vector.load %arg2[%c0_1, %c0_2] : memref<288x32xbf16, #tpu.memory_space<vmem>>, vector<288x32xbf16>
    %cst = arith.constant dense<0.000000e+00> : vector<256x32xf32>
    %2 = tpu.matmul %0, %1, %cst {dimension_numbers = #tpu.dot_dimension_numbers<[1], [0], [0], [1], [0, 0, 1, 1], [], []>} : vector<256x288xbf16>, vector<288x32xbf16>, vector<256x32xf32> -> vector<256x32xf32>
    %c0_3 = arith.constant 0 : index
    %c0_4 = arith.constant 0 : index
    %3 = vector.load %arg3[%c0_3, %c0_4] : memref<1x32xf32, #tpu.memory_space<vmem>>, vector<1x32xf32>
    %4 = vector.broadcast %3 : vector<1x32xf32> to vector<256x32xf32>
    %5 = arith.mulf %2, %4 : vector<256x32xf32>
    %c0_5 = arith.constant 0 : index
    %c0_6 = arith.constant 0 : index
    %6 = vector.load %arg4[%c0_5, %c0_6] : memref<1x32xf32, #tpu.memory_space<vmem>>, vector<1x32xf32>
    %7 = vector.broadcast %6 : vector<1x32xf32> to vector<256x32xf32>
    %8 = arith.addf %5, %7 : vector<256x32xf32>
    %c0_7 = arith.constant 0 : index
    %c0_8 = arith.constant 0 : index
    %9 = vector.load %arg5[%c0_7, %c0_8] : memref<256x32xbf16, #tpu.memory_space<vmem>>, vector<256x32xbf16>
    %10 = arith.extf %9 : vector<256x32xbf16> to vector<256x32xf32>
    %11 = arith.addf %8, %10 : vector<256x32xf32>
    %cst_9 = arith.constant 0.000000e+00 : f32
    %12 = vector.broadcast %cst_9 : f32 to vector<256x32xf32>
    %13 = arith.maximumf %11, %12 : vector<256x32xf32>
    %14 = arith.truncf %13 : vector<256x32xf32> to vector<256x32xbf16>
    %c0_10 = arith.constant 0 : index
    %c0_11 = arith.constant 0 : index
    %15 = vector.load %arg6[%c0_10, %c0_11] : memref<256x32xbf16, #tpu.memory_space<vmem>>, vector<256x32xbf16>
    tpu.vector_store %arg6[%c0_10, %c0_11], %14 {strides = array<i32>} : memref<256x32xbf16, #tpu.memory_space<vmem>>, vector<256x32xbf16>,
    return
  }
  func.func @transform_0(%arg0: i32) -> (i32, i32) {
    %c0_i32 = arith.constant 0 : i32
    %c0_i32_0 = arith.constant 0 : i32
    return %arg0, %c0_i32 : i32, i32
  }
  func.func @transform_1(%arg0: i32) -> (i32, i32) {
    %c0_i32 = arith.constant 0 : i32
    %c0_i32_0 = arith.constant 0 : i32
    %c0_i32_1 = arith.constant 0 : i32
    return %c0_i32, %c0_i32_0 : i32, i32
  }
  func.func @transform_2(%arg0: i32) -> (i32, i32) {
    %c0_i32 = arith.constant 0 : i32
    %c0_i32_0 = arith.constant 0 : i32
    %c0_i32_1 = arith.constant 0 : i32
    return %c0_i32, %c0_i32_0 : i32, i32
  }
  func.func @transform_3(%arg0: i32) -> (i32, i32) {
    %c0_i32 = arith.constant 0 : i32
    %c0_i32_0 = arith.constant 0 : i32
    %c0_i32_1 = arith.constant 0 : i32
    return %c0_i32, %c0_i32_0 : i32, i32
  }
  func.func @transform_4(%arg0: i32) -> (i32, i32) {
    %c0_i32 = arith.constant 0 : i32
    %c0_i32_0 = arith.constant 0 : i32
    return %arg0, %c0_i32 : i32, i32
  }
  func.func @transform_5(%arg0: i32) -> (i32, i32) {
    %c0_i32 = arith.constant 0 : i32
    %c0_i32_0 = arith.constant 0 : i32
    return %arg0, %c0_i32 : i32, i32
  }
}

module attributes {stable_mosaic.version = 11 : i64} {
  func.func @_matmul_bn_kernel(%arg0: i32, %arg1: memref<64x288xbf16, #tpu.memory_space<vmem>>, %arg2: memref<288x64xbf16, #tpu.memory_space<vmem>>, %arg3: memref<1x64xf32, #tpu.memory_space<vmem>>, %arg4: memref<1x64xf32, #tpu.memory_space<vmem>>, %arg5: memref<64x64xbf16, #tpu.memory_space<vmem>>) attributes {dimension_semantics = [#tpu.dimension_semantics<parallel>], iteration_bounds = array<i64: 2>, scalar_prefetch = 0 : i64, scratch_operands = 0 : i64, tpu.core_type = #tpu.core_type<tc>, window_params = [{transform_indices = @transform_0, window_bounds = array<i64: 64, 288>}, {pipeline_mode = #tpu.pipeline_mode<synchronous>, transform_indices = @transform_1, window_bounds = array<i64: 288, 64>}, {pipeline_mode = #tpu.pipeline_mode<synchronous>, transform_indices = @transform_2, window_bounds = array<i64: 1, 64>}, {pipeline_mode = #tpu.pipeline_mode<synchronous>, transform_indices = @transform_3, window_bounds = array<i64: 1, 64>}, {transform_indices = @transform_4, window_bounds = array<i64: 64, 64>}]} {
    %c0 = arith.constant 0 : index
    %c0_0 = arith.constant 0 : index
    %0 = vector.load %arg1[%c0, %c0_0] : memref<64x288xbf16, #tpu.memory_space<vmem>>, vector<64x288xbf16>
    %c0_1 = arith.constant 0 : index
    %c0_2 = arith.constant 0 : index
    %1 = vector.load %arg2[%c0_1, %c0_2] : memref<288x64xbf16, #tpu.memory_space<vmem>>, vector<288x64xbf16>
    %cst = arith.constant dense<0.000000e+00> : vector<64x64xf32>
    %2 = tpu.matmul %0, %1, %cst {dimension_numbers = #tpu.dot_dimension_numbers<[1], [0], [0], [1], [0, 0, 1, 1], [], []>} : vector<64x288xbf16>, vector<288x64xbf16>, vector<64x64xf32> -> vector<64x64xf32>
    %c0_3 = arith.constant 0 : index
    %c0_4 = arith.constant 0 : index
    %3 = vector.load %arg3[%c0_3, %c0_4] : memref<1x64xf32, #tpu.memory_space<vmem>>, vector<1x64xf32>
    %4 = vector.broadcast %3 : vector<1x64xf32> to vector<64x64xf32>
    %5 = arith.mulf %2, %4 : vector<64x64xf32>
    %c0_5 = arith.constant 0 : index
    %c0_6 = arith.constant 0 : index
    %6 = vector.load %arg4[%c0_5, %c0_6] : memref<1x64xf32, #tpu.memory_space<vmem>>, vector<1x64xf32>
    %7 = vector.broadcast %6 : vector<1x64xf32> to vector<64x64xf32>
    %8 = arith.addf %5, %7 : vector<64x64xf32>
    %cst_7 = arith.constant 0.000000e+00 : f32
    %9 = vector.broadcast %cst_7 : f32 to vector<64x64xf32>
    %10 = arith.maximumf %8, %9 : vector<64x64xf32>
    %11 = arith.truncf %10 : vector<64x64xf32> to vector<64x64xbf16>
    %c0_8 = arith.constant 0 : index
    %c0_9 = arith.constant 0 : index
    %12 = vector.load %arg5[%c0_8, %c0_9] : memref<64x64xbf16, #tpu.memory_space<vmem>>, vector<64x64xbf16>
    tpu.vector_store %arg5[%c0_8, %c0_9], %11 {strides = array<i32>} : memref<64x64xbf16, #tpu.memory_space<vmem>>, vector<64x64xbf16>,
    return
  }
  func.func @transform_0(%arg0: i32) -> (i32, i32) {
    %c0_i32 = arith.constant 0 : i32
    %c0_i32_0 = arith.constant 0 : i32
    return %arg0, %c0_i32 : i32, i32
  }
  func.func @transform_1(%arg0: i32) -> (i32, i32) {
    %c0_i32 = arith.constant 0 : i32
    %c0_i32_0 = arith.constant 0 : i32
    %c0_i32_1 = arith.constant 0 : i32
    return %c0_i32, %c0_i32_0 : i32, i32
  }
  func.func @transform_2(%arg0: i32) -> (i32, i32) {
    %c0_i32 = arith.constant 0 : i32
    %c0_i32_0 = arith.constant 0 : i32
    %c0_i32_1 = arith.constant 0 : i32
    return %c0_i32, %c0_i32_0 : i32, i32
  }
  func.func @transform_3(%arg0: i32) -> (i32, i32) {
    %c0_i32 = arith.constant 0 : i32
    %c0_i32_0 = arith.constant 0 : i32
    %c0_i32_1 = arith.constant 0 : i32
    return %c0_i32, %c0_i32_0 : i32, i32
  }
  func.func @transform_4(%arg0: i32) -> (i32, i32) {
    %c0_i32 = arith.constant 0 : i32
    %c0_i32_0 = arith.constant 0 : i32
    return %arg0, %c0_i32 : i32, i32
  }
}

module attributes {stable_mosaic.version = 11 : i64} {
  func.func @_matmul_bn_kernel(%arg0: i32, %arg1: memref<64x32xbf16, #tpu.memory_space<vmem>>, %arg2: memref<32x64xbf16, #tpu.memory_space<vmem>>, %arg3: memref<1x64xf32, #tpu.memory_space<vmem>>, %arg4: memref<1x64xf32, #tpu.memory_space<vmem>>, %arg5: memref<64x64xbf16, #tpu.memory_space<vmem>>) attributes {dimension_semantics = [#tpu.dimension_semantics<parallel>], iteration_bounds = array<i64: 2>, scalar_prefetch = 0 : i64, scratch_operands = 0 : i64, tpu.core_type = #tpu.core_type<tc>, window_params = [{transform_indices = @transform_0, window_bounds = array<i64: 64, 32>}, {pipeline_mode = #tpu.pipeline_mode<synchronous>, transform_indices = @transform_1, window_bounds = array<i64: 32, 64>}, {pipeline_mode = #tpu.pipeline_mode<synchronous>, transform_indices = @transform_2, window_bounds = array<i64: 1, 64>}, {pipeline_mode = #tpu.pipeline_mode<synchronous>, transform_indices = @transform_3, window_bounds = array<i64: 1, 64>}, {transform_indices = @transform_4, window_bounds = array<i64: 64, 64>}]} {
    %c0 = arith.constant 0 : index
    %c0_0 = arith.constant 0 : index
    %0 = vector.load %arg1[%c0, %c0_0] : memref<64x32xbf16, #tpu.memory_space<vmem>>, vector<64x32xbf16>
    %c0_1 = arith.constant 0 : index
    %c0_2 = arith.constant 0 : index
    %1 = vector.load %arg2[%c0_1, %c0_2] : memref<32x64xbf16, #tpu.memory_space<vmem>>, vector<32x64xbf16>
    %cst = arith.constant dense<0.000000e+00> : vector<64x64xf32>
    %2 = tpu.matmul %0, %1, %cst {dimension_numbers = #tpu.dot_dimension_numbers<[1], [0], [0], [1], [0, 0, 1, 1], [], []>} : vector<64x32xbf16>, vector<32x64xbf16>, vector<64x64xf32> -> vector<64x64xf32>
    %c0_3 = arith.constant 0 : index
    %c0_4 = arith.constant 0 : index
    %3 = vector.load %arg3[%c0_3, %c0_4] : memref<1x64xf32, #tpu.memory_space<vmem>>, vector<1x64xf32>
    %4 = vector.broadcast %3 : vector<1x64xf32> to vector<64x64xf32>
    %5 = arith.mulf %2, %4 : vector<64x64xf32>
    %c0_5 = arith.constant 0 : index
    %c0_6 = arith.constant 0 : index
    %6 = vector.load %arg4[%c0_5, %c0_6] : memref<1x64xf32, #tpu.memory_space<vmem>>, vector<1x64xf32>
    %7 = vector.broadcast %6 : vector<1x64xf32> to vector<64x64xf32>
    %8 = arith.addf %5, %7 : vector<64x64xf32>
    %9 = arith.truncf %8 : vector<64x64xf32> to vector<64x64xbf16>
    %c0_7 = arith.constant 0 : index
    %c0_8 = arith.constant 0 : index
    %10 = vector.load %arg5[%c0_7, %c0_8] : memref<64x64xbf16, #tpu.memory_space<vmem>>, vector<64x64xbf16>
    tpu.vector_store %arg5[%c0_7, %c0_8], %9 {strides = array<i32>} : memref<64x64xbf16, #tpu.memory_space<vmem>>, vector<64x64xbf16>,
    return
  }
  func.func @transform_0(%arg0: i32) -> (i32, i32) {
    %c0_i32 = arith.constant 0 : i32
    %c0_i32_0 = arith.constant 0 : i32
    return %arg0, %c0_i32 : i32, i32
  }
  func.func @transform_1(%arg0: i32) -> (i32, i32) {
    %c0_i32 = arith.constant 0 : i32
    %c0_i32_0 = arith.constant 0 : i32
    %c0_i32_1 = arith.constant 0 : i32
    return %c0_i32, %c0_i32_0 : i32, i32
  }
  func.func @transform_2(%arg0: i32) -> (i32, i32) {
    %c0_i32 = arith.constant 0 : i32
    %c0_i32_0 = arith.constant 0 : i32
    %c0_i32_1 = arith.constant 0 : i32
    return %c0_i32, %c0_i32_0 : i32, i32
  }
  func.func @transform_3(%arg0: i32) -> (i32, i32) {
    %c0_i32 = arith.constant 0 : i32
    %c0_i32_0 = arith.constant 0 : i32
    %c0_i32_1 = arith.constant 0 : i32
    return %c0_i32, %c0_i32_0 : i32, i32
  }
  func.func @transform_4(%arg0: i32) -> (i32, i32) {
    %c0_i32 = arith.constant 0 : i32
    %c0_i32_0 = arith.constant 0 : i32
    return %arg0, %c0_i32 : i32, i32
  }
}

module attributes {stable_mosaic.version = 11 : i64} {
  func.func @_pool_fc_kernel(%arg0: memref<2x64x64xbf16, #tpu.memory_space<vmem>>, %arg1: memref<64x10xf32, #tpu.memory_space<vmem>>, %arg2: memref<1x10xf32, #tpu.memory_space<vmem>>, %arg3: memref<2x10xf32, #tpu.memory_space<vmem>>) attributes {dimension_semantics = [], scalar_prefetch = 0 : i64, scratch_operands = 0 : i64, tpu.core_type = #tpu.core_type<tc>} {
    %c0 = arith.constant 0 : index
    %c0_0 = arith.constant 0 : index
    %c0_1 = arith.constant 0 : index
    %0 = vector.load %arg0[%c0, %c0_0, %c0_1] : memref<2x64x64xbf16, #tpu.memory_space<vmem>>, vector<2x64x64xbf16>
    %1 = arith.extf %0 : vector<2x64x64xbf16> to vector<2x64x64xf32>
    %cst = arith.constant dense<0.000000e+00> : vector<2x64xf32>
    %2 = vector.multi_reduction <add>, %1, %cst [1] : vector<2x64x64xf32> to vector<2x64xf32>
    %cst_2 = arith.constant 6.400000e+01 : f32
    %3 = vector.broadcast %cst_2 : f32 to vector<2x64xf32>
    %4 = arith.divf %2, %3 : vector<2x64xf32>
    %c0_3 = arith.constant 0 : index
    %c0_4 = arith.constant 0 : index
    %5 = vector.load %arg1[%c0_3, %c0_4] : memref<64x10xf32, #tpu.memory_space<vmem>>, vector<64x10xf32>
    %cst_5 = arith.constant dense<0.000000e+00> : vector<2x10xf32>
    %6 = tpu.matmul %4, %5, %cst_5 {dimension_numbers = #tpu.dot_dimension_numbers<[1], [0], [0], [1], [0, 0, 1, 1], [], []>} : vector<2x64xf32>, vector<64x10xf32>, vector<2x10xf32> -> vector<2x10xf32>
    %c0_6 = arith.constant 0 : index
    %c0_7 = arith.constant 0 : index
    %7 = vector.load %arg2[%c0_6, %c0_7] : memref<1x10xf32, #tpu.memory_space<vmem>>, vector<1x10xf32>
    %8 = vector.broadcast %7 : vector<1x10xf32> to vector<2x10xf32>
    %9 = arith.addf %6, %8 : vector<2x10xf32>
    %c0_8 = arith.constant 0 : index
    %c0_9 = arith.constant 0 : index
    %10 = vector.load %arg3[%c0_8, %c0_9] : memref<2x10xf32, #tpu.memory_space<vmem>>, vector<2x10xf32>
    tpu.vector_store %arg3[%c0_8, %c0_9], %9 {strides = array<i32>} : memref<2x10xf32, #tpu.memory_space<vmem>>, vector<2x10xf32>,
    return
  }
}

module attributes {stable_mosaic.version = 11 : i64} {
  func.func @_matmul_bn_res_kernel(%arg0: i32, %arg1: memref<64x576xbf16, #tpu.memory_space<vmem>>, %arg2: memref<576x64xbf16, #tpu.memory_space<vmem>>, %arg3: memref<1x64xf32, #tpu.memory_space<vmem>>, %arg4: memref<1x64xf32, #tpu.memory_space<vmem>>, %arg5: memref<64x64xbf16, #tpu.memory_space<vmem>>, %arg6: memref<64x64xbf16, #tpu.memory_space<vmem>>) attributes {dimension_semantics = [#tpu.dimension_semantics<parallel>], iteration_bounds = array<i64: 2>, scalar_prefetch = 0 : i64, scratch_operands = 0 : i64, tpu.core_type = #tpu.core_type<tc>, window_params = [{transform_indices = @transform_0, window_bounds = array<i64: 64, 576>}, {pipeline_mode = #tpu.pipeline_mode<synchronous>, transform_indices = @transform_1, window_bounds = array<i64: 576, 64>}, {pipeline_mode = #tpu.pipeline_mode<synchronous>, transform_indices = @transform_2, window_bounds = array<i64: 1, 64>}, {pipeline_mode = #tpu.pipeline_mode<synchronous>, transform_indices = @transform_3, window_bounds = array<i64: 1, 64>}, {transform_indices = @transform_4, window_bounds = array<i64: 64, 64>}, {transform_indices = @transform_5, window_bounds = array<i64: 64, 64>}]} {
    %c0 = arith.constant 0 : index
    %c0_0 = arith.constant 0 : index
    %0 = vector.load %arg1[%c0, %c0_0] : memref<64x576xbf16, #tpu.memory_space<vmem>>, vector<64x576xbf16>
    %c0_1 = arith.constant 0 : index
    %c0_2 = arith.constant 0 : index
    %1 = vector.load %arg2[%c0_1, %c0_2] : memref<576x64xbf16, #tpu.memory_space<vmem>>, vector<576x64xbf16>
    %cst = arith.constant dense<0.000000e+00> : vector<64x64xf32>
    %2 = tpu.matmul %0, %1, %cst {dimension_numbers = #tpu.dot_dimension_numbers<[1], [0], [0], [1], [0, 0, 1, 1], [], []>} : vector<64x576xbf16>, vector<576x64xbf16>, vector<64x64xf32> -> vector<64x64xf32>
    %c0_3 = arith.constant 0 : index
    %c0_4 = arith.constant 0 : index
    %3 = vector.load %arg3[%c0_3, %c0_4] : memref<1x64xf32, #tpu.memory_space<vmem>>, vector<1x64xf32>
    %4 = vector.broadcast %3 : vector<1x64xf32> to vector<64x64xf32>
    %5 = arith.mulf %2, %4 : vector<64x64xf32>
    %c0_5 = arith.constant 0 : index
    %c0_6 = arith.constant 0 : index
    %6 = vector.load %arg4[%c0_5, %c0_6] : memref<1x64xf32, #tpu.memory_space<vmem>>, vector<1x64xf32>
    %7 = vector.broadcast %6 : vector<1x64xf32> to vector<64x64xf32>
    %8 = arith.addf %5, %7 : vector<64x64xf32>
    %c0_7 = arith.constant 0 : index
    %c0_8 = arith.constant 0 : index
    %9 = vector.load %arg5[%c0_7, %c0_8] : memref<64x64xbf16, #tpu.memory_space<vmem>>, vector<64x64xbf16>
    %10 = arith.extf %9 : vector<64x64xbf16> to vector<64x64xf32>
    %11 = arith.addf %8, %10 : vector<64x64xf32>
    %cst_9 = arith.constant 0.000000e+00 : f32
    %12 = vector.broadcast %cst_9 : f32 to vector<64x64xf32>
    %13 = arith.maximumf %11, %12 : vector<64x64xf32>
    %14 = arith.truncf %13 : vector<64x64xf32> to vector<64x64xbf16>
    %c0_10 = arith.constant 0 : index
    %c0_11 = arith.constant 0 : index
    %15 = vector.load %arg6[%c0_10, %c0_11] : memref<64x64xbf16, #tpu.memory_space<vmem>>, vector<64x64xbf16>
    tpu.vector_store %arg6[%c0_10, %c0_11], %14 {strides = array<i32>} : memref<64x64xbf16, #tpu.memory_space<vmem>>, vector<64x64xbf16>,
    return
  }
  func.func @transform_0(%arg0: i32) -> (i32, i32) {
    %c0_i32 = arith.constant 0 : i32
    %c0_i32_0 = arith.constant 0 : i32
    return %arg0, %c0_i32 : i32, i32
  }
  func.func @transform_1(%arg0: i32) -> (i32, i32) {
    %c0_i32 = arith.constant 0 : i32
    %c0_i32_0 = arith.constant 0 : i32
    %c0_i32_1 = arith.constant 0 : i32
    return %c0_i32, %c0_i32_0 : i32, i32
  }
  func.func @transform_2(%arg0: i32) -> (i32, i32) {
    %c0_i32 = arith.constant 0 : i32
    %c0_i32_0 = arith.constant 0 : i32
    %c0_i32_1 = arith.constant 0 : i32
    return %c0_i32, %c0_i32_0 : i32, i32
  }
  func.func @transform_3(%arg0: i32) -> (i32, i32) {
    %c0_i32 = arith.constant 0 : i32
    %c0_i32_0 = arith.constant 0 : i32
    %c0_i32_1 = arith.constant 0 : i32
    return %c0_i32, %c0_i32_0 : i32, i32
  }
  func.func @transform_4(%arg0: i32) -> (i32, i32) {
    %c0_i32 = arith.constant 0 : i32
    %c0_i32_0 = arith.constant 0 : i32
    return %arg0, %c0_i32 : i32, i32
  }
  func.func @transform_5(%arg0: i32) -> (i32, i32) {
    %c0_i32 = arith.constant 0 : i32
    %c0_i32_0 = arith.constant 0 : i32
    return %arg0, %c0_i32 : i32, i32
  }
}

module attributes {stable_mosaic.version = 11 : i64} {
  func.func @_matmul_bn_kernel(%arg0: i32, %arg1: memref<64x576xbf16, #tpu.memory_space<vmem>>, %arg2: memref<576x64xbf16, #tpu.memory_space<vmem>>, %arg3: memref<1x64xf32, #tpu.memory_space<vmem>>, %arg4: memref<1x64xf32, #tpu.memory_space<vmem>>, %arg5: memref<64x64xbf16, #tpu.memory_space<vmem>>) attributes {dimension_semantics = [#tpu.dimension_semantics<parallel>], iteration_bounds = array<i64: 2>, scalar_prefetch = 0 : i64, scratch_operands = 0 : i64, tpu.core_type = #tpu.core_type<tc>, window_params = [{transform_indices = @transform_0, window_bounds = array<i64: 64, 576>}, {pipeline_mode = #tpu.pipeline_mode<synchronous>, transform_indices = @transform_1, window_bounds = array<i64: 576, 64>}, {pipeline_mode = #tpu.pipeline_mode<synchronous>, transform_indices = @transform_2, window_bounds = array<i64: 1, 64>}, {pipeline_mode = #tpu.pipeline_mode<synchronous>, transform_indices = @transform_3, window_bounds = array<i64: 1, 64>}, {transform_indices = @transform_4, window_bounds = array<i64: 64, 64>}]} {
    %c0 = arith.constant 0 : index
    %c0_0 = arith.constant 0 : index
    %0 = vector.load %arg1[%c0, %c0_0] : memref<64x576xbf16, #tpu.memory_space<vmem>>, vector<64x576xbf16>
    %c0_1 = arith.constant 0 : index
    %c0_2 = arith.constant 0 : index
    %1 = vector.load %arg2[%c0_1, %c0_2] : memref<576x64xbf16, #tpu.memory_space<vmem>>, vector<576x64xbf16>
    %cst = arith.constant dense<0.000000e+00> : vector<64x64xf32>
    %2 = tpu.matmul %0, %1, %cst {dimension_numbers = #tpu.dot_dimension_numbers<[1], [0], [0], [1], [0, 0, 1, 1], [], []>} : vector<64x576xbf16>, vector<576x64xbf16>, vector<64x64xf32> -> vector<64x64xf32>
    %c0_3 = arith.constant 0 : index
    %c0_4 = arith.constant 0 : index
    %3 = vector.load %arg3[%c0_3, %c0_4] : memref<1x64xf32, #tpu.memory_space<vmem>>, vector<1x64xf32>
    %4 = vector.broadcast %3 : vector<1x64xf32> to vector<64x64xf32>
    %5 = arith.mulf %2, %4 : vector<64x64xf32>
    %c0_5 = arith.constant 0 : index
    %c0_6 = arith.constant 0 : index
    %6 = vector.load %arg4[%c0_5, %c0_6] : memref<1x64xf32, #tpu.memory_space<vmem>>, vector<1x64xf32>
    %7 = vector.broadcast %6 : vector<1x64xf32> to vector<64x64xf32>
    %8 = arith.addf %5, %7 : vector<64x64xf32>
    %cst_7 = arith.constant 0.000000e+00 : f32
    %9 = vector.broadcast %cst_7 : f32 to vector<64x64xf32>
    %10 = arith.maximumf %8, %9 : vector<64x64xf32>
    %11 = arith.truncf %10 : vector<64x64xf32> to vector<64x64xbf16>
    %c0_8 = arith.constant 0 : index
    %c0_9 = arith.constant 0 : index
    %12 = vector.load %arg5[%c0_8, %c0_9] : memref<64x64xbf16, #tpu.memory_space<vmem>>, vector<64x64xbf16>
    tpu.vector_store %arg5[%c0_8, %c0_9], %11 {strides = array<i32>} : memref<64x64xbf16, #tpu.memory_space<vmem>>, vector<64x64xbf16>,
    return
  }
  func.func @transform_0(%arg0: i32) -> (i32, i32) {
    %c0_i32 = arith.constant 0 : i32
    %c0_i32_0 = arith.constant 0 : i32
    return %arg0, %c0_i32 : i32, i32
  }
  func.func @transform_1(%arg0: i32) -> (i32, i32) {
    %c0_i32 = arith.constant 0 : i32
    %c0_i32_0 = arith.constant 0 : i32
    %c0_i32_1 = arith.constant 0 : i32
    return %c0_i32, %c0_i32_0 : i32, i32
  }
  func.func @transform_2(%arg0: i32) -> (i32, i32) {
    %c0_i32 = arith.constant 0 : i32
    %c0_i32_0 = arith.constant 0 : i32
    %c0_i32_1 = arith.constant 0 : i32
    return %c0_i32, %c0_i32_0 : i32, i32
  }
  func.func @transform_3(%arg0: i32) -> (i32, i32) {
    %c0_i32 = arith.constant 0 : i32
    %c0_i32_0 = arith.constant 0 : i32
    %c0_i32_1 = arith.constant 0 : i32
    return %c0_i32, %c0_i32_0 : i32, i32
  }
  func.func @transform_4(%arg0: i32) -> (i32, i32) {
    %c0_i32 = arith.constant 0 : i32
    %c0_i32_0 = arith.constant 0 : i32
    return %arg0, %c0_i32 : i32, i32
  }
}

</mosaic_0001>

<llo_original>
// kernel: _lambda_.22
$region0: #{_lambda_.22}
  #allocation0 [shape = 'u32[]', space=smem, size = 0x4, offset = 0x4, fixed_abs, tag = 'smem constant byte address 0x4 - core index']
  #allocation1 [shape = 'u32[72,128]{1,0:T(1,128)}', space=vmem, size = 0x9000, scoped, tag = 'internal scratch']
  %s0 = inlined_call_operand.vmem [shape: bf16[2048,27], index: 0, kind: input, shape index: {}]
  %s1 = inlined_call_operand.vmem [shape: bf16[27,16], index: 1, kind: input, shape index: {}]
  %s2 = inlined_call_operand.vmem [shape: f32[1,16], index: 2, kind: input, shape index: {}]
  %s3 = inlined_call_operand.vmem [shape: f32[1,16], index: 3, kind: input, shape index: {}]
  %s4 = inlined_call_operand.vmem [shape: bf16[2048,16], index: 4, kind: output, shape index: {}]
  %s5 = sld [smem:[#allocation0]]
  $region49: #{_lambda_.22} parent=0
    _
  %s7 = ssub.s32 1, %s5
  %s8 = scalar_select 0, %s7, %s5
  loop: start=0, step=1, limit=6
  $region2: #{_lambda_.22} parent=0 // loop_pre_header
    _
  $region3: #{_lambda_.22} parent=0 // loop_header
    %s10 = sphi 0, %s14
    %p11 = scmp.ge.s32.totalorder %s10, 6
    %s20 = sphi 0, %s22
    %s23 = sphi 0, %s20
    %s24 = sphi 0, %s23
    %s40 = sphi 0, %s24
    %s44 = sphi 0, %s44
    %s46 = sphi 0, %s44
    %s47 = sphi 0, %s46
    %s61 = sphi 0, %s47
    %s65 = sphi 0, %s65
    %s67 = sphi 0, %s65
    %s68 = sphi 0, %s67
    %s82 = sphi 0, %s68
    %s86 = sphi 0, %s86
    %s88 = sphi 0, %s86
    %s89 = sphi 0, %s88
    %s103 = sphi 0, %s89
    %s109 = sphi 0, %s111
    %s112 = sphi 0, %s109
    %s113 = sphi 0, %s112
    %s129 = sphi 0, %s113
  $region4: #{_lambda_.22} parent=0 // loop_header_branch
    %13 = sbr.rel (%p11) target = $region8
  $region5: #{_lambda_.22} parent=0 // loop_body
    %s15 = ssub.s32 %s10, 1
    %s16 = ssub.s32 %s10, 2
    %s17 = sadd.s32 %s10, 1
    %s18 = ssub.s32 %s10, %s17
    %p19 = scmp.eq.s32.totalorder %s18, 0
    %s21 = sadd.s32 %s20, 1
    %s22 = scalar_select %p19, %s20, %s21
    %p25 = pneg %p19
    %p26 = scmp.eq.s32.totalorder %s10, 3
    %p27 = por %p25, %p26
    %p28 = scmp.ne.s32.totalorder %s20, %s23
    %p29 = scmp.eq.s32.totalorder %s10, 0
    %p30 = por %p28, %p29
    %p31 = scmp.ne.s32.totalorder %s20, %s23
    %p32 = scmp.eq.s32.totalorder %s15, 3
    %p33 = por %p31, %p32
    %p34 = scmp.ne.s32.totalorder %s23, %s24
    %p35 = scmp.eq.s32.totalorder %s15, 0
    %p36 = por %p34, %p35
    %p37 = scmp.ne.s32.totalorder %s23, %s24
    %p38 = scmp.eq.s32.totalorder %s16, 3
    %p39 = por %p37, %p38
    %p41 = scmp.ne.s32.totalorder %s24, %s40
    %p42 = scmp.eq.s32.totalorder %s16, 0
    %p43 = por %p41, %p42
    %s45 = sadd.s32 %s44, 1
    %p48 = scmp.eq.s32.totalorder %s10, 3
    %p49 = scmp.ne.s32.totalorder %s44, %s46
    %p50 = scmp.eq.s32.totalorder %s10, 0
    %p51 = por %p49, %p50
    %p52 = scmp.ne.s32.totalorder %s44, %s46
    %p53 = scmp.eq.s32.totalorder %s15, 3
    %p54 = por %p52, %p53
    %p55 = scmp.ne.s32.totalorder %s46, %s47
    %p56 = scmp.eq.s32.totalorder %s15, 0
    %p57 = por %p55, %p56
    %p58 = scmp.ne.s32.totalorder %s46, %s47
    %p59 = scmp.eq.s32.totalorder %s16, 3
    %p60 = por %p58, %p59
    %p62 = scmp.ne.s32.totalorder %s47, %s61
    %p63 = scmp.eq.s32.totalorder %s16, 0
    %p64 = por %p62, %p63
    %s66 = sadd.s32 %s65, 1
    %p69 = scmp.eq.s32.totalorder %s10, 3
    %p70 = scmp.ne.s32.totalorder %s65, %s67
    %p71 = scmp.eq.s32.totalorder %s10, 0
    %p72 = por %p70, %p71
    %p73 = scmp.ne.s32.totalorder %s65, %s67
    %p74 = scmp.eq.s32.totalorder %s15, 3
    %p75 = por %p73, %p74
    %p76 = scmp.ne.s32.totalorder %s67, %s68
    %p77 = scmp.eq.s32.totalorder %s15, 0
    %p78 = por %p76, %p77
    %p79 = scmp.ne.s32.totalorder %s67, %s68
    %p80 = scmp.eq.s32.totalorder %s16, 3
    %p81 = por %p79, %p80
    %p83 = scmp.ne.s32.totalorder %s68, %s82
    %p84 = scmp.eq.s32.totalorder %s16, 0
    %p85 = por %p83, %p84
    %s87 = sadd.s32 %s86, 1
    %p90 = scmp.eq.s32.totalorder %s10, 3
    %p91 = scmp.ne.s32.totalorder %s86, %s88
    %p92 = scmp.eq.s32.totalorder %s10, 0
    %p93 = por %p91, %p92
    %p94 = scmp.ne.s32.totalorder %s86, %s88
    %p95 = scmp.eq.s32.totalorder %s15, 3
    %p96 = por %p94, %p95
    %p97 = scmp.ne.s32.totalorder %s88, %s89
    %p98 = scmp.eq.s32.totalorder %s15, 0
    %p99 = por %p97, %p98
    %p100 = scmp.ne.s32.totalorder %s88, %s89
    %p101 = scmp.eq.s32.totalorder %s16, 3
    %p102 = por %p100, %p101
    %p104 = scmp.ne.s32.totalorder %s89, %s103
    %p105 = scmp.eq.s32.totalorder %s16, 0
    %p106 = por %p104, %p105
    %s107 = ssub.s32 %s10, %s17
    %p108 = scmp.eq.s32.totalorder %s107, 0
    %s110 = sadd.s32 %s109, 1
    %s111 = scalar_select %p108, %s109, %s110
    %p114 = pneg %p108
    %p115 = scmp.eq.s32.totalorder %s10, 3
    %p116 = por %p114, %p115
    %p117 = scmp.ne.s32.totalorder %s109, %s112
    %p118 = scmp.eq.s32.totalorder %s10, 0
    %p119 = por %p117, %p118
    %p120 = scmp.ne.s32.totalorder %s109, %s112
    %p121 = scmp.eq.s32.totalorder %s15, 3
    %p122 = por %p120, %p121
    %p123 = scmp.ne.s32.totalorder %s112, %s113
    %p124 = scmp.eq.s32.totalorder %s15, 0
    %p125 = por %p123, %p124
    %p126 = scmp.ne.s32.totalorder %s112, %s113
    %p127 = scmp.eq.s32.totalorder %s16, 3
    %p128 = por %p126, %p127
    %p130 = scmp.ne.s32.totalorder %s113, %s129
    %p131 = scmp.eq.s32.totalorder %s16, 0
    %p132 = por %p130, %p131
    %p133 = scmp.le.s32.totalorder 1, %s10
    %p134 = scmp.lt.s32.totalorder %s10, 5
    %p135 = pnand %p133, %p134
    %p136 = pneg %p135
    // Predicated region
    $region9: #{_lambda_.22} parent=5 // pred_check
      _
    $region10: #{_lambda_.22} parent=5 // pred_check_branch
      %138 = sbr.rel (%p135) target = $region12
    $region11: #{_lambda_.22} parent=5 // pred_region
      %s139 = ssub.s32 %s10, 1
      // Predicated region
      $region13: #{_lambda_.22} parent=11 // pred_check
        %p140 = pneg %p57
      $region14: #{_lambda_.22} parent=11 // pred_check_branch
        %142 = sbr.rel (%p140) target = $region16
      $region15: #{_lambda_.22} parent=11 // pred_region
        _
      $region16: #{_lambda_.22} parent=11 // pred_fallthru
        _
      // Predicated region
      $region17: #{_lambda_.22} parent=11 // pred_check
        %p143 = pneg %p78
      $region18: #{_lambda_.22} parent=11 // pred_check_branch
        %145 = sbr.rel (%p143) target = $region20
      $region19: #{_lambda_.22} parent=11 // pred_region
        _
      $region20: #{_lambda_.22} parent=11 // pred_fallthru
        _
      // Predicated region
      $region21: #{_lambda_.22} parent=11 // pred_check
        %p146 = pneg %p99
      $region22: #{_lambda_.22} parent=11 // pred_check_branch
        %148 = sbr.rel (%p146) target = $region24
      $region23: #{_lambda_.22} parent=11 // pred_region
        _
      $region24: #{_lambda_.22} parent=11 // pred_fallthru
        _
    $region12: #{_lambda_.22} parent=5 // pred_fallthru
      _
    %p149 = scmp.lt.s32.totalorder %s10, 4
    // Predicated region
    $region25: #{_lambda_.22} parent=5 // pred_check
      %p150 = pneg %p149
    $region26: #{_lambda_.22} parent=5 // pred_check_branch
      %152 = sbr.rel (%p150) target = $region28
    $region27: #{_lambda_.22} parent=5 // pred_region
      // Predicated region
      $region29: #{_lambda_.22} parent=27 // pred_check
        %p153 = pneg %p30
      $region30: #{_lambda_.22} parent=27 // pred_check_branch
        %155 = sbr.rel (%p153) target = $region32
      $region31: #{_lambda_.22} parent=27 // pred_region
        %s156 = smul.u32 64, %s10
        %p157 = scmp.lt.s32.totalorder %s156, 255
        %s158 = scalar_select %p157, %s156, 255
        %s159 = smul.addr %s158, 4
        %s160 = scalar_lea.vmem %s0, %s159
        %s161 = smul.u32 64, %s10
      $region32: #{_lambda_.22} parent=27 // pred_fallthru
        _
    $region28: #{_lambda_.22} parent=5 // pred_fallthru
      _
    %p162 = scmp.le.s32.totalorder 1, %s10
    %p163 = scmp.lt.s32.totalorder %s10, 5
    %p164 = pnand %p162, %p163
    %p165 = pneg %p164
    // Predicated region
    $region33: #{_lambda_.22} parent=5 // pred_check
      _
    $region34: #{_lambda_.22} parent=5 // pred_check_branch
      %167 = sbr.rel (%p164) target = $region36
    $region35: #{_lambda_.22} parent=5 // pred_region
      %s168 = ssub.s32 %s10, 1
      %s169 = smul.u32 64, %s15
      %p170 = scmp.lt.s32.totalorder %s169, 255
      %s171 = scalar_select %p170, %s169, 255
      %s172 = smul.addr %s171, 4
      %s173 = scalar_lea.vmem %s0, %s172
      %p174 = pneg %p36
      %p175 = pneg %p33
      %p176 = pneg %p57
      %p177 = pneg %p54
      %p178 = pneg %p78
      %p179 = pneg %p75
      %p180 = pneg %p99
      %p181 = pneg %p96
      %p182 = pneg %p125
      %p183 = pneg %p122
      %s184 = smul.u32 64, %s15
      %p185 = scmp.lt.s32.totalorder %s184, 255
      %s186 = scalar_select %p185, %s184, 255
      %s187 = smul.addr %s186, 4
      %s188 = scalar_lea.vmem %s4, %s187
      %s189 = smul.u32 64, %s15
      %p190 = scmp.lt.s32.totalorder %s189, 255
      %s191 = scalar_select %p190, %s189, 255
      %s192 = smul.addr %s191, 4
      %s193 = scalar_lea.vmem %s0, %s192
      %s194 = smul.u32 64, %s15
      %s195 = smul.u32 64, %s15
      %p196 = scmp.lt.s32.totalorder %s195, 255
      %s197 = scalar_select %p196, %s195, 255
      %s198 = smul.addr %s197, 4
      %s199 = scalar_lea.vmem %s4, %s198
      %s200 = smul.u32 64, %s15
      %v202 = vld [vmem:[%s193] sm:$0xf]
      %v203 = vld [vmem:[%s193 + $0x4] sm:$0xf]
      %v204 = vld [vmem:[%s193 + $0x8] sm:$0xf]
      %v205 = vld [vmem:[%s193 + $0xc] sm:$0xf]
      %v206 = vld [vmem:[%s193 + $0x10] sm:$0xf]
      %v207 = vld [vmem:[%s193 + $0x14] sm:$0xf]
      %v208 = vld [vmem:[%s193 + $0x18] sm:$0xf]
      %v209 = vld [vmem:[%s193 + $0x1c] sm:$0xf]
      %v210 = vld [vmem:[%s193 + $0x20] sm:$0xf]
      %v211 = vld [vmem:[%s193 + $0x24] sm:$0xf]
      %v212 = vld [vmem:[%s193 + $0x28] sm:$0xf]
      %v213 = vld [vmem:[%s193 + $0x2c] sm:$0xf]
      %v214 = vld [vmem:[%s193 + $0x30] sm:$0xf]
      %v215 = vld [vmem:[%s193 + $0x34] sm:$0xf]
      %v216 = vld [vmem:[%s193 + $0x38] sm:$0xf]
      %v217 = vld [vmem:[%s193 + $0x3c] sm:$0xf]
      %v218 = vld [vmem:[%s193 + $0x40] sm:$0xf]
      %v219 = vld [vmem:[%s193 + $0x44] sm:$0xf]
      %v220 = vld [vmem:[%s193 + $0x48] sm:$0xf]
      %v221 = vld [vmem:[%s193 + $0x4c] sm:$0xf]
      %v222 = vld [vmem:[%s193 + $0x50] sm:$0xf]
      %v223 = vld [vmem:[%s193 + $0x54] sm:$0xf]
      %v224 = vld [vmem:[%s193 + $0x58] sm:$0xf]
      %v225 = vld [vmem:[%s193 + $0x5c] sm:$0xf]
      %v226 = vld [vmem:[%s193 + $0x60] sm:$0xf]
      %v227 = vld [vmem:[%s193 + $0x64] sm:$0xf]
      %v228 = vld [vmem:[%s193 + $0x68] sm:$0xf]
      %v229 = vld [vmem:[%s193 + $0x6c] sm:$0xf]
      %v230 = vld [vmem:[%s193 + $0x70] sm:$0xf]
      %v231 = vld [vmem:[%s193 + $0x74] sm:$0xf]
      %v232 = vld [vmem:[%s193 + $0x78] sm:$0xf]
      %v233 = vld [vmem:[%s193 + $0x7c] sm:$0xf]
      %v234 = vld [vmem:[%s193 + $0x80] sm:$0xf]
      %v235 = vld [vmem:[%s193 + $0x84] sm:$0xf]
      %v236 = vld [vmem:[%s193 + $0x88] sm:$0xf]
      %v237 = vld [vmem:[%s193 + $0x8c] sm:$0xf]
      %v238 = vld [vmem:[%s193 + $0x90] sm:$0xf]
      %v239 = vld [vmem:[%s193 + $0x94] sm:$0xf]
      %v240 = vld [vmem:[%s193 + $0x98] sm:$0xf]
      %v241 = vld [vmem:[%s193 + $0x9c] sm:$0xf]
      %v242 = vld [vmem:[%s193 + $0xa0] sm:$0xf]
      %v243 = vld [vmem:[%s193 + $0xa4] sm:$0xf]
      %v244 = vld [vmem:[%s193 + $0xa8] sm:$0xf]
      %v245 = vld [vmem:[%s193 + $0xac] sm:$0xf]
      %v246 = vld [vmem:[%s193 + $0xb0] sm:$0xf]
      %v247 = vld [vmem:[%s193 + $0xb4] sm:$0xf]
      %v248 = vld [vmem:[%s193 + $0xb8] sm:$0xf]
      %v249 = vld [vmem:[%s193 + $0xbc] sm:$0xf]
      %v250 = vld [vmem:[%s193 + $0xc0] sm:$0xf]
      %v251 = vld [vmem:[%s193 + $0xc4] sm:$0xf]
      %v252 = vld [vmem:[%s193 + $0xc8] sm:$0xf]
      %v253 = vld [vmem:[%s193 + $0xcc] sm:$0xf]
      %v254 = vld [vmem:[%s193 + $0xd0] sm:$0xf]
      %v255 = vld [vmem:[%s193 + $0xd4] sm:$0xf]
      %v256 = vld [vmem:[%s193 + $0xd8] sm:$0xf]
      %v257 = vld [vmem:[%s193 + $0xdc] sm:$0xf]
      %v258 = vld [vmem:[%s193 + $0xe0] sm:$0xf]
      %v259 = vld [vmem:[%s193 + $0xe4] sm:$0xf]
      %v260 = vld [vmem:[%s193 + $0xe8] sm:$0xf]
      %v261 = vld [vmem:[%s193 + $0xec] sm:$0xf]
      %v262 = vld [vmem:[%s193 + $0xf0] sm:$0xf]
      %v263 = vld [vmem:[%s193 + $0xf4] sm:$0xf]
      %v264 = vld [vmem:[%s193 + $0xf8] sm:$0xf]
      %v265 = vld [vmem:[%s193 + $0xfc] sm:$0xf]
      %v266 = vld [vmem:[%s1] sm:$0xf]
      %v267 = vld [vmem:[%s1 + $0x4] sm:$0xf]
      %v268 = vld [vmem:[%s1 + $0x8] sm:$0xf]
      %v269 = vld [vmem:[%s1 + $0xc] sm:$0x3]
      %v334 = vunpack.c.l.b16 %v202
      %v335 = vunpack.c.l.b16 %v203
      %v336 = vunpack.c.l.b16 %v204
      %v337 = vunpack.c.l.b16 %v205
      %v338 = vunpack.c.l.b16 %v206
      %v339 = vunpack.c.l.b16 %v207
      %v340 = vunpack.c.l.b16 %v208
      %v341 = vunpack.c.l.b16 %v209
      %v342 = vunpack.c.l.b16 %v210
      %v343 = vunpack.c.l.b16 %v211
      %v344 = vunpack.c.l.b16 %v212
      %v345 = vunpack.c.l.b16 %v213
      %v346 = vunpack.c.l.b16 %v214
      %v347 = vunpack.c.l.b16 %v215
      %v348 = vunpack.c.l.b16 %v216
      %v349 = vunpack.c.l.b16 %v217
      %v350 = vunpack.c.l.b16 %v218
      %v351 = vunpack.c.l.b16 %v219
      %v352 = vunpack.c.l.b16 %v220
      %v353 = vunpack.c.l.b16 %v221
      %v354 = vunpack.c.l.b16 %v222
      %v355 = vunpack.c.l.b16 %v223
      %v356 = vunpack.c.l.b16 %v224
      %v357 = vunpack.c.l.b16 %v225
      %v358 = vunpack.c.l.b16 %v226
      %v359 = vunpack.c.l.b16 %v227
      %v360 = vunpack.c.l.b16 %v228
      %v361 = vunpack.c.l.b16 %v229
      %v362 = vunpack.c.l.b16 %v230
      %v363 = vunpack.c.l.b16 %v231
      %v364 = vunpack.c.l.b16 %v232
      %v365 = vunpack.c.l.b16 %v233
      %v366 = vunpack.c.l.b16 %v234
      %v367 = vunpack.c.l.b16 %v235
      %v368 = vunpack.c.l.b16 %v236
      %v369 = vunpack.c.l.b16 %v237
      %v370 = vunpack.c.l.b16 %v238
      %v371 = vunpack.c.l.b16 %v239
      %v372 = vunpack.c.l.b16 %v240
      %v373 = vunpack.c.l.b16 %v241
      %v374 = vunpack.c.l.b16 %v242
      %v375 = vunpack.c.l.b16 %v243
      %v376 = vunpack.c.l.b16 %v244
      %v377 = vunpack.c.l.b16 %v245
      %v378 = vunpack.c.l.b16 %v246
      %v379 = vunpack.c.l.b16 %v247
      %v380 = vunpack.c.l.b16 %v248
      %v381 = vunpack.c.l.b16 %v249
      %v382 = vunpack.c.l.b16 %v250
      %v383 = vunpack.c.l.b16 %v251
      %v384 = vunpack.c.l.b16 %v252
      %v385 = vunpack.c.l.b16 %v253
      %v386 = vunpack.c.l.b16 %v254
      %v387 = vunpack.c.l.b16 %v255
      %v388 = vunpack.c.l.b16 %v256
      %v389 = vunpack.c.l.b16 %v257
      %v390 = vunpack.c.l.b16 %v258
      %v391 = vunpack.c.l.b16 %v259
      %v392 = vunpack.c.l.b16 %v260
      %v393 = vunpack.c.l.b16 %v261
      %v394 = vunpack.c.l.b16 %v262
      %v395 = vunpack.c.l.b16 %v263
      %v396 = vunpack.c.l.b16 %v264
      %v397 = vunpack.c.l.b16 %v265
      %v398 = vpack.c.b16 %v335, %v334
      %v399 = vpack.c.b16 %v337, %v336
      %v400 = vpack.c.b16 %v339, %v338
      %v401 = vpack.c.b16 %v341, %v340
      %v402 = vpack.c.b16 %v343, %v342
      %v403 = vpack.c.b16 %v345, %v344
      %v404 = vpack.c.b16 %v347, %v346
      %v405 = vpack.c.b16 %v349, %v348
      %v406 = vpack.c.b16 %v351, %v350
      %v407 = vpack.c.b16 %v353, %v352
      %v408 = vpack.c.b16 %v355, %v354
      %v409 = vpack.c.b16 %v357, %v356
      %v410 = vpack.c.b16 %v359, %v358
      %v411 = vpack.c.b16 %v361, %v360
      %v412 = vpack.c.b16 %v363, %v362
      %v413 = vpack.c.b16 %v365, %v364
      %v414 = vpack.c.b16 %v367, %v366
      %v415 = vpack.c.b16 %v369, %v368
      %v416 = vpack.c.b16 %v371, %v370
      %v417 = vpack.c.b16 %v373, %v372
      %v418 = vpack.c.b16 %v375, %v374
      %v419 = vpack.c.b16 %v377, %v376
      %v420 = vpack.c.b16 %v379, %v378
      %v421 = vpack.c.b16 %v381, %v380
      %v422 = vpack.c.b16 %v383, %v382
      %v423 = vpack.c.b16 %v385, %v384
      %v424 = vpack.c.b16 %v387, %v386
      %v425 = vpack.c.b16 %v389, %v388
      %v426 = vpack.c.b16 %v391, %v390
      %v427 = vpack.c.b16 %v393, %v392
      %v428 = vpack.c.b16 %v395, %v394
      %v429 = vpack.c.b16 %v397, %v396
      %v434 = vunpack.c.l.b16 %v266
      %v435 = vunpack.c.l.b16 %v267
      %v436 = vunpack.c.l.b16 %v268
      %v437 = vunpack.c.l.b16 %v269
      %v438 = vpack.c.b16 %v435, %v434
      %v439 = vpack.c.b16 %v437, %v436
      %vm441 = vcmask 220160
      %v443 = vsel %vm441, %v398, 0
      %v446 = vsel %vm441, %v399, 0
      %v449 = vsel %vm441, %v400, 0
      %v452 = vsel %vm441, %v401, 0
      %v455 = vsel %vm441, %v402, 0
      %v458 = vsel %vm441, %v403, 0
      %v461 = vsel %vm441, %v404, 0
      %v464 = vsel %vm441, %v405, 0
      %v467 = vsel %vm441, %v406, 0
      %v470 = vsel %vm441, %v407, 0
      %v473 = vsel %vm441, %v408, 0
      %v476 = vsel %vm441, %v409, 0
      %v479 = vsel %vm441, %v410, 0
      %v482 = vsel %vm441, %v411, 0
      %v485 = vsel %vm441, %v412, 0
      %v488 = vsel %vm441, %v413, 0
      %v491 = vsel %vm441, %v414, 0
      %v494 = vsel %vm441, %v415, 0
      %v497 = vsel %vm441, %v416, 0
      %v500 = vsel %vm441, %v417, 0
      %v503 = vsel %vm441, %v418, 0
      %v506 = vsel %vm441, %v419, 0
      %v509 = vsel %vm441, %v420, 0
      %v512 = vsel %vm441, %v421, 0
      %v515 = vsel %vm441, %v422, 0
      %v518 = vsel %vm441, %v423, 0
      %v521 = vsel %vm441, %v424, 0
      %v524 = vsel %vm441, %v425, 0
      %v527 = vsel %vm441, %v426, 0
      %v530 = vsel %vm441, %v427, 0
      %v533 = vsel %vm441, %v428, 0
      %v536 = vsel %vm441, %v429, 0
      %vm538 = vcmask 1044480
      %vm539 = vcmask 1045504
      %v540 = vsel %vm538, 4294967295, 65535
      %v541 = vsel %vm539, %v540, 0
      %v543 = vand.u32 %v439, %v541
      %545 = vmatpush.bf16.msra.mxu0 0
      %546 = vmatpush.bf16.msra.mxu0 0
      %547 = vmatpush.bf16.msra.mxu0 0
      %548 = vmatpush.bf16.msra.mxu0 0
      %549 = vmatpush.bf16.msra.mxu0 0
      %550 = vmatpush.bf16.msra.mxu0 0
      %551 = vmatpush.bf16.msra.mxu0 %v543
      %552 = vmatpush.bf16.msra.mxu0 %v438
      %553 = vmatmul.bf16.gmra.mxu0 %v443
      %v554 = vpop.f32.mrf.mxu0
      %v555 = vadd.f32 0.0, %v554
      %v556 = vpop.f32.mrf.mxu0
      %v557 = vadd.f32 0.0, %v556
      %558 = vmatmul.bf16.gmra.mxu0 %v446
      %v559 = vpop.f32.mrf.mxu0
      %v560 = vadd.f32 0.0, %v559
      %v561 = vpop.f32.mrf.mxu0
      %v562 = vadd.f32 0.0, %v561
      %563 = vmatmul.bf16.gmra.mxu0 %v449
      %v564 = vpop.f32.mrf.mxu0
      %v565 = vadd.f32 0.0, %v564
      %v566 = vpop.f32.mrf.mxu0
      %v567 = vadd.f32 0.0, %v566
      %568 = vmatmul.bf16.gmra.mxu0 %v452
      %v569 = vpop.f32.mrf.mxu0
      %v570 = vadd.f32 0.0, %v569
      %v571 = vpop.f32.mrf.mxu0
      %v572 = vadd.f32 0.0, %v571
      %573 = vmatmul.bf16.gmra.mxu0 %v455
      %v574 = vpop.f32.mrf.mxu0
      %v575 = vadd.f32 0.0, %v574
      %v576 = vpop.f32.mrf.mxu0
      %v577 = vadd.f32 0.0, %v576
      %578 = vmatmul.bf16.gmra.mxu0 %v458
      %v579 = vpop.f32.mrf.mxu0
      %v580 = vadd.f32 0.0, %v579
      %v581 = vpop.f32.mrf.mxu0
      %v582 = vadd.f32 0.0, %v581
      %583 = vmatmul.bf16.gmra.mxu0 %v461
      %v584 = vpop.f32.mrf.mxu0
      %v585 = vadd.f32 0.0, %v584
      %v586 = vpop.f32.mrf.mxu0
      %v587 = vadd.f32 0.0, %v586
      %588 = vmatmul.bf16.gmra.mxu0 %v464
      %v589 = vpop.f32.mrf.mxu0
      %v590 = vadd.f32 0.0, %v589
      %v591 = vpop.f32.mrf.mxu0
      %v592 = vadd.f32 0.0, %v591
      %593 = vmatmul.bf16.gmra.mxu0 %v467
      %v594 = vpop.f32.mrf.mxu0
      %v595 = vadd.f32 0.0, %v594
      %v596 = vpop.f32.mrf.mxu0
      %v597 = vadd.f32 0.0, %v596
      %598 = vmatmul.bf16.gmra.mxu0 %v470
      %v599 = vpop.f32.mrf.mxu0
      %v600 = vadd.f32 0.0, %v599
      %v601 = vpop.f32.mrf.mxu0
      %v602 = vadd.f32 0.0, %v601
      %603 = vmatmul.bf16.gmra.mxu0 %v473
      %v604 = vpop.f32.mrf.mxu0
      %v605 = vadd.f32 0.0, %v604
      %v606 = vpop.f32.mrf.mxu0
      %v607 = vadd.f32 0.0, %v606
      %608 = vmatmul.bf16.gmra.mxu0 %v476
      %v609 = vpop.f32.mrf.mxu0
      %v610 = vadd.f32 0.0, %v609
      %v611 = vpop.f32.mrf.mxu0
      %v612 = vadd.f32 0.0, %v611
      %613 = vmatmul.bf16.gmra.mxu0 %v479
      %v614 = vpop.f32.mrf.mxu0
      %v615 = vadd.f32 0.0, %v614
      %v616 = vpop.f32.mrf.mxu0
      %v617 = vadd.f32 0.0, %v616
      %618 = vmatmul.bf16.gmra.mxu0 %v482
      %v619 = vpop.f32.mrf.mxu0
      %v620 = vadd.f32 0.0, %v619
      %v621 = vpop.f32.mrf.mxu0
      %v622 = vadd.f32 0.0, %v621
      %623 = vmatmul.bf16.gmra.mxu0 %v485
      %v624 = vpop.f32.mrf.mxu0
      %v625 = vadd.f32 0.0, %v624
      %v626 = vpop.f32.mrf.mxu0
      %v627 = vadd.f32 0.0, %v626
      %628 = vmatmul.bf16.gmra.mxu0 %v488
      %v629 = vpop.f32.mrf.mxu0
      %v630 = vadd.f32 0.0, %v629
      %v631 = vpop.f32.mrf.mxu0
      %v632 = vadd.f32 0.0, %v631
      %633 = vmatmul.bf16.gmra.mxu0 %v491
      %v634 = vpop.f32.mrf.mxu0
      %v635 = vadd.f32 0.0, %v634
      %v636 = vpop.f32.mrf.mxu0
      %v637 = vadd.f32 0.0, %v636
      %638 = vmatmul.bf16.gmra.mxu0 %v494
      %v639 = vpop.f32.mrf.mxu0
      %v640 = vadd.f32 0.0, %v639
      %v641 = vpop.f32.mrf.mxu0
      %v642 = vadd.f32 0.0, %v641
      %643 = vmatmul.bf16.gmra.mxu0 %v497
      %v644 = vpop.f32.mrf.mxu0
      %v645 = vadd.f32 0.0, %v644
      %v646 = vpop.f32.mrf.mxu0
      %v647 = vadd.f32 0.0, %v646
      %648 = vmatmul.bf16.gmra.mxu0 %v500
      %v649 = vpop.f32.mrf.mxu0
      %v650 = vadd.f32 0.0, %v649
      %v651 = vpop.f32.mrf.mxu0
      %v652 = vadd.f32 0.0, %v651
      %653 = vmatmul.bf16.gmra.mxu0 %v503
      %v654 = vpop.f32.mrf.mxu0
      %v655 = vadd.f32 0.0, %v654
      %v656 = vpop.f32.mrf.mxu0
      %v657 = vadd.f32 0.0, %v656
      %658 = vmatmul.bf16.gmra.mxu0 %v506
      %v659 = vpop.f32.mrf.mxu0
      %v660 = vadd.f32 0.0, %v659
      %v661 = vpop.f32.mrf.mxu0
      %v662 = vadd.f32 0.0, %v661
      %663 = vmatmul.bf16.gmra.mxu0 %v509
      %v664 = vpop.f32.mrf.mxu0
      %v665 = vadd.f32 0.0, %v664
      %v666 = vpop.f32.mrf.mxu0
      %v667 = vadd.f32 0.0, %v666
      %668 = vmatmul.bf16.gmra.mxu0 %v512
      %v669 = vpop.f32.mrf.mxu0
      %v670 = vadd.f32 0.0, %v669
      %v671 = vpop.f32.mrf.mxu0
      %v672 = vadd.f32 0.0, %v671
      %673 = vmatmul.bf16.gmra.mxu0 %v515
      %v674 = vpop.f32.mrf.mxu0
      %v675 = vadd.f32 0.0, %v674
      %v676 = vpop.f32.mrf.mxu0
      %v677 = vadd.f32 0.0, %v676
      %678 = vmatmul.bf16.gmra.mxu0 %v518
      %v679 = vpop.f32.mrf.mxu0
      %v680 = vadd.f32 0.0, %v679
      %v681 = vpop.f32.mrf.mxu0
      %v682 = vadd.f32 0.0, %v681
      %683 = vmatmul.bf16.gmra.mxu0 %v521
      %v684 = vpop.f32.mrf.mxu0
      %v685 = vadd.f32 0.0, %v684
      %v686 = vpop.f32.mrf.mxu0
      %v687 = vadd.f32 0.0, %v686
      %688 = vmatmul.bf16.gmra.mxu0 %v524
      %v689 = vpop.f32.mrf.mxu0
      %v690 = vadd.f32 0.0, %v689
      %v691 = vpop.f32.mrf.mxu0
      %v692 = vadd.f32 0.0, %v691
      %693 = vmatmul.bf16.gmra.mxu0 %v527
      %v694 = vpop.f32.mrf.mxu0
      %v695 = vadd.f32 0.0, %v694
      %v696 = vpop.f32.mrf.mxu0
      %v697 = vadd.f32 0.0, %v696
      %698 = vmatmul.bf16.gmra.mxu0 %v530
      %v699 = vpop.f32.mrf.mxu0
      %v700 = vadd.f32 0.0, %v699
      %v701 = vpop.f32.mrf.mxu0
      %v702 = vadd.f32 0.0, %v701
      %703 = vmatmul.bf16.gmra.mxu0 %v533
      %v704 = vpop.f32.mrf.mxu0
      %v705 = vadd.f32 0.0, %v704
      %v706 = vpop.f32.mrf.mxu0
      %v707 = vadd.f32 0.0, %v706
      %708 = vmatmul.bf16.gmra.mxu0 %v536
      %v709 = vpop.f32.mrf.mxu0
      %v710 = vadd.f32 0.0, %v709
      %v711 = vpop.f32.mrf.mxu0
      %v712 = vadd.f32 0.0, %v711
      %713 = vdwg.mxu0
      %v714 = vld [vmem:[%s2] sm:$0x1]
      %v716 = vperm.slane %v714, 0
      %v718 = vmul.f32 %v555, %v716
      %v719 = vmul.f32 %v557, %v716
      %v720 = vmul.f32 %v560, %v716
      %v721 = vmul.f32 %v562, %v716
      %v722 = vmul.f32 %v565, %v716
      %v723 = vmul.f32 %v567, %v716
      %v724 = vmul.f32 %v570, %v716
      %v725 = vmul.f32 %v572, %v716
      %v726 = vmul.f32 %v575, %v716
      %v727 = vmul.f32 %v577, %v716
      %v728 = vmul.f32 %v580, %v716
      %v729 = vmul.f32 %v582, %v716
      %v730 = vmul.f32 %v585, %v716
      %v731 = vmul.f32 %v587, %v716
      %v732 = vmul.f32 %v590, %v716
      %v733 = vmul.f32 %v592, %v716
      %v734 = vmul.f32 %v595, %v716
      %v735 = vmul.f32 %v597, %v716
      %v736 = vmul.f32 %v600, %v716
      %v737 = vmul.f32 %v602, %v716
      %v738 = vmul.f32 %v605, %v716
      %v739 = vmul.f32 %v607, %v716
      %v740 = vmul.f32 %v610, %v716
      %v741 = vmul.f32 %v612, %v716
      %v742 = vmul.f32 %v615, %v716
      %v743 = vmul.f32 %v617, %v716
      %v744 = vmul.f32 %v620, %v716
      %v745 = vmul.f32 %v622, %v716
      %v746 = vmul.f32 %v625, %v716
      %v747 = vmul.f32 %v627, %v716
      %v748 = vmul.f32 %v630, %v716
      %v749 = vmul.f32 %v632, %v716
      %v750 = vmul.f32 %v635, %v716
      %v751 = vmul.f32 %v637, %v716
      %v752 = vmul.f32 %v640, %v716
      %v753 = vmul.f32 %v642, %v716
      %v754 = vmul.f32 %v645, %v716
      %v755 = vmul.f32 %v647, %v716
      %v756 = vmul.f32 %v650, %v716
      %v757 = vmul.f32 %v652, %v716
      %v758 = vmul.f32 %v655, %v716
      %v759 = vmul.f32 %v657, %v716
      %v760 = vmul.f32 %v660, %v716
      %v761 = vmul.f32 %v662, %v716
      %v762 = vmul.f32 %v665, %v716
      %v763 = vmul.f32 %v667, %v716
      %v764 = vmul.f32 %v670, %v716
      %v765 = vmul.f32 %v672, %v716
      %v766 = vmul.f32 %v675, %v716
      %v767 = vmul.f32 %v677, %v716
      %v768 = vmul.f32 %v680, %v716
      %v769 = vmul.f32 %v682, %v716
      %v770 = vmul.f32 %v685, %v716
      %v771 = vmul.f32 %v687, %v716
      %v772 = vmul.f32 %v690, %v716
      %v773 = vmul.f32 %v692, %v716
      %v774 = vmul.f32 %v695, %v716
      %v775 = vmul.f32 %v697, %v716
      %v776 = vmul.f32 %v700, %v716
      %v777 = vmul.f32 %v702, %v716
      %v778 = vmul.f32 %v705, %v716
      %v779 = vmul.f32 %v707, %v716
      %v780 = vmul.f32 %v710, %v716
      %v781 = vmul.f32 %v712, %v716
      %v782 = vld [vmem:[%s3] sm:$0x1]
      %v784 = vperm.slane %v782, 0
      %v786 = vadd.f32 %v718, %v784
      %v787 = vadd.f32 %v719, %v784
      %v788 = vadd.f32 %v720, %v784
      %v789 = vadd.f32 %v721, %v784
      %v790 = vadd.f32 %v722, %v784
      %v791 = vadd.f32 %v723, %v784
      %v792 = vadd.f32 %v724, %v784
      %v793 = vadd.f32 %v725, %v784
      %v794 = vadd.f32 %v726, %v784
      %v795 = vadd.f32 %v727, %v784
      %v796 = vadd.f32 %v728, %v784
      %v797 = vadd.f32 %v729, %v784
      %v798 = vadd.f32 %v730, %v784
      %v799 = vadd.f32 %v731, %v784
      %v800 = vadd.f32 %v732, %v784
      %v801 = vadd.f32 %v733, %v784
      %v802 = vadd.f32 %v734, %v784
      %v803 = vadd.f32 %v735, %v784
      %v804 = vadd.f32 %v736, %v784
      %v805 = vadd.f32 %v737, %v784
      %v806 = vadd.f32 %v738, %v784
      %v807 = vadd.f32 %v739, %v784
      %v808 = vadd.f32 %v740, %v784
      %v809 = vadd.f32 %v741, %v784
      %v810 = vadd.f32 %v742, %v784
      %v811 = vadd.f32 %v743, %v784
      %v812 = vadd.f32 %v744, %v784
      %v813 = vadd.f32 %v745, %v784
      %v814 = vadd.f32 %v746, %v784
      %v815 = vadd.f32 %v747, %v784
      %v816 = vadd.f32 %v748, %v784
      %v817 = vadd.f32 %v749, %v784
      %v818 = vadd.f32 %v750, %v784
      %v819 = vadd.f32 %v751, %v784
      %v820 = vadd.f32 %v752, %v784
      %v821 = vadd.f32 %v753, %v784
      %v822 = vadd.f32 %v754, %v784
      %v823 = vadd.f32 %v755, %v784
      %v824 = vadd.f32 %v756, %v784
      %v825 = vadd.f32 %v757, %v784
      %v826 = vadd.f32 %v758, %v784
      %v827 = vadd.f32 %v759, %v784
      %v828 = vadd.f32 %v760, %v784
      %v829 = vadd.f32 %v761, %v784
      %v830 = vadd.f32 %v762, %v784
      %v831 = vadd.f32 %v763, %v784
      %v832 = vadd.f32 %v764, %v784
      %v833 = vadd.f32 %v765, %v784
      %v834 = vadd.f32 %v766, %v784
      %v835 = vadd.f32 %v767, %v784
      %v836 = vadd.f32 %v768, %v784
      %v837 = vadd.f32 %v769, %v784
      %v838 = vadd.f32 %v770, %v784
      %v839 = vadd.f32 %v771, %v784
      %v840 = vadd.f32 %v772, %v784
      %v841 = vadd.f32 %v773, %v784
      %v842 = vadd.f32 %v774, %v784
      %v843 = vadd.f32 %v775, %v784
      %v844 = vadd.f32 %v776, %v784
      %v845 = vadd.f32 %v777, %v784
      %v846 = vadd.f32 %v778, %v784
      %v847 = vadd.f32 %v779, %v784
      %v848 = vadd.f32 %v780, %v784
      %v849 = vadd.f32 %v781, %v784
      %v850 = vmax.f32 %v786, 0.0
      %v851 = vmax.f32 %v787, 0.0
      %v852 = vmax.f32 %v788, 0.0
      %v853 = vmax.f32 %v789, 0.0
      %v854 = vmax.f32 %v790, 0.0
      %v855 = vmax.f32 %v791, 0.0
      %v856 = vmax.f32 %v792, 0.0
      %v857 = vmax.f32 %v793, 0.0
      %v858 = vmax.f32 %v794, 0.0
      %v859 = vmax.f32 %v795, 0.0
      %v860 = vmax.f32 %v796, 0.0
      %v861 = vmax.f32 %v797, 0.0
      %v862 = vmax.f32 %v798, 0.0
      %v863 = vmax.f32 %v799, 0.0
      %v864 = vmax.f32 %v800, 0.0
      %v865 = vmax.f32 %v801, 0.0
      %v866 = vmax.f32 %v802, 0.0
      %v867 = vmax.f32 %v803, 0.0
      %v868 = vmax.f32 %v804, 0.0
      %v869 = vmax.f32 %v805, 0.0
      %v870 = vmax.f32 %v806, 0.0
      %v871 = vmax.f32 %v807, 0.0
      %v872 = vmax.f32 %v808, 0.0
      %v873 = vmax.f32 %v809, 0.0
      %v874 = vmax.f32 %v810, 0.0
      %v875 = vmax.f32 %v811, 0.0
      %v876 = vmax.f32 %v812, 0.0
      %v877 = vmax.f32 %v813, 0.0
      %v878 = vmax.f32 %v814, 0.0
      %v879 = vmax.f32 %v815, 0.0
      %v880 = vmax.f32 %v816, 0.0
      %v881 = vmax.f32 %v817, 0.0
      %v882 = vmax.f32 %v818, 0.0
      %v883 = vmax.f32 %v819, 0.0
      %v884 = vmax.f32 %v820, 0.0
      %v885 = vmax.f32 %v821, 0.0
      %v886 = vmax.f32 %v822, 0.0
      %v887 = vmax.f32 %v823, 0.0
      %v888 = vmax.f32 %v824, 0.0
      %v889 = vmax.f32 %v825, 0.0
      %v890 = vmax.f32 %v826, 0.0
      %v891 = vmax.f32 %v827, 0.0
      %v892 = vmax.f32 %v828, 0.0
      %v893 = vmax.f32 %v829, 0.0
      %v894 = vmax.f32 %v830, 0.0
      %v895 = vmax.f32 %v831, 0.0
      %v896 = vmax.f32 %v832, 0.0
      %v897 = vmax.f32 %v833, 0.0
      %v898 = vmax.f32 %v834, 0.0
      %v899 = vmax.f32 %v835, 0.0
      %v900 = vmax.f32 %v836, 0.0
      %v901 = vmax.f32 %v837, 0.0
      %v902 = vmax.f32 %v838, 0.0
      %v903 = vmax.f32 %v839, 0.0
      %v904 = vmax.f32 %v840, 0.0
      %v905 = vmax.f32 %v841, 0.0
      %v906 = vmax.f32 %v842, 0.0
      %v907 = vmax.f32 %v843, 0.0
      %v908 = vmax.f32 %v844, 0.0
      %v909 = vmax.f32 %v845, 0.0
      %v910 = vmax.f32 %v846, 0.0
      %v911 = vmax.f32 %v847, 0.0
      %v912 = vmax.f32 %v848, 0.0
      %v913 = vmax.f32 %v849, 0.0
      %v914 = vpack.c.bf16 %v850, %v850
      %v915 = vpack.c.bf16 %v851, %v851
      %v916 = vpack.c.bf16 %v852, %v852
      %v917 = vpack.c.bf16 %v853, %v853
      %v918 = vpack.c.bf16 %v854, %v854
      %v919 = vpack.c.bf16 %v855, %v855
      %v920 = vpack.c.bf16 %v856, %v856
      %v921 = vpack.c.bf16 %v857, %v857
      %v922 = vpack.c.bf16 %v858, %v858
      %v923 = vpack.c.bf16 %v859, %v859
      %v924 = vpack.c.bf16 %v860, %v860
      %v925 = vpack.c.bf16 %v861, %v861
      %v926 = vpack.c.bf16 %v862, %v862
      %v927 = vpack.c.bf16 %v863, %v863
      %v928 = vpack.c.bf16 %v864, %v864
      %v929 = vpack.c.bf16 %v865, %v865
      %v930 = vpack.c.bf16 %v866, %v866
      %v931 = vpack.c.bf16 %v867, %v867
      %v932 = vpack.c.bf16 %v868, %v868
      %v933 = vpack.c.bf16 %v869, %v869
      %v934 = vpack.c.bf16 %v870, %v870
      %v935 = vpack.c.bf16 %v871, %v871
      %v936 = vpack.c.bf16 %v872, %v872
      %v937 = vpack.c.bf16 %v873, %v873
      %v938 = vpack.c.bf16 %v874, %v874
      %v939 = vpack.c.bf16 %v875, %v875
      %v940 = vpack.c.bf16 %v876, %v876
      %v941 = vpack.c.bf16 %v877, %v877
      %v942 = vpack.c.bf16 %v878, %v878
      %v943 = vpack.c.bf16 %v879, %v879
      %v944 = vpack.c.bf16 %v880, %v880
      %v945 = vpack.c.bf16 %v881, %v881
      %v946 = vpack.c.bf16 %v882, %v882
      %v947 = vpack.c.bf16 %v883, %v883
      %v948 = vpack.c.bf16 %v884, %v884
      %v949 = vpack.c.bf16 %v885, %v885
      %v950 = vpack.c.bf16 %v886, %v886
      %v951 = vpack.c.bf16 %v887, %v887
      %v952 = vpack.c.bf16 %v888, %v888
      %v953 = vpack.c.bf16 %v889, %v889
      %v954 = vpack.c.bf16 %v890, %v890
      %v955 = vpack.c.bf16 %v891, %v891
      %v956 = vpack.c.bf16 %v892, %v892
      %v957 = vpack.c.bf16 %v893, %v893
      %v958 = vpack.c.bf16 %v894, %v894
      %v959 = vpack.c.bf16 %v895, %v895
      %v960 = vpack.c.bf16 %v896, %v896
      %v961 = vpack.c.bf16 %v897, %v897
      %v962 = vpack.c.bf16 %v898, %v898
      %v963 = vpack.c.bf16 %v899, %v899
      %v964 = vpack.c.bf16 %v900, %v900
      %v965 = vpack.c.bf16 %v901, %v901
      %v966 = vpack.c.bf16 %v902, %v902
      %v967 = vpack.c.bf16 %v903, %v903
      %v968 = vpack.c.bf16 %v904, %v904
      %v969 = vpack.c.bf16 %v905, %v905
      %v970 = vpack.c.bf16 %v906, %v906
      %v971 = vpack.c.bf16 %v907, %v907
      %v972 = vpack.c.bf16 %v908, %v908
      %v973 = vpack.c.bf16 %v909, %v909
      %v974 = vpack.c.bf16 %v910, %v910
      %v975 = vpack.c.bf16 %v911, %v911
      %v976 = vpack.c.bf16 %v912, %v912
      %v977 = vpack.c.bf16 %v913, %v913
      %vm978 = vcmask 125952
      %979 = vst.msk [vmem:[%s199] sm:$0xf] %vm978, %v914
      %980 = vst.msk [vmem:[%s199 + $0x4] sm:$0xf] %vm978, %v915
      %981 = vst.msk [vmem:[%s199 + $0x8] sm:$0xf] %vm978, %v916
      %982 = vst.msk [vmem:[%s199 + $0xc] sm:$0xf] %vm978, %v917
      %983 = vst.msk [vmem:[%s199 + $0x10] sm:$0xf] %vm978, %v918
      %984 = vst.msk [vmem:[%s199 + $0x14] sm:$0xf] %vm978, %v919
      %985 = vst.msk [vmem:[%s199 + $0x18] sm:$0xf] %vm978, %v920
      %986 = vst.msk [vmem:[%s199 + $0x1c] sm:$0xf] %vm978, %v921
      %987 = vst.msk [vmem:[%s199 + $0x20] sm:$0xf] %vm978, %v922
      %988 = vst.msk [vmem:[%s199 + $0x24] sm:$0xf] %vm978, %v923
      %989 = vst.msk [vmem:[%s199 + $0x28] sm:$0xf] %vm978, %v924
      %990 = vst.msk [vmem:[%s199 + $0x2c] sm:$0xf] %vm978, %v925
      %991 = vst.msk [vmem:[%s199 + $0x30] sm:$0xf] %vm978, %v926
      %992 = vst.msk [vmem:[%s199 + $0x34] sm:$0xf] %vm978, %v927
      %993 = vst.msk [vmem:[%s199 + $0x38] sm:$0xf] %vm978, %v928
      %994 = vst.msk [vmem:[%s199 + $0x3c] sm:$0xf] %vm978, %v929
      %995 = vst.msk [vmem:[%s199 + $0x40] sm:$0xf] %vm978, %v930
      %996 = vst.msk [vmem:[%s199 + $0x44] sm:$0xf] %vm978, %v931
      %997 = vst.msk [vmem:[%s199 + $0x48] sm:$0xf] %vm978, %v932
      %998 = vst.msk [vmem:[%s199 + $0x4c] sm:$0xf] %vm978, %v933
      %999 = vst.msk [vmem:[%s199 + $0x50] sm:$0xf] %vm978, %v934
      %1000 = vst.msk [vmem:[%s199 + $0x54] sm:$0xf] %vm978, %v935
      %1001 = vst.msk [vmem:[%s199 + $0x58] sm:$0xf] %vm978, %v936
      %1002 = vst.msk [vmem:[%s199 + $0x5c] sm:$0xf] %vm978, %v937
      %1003 = vst.msk [vmem:[%s199 + $0x60] sm:$0xf] %vm978, %v938
      %1004 = vst.msk [vmem:[%s199 + $0x64] sm:$0xf] %vm978, %v939
      %1005 = vst.msk [vmem:[%s199 + $0x68] sm:$0xf] %vm978, %v940
      %1006 = vst.msk [vmem:[%s199 + $0x6c] sm:$0xf] %vm978, %v941
      %1007 = vst.msk [vmem:[%s199 + $0x70] sm:$0xf] %vm978, %v942
      %1008 = vst.msk [vmem:[%s199 + $0x74] sm:$0xf] %vm978, %v943
      %1009 = vst.msk [vmem:[%s199 + $0x78] sm:$0xf] %vm978, %v944
      %1010 = vst.msk [vmem:[%s199 + $0x7c] sm:$0xf] %vm978, %v945
      %1011 = vst.msk [vmem:[%s199 + $0x80] sm:$0xf] %vm978, %v946
      %1012 = vst.msk [vmem:[%s199 + $0x84] sm:$0xf] %vm978, %v947
      %1013 = vst.msk [vmem:[%s199 + $0x88] sm:$0xf] %vm978, %v948
      %1014 = vst.msk [vmem:[%s199 + $0x8c] sm:$0xf] %vm978, %v949
      %1015 = vst.msk [vmem:[%s199 + $0x90] sm:$0xf] %vm978, %v950
      %1016 = vst.msk [vmem:[%s199 + $0x94] sm:$0xf] %vm978, %v951
      %1017 = vst.msk [vmem:[%s199 + $0x98] sm:$0xf] %vm978, %v952
      %1018 = vst.msk [vmem:[%s199 + $0x9c] sm:$0xf] %vm978, %v953
      %1019 = vst.msk [vmem:[%s199 + $0xa0] sm:$0xf] %vm978, %v954
      %1020 = vst.msk [vmem:[%s199 + $0xa4] sm:$0xf] %vm978, %v955
      %1021 = vst.msk [vmem:[%s199 + $0xa8] sm:$0xf] %vm978, %v956
      %1022 = vst.msk [vmem:[%s199 + $0xac] sm:$0xf] %vm978, %v957
      %1023 = vst.msk [vmem:[%s199 + $0xb0] sm:$0xf] %vm978, %v958
      %1024 = vst.msk [vmem:[%s199 + $0xb4] sm:$0xf] %vm978, %v959
      %1025 = vst.msk [vmem:[%s199 + $0xb8] sm:$0xf] %vm978, %v960
      %1026 = vst.msk [vmem:[%s199 + $0xbc] sm:$0xf] %vm978, %v961
      %1027 = vst.msk [vmem:[%s199 + $0xc0] sm:$0xf] %vm978, %v962
      %1028 = vst.msk [vmem:[%s199 + $0xc4] sm:$0xf] %vm978, %v963
      %1029 = vst.msk [vmem:[%s199 + $0xc8] sm:$0xf] %vm978, %v964
      %1030 = vst.msk [vmem:[%s199 + $0xcc] sm:$0xf] %vm978, %v965
      %1031 = vst.msk [vmem:[%s199 + $0xd0] sm:$0xf] %vm978, %v966
      %1032 = vst.msk [vmem:[%s199 + $0xd4] sm:$0xf] %vm978, %v967
      %1033 = vst.msk [vmem:[%s199 + $0xd8] sm:$0xf] %vm978, %v968
      %1034 = vst.msk [vmem:[%s199 + $0xdc] sm:$0xf] %vm978, %v969
      %1035 = vst.msk [vmem:[%s199 + $0xe0] sm:$0xf] %vm978, %v970
      %1036 = vst.msk [vmem:[%s199 + $0xe4] sm:$0xf] %vm978, %v971
      %1037 = vst.msk [vmem:[%s199 + $0xe8] sm:$0xf] %vm978, %v972
      %1038 = vst.msk [vmem:[%s199 + $0xec] sm:$0xf] %vm978, %v973
      %1039 = vst.msk [vmem:[%s199 + $0xf0] sm:$0xf] %vm978, %v974
      %1040 = vst.msk [vmem:[%s199 + $0xf4] sm:$0xf] %vm978, %v975
      %1041 = vst.msk [vmem:[%s199 + $0xf8] sm:$0xf] %vm978, %v976
      %1042 = vst.msk [vmem:[%s199 + $0xfc] sm:$0xf] %vm978, %v977
      %s1043 = smul.u32 64, %s15
      %p1044 = scmp.lt.s32.totalorder %s1043, 255
      %s1045 = scalar_select %p1044, %s1043, 255
      %s1046 = smul.addr %s1045, 4
      %s1047 = scalar_lea.vmem %s4, %s1046
      // Predicated region
      $region37: #{_lambda_.22} parent=35 // pred_check
        %p1048 = pneg %p122
      $region38: #{_lambda_.22} parent=35 // pred_check_branch
        %1050 = sbr.rel (%p1048) target = $region40
      $region39: #{_lambda_.22} parent=35 // pred_region
        %s1051 = smul.u32 64, %s15
      $region40: #{_lambda_.22} parent=35 // pred_fallthru
        _
    $region36: #{_lambda_.22} parent=5 // pred_fallthru
      _
    %p1052 = scmp.le.s32.totalorder 2, %s10
    // Predicated region
    $region41: #{_lambda_.22} parent=5 // pred_check
      %p1053 = pneg %p1052
    $region42: #{_lambda_.22} parent=5 // pred_check_branch
      %1055 = sbr.rel (%p1053) target = $region44
    $region43: #{_lambda_.22} parent=5 // pred_region
      %s1056 = ssub.s32 %s10, 2
      // Predicated region
      $region45: #{_lambda_.22} parent=43 // pred_check
        %p1057 = pneg %p128
      $region46: #{_lambda_.22} parent=43 // pred_check_branch
        %1059 = sbr.rel (%p1057) target = $region48
      $region47: #{_lambda_.22} parent=43 // pred_region
        %s1060 = smul.u32 64, %s16
        %p1061 = scmp.lt.s32.totalorder %s1060, 255
        %s1062 = scalar_select %p1061, %s1060, 255
        %s1063 = smul.addr %s1062, 4
        %s1064 = scalar_lea.vmem %s4, %s1063
      $region48: #{_lambda_.22} parent=43 // pred_fallthru
        _
    $region44: #{_lambda_.22} parent=5 // pred_fallthru
      _
  $region6: #{_lambda_.22} parent=0 // loop_footer
    %s14 = sadd.s32 1, %s10
  $region7: #{_lambda_.22} parent=0 // loop_footer_branch
    %9 = sbr.rel target = $region3
  $region8: #{_lambda_.22} parent=0 // loop_exit
    _

// kernel: _lambda_.23
$region0: #{_lambda_.23}
  #allocation0 [shape = 'u32[]', space=smem, size = 0x4, offset = 0x4, fixed_abs, tag = 'smem constant byte address 0x4 - core index']
  #allocation1 [shape = 'u32[72,128]{1,0:T(1,128)}', space=vmem, size = 0x9000, scoped, tag = 'internal scratch']
  %s0 = inlined_call_operand.vmem [shape: bf16[2048,144], index: 0, kind: input, shape index: {}]
  %s1 = inlined_call_operand.vmem [shape: bf16[144,16], index: 1, kind: input, shape index: {}]
  %s2 = inlined_call_operand.vmem [shape: f32[1,16], index: 2, kind: input, shape index: {}]
  %s3 = inlined_call_operand.vmem [shape: f32[1,16], index: 3, kind: input, shape index: {}]
  %s4 = inlined_call_operand.vmem [shape: bf16[2048,16], index: 4, kind: output, shape index: {}]
  %s5 = sld [smem:[#allocation0]]
  $region49: #{_lambda_.23} parent=0
    _
  %s7 = ssub.s32 1, %s5
  %s8 = scalar_select 0, %s7, %s5
  loop: start=0, step=1, limit=6
  $region2: #{_lambda_.23} parent=0 // loop_pre_header
    _
  $region3: #{_lambda_.23} parent=0 // loop_header
    %s10 = sphi 0, %s14
    %p11 = scmp.ge.s32.totalorder %s10, 6
    %s20 = sphi 0, %s22
    %s23 = sphi 0, %s20
    %s24 = sphi 0, %s23
    %s40 = sphi 0, %s24
    %s44 = sphi 0, %s44
    %s46 = sphi 0, %s44
    %s47 = sphi 0, %s46
    %s61 = sphi 0, %s47
    %s65 = sphi 0, %s65
    %s67 = sphi 0, %s65
    %s68 = sphi 0, %s67
    %s82 = sphi 0, %s68
    %s86 = sphi 0, %s86
    %s88 = sphi 0, %s86
    %s89 = sphi 0, %s88
    %s103 = sphi 0, %s89
    %s109 = sphi 0, %s111
    %s112 = sphi 0, %s109
    %s113 = sphi 0, %s112
    %s129 = sphi 0, %s113
  $region4: #{_lambda_.23} parent=0 // loop_header_branch
    %13 = sbr.rel (%p11) target = $region8
  $region5: #{_lambda_.23} parent=0 // loop_body
    %s15 = ssub.s32 %s10, 1
    %s16 = ssub.s32 %s10, 2
    %s17 = sadd.s32 %s10, 1
    %s18 = ssub.s32 %s10, %s17
    %p19 = scmp.eq.s32.totalorder %s18, 0
    %s21 = sadd.s32 %s20, 1
    %s22 = scalar_select %p19, %s20, %s21
    %p25 = pneg %p19
    %p26 = scmp.eq.s32.totalorder %s10, 3
    %p27 = por %p25, %p26
    %p28 = scmp.ne.s32.totalorder %s20, %s23
    %p29 = scmp.eq.s32.totalorder %s10, 0
    %p30 = por %p28, %p29
    %p31 = scmp.ne.s32.totalorder %s20, %s23
    %p32 = scmp.eq.s32.totalorder %s15, 3
    %p33 = por %p31, %p32
    %p34 = scmp.ne.s32.totalorder %s23, %s24
    %p35 = scmp.eq.s32.totalorder %s15, 0
    %p36 = por %p34, %p35
    %p37 = scmp.ne.s32.totalorder %s23, %s24
    %p38 = scmp.eq.s32.totalorder %s16, 3
    %p39 = por %p37, %p38
    %p41 = scmp.ne.s32.totalorder %s24, %s40
    %p42 = scmp.eq.s32.totalorder %s16, 0
    %p43 = por %p41, %p42
    %s45 = sadd.s32 %s44, 1
    %p48 = scmp.eq.s32.totalorder %s10, 3
    %p49 = scmp.ne.s32.totalorder %s44, %s46
    %p50 = scmp.eq.s32.totalorder %s10, 0
    %p51 = por %p49, %p50
    %p52 = scmp.ne.s32.totalorder %s44, %s46
    %p53 = scmp.eq.s32.totalorder %s15, 3
    %p54 = por %p52, %p53
    %p55 = scmp.ne.s32.totalorder %s46, %s47
    %p56 = scmp.eq.s32.totalorder %s15, 0
    %p57 = por %p55, %p56
    %p58 = scmp.ne.s32.totalorder %s46, %s47
    %p59 = scmp.eq.s32.totalorder %s16, 3
    %p60 = por %p58, %p59
    %p62 = scmp.ne.s32.totalorder %s47, %s61
    %p63 = scmp.eq.s32.totalorder %s16, 0
    %p64 = por %p62, %p63
    %s66 = sadd.s32 %s65, 1
    %p69 = scmp.eq.s32.totalorder %s10, 3
    %p70 = scmp.ne.s32.totalorder %s65, %s67
    %p71 = scmp.eq.s32.totalorder %s10, 0
    %p72 = por %p70, %p71
    %p73 = scmp.ne.s32.totalorder %s65, %s67
    %p74 = scmp.eq.s32.totalorder %s15, 3
    %p75 = por %p73, %p74
    %p76 = scmp.ne.s32.totalorder %s67, %s68
    %p77 = scmp.eq.s32.totalorder %s15, 0
    %p78 = por %p76, %p77
    %p79 = scmp.ne.s32.totalorder %s67, %s68
    %p80 = scmp.eq.s32.totalorder %s16, 3
    %p81 = por %p79, %p80
    %p83 = scmp.ne.s32.totalorder %s68, %s82
    %p84 = scmp.eq.s32.totalorder %s16, 0
    %p85 = por %p83, %p84
    %s87 = sadd.s32 %s86, 1
    %p90 = scmp.eq.s32.totalorder %s10, 3
    %p91 = scmp.ne.s32.totalorder %s86, %s88
    %p92 = scmp.eq.s32.totalorder %s10, 0
    %p93 = por %p91, %p92
    %p94 = scmp.ne.s32.totalorder %s86, %s88
    %p95 = scmp.eq.s32.totalorder %s15, 3
    %p96 = por %p94, %p95
    %p97 = scmp.ne.s32.totalorder %s88, %s89
    %p98 = scmp.eq.s32.totalorder %s15, 0
    %p99 = por %p97, %p98
    %p100 = scmp.ne.s32.totalorder %s88, %s89
    %p101 = scmp.eq.s32.totalorder %s16, 3
    %p102 = por %p100, %p101
    %p104 = scmp.ne.s32.totalorder %s89, %s103
    %p105 = scmp.eq.s32.totalorder %s16, 0
    %p106 = por %p104, %p105
    %s107 = ssub.s32 %s10, %s17
    %p108 = scmp.eq.s32.totalorder %s107, 0
    %s110 = sadd.s32 %s109, 1
    %s111 = scalar_select %p108, %s109, %s110
    %p114 = pneg %p108
    %p115 = scmp.eq.s32.totalorder %s10, 3
    %p116 = por %p114, %p115
    %p117 = scmp.ne.s32.totalorder %s109, %s112
    %p118 = scmp.eq.s32.totalorder %s10, 0
    %p119 = por %p117, %p118
    %p120 = scmp.ne.s32.totalorder %s109, %s112
    %p121 = scmp.eq.s32.totalorder %s15, 3
    %p122 = por %p120, %p121
    %p123 = scmp.ne.s32.totalorder %s112, %s113
    %p124 = scmp.eq.s32.totalorder %s15, 0
    %p125 = por %p123, %p124
    %p126 = scmp.ne.s32.totalorder %s112, %s113
    %p127 = scmp.eq.s32.totalorder %s16, 3
    %p128 = por %p126, %p127
    %p130 = scmp.ne.s32.totalorder %s113, %s129
    %p131 = scmp.eq.s32.totalorder %s16, 0
    %p132 = por %p130, %p131
    %p133 = scmp.le.s32.totalorder 1, %s10
    %p134 = scmp.lt.s32.totalorder %s10, 5
    %p135 = pnand %p133, %p134
    %p136 = pneg %p135
    // Predicated region
    $region9: #{_lambda_.23} parent=5 // pred_check
      _
    $region10: #{_lambda_.23} parent=5 // pred_check_branch
      %138 = sbr.rel (%p135) target = $region12
    $region11: #{_lambda_.23} parent=5 // pred_region
      %s139 = ssub.s32 %s10, 1
      // Predicated region
      $region13: #{_lambda_.23} parent=11 // pred_check
        %p140 = pneg %p57
      $region14: #{_lambda_.23} parent=11 // pred_check_branch
        %142 = sbr.rel (%p140) target = $region16
      $region15: #{_lambda_.23} parent=11 // pred_region
        _
      $region16: #{_lambda_.23} parent=11 // pred_fallthru
        _
      // Predicated region
      $region17: #{_lambda_.23} parent=11 // pred_check
        %p143 = pneg %p78
      $region18: #{_lambda_.23} parent=11 // pred_check_branch
        %145 = sbr.rel (%p143) target = $region20
      $region19: #{_lambda_.23} parent=11 // pred_region
        _
      $region20: #{_lambda_.23} parent=11 // pred_fallthru
        _
      // Predicated region
      $region21: #{_lambda_.23} parent=11 // pred_check
        %p146 = pneg %p99
      $region22: #{_lambda_.23} parent=11 // pred_check_branch
        %148 = sbr.rel (%p146) target = $region24
      $region23: #{_lambda_.23} parent=11 // pred_region
        _
      $region24: #{_lambda_.23} parent=11 // pred_fallthru
        _
    $region12: #{_lambda_.23} parent=5 // pred_fallthru
      _
    %p149 = scmp.lt.s32.totalorder %s10, 4
    // Predicated region
    $region25: #{_lambda_.23} parent=5 // pred_check
      %p150 = pneg %p149
    $region26: #{_lambda_.23} parent=5 // pred_check_branch
      %152 = sbr.rel (%p150) target = $region28
    $region27: #{_lambda_.23} parent=5 // pred_region
      // Predicated region
      $region29: #{_lambda_.23} parent=27 // pred_check
        %p153 = pneg %p30
      $region30: #{_lambda_.23} parent=27 // pred_check_branch
        %155 = sbr.rel (%p153) target = $region32
      $region31: #{_lambda_.23} parent=27 // pred_region
        %s156 = smul.u32 64, %s10
        %p157 = scmp.lt.s32.totalorder %s156, 255
        %s158 = scalar_select %p157, %s156, 255
        %s159 = smul.addr %s158, 2
        %s160 = smul.addr %s159, 4
        %s161 = scalar_lea.vmem %s0, %s160
        %s162 = smul.u32 64, %s10
      $region32: #{_lambda_.23} parent=27 // pred_fallthru
        _
    $region28: #{_lambda_.23} parent=5 // pred_fallthru
      _
    %p163 = scmp.le.s32.totalorder 1, %s10
    %p164 = scmp.lt.s32.totalorder %s10, 5
    %p165 = pnand %p163, %p164
    %p166 = pneg %p165
    // Predicated region
    $region33: #{_lambda_.23} parent=5 // pred_check
      _
    $region34: #{_lambda_.23} parent=5 // pred_check_branch
      %168 = sbr.rel (%p165) target = $region36
    $region35: #{_lambda_.23} parent=5 // pred_region
      %s169 = ssub.s32 %s10, 1
      %s170 = smul.u32 64, %s15
      %p171 = scmp.lt.s32.totalorder %s170, 255
      %s172 = scalar_select %p171, %s170, 255
      %s173 = smul.addr %s172, 2
      %s174 = smul.addr %s173, 4
      %s175 = scalar_lea.vmem %s0, %s174
      %p176 = pneg %p36
      %p177 = pneg %p33
      %p178 = pneg %p57
      %p179 = pneg %p54
      %p180 = pneg %p78
      %p181 = pneg %p75
      %p182 = pneg %p99
      %p183 = pneg %p96
      %p184 = pneg %p125
      %p185 = pneg %p122
      %s186 = smul.u32 64, %s15
      %p187 = scmp.lt.s32.totalorder %s186, 255
      %s188 = scalar_select %p187, %s186, 255
      %s189 = smul.addr %s188, 4
      %s190 = scalar_lea.vmem %s4, %s189
      %s191 = smul.u32 64, %s15
      %p192 = scmp.lt.s32.totalorder %s191, 255
      %s193 = scalar_select %p192, %s191, 255
      %s194 = smul.addr %s193, 2
      %s195 = smul.addr %s194, 4
      %s196 = scalar_lea.vmem %s0, %s195
      %s197 = smul.u32 64, %s15
      %s198 = smul.u32 64, %s15
      %p199 = scmp.lt.s32.totalorder %s198, 255
      %s200 = scalar_select %p199, %s198, 255
      %s201 = smul.addr %s200, 4
      %s202 = scalar_lea.vmem %s4, %s201
      %s203 = smul.u32 64, %s15
      %v205 = vld [vmem:[%s196] sm:$0xff]
      %v206 = vld [vmem:[%s196 + $0x8] sm:$0xff]
      %v207 = vld [vmem:[%s196 + $0x10] sm:$0xff]
      %v208 = vld [vmem:[%s196 + $0x18] sm:$0xff]
      %v209 = vld [vmem:[%s196 + $0x20] sm:$0xff]
      %v210 = vld [vmem:[%s196 + $0x28] sm:$0xff]
      %v211 = vld [vmem:[%s196 + $0x30] sm:$0xff]
      %v212 = vld [vmem:[%s196 + $0x38] sm:$0xff]
      %v213 = vld [vmem:[%s196 + $0x40] sm:$0xff]
      %v214 = vld [vmem:[%s196 + $0x48] sm:$0xff]
      %v215 = vld [vmem:[%s196 + $0x50] sm:$0xff]
      %v216 = vld [vmem:[%s196 + $0x58] sm:$0xff]
      %v217 = vld [vmem:[%s196 + $0x60] sm:$0xff]
      %v218 = vld [vmem:[%s196 + $0x68] sm:$0xff]
      %v219 = vld [vmem:[%s196 + $0x70] sm:$0xff]
      %v220 = vld [vmem:[%s196 + $0x78] sm:$0xff]
      %v221 = vld [vmem:[%s196 + $0x80] sm:$0xff]
      %v222 = vld [vmem:[%s196 + $0x88] sm:$0xff]
      %v223 = vld [vmem:[%s196 + $0x90] sm:$0xff]
      %v224 = vld [vmem:[%s196 + $0x98] sm:$0xff]
      %v225 = vld [vmem:[%s196 + $0xa0] sm:$0xff]
      %v226 = vld [vmem:[%s196 + $0xa8] sm:$0xff]
      %v227 = vld [vmem:[%s196 + $0xb0] sm:$0xff]
      %v228 = vld [vmem:[%s196 + $0xb8] sm:$0xff]
      %v229 = vld [vmem:[%s196 + $0xc0] sm:$0xff]
      %v230 = vld [vmem:[%s196 + $0xc8] sm:$0xff]
      %v231 = vld [vmem:[%s196 + $0xd0] sm:$0xff]
      %v232 = vld [vmem:[%s196 + $0xd8] sm:$0xff]
      %v233 = vld [vmem:[%s196 + $0xe0] sm:$0xff]
      %v234 = vld [vmem:[%s196 + $0xe8] sm:$0xff]
      %v235 = vld [vmem:[%s196 + $0xf0] sm:$0xff]
      %v236 = vld [vmem:[%s196 + $0xf8] sm:$0xff]
      %v237 = vld [vmem:[%s196 + $0x100] sm:$0xff]
      %v238 = vld [vmem:[%s196 + $0x108] sm:$0xff]
      %v239 = vld [vmem:[%s196 + $0x110] sm:$0xff]
      %v240 = vld [vmem:[%s196 + $0x118] sm:$0xff]
      %v241 = vld [vmem:[%s196 + $0x120] sm:$0xff]
      %v242 = vld [vmem:[%s196 + $0x128] sm:$0xff]
      %v243 = vld [vmem:[%s196 + $0x130] sm:$0xff]
      %v244 = vld [vmem:[%s196 + $0x138] sm:$0xff]
      %v245 = vld [vmem:[%s196 + $0x140] sm:$0xff]
      %v246 = vld [vmem:[%s196 + $0x148] sm:$0xff]
      %v247 = vld [vmem:[%s196 + $0x150] sm:$0xff]
      %v248 = vld [vmem:[%s196 + $0x158] sm:$0xff]
      %v249 = vld [vmem:[%s196 + $0x160] sm:$0xff]
      %v250 = vld [vmem:[%s196 + $0x168] sm:$0xff]
      %v251 = vld [vmem:[%s196 + $0x170] sm:$0xff]
      %v252 = vld [vmem:[%s196 + $0x178] sm:$0xff]
      %v253 = vld [vmem:[%s196 + $0x180] sm:$0xff]
      %v254 = vld [vmem:[%s196 + $0x188] sm:$0xff]
      %v255 = vld [vmem:[%s196 + $0x190] sm:$0xff]
      %v256 = vld [vmem:[%s196 + $0x198] sm:$0xff]
      %v257 = vld [vmem:[%s196 + $0x1a0] sm:$0xff]
      %v258 = vld [vmem:[%s196 + $0x1a8] sm:$0xff]
      %v259 = vld [vmem:[%s196 + $0x1b0] sm:$0xff]
      %v260 = vld [vmem:[%s196 + $0x1b8] sm:$0xff]
      %v261 = vld [vmem:[%s196 + $0x1c0] sm:$0xff]
      %v262 = vld [vmem:[%s196 + $0x1c8] sm:$0xff]
      %v263 = vld [vmem:[%s196 + $0x1d0] sm:$0xff]
      %v264 = vld [vmem:[%s196 + $0x1d8] sm:$0xff]
      %v265 = vld [vmem:[%s196 + $0x1e0] sm:$0xff]
      %v266 = vld [vmem:[%s196 + $0x1e8] sm:$0xff]
      %v267 = vld [vmem:[%s196 + $0x1f0] sm:$0xff]
      %v268 = vld [vmem:[%s196 + $0x1f8] sm:$0xff]
      %v269 = vld [vmem:[%s1] sm:$0xf]
      %v270 = vld [vmem:[%s1 + $0x4] sm:$0xf]
      %v271 = vld [vmem:[%s1 + $0x8] sm:$0xf]
      %v272 = vld [vmem:[%s1 + $0xc] sm:$0xf]
      %v273 = vld [vmem:[%s1 + $0x10] sm:$0xf]
      %v274 = vld [vmem:[%s1 + $0x14] sm:$0xf]
      %v275 = vld [vmem:[%s1 + $0x18] sm:$0xf]
      %v276 = vld [vmem:[%s1 + $0x1c] sm:$0xf]
      %v277 = vld [vmem:[%s1 + $0x20] sm:$0xf]
      %v278 = vld [vmem:[%s1 + $0x24] sm:$0xf]
      %v279 = vld [vmem:[%s1 + $0x28] sm:$0xf]
      %v280 = vld [vmem:[%s1 + $0x2c] sm:$0xf]
      %v281 = vld [vmem:[%s1 + $0x30] sm:$0xf]
      %v282 = vld [vmem:[%s1 + $0x34] sm:$0xf]
      %v283 = vld [vmem:[%s1 + $0x38] sm:$0xf]
      %v284 = vld [vmem:[%s1 + $0x3c] sm:$0xf]
      %v285 = vld [vmem:[%s1 + $0x40] sm:$0xf]
      %v286 = vld [vmem:[%s1 + $0x44] sm:$0xf]
      %v351 = vunpack.c.l.b16 %v205
      %v352 = vunpack.c.h.b16 %v205
      %v353 = vunpack.c.l.b16 %v206
      %v354 = vunpack.c.h.b16 %v206
      %v355 = vunpack.c.l.b16 %v207
      %v356 = vunpack.c.h.b16 %v207
      %v357 = vunpack.c.l.b16 %v208
      %v358 = vunpack.c.h.b16 %v208
      %v359 = vunpack.c.l.b16 %v209
      %v360 = vunpack.c.h.b16 %v209
      %v361 = vunpack.c.l.b16 %v210
      %v362 = vunpack.c.h.b16 %v210
      %v363 = vunpack.c.l.b16 %v211
      %v364 = vunpack.c.h.b16 %v211
      %v365 = vunpack.c.l.b16 %v212
      %v366 = vunpack.c.h.b16 %v212
      %v367 = vunpack.c.l.b16 %v213
      %v368 = vunpack.c.h.b16 %v213
      %v369 = vunpack.c.l.b16 %v214
      %v370 = vunpack.c.h.b16 %v214
      %v371 = vunpack.c.l.b16 %v215
      %v372 = vunpack.c.h.b16 %v215
      %v373 = vunpack.c.l.b16 %v216
      %v374 = vunpack.c.h.b16 %v216
      %v375 = vunpack.c.l.b16 %v217
      %v376 = vunpack.c.h.b16 %v217
      %v377 = vunpack.c.l.b16 %v218
      %v378 = vunpack.c.h.b16 %v218
      %v379 = vunpack.c.l.b16 %v219
      %v380 = vunpack.c.h.b16 %v219
      %v381 = vunpack.c.l.b16 %v220
      %v382 = vunpack.c.h.b16 %v220
      %v383 = vunpack.c.l.b16 %v221
      %v384 = vunpack.c.h.b16 %v221
      %v385 = vunpack.c.l.b16 %v222
      %v386 = vunpack.c.h.b16 %v222
      %v387 = vunpack.c.l.b16 %v223
      %v388 = vunpack.c.h.b16 %v223
      %v389 = vunpack.c.l.b16 %v224
      %v390 = vunpack.c.h.b16 %v224
      %v391 = vunpack.c.l.b16 %v225
      %v392 = vunpack.c.h.b16 %v225
      %v393 = vunpack.c.l.b16 %v226
      %v394 = vunpack.c.h.b16 %v226
      %v395 = vunpack.c.l.b16 %v227
      %v396 = vunpack.c.h.b16 %v227
      %v397 = vunpack.c.l.b16 %v228
      %v398 = vunpack.c.h.b16 %v228
      %v399 = vunpack.c.l.b16 %v229
      %v400 = vunpack.c.h.b16 %v229
      %v401 = vunpack.c.l.b16 %v230
      %v402 = vunpack.c.h.b16 %v230
      %v403 = vunpack.c.l.b16 %v231
      %v404 = vunpack.c.h.b16 %v231
      %v405 = vunpack.c.l.b16 %v232
      %v406 = vunpack.c.h.b16 %v232
      %v407 = vunpack.c.l.b16 %v233
      %v408 = vunpack.c.h.b16 %v233
      %v409 = vunpack.c.l.b16 %v234
      %v410 = vunpack.c.h.b16 %v234
      %v411 = vunpack.c.l.b16 %v235
      %v412 = vunpack.c.h.b16 %v235
      %v413 = vunpack.c.l.b16 %v236
      %v414 = vunpack.c.h.b16 %v236
      %v415 = vunpack.c.l.b16 %v237
      %v416 = vunpack.c.h.b16 %v237
      %v417 = vunpack.c.l.b16 %v238
      %v418 = vunpack.c.h.b16 %v238
      %v419 = vunpack.c.l.b16 %v239
      %v420 = vunpack.c.h.b16 %v239
      %v421 = vunpack.c.l.b16 %v240
      %v422 = vunpack.c.h.b16 %v240
      %v423 = vunpack.c.l.b16 %v241
      %v424 = vunpack.c.h.b16 %v241
      %v425 = vunpack.c.l.b16 %v242
      %v426 = vunpack.c.h.b16 %v242
      %v427 = vunpack.c.l.b16 %v243
      %v428 = vunpack.c.h.b16 %v243
      %v429 = vunpack.c.l.b16 %v244
      %v430 = vunpack.c.h.b16 %v244
      %v431 = vunpack.c.l.b16 %v245
      %v432 = vunpack.c.h.b16 %v245
      %v433 = vunpack.c.l.b16 %v246
      %v434 = vunpack.c.h.b16 %v246
      %v435 = vunpack.c.l.b16 %v247
      %v436 = vunpack.c.h.b16 %v247
      %v437 = vunpack.c.l.b16 %v248
      %v438 = vunpack.c.h.b16 %v248
      %v439 = vunpack.c.l.b16 %v249
      %v440 = vunpack.c.h.b16 %v249
      %v441 = vunpack.c.l.b16 %v250
      %v442 = vunpack.c.h.b16 %v250
      %v443 = vunpack.c.l.b16 %v251
      %v444 = vunpack.c.h.b16 %v251
      %v445 = vunpack.c.l.b16 %v252
      %v446 = vunpack.c.h.b16 %v252
      %v447 = vunpack.c.l.b16 %v253
      %v448 = vunpack.c.h.b16 %v253
      %v449 = vunpack.c.l.b16 %v254
      %v450 = vunpack.c.h.b16 %v254
      %v451 = vunpack.c.l.b16 %v255
      %v452 = vunpack.c.h.b16 %v255
      %v453 = vunpack.c.l.b16 %v256
      %v454 = vunpack.c.h.b16 %v256
      %v455 = vunpack.c.l.b16 %v257
      %v456 = vunpack.c.h.b16 %v257
      %v457 = vunpack.c.l.b16 %v258
      %v458 = vunpack.c.h.b16 %v258
      %v459 = vunpack.c.l.b16 %v259
      %v460 = vunpack.c.h.b16 %v259
      %v461 = vunpack.c.l.b16 %v260
      %v462 = vunpack.c.h.b16 %v260
      %v463 = vunpack.c.l.b16 %v261
      %v464 = vunpack.c.h.b16 %v261
      %v465 = vunpack.c.l.b16 %v262
      %v466 = vunpack.c.h.b16 %v262
      %v467 = vunpack.c.l.b16 %v263
      %v468 = vunpack.c.h.b16 %v263
      %v469 = vunpack.c.l.b16 %v264
      %v470 = vunpack.c.h.b16 %v264
      %v471 = vunpack.c.l.b16 %v265
      %v472 = vunpack.c.h.b16 %v265
      %v473 = vunpack.c.l.b16 %v266
      %v474 = vunpack.c.h.b16 %v266
      %v475 = vunpack.c.l.b16 %v267
      %v476 = vunpack.c.h.b16 %v267
      %v477 = vunpack.c.l.b16 %v268
      %v478 = vunpack.c.h.b16 %v268
      %v479 = vpack.c.b16 %v353, %v351
      %v480 = vpack.c.b16 %v354, %v352
      %v481 = vpack.c.b16 %v357, %v355
      %v482 = vpack.c.b16 %v358, %v356
      %v483 = vpack.c.b16 %v361, %v359
      %v484 = vpack.c.b16 %v362, %v360
      %v485 = vpack.c.b16 %v365, %v363
      %v486 = vpack.c.b16 %v366, %v364
      %v487 = vpack.c.b16 %v369, %v367
      %v488 = vpack.c.b16 %v370, %v368
      %v489 = vpack.c.b16 %v373, %v371
      %v490 = vpack.c.b16 %v374, %v372
      %v491 = vpack.c.b16 %v377, %v375
      %v492 = vpack.c.b16 %v378, %v376
      %v493 = vpack.c.b16 %v381, %v379
      %v494 = vpack.c.b16 %v382, %v380
      %v495 = vpack.c.b16 %v385, %v383
      %v496 = vpack.c.b16 %v386, %v384
      %v497 = vpack.c.b16 %v389, %v387
      %v498 = vpack.c.b16 %v390, %v388
      %v499 = vpack.c.b16 %v393, %v391
      %v500 = vpack.c.b16 %v394, %v392
      %v501 = vpack.c.b16 %v397, %v395
      %v502 = vpack.c.b16 %v398, %v396
      %v503 = vpack.c.b16 %v401, %v399
      %v504 = vpack.c.b16 %v402, %v400
      %v505 = vpack.c.b16 %v405, %v403
      %v506 = vpack.c.b16 %v406, %v404
      %v507 = vpack.c.b16 %v409, %v407
      %v508 = vpack.c.b16 %v410, %v408
      %v509 = vpack.c.b16 %v413, %v411
      %v510 = vpack.c.b16 %v414, %v412
      %v511 = vpack.c.b16 %v417, %v415
      %v512 = vpack.c.b16 %v418, %v416
      %v513 = vpack.c.b16 %v421, %v419
      %v514 = vpack.c.b16 %v422, %v420
      %v515 = vpack.c.b16 %v425, %v423
      %v516 = vpack.c.b16 %v426, %v424
      %v517 = vpack.c.b16 %v429, %v427
      %v518 = vpack.c.b16 %v430, %v428
      %v519 = vpack.c.b16 %v433, %v431
      %v520 = vpack.c.b16 %v434, %v432
      %v521 = vpack.c.b16 %v437, %v435
      %v522 = vpack.c.b16 %v438, %v436
      %v523 = vpack.c.b16 %v441, %v439
      %v524 = vpack.c.b16 %v442, %v440
      %v525 = vpack.c.b16 %v445, %v443
      %v526 = vpack.c.b16 %v446, %v444
      %v527 = vpack.c.b16 %v449, %v447
      %v528 = vpack.c.b16 %v450, %v448
      %v529 = vpack.c.b16 %v453, %v451
      %v530 = vpack.c.b16 %v454, %v452
      %v531 = vpack.c.b16 %v457, %v455
      %v532 = vpack.c.b16 %v458, %v456
      %v533 = vpack.c.b16 %v461, %v459
      %v534 = vpack.c.b16 %v462, %v460
      %v535 = vpack.c.b16 %v465, %v463
      %v536 = vpack.c.b16 %v466, %v464
      %v537 = vpack.c.b16 %v469, %v467
      %v538 = vpack.c.b16 %v470, %v468
      %v539 = vpack.c.b16 %v473, %v471
      %v540 = vpack.c.b16 %v474, %v472
      %v541 = vpack.c.b16 %v477, %v475
      %v542 = vpack.c.b16 %v478, %v476
      %v593 = vunpack.c.l.b16 %v269
      %v594 = vunpack.c.l.b16 %v270
      %v595 = vunpack.c.l.b16 %v271
      %v596 = vunpack.c.l.b16 %v272
      %v597 = vunpack.c.l.b16 %v273
      %v598 = vunpack.c.l.b16 %v274
      %v599 = vunpack.c.l.b16 %v275
      %v600 = vunpack.c.l.b16 %v276
      %v601 = vunpack.c.l.b16 %v277
      %v602 = vunpack.c.l.b16 %v278
      %v603 = vunpack.c.l.b16 %v279
      %v604 = vunpack.c.l.b16 %v280
      %v605 = vunpack.c.l.b16 %v281
      %v606 = vunpack.c.l.b16 %v282
      %v607 = vunpack.c.l.b16 %v283
      %v608 = vunpack.c.l.b16 %v284
      %v609 = vunpack.c.l.b16 %v285
      %v610 = vunpack.c.l.b16 %v286
      %v611 = vpack.c.b16 %v594, %v593
      %v612 = vpack.c.b16 %v596, %v595
      %v613 = vpack.c.b16 %v598, %v597
      %v614 = vpack.c.b16 %v600, %v599
      %v615 = vpack.c.b16 %v602, %v601
      %v616 = vpack.c.b16 %v604, %v603
      %v617 = vpack.c.b16 %v606, %v605
      %v618 = vpack.c.b16 %v608, %v607
      %v619 = vpack.c.b16 %v610, %v609
      %vm629 = vcmask 130048
      %v631 = vsel %vm629, %v480, 0
      %v634 = vsel %vm629, %v482, 0
      %v637 = vsel %vm629, %v484, 0
      %v640 = vsel %vm629, %v486, 0
      %v643 = vsel %vm629, %v488, 0
      %v646 = vsel %vm629, %v490, 0
      %v649 = vsel %vm629, %v492, 0
      %v652 = vsel %vm629, %v494, 0
      %v655 = vsel %vm629, %v496, 0
      %v658 = vsel %vm629, %v498, 0
      %v661 = vsel %vm629, %v500, 0
      %v664 = vsel %vm629, %v502, 0
      %v667 = vsel %vm629, %v504, 0
      %v670 = vsel %vm629, %v506, 0
      %v673 = vsel %vm629, %v508, 0
      %v676 = vsel %vm629, %v510, 0
      %v679 = vsel %vm629, %v512, 0
      %v682 = vsel %vm629, %v514, 0
      %v685 = vsel %vm629, %v516, 0
      %v688 = vsel %vm629, %v518, 0
      %v691 = vsel %vm629, %v520, 0
      %v694 = vsel %vm629, %v522, 0
      %v697 = vsel %vm629, %v524, 0
      %v700 = vsel %vm629, %v526, 0
      %v703 = vsel %vm629, %v528, 0
      %v706 = vsel %vm629, %v530, 0
      %v709 = vsel %vm629, %v532, 0
      %v712 = vsel %vm629, %v534, 0
      %v715 = vsel %vm629, %v536, 0
      %v718 = vsel %vm629, %v538, 0
      %v721 = vsel %vm629, %v540, 0
      %v724 = vsel %vm629, %v542, 0
      %726 = vmatpush.bf16.msra.mxu0 %v618
      %727 = vmatpush.bf16.msra.mxu0 %v617
      %728 = vmatpush.bf16.msra.mxu0 %v616
      %729 = vmatpush.bf16.msra.mxu0 %v615
      %730 = vmatpush.bf16.msra.mxu0 %v614
      %731 = vmatpush.bf16.msra.mxu0 %v613
      %732 = vmatpush.bf16.msra.mxu0 %v612
      %733 = vmatpush.bf16.msra.mxu0 %v611
      %734 = vmatmul.bf16.gmra.mxu0 %v479
      %v735 = vpop.f32.mrf.mxu0
      %v736 = vadd.f32 0.0, %v735
      %v737 = vpop.f32.mrf.mxu0
      %v738 = vadd.f32 0.0, %v737
      %739 = vmatmul.bf16.gmra.mxu0 %v481
      %v740 = vpop.f32.mrf.mxu0
      %v741 = vadd.f32 0.0, %v740
      %v742 = vpop.f32.mrf.mxu0
      %v743 = vadd.f32 0.0, %v742
      %744 = vmatmul.bf16.gmra.mxu0 %v483
      %v745 = vpop.f32.mrf.mxu0
      %v746 = vadd.f32 0.0, %v745
      %v747 = vpop.f32.mrf.mxu0
      %v748 = vadd.f32 0.0, %v747
      %749 = vmatmul.bf16.gmra.mxu0 %v485
      %v750 = vpop.f32.mrf.mxu0
      %v751 = vadd.f32 0.0, %v750
      %v752 = vpop.f32.mrf.mxu0
      %v753 = vadd.f32 0.0, %v752
      %754 = vmatmul.bf16.gmra.mxu0 %v487
      %v755 = vpop.f32.mrf.mxu0
      %v756 = vadd.f32 0.0, %v755
      %v757 = vpop.f32.mrf.mxu0
      %v758 = vadd.f32 0.0, %v757
      %759 = vmatmul.bf16.gmra.mxu0 %v489
      %v760 = vpop.f32.mrf.mxu0
      %v761 = vadd.f32 0.0, %v760
      %v762 = vpop.f32.mrf.mxu0
      %v763 = vadd.f32 0.0, %v762
      %764 = vmatmul.bf16.gmra.mxu0 %v491
      %v765 = vpop.f32.mrf.mxu0
      %v766 = vadd.f32 0.0, %v765
      %v767 = vpop.f32.mrf.mxu0
      %v768 = vadd.f32 0.0, %v767
      %769 = vmatmul.bf16.gmra.mxu0 %v493
      %v770 = vpop.f32.mrf.mxu0
      %v771 = vadd.f32 0.0, %v770
      %v772 = vpop.f32.mrf.mxu0
      %v773 = vadd.f32 0.0, %v772
      %774 = vmatmul.bf16.gmra.mxu0 %v495
      %v775 = vpop.f32.mrf.mxu0
      %v776 = vadd.f32 0.0, %v775
      %v777 = vpop.f32.mrf.mxu0
      %v778 = vadd.f32 0.0, %v777
      %779 = vmatmul.bf16.gmra.mxu0 %v497
      %v780 = vpop.f32.mrf.mxu0
      %v781 = vadd.f32 0.0, %v780
      %v782 = vpop.f32.mrf.mxu0
      %v783 = vadd.f32 0.0, %v782
      %784 = vmatmul.bf16.gmra.mxu0 %v499
      %v785 = vpop.f32.mrf.mxu0
      %v786 = vadd.f32 0.0, %v785
      %v787 = vpop.f32.mrf.mxu0
      %v788 = vadd.f32 0.0, %v787
      %789 = vmatmul.bf16.gmra.mxu0 %v501
      %v790 = vpop.f32.mrf.mxu0
      %v791 = vadd.f32 0.0, %v790
      %v792 = vpop.f32.mrf.mxu0
      %v793 = vadd.f32 0.0, %v792
      %794 = vmatmul.bf16.gmra.mxu0 %v503
      %v795 = vpop.f32.mrf.mxu0
      %v796 = vadd.f32 0.0, %v795
      %v797 = vpop.f32.mrf.mxu0
      %v798 = vadd.f32 0.0, %v797
      %799 = vmatmul.bf16.gmra.mxu0 %v505
      %v800 = vpop.f32.mrf.mxu0
      %v801 = vadd.f32 0.0, %v800
      %v802 = vpop.f32.mrf.mxu0
      %v803 = vadd.f32 0.0, %v802
      %804 = vmatmul.bf16.gmra.mxu0 %v507
      %v805 = vpop.f32.mrf.mxu0
      %v806 = vadd.f32 0.0, %v805
      %v807 = vpop.f32.mrf.mxu0
      %v808 = vadd.f32 0.0, %v807
      %809 = vmatmul.bf16.gmra.mxu0 %v509
      %v810 = vpop.f32.mrf.mxu0
      %v811 = vadd.f32 0.0, %v810
      %v812 = vpop.f32.mrf.mxu0
      %v813 = vadd.f32 0.0, %v812
      %814 = vmatmul.bf16.gmra.mxu0 %v511
      %v815 = vpop.f32.mrf.mxu0
      %v816 = vadd.f32 0.0, %v815
      %v817 = vpop.f32.mrf.mxu0
      %v818 = vadd.f32 0.0, %v817
      %819 = vmatmul.bf16.gmra.mxu0 %v513
      %v820 = vpop.f32.mrf.mxu0
      %v821 = vadd.f32 0.0, %v820
      %v822 = vpop.f32.mrf.mxu0
      %v823 = vadd.f32 0.0, %v822
      %824 = vmatmul.bf16.gmra.mxu0 %v515
      %v825 = vpop.f32.mrf.mxu0
      %v826 = vadd.f32 0.0, %v825
      %v827 = vpop.f32.mrf.mxu0
      %v828 = vadd.f32 0.0, %v827
      %829 = vmatmul.bf16.gmra.mxu0 %v517
      %v830 = vpop.f32.mrf.mxu0
      %v831 = vadd.f32 0.0, %v830
      %v832 = vpop.f32.mrf.mxu0
      %v833 = vadd.f32 0.0, %v832
      %834 = vmatmul.bf16.gmra.mxu0 %v519
      %v835 = vpop.f32.mrf.mxu0
      %v836 = vadd.f32 0.0, %v835
      %v837 = vpop.f32.mrf.mxu0
      %v838 = vadd.f32 0.0, %v837
      %839 = vmatmul.bf16.gmra.mxu0 %v521
      %v840 = vpop.f32.mrf.mxu0
      %v841 = vadd.f32 0.0, %v840
      %v842 = vpop.f32.mrf.mxu0
      %v843 = vadd.f32 0.0, %v842
      %844 = vmatmul.bf16.gmra.mxu0 %v523
      %v845 = vpop.f32.mrf.mxu0
      %v846 = vadd.f32 0.0, %v845
      %v847 = vpop.f32.mrf.mxu0
      %v848 = vadd.f32 0.0, %v847
      %849 = vmatmul.bf16.gmra.mxu0 %v525
      %v850 = vpop.f32.mrf.mxu0
      %v851 = vadd.f32 0.0, %v850
      %v852 = vpop.f32.mrf.mxu0
      %v853 = vadd.f32 0.0, %v852
      %854 = vmatmul.bf16.gmra.mxu0 %v527
      %v855 = vpop.f32.mrf.mxu0
      %v856 = vadd.f32 0.0, %v855
      %v857 = vpop.f32.mrf.mxu0
      %v858 = vadd.f32 0.0, %v857
      %859 = vmatmul.bf16.gmra.mxu0 %v529
      %v860 = vpop.f32.mrf.mxu0
      %v861 = vadd.f32 0.0, %v860
      %v862 = vpop.f32.mrf.mxu0
      %v863 = vadd.f32 0.0, %v862
      %864 = vmatmul.bf16.gmra.mxu0 %v531
      %v865 = vpop.f32.mrf.mxu0
      %v866 = vadd.f32 0.0, %v865
      %v867 = vpop.f32.mrf.mxu0
      %v868 = vadd.f32 0.0, %v867
      %869 = vmatmul.bf16.gmra.mxu0 %v533
      %v870 = vpop.f32.mrf.mxu0
      %v871 = vadd.f32 0.0, %v870
      %v872 = vpop.f32.mrf.mxu0
      %v873 = vadd.f32 0.0, %v872
      %874 = vmatmul.bf16.gmra.mxu0 %v535
      %v875 = vpop.f32.mrf.mxu0
      %v876 = vadd.f32 0.0, %v875
      %v877 = vpop.f32.mrf.mxu0
      %v878 = vadd.f32 0.0, %v877
      %879 = vmatmul.bf16.gmra.mxu0 %v537
      %v880 = vpop.f32.mrf.mxu0
      %v881 = vadd.f32 0.0, %v880
      %v882 = vpop.f32.mrf.mxu0
      %v883 = vadd.f32 0.0, %v882
      %884 = vmatmul.bf16.gmra.mxu0 %v539
      %v885 = vpop.f32.mrf.mxu0
      %v886 = vadd.f32 0.0, %v885
      %v887 = vpop.f32.mrf.mxu0
      %v888 = vadd.f32 0.0, %v887
      %889 = vmatmul.bf16.gmra.mxu0 %v541
      %v890 = vpop.f32.mrf.mxu0
      %v891 = vadd.f32 0.0, %v890
      %v892 = vpop.f32.mrf.mxu0
      %v893 = vadd.f32 0.0, %v892
      %894 = vdwg.mxu0
      %895 = vmatpush.bf16.msra.mxu0 0
      %896 = vmatpush.bf16.msra.mxu0 0
      %897 = vmatpush.bf16.msra.mxu0 0
      %898 = vmatpush.bf16.msra.mxu0 0
      %899 = vmatpush.bf16.msra.mxu0 0
      %900 = vmatpush.bf16.msra.mxu0 0
      %901 = vmatpush.bf16.msra.mxu0 0
      %902 = vmatpush.bf16.msra.mxu0 %v619
      %903 = vmatmul.bf16.gmra.mxu0 %v631
      %v904 = vpop.f32.mrf.mxu0
      %v905 = vadd.f32 %v736, %v904
      %v906 = vpop.f32.mrf.mxu0
      %v907 = vadd.f32 %v738, %v906
      %908 = vmatmul.bf16.gmra.mxu0 %v634
      %v909 = vpop.f32.mrf.mxu0
      %v910 = vadd.f32 %v741, %v909
      %v911 = vpop.f32.mrf.mxu0
      %v912 = vadd.f32 %v743, %v911
      %913 = vmatmul.bf16.gmra.mxu0 %v637
      %v914 = vpop.f32.mrf.mxu0
      %v915 = vadd.f32 %v746, %v914
      %v916 = vpop.f32.mrf.mxu0
      %v917 = vadd.f32 %v748, %v916
      %918 = vmatmul.bf16.gmra.mxu0 %v640
      %v919 = vpop.f32.mrf.mxu0
      %v920 = vadd.f32 %v751, %v919
      %v921 = vpop.f32.mrf.mxu0
      %v922 = vadd.f32 %v753, %v921
      %923 = vmatmul.bf16.gmra.mxu0 %v643
      %v924 = vpop.f32.mrf.mxu0
      %v925 = vadd.f32 %v756, %v924
      %v926 = vpop.f32.mrf.mxu0
      %v927 = vadd.f32 %v758, %v926
      %928 = vmatmul.bf16.gmra.mxu0 %v646
      %v929 = vpop.f32.mrf.mxu0
      %v930 = vadd.f32 %v761, %v929
      %v931 = vpop.f32.mrf.mxu0
      %v932 = vadd.f32 %v763, %v931
      %933 = vmatmul.bf16.gmra.mxu0 %v649
      %v934 = vpop.f32.mrf.mxu0
      %v935 = vadd.f32 %v766, %v934
      %v936 = vpop.f32.mrf.mxu0
      %v937 = vadd.f32 %v768, %v936
      %938 = vmatmul.bf16.gmra.mxu0 %v652
      %v939 = vpop.f32.mrf.mxu0
      %v940 = vadd.f32 %v771, %v939
      %v941 = vpop.f32.mrf.mxu0
      %v942 = vadd.f32 %v773, %v941
      %943 = vmatmul.bf16.gmra.mxu0 %v655
      %v944 = vpop.f32.mrf.mxu0
      %v945 = vadd.f32 %v776, %v944
      %v946 = vpop.f32.mrf.mxu0
      %v947 = vadd.f32 %v778, %v946
      %948 = vmatmul.bf16.gmra.mxu0 %v658
      %v949 = vpop.f32.mrf.mxu0
      %v950 = vadd.f32 %v781, %v949
      %v951 = vpop.f32.mrf.mxu0
      %v952 = vadd.f32 %v783, %v951
      %953 = vmatmul.bf16.gmra.mxu0 %v661
      %v954 = vpop.f32.mrf.mxu0
      %v955 = vadd.f32 %v786, %v954
      %v956 = vpop.f32.mrf.mxu0
      %v957 = vadd.f32 %v788, %v956
      %958 = vmatmul.bf16.gmra.mxu0 %v664
      %v959 = vpop.f32.mrf.mxu0
      %v960 = vadd.f32 %v791, %v959
      %v961 = vpop.f32.mrf.mxu0
      %v962 = vadd.f32 %v793, %v961
      %963 = vmatmul.bf16.gmra.mxu0 %v667
      %v964 = vpop.f32.mrf.mxu0
      %v965 = vadd.f32 %v796, %v964
      %v966 = vpop.f32.mrf.mxu0
      %v967 = vadd.f32 %v798, %v966
      %968 = vmatmul.bf16.gmra.mxu0 %v670
      %v969 = vpop.f32.mrf.mxu0
      %v970 = vadd.f32 %v801, %v969
      %v971 = vpop.f32.mrf.mxu0
      %v972 = vadd.f32 %v803, %v971
      %973 = vmatmul.bf16.gmra.mxu0 %v673
      %v974 = vpop.f32.mrf.mxu0
      %v975 = vadd.f32 %v806, %v974
      %v976 = vpop.f32.mrf.mxu0
      %v977 = vadd.f32 %v808, %v976
      %978 = vmatmul.bf16.gmra.mxu0 %v676
      %v979 = vpop.f32.mrf.mxu0
      %v980 = vadd.f32 %v811, %v979
      %v981 = vpop.f32.mrf.mxu0
      %v982 = vadd.f32 %v813, %v981
      %983 = vmatmul.bf16.gmra.mxu0 %v679
      %v984 = vpop.f32.mrf.mxu0
      %v985 = vadd.f32 %v816, %v984
      %v986 = vpop.f32.mrf.mxu0
      %v987 = vadd.f32 %v818, %v986
      %988 = vmatmul.bf16.gmra.mxu0 %v682
      %v989 = vpop.f32.mrf.mxu0
      %v990 = vadd.f32 %v821, %v989
      %v991 = vpop.f32.mrf.mxu0
      %v992 = vadd.f32 %v823, %v991
      %993 = vmatmul.bf16.gmra.mxu0 %v685
      %v994 = vpop.f32.mrf.mxu0
      %v995 = vadd.f32 %v826, %v994
      %v996 = vpop.f32.mrf.mxu0
      %v997 = vadd.f32 %v828, %v996
      %998 = vmatmul.bf16.gmra.mxu0 %v688
      %v999 = vpop.f32.mrf.mxu0
      %v1000 = vadd.f32 %v831, %v999
      %v1001 = vpop.f32.mrf.mxu0
      %v1002 = vadd.f32 %v833, %v1001
      %1003 = vmatmul.bf16.gmra.mxu0 %v691
      %v1004 = vpop.f32.mrf.mxu0
      %v1005 = vadd.f32 %v836, %v1004
      %v1006 = vpop.f32.mrf.mxu0
      %v1007 = vadd.f32 %v838, %v1006
      %1008 = vmatmul.bf16.gmra.mxu0 %v694
      %v1009 = vpop.f32.mrf.mxu0
      %v1010 = vadd.f32 %v841, %v1009
      %v1011 = vpop.f32.mrf.mxu0
      %v1012 = vadd.f32 %v843, %v1011
      %1013 = vmatmul.bf16.gmra.mxu0 %v697
      %v1014 = vpop.f32.mrf.mxu0
      %v1015 = vadd.f32 %v846, %v1014
      %v1016 = vpop.f32.mrf.mxu0
      %v1017 = vadd.f32 %v848, %v1016
      %1018 = vmatmul.bf16.gmra.mxu0 %v700
      %v1019 = vpop.f32.mrf.mxu0
      %v1020 = vadd.f32 %v851, %v1019
      %v1021 = vpop.f32.mrf.mxu0
      %v1022 = vadd.f32 %v853, %v1021
      %1023 = vmatmul.bf16.gmra.mxu0 %v703
      %v1024 = vpop.f32.mrf.mxu0
      %v1025 = vadd.f32 %v856, %v1024
      %v1026 = vpop.f32.mrf.mxu0
      %v1027 = vadd.f32 %v858, %v1026
      %1028 = vmatmul.bf16.gmra.mxu0 %v706
      %v1029 = vpop.f32.mrf.mxu0
      %v1030 = vadd.f32 %v861, %v1029
      %v1031 = vpop.f32.mrf.mxu0
      %v1032 = vadd.f32 %v863, %v1031
      %1033 = vmatmul.bf16.gmra.mxu0 %v709
      %v1034 = vpop.f32.mrf.mxu0
      %v1035 = vadd.f32 %v866, %v1034
      %v1036 = vpop.f32.mrf.mxu0
      %v1037 = vadd.f32 %v868, %v1036
      %1038 = vmatmul.bf16.gmra.mxu0 %v712
      %v1039 = vpop.f32.mrf.mxu0
      %v1040 = vadd.f32 %v871, %v1039
      %v1041 = vpop.f32.mrf.mxu0
      %v1042 = vadd.f32 %v873, %v1041
      %1043 = vmatmul.bf16.gmra.mxu0 %v715
      %v1044 = vpop.f32.mrf.mxu0
      %v1045 = vadd.f32 %v876, %v1044
      %v1046 = vpop.f32.mrf.mxu0
      %v1047 = vadd.f32 %v878, %v1046
      %1048 = vmatmul.bf16.gmra.mxu0 %v718
      %v1049 = vpop.f32.mrf.mxu0
      %v1050 = vadd.f32 %v881, %v1049
      %v1051 = vpop.f32.mrf.mxu0
      %v1052 = vadd.f32 %v883, %v1051
      %1053 = vmatmul.bf16.gmra.mxu0 %v721
      %v1054 = vpop.f32.mrf.mxu0
      %v1055 = vadd.f32 %v886, %v1054
      %v1056 = vpop.f32.mrf.mxu0
      %v1057 = vadd.f32 %v888, %v1056
      %1058 = vmatmul.bf16.gmra.mxu0 %v724
      %v1059 = vpop.f32.mrf.mxu0
      %v1060 = vadd.f32 %v891, %v1059
      %v1061 = vpop.f32.mrf.mxu0
      %v1062 = vadd.f32 %v893, %v1061
      %1063 = vdwg.mxu0
      %v1064 = vld [vmem:[%s2] sm:$0x1]
      %v1066 = vperm.slane %v1064, 0
      %v1068 = vmul.f32 %v905, %v1066
      %v1069 = vmul.f32 %v907, %v1066
      %v1070 = vmul.f32 %v910, %v1066
      %v1071 = vmul.f32 %v912, %v1066
      %v1072 = vmul.f32 %v915, %v1066
      %v1073 = vmul.f32 %v917, %v1066
      %v1074 = vmul.f32 %v920, %v1066
      %v1075 = vmul.f32 %v922, %v1066
      %v1076 = vmul.f32 %v925, %v1066
      %v1077 = vmul.f32 %v927, %v1066
      %v1078 = vmul.f32 %v930, %v1066
      %v1079 = vmul.f32 %v932, %v1066
      %v1080 = vmul.f32 %v935, %v1066
      %v1081 = vmul.f32 %v937, %v1066
      %v1082 = vmul.f32 %v940, %v1066
      %v1083 = vmul.f32 %v942, %v1066
      %v1084 = vmul.f32 %v945, %v1066
      %v1085 = vmul.f32 %v947, %v1066
      %v1086 = vmul.f32 %v950, %v1066
      %v1087 = vmul.f32 %v952, %v1066
      %v1088 = vmul.f32 %v955, %v1066
      %v1089 = vmul.f32 %v957, %v1066
      %v1090 = vmul.f32 %v960, %v1066
      %v1091 = vmul.f32 %v962, %v1066
      %v1092 = vmul.f32 %v965, %v1066
      %v1093 = vmul.f32 %v967, %v1066
      %v1094 = vmul.f32 %v970, %v1066
      %v1095 = vmul.f32 %v972, %v1066
      %v1096 = vmul.f32 %v975, %v1066
      %v1097 = vmul.f32 %v977, %v1066
      %v1098 = vmul.f32 %v980, %v1066
      %v1099 = vmul.f32 %v982, %v1066
      %v1100 = vmul.f32 %v985, %v1066
      %v1101 = vmul.f32 %v987, %v1066
      %v1102 = vmul.f32 %v990, %v1066
      %v1103 = vmul.f32 %v992, %v1066
      %v1104 = vmul.f32 %v995, %v1066
      %v1105 = vmul.f32 %v997, %v1066
      %v1106 = vmul.f32 %v1000, %v1066
      %v1107 = vmul.f32 %v1002, %v1066
      %v1108 = vmul.f32 %v1005, %v1066
      %v1109 = vmul.f32 %v1007, %v1066
      %v1110 = vmul.f32 %v1010, %v1066
      %v1111 = vmul.f32 %v1012, %v1066
      %v1112 = vmul.f32 %v1015, %v1066
      %v1113 = vmul.f32 %v1017, %v1066
      %v1114 = vmul.f32 %v1020, %v1066
      %v1115 = vmul.f32 %v1022, %v1066
      %v1116 = vmul.f32 %v1025, %v1066
      %v1117 = vmul.f32 %v1027, %v1066
      %v1118 = vmul.f32 %v1030, %v1066
      %v1119 = vmul.f32 %v1032, %v1066
      %v1120 = vmul.f32 %v1035, %v1066
      %v1121 = vmul.f32 %v1037, %v1066
      %v1122 = vmul.f32 %v1040, %v1066
      %v1123 = vmul.f32 %v1042, %v1066
      %v1124 = vmul.f32 %v1045, %v1066
      %v1125 = vmul.f32 %v1047, %v1066
      %v1126 = vmul.f32 %v1050, %v1066
      %v1127 = vmul.f32 %v1052, %v1066
      %v1128 = vmul.f32 %v1055, %v1066
      %v1129 = vmul.f32 %v1057, %v1066
      %v1130 = vmul.f32 %v1060, %v1066
      %v1131 = vmul.f32 %v1062, %v1066
      %v1132 = vld [vmem:[%s3] sm:$0x1]
      %v1134 = vperm.slane %v1132, 0
      %v1136 = vadd.f32 %v1068, %v1134
      %v1137 = vadd.f32 %v1069, %v1134
      %v1138 = vadd.f32 %v1070, %v1134
      %v1139 = vadd.f32 %v1071, %v1134
      %v1140 = vadd.f32 %v1072, %v1134
      %v1141 = vadd.f32 %v1073, %v1134
      %v1142 = vadd.f32 %v1074, %v1134
      %v1143 = vadd.f32 %v1075, %v1134
      %v1144 = vadd.f32 %v1076, %v1134
      %v1145 = vadd.f32 %v1077, %v1134
      %v1146 = vadd.f32 %v1078, %v1134
      %v1147 = vadd.f32 %v1079, %v1134
      %v1148 = vadd.f32 %v1080, %v1134
      %v1149 = vadd.f32 %v1081, %v1134
      %v1150 = vadd.f32 %v1082, %v1134
      %v1151 = vadd.f32 %v1083, %v1134
      %v1152 = vadd.f32 %v1084, %v1134
      %v1153 = vadd.f32 %v1085, %v1134
      %v1154 = vadd.f32 %v1086, %v1134
      %v1155 = vadd.f32 %v1087, %v1134
      %v1156 = vadd.f32 %v1088, %v1134
      %v1157 = vadd.f32 %v1089, %v1134
      %v1158 = vadd.f32 %v1090, %v1134
      %v1159 = vadd.f32 %v1091, %v1134
      %v1160 = vadd.f32 %v1092, %v1134
      %v1161 = vadd.f32 %v1093, %v1134
      %v1162 = vadd.f32 %v1094, %v1134
      %v1163 = vadd.f32 %v1095, %v1134
      %v1164 = vadd.f32 %v1096, %v1134
      %v1165 = vadd.f32 %v1097, %v1134
      %v1166 = vadd.f32 %v1098, %v1134
      %v1167 = vadd.f32 %v1099, %v1134
      %v1168 = vadd.f32 %v1100, %v1134
      %v1169 = vadd.f32 %v1101, %v1134
      %v1170 = vadd.f32 %v1102, %v1134
      %v1171 = vadd.f32 %v1103, %v1134
      %v1172 = vadd.f32 %v1104, %v1134
      %v1173 = vadd.f32 %v1105, %v1134
      %v1174 = vadd.f32 %v1106, %v1134
      %v1175 = vadd.f32 %v1107, %v1134
      %v1176 = vadd.f32 %v1108, %v1134
      %v1177 = vadd.f32 %v1109, %v1134
      %v1178 = vadd.f32 %v1110, %v1134
      %v1179 = vadd.f32 %v1111, %v1134
      %v1180 = vadd.f32 %v1112, %v1134
      %v1181 = vadd.f32 %v1113, %v1134
      %v1182 = vadd.f32 %v1114, %v1134
      %v1183 = vadd.f32 %v1115, %v1134
      %v1184 = vadd.f32 %v1116, %v1134
      %v1185 = vadd.f32 %v1117, %v1134
      %v1186 = vadd.f32 %v1118, %v1134
      %v1187 = vadd.f32 %v1119, %v1134
      %v1188 = vadd.f32 %v1120, %v1134
      %v1189 = vadd.f32 %v1121, %v1134
      %v1190 = vadd.f32 %v1122, %v1134
      %v1191 = vadd.f32 %v1123, %v1134
      %v1192 = vadd.f32 %v1124, %v1134
      %v1193 = vadd.f32 %v1125, %v1134
      %v1194 = vadd.f32 %v1126, %v1134
      %v1195 = vadd.f32 %v1127, %v1134
      %v1196 = vadd.f32 %v1128, %v1134
      %v1197 = vadd.f32 %v1129, %v1134
      %v1198 = vadd.f32 %v1130, %v1134
      %v1199 = vadd.f32 %v1131, %v1134
      %v1200 = vmax.f32 %v1136, 0.0
      %v1201 = vmax.f32 %v1137, 0.0
      %v1202 = vmax.f32 %v1138, 0.0
      %v1203 = vmax.f32 %v1139, 0.0
      %v1204 = vmax.f32 %v1140, 0.0
      %v1205 = vmax.f32 %v1141, 0.0
      %v1206 = vmax.f32 %v1142, 0.0
      %v1207 = vmax.f32 %v1143, 0.0
      %v1208 = vmax.f32 %v1144, 0.0
      %v1209 = vmax.f32 %v1145, 0.0
      %v1210 = vmax.f32 %v1146, 0.0
      %v1211 = vmax.f32 %v1147, 0.0
      %v1212 = vmax.f32 %v1148, 0.0
      %v1213 = vmax.f32 %v1149, 0.0
      %v1214 = vmax.f32 %v1150, 0.0
      %v1215 = vmax.f32 %v1151, 0.0
      %v1216 = vmax.f32 %v1152, 0.0
      %v1217 = vmax.f32 %v1153, 0.0
      %v1218 = vmax.f32 %v1154, 0.0
      %v1219 = vmax.f32 %v1155, 0.0
      %v1220 = vmax.f32 %v1156, 0.0
      %v1221 = vmax.f32 %v1157, 0.0
      %v1222 = vmax.f32 %v1158, 0.0
      %v1223 = vmax.f32 %v1159, 0.0
      %v1224 = vmax.f32 %v1160, 0.0
      %v1225 = vmax.f32 %v1161, 0.0
      %v1226 = vmax.f32 %v1162, 0.0
      %v1227 = vmax.f32 %v1163, 0.0
      %v1228 = vmax.f32 %v1164, 0.0
      %v1229 = vmax.f32 %v1165, 0.0
      %v1230 = vmax.f32 %v1166, 0.0
      %v1231 = vmax.f32 %v1167, 0.0
      %v1232 = vmax.f32 %v1168, 0.0
      %v1233 = vmax.f32 %v1169, 0.0
      %v1234 = vmax.f32 %v1170, 0.0
      %v1235 = vmax.f32 %v1171, 0.0
      %v1236 = vmax.f32 %v1172, 0.0
      %v1237 = vmax.f32 %v1173, 0.0
      %v1238 = vmax.f32 %v1174, 0.0
      %v1239 = vmax.f32 %v1175, 0.0
      %v1240 = vmax.f32 %v1176, 0.0
      %v1241 = vmax.f32 %v1177, 0.0
      %v1242 = vmax.f32 %v1178, 0.0
      %v1243 = vmax.f32 %v1179, 0.0
      %v1244 = vmax.f32 %v1180, 0.0
      %v1245 = vmax.f32 %v1181, 0.0
      %v1246 = vmax.f32 %v1182, 0.0
      %v1247 = vmax.f32 %v1183, 0.0
      %v1248 = vmax.f32 %v1184, 0.0
      %v1249 = vmax.f32 %v1185, 0.0
      %v1250 = vmax.f32 %v1186, 0.0
      %v1251 = vmax.f32 %v1187, 0.0
      %v1252 = vmax.f32 %v1188, 0.0
      %v1253 = vmax.f32 %v1189, 0.0
      %v1254 = vmax.f32 %v1190, 0.0
      %v1255 = vmax.f32 %v1191, 0.0
      %v1256 = vmax.f32 %v1192, 0.0
      %v1257 = vmax.f32 %v1193, 0.0
      %v1258 = vmax.f32 %v1194, 0.0
      %v1259 = vmax.f32 %v1195, 0.0
      %v1260 = vmax.f32 %v1196, 0.0
      %v1261 = vmax.f32 %v1197, 0.0
      %v1262 = vmax.f32 %v1198, 0.0
      %v1263 = vmax.f32 %v1199, 0.0
      %v1264 = vpack.c.bf16 %v1200, %v1200
      %v1265 = vpack.c.bf16 %v1201, %v1201
      %v1266 = vpack.c.bf16 %v1202, %v1202
      %v1267 = vpack.c.bf16 %v1203, %v1203
      %v1268 = vpack.c.bf16 %v1204, %v1204
      %v1269 = vpack.c.bf16 %v1205, %v1205
      %v1270 = vpack.c.bf16 %v1206, %v1206
      %v1271 = vpack.c.bf16 %v1207, %v1207
      %v1272 = vpack.c.bf16 %v1208, %v1208
      %v1273 = vpack.c.bf16 %v1209, %v1209
      %v1274 = vpack.c.bf16 %v1210, %v1210
      %v1275 = vpack.c.bf16 %v1211, %v1211
      %v1276 = vpack.c.bf16 %v1212, %v1212
      %v1277 = vpack.c.bf16 %v1213, %v1213
      %v1278 = vpack.c.bf16 %v1214, %v1214
      %v1279 = vpack.c.bf16 %v1215, %v1215
      %v1280 = vpack.c.bf16 %v1216, %v1216
      %v1281 = vpack.c.bf16 %v1217, %v1217
      %v1282 = vpack.c.bf16 %v1218, %v1218
      %v1283 = vpack.c.bf16 %v1219, %v1219
      %v1284 = vpack.c.bf16 %v1220, %v1220
      %v1285 = vpack.c.bf16 %v1221, %v1221
      %v1286 = vpack.c.bf16 %v1222, %v1222
      %v1287 = vpack.c.bf16 %v1223, %v1223
      %v1288 = vpack.c.bf16 %v1224, %v1224
      %v1289 = vpack.c.bf16 %v1225, %v1225
      %v1290 = vpack.c.bf16 %v1226, %v1226
      %v1291 = vpack.c.bf16 %v1227, %v1227
      %v1292 = vpack.c.bf16 %v1228, %v1228
      %v1293 = vpack.c.bf16 %v1229, %v1229
      %v1294 = vpack.c.bf16 %v1230, %v1230
      %v1295 = vpack.c.bf16 %v1231, %v1231
      %v1296 = vpack.c.bf16 %v1232, %v1232
      %v1297 = vpack.c.bf16 %v1233, %v1233
      %v1298 = vpack.c.bf16 %v1234, %v1234
      %v1299 = vpack.c.bf16 %v1235, %v1235
      %v1300 = vpack.c.bf16 %v1236, %v1236
      %v1301 = vpack.c.bf16 %v1237, %v1237
      %v1302 = vpack.c.bf16 %v1238, %v1238
      %v1303 = vpack.c.bf16 %v1239, %v1239
      %v1304 = vpack.c.bf16 %v1240, %v1240
      %v1305 = vpack.c.bf16 %v1241, %v1241
      %v1306 = vpack.c.bf16 %v1242, %v1242
      %v1307 = vpack.c.bf16 %v1243, %v1243
      %v1308 = vpack.c.bf16 %v1244, %v1244
      %v1309 = vpack.c.bf16 %v1245, %v1245
      %v1310 = vpack.c.bf16 %v1246, %v1246
      %v1311 = vpack.c.bf16 %v1247, %v1247
      %v1312 = vpack.c.bf16 %v1248, %v1248
      %v1313 = vpack.c.bf16 %v1249, %v1249
      %v1314 = vpack.c.bf16 %v1250, %v1250
      %v1315 = vpack.c.bf16 %v1251, %v1251
      %v1316 = vpack.c.bf16 %v1252, %v1252
      %v1317 = vpack.c.bf16 %v1253, %v1253
      %v1318 = vpack.c.bf16 %v1254, %v1254
      %v1319 = vpack.c.bf16 %v1255, %v1255
      %v1320 = vpack.c.bf16 %v1256, %v1256
      %v1321 = vpack.c.bf16 %v1257, %v1257
      %v1322 = vpack.c.bf16 %v1258, %v1258
      %v1323 = vpack.c.bf16 %v1259, %v1259
      %v1324 = vpack.c.bf16 %v1260, %v1260
      %v1325 = vpack.c.bf16 %v1261, %v1261
      %v1326 = vpack.c.bf16 %v1262, %v1262
      %v1327 = vpack.c.bf16 %v1263, %v1263
      %vm1328 = vcmask 125952
      %1329 = vst.msk [vmem:[%s202] sm:$0xf] %vm1328, %v1264
      %1330 = vst.msk [vmem:[%s202 + $0x4] sm:$0xf] %vm1328, %v1265
      %1331 = vst.msk [vmem:[%s202 + $0x8] sm:$0xf] %vm1328, %v1266
      %1332 = vst.msk [vmem:[%s202 + $0xc] sm:$0xf] %vm1328, %v1267
      %1333 = vst.msk [vmem:[%s202 + $0x10] sm:$0xf] %vm1328, %v1268
      %1334 = vst.msk [vmem:[%s202 + $0x14] sm:$0xf] %vm1328, %v1269
      %1335 = vst.msk [vmem:[%s202 + $0x18] sm:$0xf] %vm1328, %v1270
      %1336 = vst.msk [vmem:[%s202 + $0x1c] sm:$0xf] %vm1328, %v1271
      %1337 = vst.msk [vmem:[%s202 + $0x20] sm:$0xf] %vm1328, %v1272
      %1338 = vst.msk [vmem:[%s202 + $0x24] sm:$0xf] %vm1328, %v1273
      %1339 = vst.msk [vmem:[%s202 + $0x28] sm:$0xf] %vm1328, %v1274
      %1340 = vst.msk [vmem:[%s202 + $0x2c] sm:$0xf] %vm1328, %v1275
      %1341 = vst.msk [vmem:[%s202 + $0x30] sm:$0xf] %vm1328, %v1276
      %1342 = vst.msk [vmem:[%s202 + $0x34] sm:$0xf] %vm1328, %v1277
      %1343 = vst.msk [vmem:[%s202 + $0x38] sm:$0xf] %vm1328, %v1278
      %1344 = vst.msk [vmem:[%s202 + $0x3c] sm:$0xf] %vm1328, %v1279
      %1345 = vst.msk [vmem:[%s202 + $0x40] sm:$0xf] %vm1328, %v1280
      %1346 = vst.msk [vmem:[%s202 + $0x44] sm:$0xf] %vm1328, %v1281
      %1347 = vst.msk [vmem:[%s202 + $0x48] sm:$0xf] %vm1328, %v1282
      %1348 = vst.msk [vmem:[%s202 + $0x4c] sm:$0xf] %vm1328, %v1283
      %1349 = vst.msk [vmem:[%s202 + $0x50] sm:$0xf] %vm1328, %v1284
      %1350 = vst.msk [vmem:[%s202 + $0x54] sm:$0xf] %vm1328, %v1285
      %1351 = vst.msk [vmem:[%s202 + $0x58] sm:$0xf] %vm1328, %v1286
      %1352 = vst.msk [vmem:[%s202 + $0x5c] sm:$0xf] %vm1328, %v1287
      %1353 = vst.msk [vmem:[%s202 + $0x60] sm:$0xf] %vm1328, %v1288
      %1354 = vst.msk [vmem:[%s202 + $0x64] sm:$0xf] %vm1328, %v1289
      %1355 = vst.msk [vmem:[%s202 + $0x68] sm:$0xf] %vm1328, %v1290
      %1356 = vst.msk [vmem:[%s202 + $0x6c] sm:$0xf] %vm1328, %v1291
      %1357 = vst.msk [vmem:[%s202 + $0x70] sm:$0xf] %vm1328, %v1292
      %1358 = vst.msk [vmem:[%s202 + $0x74] sm:$0xf] %vm1328, %v1293
      %1359 = vst.msk [vmem:[%s202 + $0x78] sm:$0xf] %vm1328, %v1294
      %1360 = vst.msk [vmem:[%s202 + $0x7c] sm:$0xf] %vm1328, %v1295
      %1361 = vst.msk [vmem:[%s202 + $0x80] sm:$0xf] %vm1328, %v1296
      %1362 = vst.msk [vmem:[%s202 + $0x84] sm:$0xf] %vm1328, %v1297
      %1363 = vst.msk [vmem:[%s202 + $0x88] sm:$0xf] %vm1328, %v1298
      %1364 = vst.msk [vmem:[%s202 + $0x8c] sm:$0xf] %vm1328, %v1299
      %1365 = vst.msk [vmem:[%s202 + $0x90] sm:$0xf] %vm1328, %v1300
      %1366 = vst.msk [vmem:[%s202 + $0x94] sm:$0xf] %vm1328, %v1301
      %1367 = vst.msk [vmem:[%s202 + $0x98] sm:$0xf] %vm1328, %v1302
      %1368 = vst.msk [vmem:[%s202 + $0x9c] sm:$0xf] %vm1328, %v1303
      %1369 = vst.msk [vmem:[%s202 + $0xa0] sm:$0xf] %vm1328, %v1304
      %1370 = vst.msk [vmem:[%s202 + $0xa4] sm:$0xf] %vm1328, %v1305
      %1371 = vst.msk [vmem:[%s202 + $0xa8] sm:$0xf] %vm1328, %v1306
      %1372 = vst.msk [vmem:[%s202 + $0xac] sm:$0xf] %vm1328, %v1307
      %1373 = vst.msk [vmem:[%s202 + $0xb0] sm:$0xf] %vm1328, %v1308
      %1374 = vst.msk [vmem:[%s202 + $0xb4] sm:$0xf] %vm1328, %v1309
      %1375 = vst.msk [vmem:[%s202 + $0xb8] sm:$0xf] %vm1328, %v1310
      %1376 = vst.msk [vmem:[%s202 + $0xbc] sm:$0xf] %vm1328, %v1311
      %1377 = vst.msk [vmem:[%s202 + $0xc0] sm:$0xf] %vm1328, %v1312
      %1378 = vst.msk [vmem:[%s202 + $0xc4] sm:$0xf] %vm1328, %v1313
      %1379 = vst.msk [vmem:[%s202 + $0xc8] sm:$0xf] %vm1328, %v1314
      %1380 = vst.msk [vmem:[%s202 + $0xcc] sm:$0xf] %vm1328, %v1315
      %1381 = vst.msk [vmem:[%s202 + $0xd0] sm:$0xf] %vm1328, %v1316
      %1382 = vst.msk [vmem:[%s202 + $0xd4] sm:$0xf] %vm1328, %v1317
      %1383 = vst.msk [vmem:[%s202 + $0xd8] sm:$0xf] %vm1328, %v1318
      %1384 = vst.msk [vmem:[%s202 + $0xdc] sm:$0xf] %vm1328, %v1319
      %1385 = vst.msk [vmem:[%s202 + $0xe0] sm:$0xf] %vm1328, %v1320
      %1386 = vst.msk [vmem:[%s202 + $0xe4] sm:$0xf] %vm1328, %v1321
      %1387 = vst.msk [vmem:[%s202 + $0xe8] sm:$0xf] %vm1328, %v1322
      %1388 = vst.msk [vmem:[%s202 + $0xec] sm:$0xf] %vm1328, %v1323
      %1389 = vst.msk [vmem:[%s202 + $0xf0] sm:$0xf] %vm1328, %v1324
      %1390 = vst.msk [vmem:[%s202 + $0xf4] sm:$0xf] %vm1328, %v1325
      %1391 = vst.msk [vmem:[%s202 + $0xf8] sm:$0xf] %vm1328, %v1326
      %1392 = vst.msk [vmem:[%s202 + $0xfc] sm:$0xf] %vm1328, %v1327
      %s1393 = smul.u32 64, %s15
      %p1394 = scmp.lt.s32.totalorder %s1393, 255
      %s1395 = scalar_select %p1394, %s1393, 255
      %s1396 = smul.addr %s1395, 4
      %s1397 = scalar_lea.vmem %s4, %s1396
      // Predicated region
      $region37: #{_lambda_.23} parent=35 // pred_check
        %p1398 = pneg %p122
      $region38: #{_lambda_.23} parent=35 // pred_check_branch
        %1400 = sbr.rel (%p1398) target = $region40
      $region39: #{_lambda_.23} parent=35 // pred_region
        %s1401 = smul.u32 64, %s15
      $region40: #{_lambda_.23} parent=35 // pred_fallthru
        _
    $region36: #{_lambda_.23} parent=5 // pred_fallthru
      _
    %p1402 = scmp.le.s32.totalorder 2, %s10
    // Predicated region
    $region41: #{_lambda_.23} parent=5 // pred_check
      %p1403 = pneg %p1402
    $region42: #{_lambda_.23} parent=5 // pred_check_branch
      %1405 = sbr.rel (%p1403) target = $region44
    $region43: #{_lambda_.23} parent=5 // pred_region
      %s1406 = ssub.s32 %s10, 2
      // Predicated region
      $region45: #{_lambda_.23} parent=43 // pred_check
        %p1407 = pneg %p128
      $region46: #{_lambda_.23} parent=43 // pred_check_branch
        %1409 = sbr.rel (%p1407) target = $region48
      $region47: #{_lambda_.23} parent=43 // pred_region
        %s1410 = smul.u32 64, %s16
        %p1411 = scmp.lt.s32.totalorder %s1410, 255
        %s1412 = scalar_select %p1411, %s1410, 255
        %s1413 = smul.addr %s1412, 4
        %s1414 = scalar_lea.vmem %s4, %s1413
      $region48: #{_lambda_.23} parent=43 // pred_fallthru
        _
    $region44: #{_lambda_.23} parent=5 // pred_fallthru
      _
  $region6: #{_lambda_.23} parent=0 // loop_footer
    %s14 = sadd.s32 1, %s10
  $region7: #{_lambda_.23} parent=0 // loop_footer_branch
    %9 = sbr.rel target = $region3
  $region8: #{_lambda_.23} parent=0 // loop_exit
    _

// kernel: _lambda_.24
$region0: #{_lambda_.24}
  #allocation0 [shape = 'u32[]', space=smem, size = 0x4, offset = 0x4, fixed_abs, tag = 'smem constant byte address 0x4 - core index']
  #allocation1 [shape = 'u32[72,128]{1,0:T(1,128)}', space=vmem, size = 0x9000, scoped, tag = 'internal scratch']
  %s0 = inlined_call_operand.vmem [shape: bf16[2048,144], index: 0, kind: input, shape index: {}]
  %s1 = inlined_call_operand.vmem [shape: bf16[144,16], index: 1, kind: input, shape index: {}]
  %s2 = inlined_call_operand.vmem [shape: f32[1,16], index: 2, kind: input, shape index: {}]
  %s3 = inlined_call_operand.vmem [shape: f32[1,16], index: 3, kind: input, shape index: {}]
  %s4 = inlined_call_operand.vmem [shape: bf16[2048,16], index: 4, kind: input, shape index: {}]
  %s5 = inlined_call_operand.vmem [shape: bf16[2048,16], index: 5, kind: output, shape index: {}]
  %s6 = sld [smem:[#allocation0]]
  $region53: #{_lambda_.24} parent=0
    _
  %s8 = ssub.s32 1, %s6
  %s9 = scalar_select 0, %s8, %s6
  loop: start=0, step=1, limit=6
  $region2: #{_lambda_.24} parent=0 // loop_pre_header
    _
  $region3: #{_lambda_.24} parent=0 // loop_header
    %s11 = sphi 0, %s15
    %p12 = scmp.ge.s32.totalorder %s11, 6
    %s21 = sphi 0, %s23
    %s24 = sphi 0, %s21
    %s25 = sphi 0, %s24
    %s41 = sphi 0, %s25
    %s45 = sphi 0, %s45
    %s47 = sphi 0, %s45
    %s48 = sphi 0, %s47
    %s62 = sphi 0, %s48
    %s66 = sphi 0, %s66
    %s68 = sphi 0, %s66
    %s69 = sphi 0, %s68
    %s83 = sphi 0, %s69
    %s87 = sphi 0, %s87
    %s89 = sphi 0, %s87
    %s90 = sphi 0, %s89
    %s104 = sphi 0, %s90
    %s110 = sphi 0, %s112
    %s113 = sphi 0, %s110
    %s114 = sphi 0, %s113
    %s130 = sphi 0, %s114
    %s136 = sphi 0, %s138
    %s139 = sphi 0, %s136
    %s140 = sphi 0, %s139
    %s156 = sphi 0, %s140
  $region4: #{_lambda_.24} parent=0 // loop_header_branch
    %14 = sbr.rel (%p12) target = $region8
  $region5: #{_lambda_.24} parent=0 // loop_body
    %s16 = ssub.s32 %s11, 1
    %s17 = ssub.s32 %s11, 2
    %s18 = sadd.s32 %s11, 1
    %s19 = ssub.s32 %s11, %s18
    %p20 = scmp.eq.s32.totalorder %s19, 0
    %s22 = sadd.s32 %s21, 1
    %s23 = scalar_select %p20, %s21, %s22
    %p26 = pneg %p20
    %p27 = scmp.eq.s32.totalorder %s11, 3
    %p28 = por %p26, %p27
    %p29 = scmp.ne.s32.totalorder %s21, %s24
    %p30 = scmp.eq.s32.totalorder %s11, 0
    %p31 = por %p29, %p30
    %p32 = scmp.ne.s32.totalorder %s21, %s24
    %p33 = scmp.eq.s32.totalorder %s16, 3
    %p34 = por %p32, %p33
    %p35 = scmp.ne.s32.totalorder %s24, %s25
    %p36 = scmp.eq.s32.totalorder %s16, 0
    %p37 = por %p35, %p36
    %p38 = scmp.ne.s32.totalorder %s24, %s25
    %p39 = scmp.eq.s32.totalorder %s17, 3
    %p40 = por %p38, %p39
    %p42 = scmp.ne.s32.totalorder %s25, %s41
    %p43 = scmp.eq.s32.totalorder %s17, 0
    %p44 = por %p42, %p43
    %s46 = sadd.s32 %s45, 1
    %p49 = scmp.eq.s32.totalorder %s11, 3
    %p50 = scmp.ne.s32.totalorder %s45, %s47
    %p51 = scmp.eq.s32.totalorder %s11, 0
    %p52 = por %p50, %p51
    %p53 = scmp.ne.s32.totalorder %s45, %s47
    %p54 = scmp.eq.s32.totalorder %s16, 3
    %p55 = por %p53, %p54
    %p56 = scmp.ne.s32.totalorder %s47, %s48
    %p57 = scmp.eq.s32.totalorder %s16, 0
    %p58 = por %p56, %p57
    %p59 = scmp.ne.s32.totalorder %s47, %s48
    %p60 = scmp.eq.s32.totalorder %s17, 3
    %p61 = por %p59, %p60
    %p63 = scmp.ne.s32.totalorder %s48, %s62
    %p64 = scmp.eq.s32.totalorder %s17, 0
    %p65 = por %p63, %p64
    %s67 = sadd.s32 %s66, 1
    %p70 = scmp.eq.s32.totalorder %s11, 3
    %p71 = scmp.ne.s32.totalorder %s66, %s68
    %p72 = scmp.eq.s32.totalorder %s11, 0
    %p73 = por %p71, %p72
    %p74 = scmp.ne.s32.totalorder %s66, %s68
    %p75 = scmp.eq.s32.totalorder %s16, 3
    %p76 = por %p74, %p75
    %p77 = scmp.ne.s32.totalorder %s68, %s69
    %p78 = scmp.eq.s32.totalorder %s16, 0
    %p79 = por %p77, %p78
    %p80 = scmp.ne.s32.totalorder %s68, %s69
    %p81 = scmp.eq.s32.totalorder %s17, 3
    %p82 = por %p80, %p81
    %p84 = scmp.ne.s32.totalorder %s69, %s83
    %p85 = scmp.eq.s32.totalorder %s17, 0
    %p86 = por %p84, %p85
    %s88 = sadd.s32 %s87, 1
    %p91 = scmp.eq.s32.totalorder %s11, 3
    %p92 = scmp.ne.s32.totalorder %s87, %s89
    %p93 = scmp.eq.s32.totalorder %s11, 0
    %p94 = por %p92, %p93
    %p95 = scmp.ne.s32.totalorder %s87, %s89
    %p96 = scmp.eq.s32.totalorder %s16, 3
    %p97 = por %p95, %p96
    %p98 = scmp.ne.s32.totalorder %s89, %s90
    %p99 = scmp.eq.s32.totalorder %s16, 0
    %p100 = por %p98, %p99
    %p101 = scmp.ne.s32.totalorder %s89, %s90
    %p102 = scmp.eq.s32.totalorder %s17, 3
    %p103 = por %p101, %p102
    %p105 = scmp.ne.s32.totalorder %s90, %s104
    %p106 = scmp.eq.s32.totalorder %s17, 0
    %p107 = por %p105, %p106
    %s108 = ssub.s32 %s11, %s18
    %p109 = scmp.eq.s32.totalorder %s108, 0
    %s111 = sadd.s32 %s110, 1
    %s112 = scalar_select %p109, %s110, %s111
    %p115 = pneg %p109
    %p116 = scmp.eq.s32.totalorder %s11, 3
    %p117 = por %p115, %p116
    %p118 = scmp.ne.s32.totalorder %s110, %s113
    %p119 = scmp.eq.s32.totalorder %s11, 0
    %p120 = por %p118, %p119
    %p121 = scmp.ne.s32.totalorder %s110, %s113
    %p122 = scmp.eq.s32.totalorder %s16, 3
    %p123 = por %p121, %p122
    %p124 = scmp.ne.s32.totalorder %s113, %s114
    %p125 = scmp.eq.s32.totalorder %s16, 0
    %p126 = por %p124, %p125
    %p127 = scmp.ne.s32.totalorder %s113, %s114
    %p128 = scmp.eq.s32.totalorder %s17, 3
    %p129 = por %p127, %p128
    %p131 = scmp.ne.s32.totalorder %s114, %s130
    %p132 = scmp.eq.s32.totalorder %s17, 0
    %p133 = por %p131, %p132
    %s134 = ssub.s32 %s11, %s18
    %p135 = scmp.eq.s32.totalorder %s134, 0
    %s137 = sadd.s32 %s136, 1
    %s138 = scalar_select %p135, %s136, %s137
    %p141 = pneg %p135
    %p142 = scmp.eq.s32.totalorder %s11, 3
    %p143 = por %p141, %p142
    %p144 = scmp.ne.s32.totalorder %s136, %s139
    %p145 = scmp.eq.s32.totalorder %s11, 0
    %p146 = por %p144, %p145
    %p147 = scmp.ne.s32.totalorder %s136, %s139
    %p148 = scmp.eq.s32.totalorder %s16, 3
    %p149 = por %p147, %p148
    %p150 = scmp.ne.s32.totalorder %s139, %s140
    %p151 = scmp.eq.s32.totalorder %s16, 0
    %p152 = por %p150, %p151
    %p153 = scmp.ne.s32.totalorder %s139, %s140
    %p154 = scmp.eq.s32.totalorder %s17, 3
    %p155 = por %p153, %p154
    %p157 = scmp.ne.s32.totalorder %s140, %s156
    %p158 = scmp.eq.s32.totalorder %s17, 0
    %p159 = por %p157, %p158
    %p160 = scmp.le.s32.totalorder 1, %s11
    %p161 = scmp.lt.s32.totalorder %s11, 5
    %p162 = pnand %p160, %p161
    %p163 = pneg %p162
    // Predicated region
    $region9: #{_lambda_.24} parent=5 // pred_check
      _
    $region10: #{_lambda_.24} parent=5 // pred_check_branch
      %165 = sbr.rel (%p162) target = $region12
    $region11: #{_lambda_.24} parent=5 // pred_region
      %s166 = ssub.s32 %s11, 1
      // Predicated region
      $region13: #{_lambda_.24} parent=11 // pred_check
        %p167 = pneg %p58
      $region14: #{_lambda_.24} parent=11 // pred_check_branch
        %169 = sbr.rel (%p167) target = $region16
      $region15: #{_lambda_.24} parent=11 // pred_region
        _
      $region16: #{_lambda_.24} parent=11 // pred_fallthru
        _
      // Predicated region
      $region17: #{_lambda_.24} parent=11 // pred_check
        %p170 = pneg %p79
      $region18: #{_lambda_.24} parent=11 // pred_check_branch
        %172 = sbr.rel (%p170) target = $region20
      $region19: #{_lambda_.24} parent=11 // pred_region
        _
      $region20: #{_lambda_.24} parent=11 // pred_fallthru
        _
      // Predicated region
      $region21: #{_lambda_.24} parent=11 // pred_check
        %p173 = pneg %p100
      $region22: #{_lambda_.24} parent=11 // pred_check_branch
        %175 = sbr.rel (%p173) target = $region24
      $region23: #{_lambda_.24} parent=11 // pred_region
        _
      $region24: #{_lambda_.24} parent=11 // pred_fallthru
        _
    $region12: #{_lambda_.24} parent=5 // pred_fallthru
      _
    %p176 = scmp.lt.s32.totalorder %s11, 4
    // Predicated region
    $region25: #{_lambda_.24} parent=5 // pred_check
      %p177 = pneg %p176
    $region26: #{_lambda_.24} parent=5 // pred_check_branch
      %179 = sbr.rel (%p177) target = $region28
    $region27: #{_lambda_.24} parent=5 // pred_region
      // Predicated region
      $region29: #{_lambda_.24} parent=27 // pred_check
        %p180 = pneg %p31
      $region30: #{_lambda_.24} parent=27 // pred_check_branch
        %182 = sbr.rel (%p180) target = $region32
      $region31: #{_lambda_.24} parent=27 // pred_region
        %s183 = smul.u32 64, %s11
        %p184 = scmp.lt.s32.totalorder %s183, 255
        %s185 = scalar_select %p184, %s183, 255
        %s186 = smul.addr %s185, 2
        %s187 = smul.addr %s186, 4
        %s188 = scalar_lea.vmem %s0, %s187
        %s189 = smul.u32 64, %s11
      $region32: #{_lambda_.24} parent=27 // pred_fallthru
        _
      // Predicated region
      $region33: #{_lambda_.24} parent=27 // pred_check
        %p190 = pneg %p120
      $region34: #{_lambda_.24} parent=27 // pred_check_branch
        %192 = sbr.rel (%p190) target = $region36
      $region35: #{_lambda_.24} parent=27 // pred_region
        %s193 = smul.u32 64, %s11
        %p194 = scmp.lt.s32.totalorder %s193, 255
        %s195 = scalar_select %p194, %s193, 255
        %s196 = smul.addr %s195, 4
        %s197 = scalar_lea.vmem %s4, %s196
        %s198 = smul.u32 64, %s11
      $region36: #{_lambda_.24} parent=27 // pred_fallthru
        _
    $region28: #{_lambda_.24} parent=5 // pred_fallthru
      _
    %p199 = scmp.le.s32.totalorder 1, %s11
    %p200 = scmp.lt.s32.totalorder %s11, 5
    %p201 = pnand %p199, %p200
    %p202 = pneg %p201
    // Predicated region
    $region37: #{_lambda_.24} parent=5 // pred_check
      _
    $region38: #{_lambda_.24} parent=5 // pred_check_branch
      %204 = sbr.rel (%p201) target = $region40
    $region39: #{_lambda_.24} parent=5 // pred_region
      %s205 = ssub.s32 %s11, 1
      %s206 = smul.u32 64, %s16
      %p207 = scmp.lt.s32.totalorder %s206, 255
      %s208 = scalar_select %p207, %s206, 255
      %s209 = smul.addr %s208, 2
      %s210 = smul.addr %s209, 4
      %s211 = scalar_lea.vmem %s0, %s210
      %p212 = pneg %p37
      %p213 = pneg %p34
      %p214 = pneg %p58
      %p215 = pneg %p55
      %p216 = pneg %p79
      %p217 = pneg %p76
      %p218 = pneg %p100
      %p219 = pneg %p97
      %s220 = smul.u32 64, %s16
      %p221 = scmp.lt.s32.totalorder %s220, 255
      %s222 = scalar_select %p221, %s220, 255
      %s223 = smul.addr %s222, 4
      %s224 = scalar_lea.vmem %s4, %s223
      %p225 = pneg %p126
      %p226 = pneg %p123
      %p227 = pneg %p152
      %p228 = pneg %p149
      %s229 = smul.u32 64, %s16
      %p230 = scmp.lt.s32.totalorder %s229, 255
      %s231 = scalar_select %p230, %s229, 255
      %s232 = smul.addr %s231, 4
      %s233 = scalar_lea.vmem %s5, %s232
      %s234 = smul.u32 64, %s16
      %p235 = scmp.lt.s32.totalorder %s234, 255
      %s236 = scalar_select %p235, %s234, 255
      %s237 = smul.addr %s236, 2
      %s238 = smul.addr %s237, 4
      %s239 = scalar_lea.vmem %s0, %s238
      %s240 = smul.u32 64, %s16
      %s241 = smul.u32 64, %s16
      %p242 = scmp.lt.s32.totalorder %s241, 255
      %s243 = scalar_select %p242, %s241, 255
      %s244 = smul.addr %s243, 4
      %s245 = scalar_lea.vmem %s4, %s244
      %s246 = smul.u32 64, %s16
      %s247 = smul.u32 64, %s16
      %p248 = scmp.lt.s32.totalorder %s247, 255
      %s249 = scalar_select %p248, %s247, 255
      %s250 = smul.addr %s249, 4
      %s251 = scalar_lea.vmem %s5, %s250
      %s252 = smul.u32 64, %s16
      %v254 = vld [vmem:[%s239] sm:$0xff]
      %v255 = vld [vmem:[%s239 + $0x8] sm:$0xff]
      %v256 = vld [vmem:[%s239 + $0x10] sm:$0xff]
      %v257 = vld [vmem:[%s239 + $0x18] sm:$0xff]
      %v258 = vld [vmem:[%s239 + $0x20] sm:$0xff]
      %v259 = vld [vmem:[%s239 + $0x28] sm:$0xff]
      %v260 = vld [vmem:[%s239 + $0x30] sm:$0xff]
      %v261 = vld [vmem:[%s239 + $0x38] sm:$0xff]
      %v262 = vld [vmem:[%s239 + $0x40] sm:$0xff]
      %v263 = vld [vmem:[%s239 + $0x48] sm:$0xff]
      %v264 = vld [vmem:[%s239 + $0x50] sm:$0xff]
      %v265 = vld [vmem:[%s239 + $0x58] sm:$0xff]
      %v266 = vld [vmem:[%s239 + $0x60] sm:$0xff]
      %v267 = vld [vmem:[%s239 + $0x68] sm:$0xff]
      %v268 = vld [vmem:[%s239 + $0x70] sm:$0xff]
      %v269 = vld [vmem:[%s239 + $0x78] sm:$0xff]
      %v270 = vld [vmem:[%s239 + $0x80] sm:$0xff]
      %v271 = vld [vmem:[%s239 + $0x88] sm:$0xff]
      %v272 = vld [vmem:[%s239 + $0x90] sm:$0xff]
      %v273 = vld [vmem:[%s239 + $0x98] sm:$0xff]
      %v274 = vld [vmem:[%s239 + $0xa0] sm:$0xff]
      %v275 = vld [vmem:[%s239 + $0xa8] sm:$0xff]
      %v276 = vld [vmem:[%s239 + $0xb0] sm:$0xff]
      %v277 = vld [vmem:[%s239 + $0xb8] sm:$0xff]
      %v278 = vld [vmem:[%s239 + $0xc0] sm:$0xff]
      %v279 = vld [vmem:[%s239 + $0xc8] sm:$0xff]
      %v280 = vld [vmem:[%s239 + $0xd0] sm:$0xff]
      %v281 = vld [vmem:[%s239 + $0xd8] sm:$0xff]
      %v282 = vld [vmem:[%s239 + $0xe0] sm:$0xff]
      %v283 = vld [vmem:[%s239 + $0xe8] sm:$0xff]
      %v284 = vld [vmem:[%s239 + $0xf0] sm:$0xff]
      %v285 = vld [vmem:[%s239 + $0xf8] sm:$0xff]
      %v286 = vld [vmem:[%s239 + $0x100] sm:$0xff]
      %v287 = vld [vmem:[%s239 + $0x108] sm:$0xff]
      %v288 = vld [vmem:[%s239 + $0x110] sm:$0xff]
      %v289 = vld [vmem:[%s239 + $0x118] sm:$0xff]
      %v290 = vld [vmem:[%s239 + $0x120] sm:$0xff]
      %v291 = vld [vmem:[%s239 + $0x128] sm:$0xff]
      %v292 = vld [vmem:[%s239 + $0x130] sm:$0xff]
      %v293 = vld [vmem:[%s239 + $0x138] sm:$0xff]
      %v294 = vld [vmem:[%s239 + $0x140] sm:$0xff]
      %v295 = vld [vmem:[%s239 + $0x148] sm:$0xff]
      %v296 = vld [vmem:[%s239 + $0x150] sm:$0xff]
      %v297 = vld [vmem:[%s239 + $0x158] sm:$0xff]
      %v298 = vld [vmem:[%s239 + $0x160] sm:$0xff]
      %v299 = vld [vmem:[%s239 + $0x168] sm:$0xff]
      %v300 = vld [vmem:[%s239 + $0x170] sm:$0xff]
      %v301 = vld [vmem:[%s239 + $0x178] sm:$0xff]
      %v302 = vld [vmem:[%s239 + $0x180] sm:$0xff]
      %v303 = vld [vmem:[%s239 + $0x188] sm:$0xff]
      %v304 = vld [vmem:[%s239 + $0x190] sm:$0xff]
      %v305 = vld [vmem:[%s239 + $0x198] sm:$0xff]
      %v306 = vld [vmem:[%s239 + $0x1a0] sm:$0xff]
      %v307 = vld [vmem:[%s239 + $0x1a8] sm:$0xff]
      %v308 = vld [vmem:[%s239 + $0x1b0] sm:$0xff]
      %v309 = vld [vmem:[%s239 + $0x1b8] sm:$0xff]
      %v310 = vld [vmem:[%s239 + $0x1c0] sm:$0xff]
      %v311 = vld [vmem:[%s239 + $0x1c8] sm:$0xff]
      %v312 = vld [vmem:[%s239 + $0x1d0] sm:$0xff]
      %v313 = vld [vmem:[%s239 + $0x1d8] sm:$0xff]
      %v314 = vld [vmem:[%s239 + $0x1e0] sm:$0xff]
      %v315 = vld [vmem:[%s239 + $0x1e8] sm:$0xff]
      %v316 = vld [vmem:[%s239 + $0x1f0] sm:$0xff]
      %v317 = vld [vmem:[%s239 + $0x1f8] sm:$0xff]
      %v318 = vld [vmem:[%s1] sm:$0xf]
      %v319 = vld [vmem:[%s1 + $0x4] sm:$0xf]
      %v320 = vld [vmem:[%s1 + $0x8] sm:$0xf]
      %v321 = vld [vmem:[%s1 + $0xc] sm:$0xf]
      %v322 = vld [vmem:[%s1 + $0x10] sm:$0xf]
      %v323 = vld [vmem:[%s1 + $0x14] sm:$0xf]
      %v324 = vld [vmem:[%s1 + $0x18] sm:$0xf]
      %v325 = vld [vmem:[%s1 + $0x1c] sm:$0xf]
      %v326 = vld [vmem:[%s1 + $0x20] sm:$0xf]
      %v327 = vld [vmem:[%s1 + $0x24] sm:$0xf]
      %v328 = vld [vmem:[%s1 + $0x28] sm:$0xf]
      %v329 = vld [vmem:[%s1 + $0x2c] sm:$0xf]
      %v330 = vld [vmem:[%s1 + $0x30] sm:$0xf]
      %v331 = vld [vmem:[%s1 + $0x34] sm:$0xf]
      %v332 = vld [vmem:[%s1 + $0x38] sm:$0xf]
      %v333 = vld [vmem:[%s1 + $0x3c] sm:$0xf]
      %v334 = vld [vmem:[%s1 + $0x40] sm:$0xf]
      %v335 = vld [vmem:[%s1 + $0x44] sm:$0xf]
      %v400 = vunpack.c.l.b16 %v254
      %v401 = vunpack.c.h.b16 %v254
      %v402 = vunpack.c.l.b16 %v255
      %v403 = vunpack.c.h.b16 %v255
      %v404 = vunpack.c.l.b16 %v256
      %v405 = vunpack.c.h.b16 %v256
      %v406 = vunpack.c.l.b16 %v257
      %v407 = vunpack.c.h.b16 %v257
      %v408 = vunpack.c.l.b16 %v258
      %v409 = vunpack.c.h.b16 %v258
      %v410 = vunpack.c.l.b16 %v259
      %v411 = vunpack.c.h.b16 %v259
      %v412 = vunpack.c.l.b16 %v260
      %v413 = vunpack.c.h.b16 %v260
      %v414 = vunpack.c.l.b16 %v261
      %v415 = vunpack.c.h.b16 %v261
      %v416 = vunpack.c.l.b16 %v262
      %v417 = vunpack.c.h.b16 %v262
      %v418 = vunpack.c.l.b16 %v263
      %v419 = vunpack.c.h.b16 %v263
      %v420 = vunpack.c.l.b16 %v264
      %v421 = vunpack.c.h.b16 %v264
      %v422 = vunpack.c.l.b16 %v265
      %v423 = vunpack.c.h.b16 %v265
      %v424 = vunpack.c.l.b16 %v266
      %v425 = vunpack.c.h.b16 %v266
      %v426 = vunpack.c.l.b16 %v267
      %v427 = vunpack.c.h.b16 %v267
      %v428 = vunpack.c.l.b16 %v268
      %v429 = vunpack.c.h.b16 %v268
      %v430 = vunpack.c.l.b16 %v269
      %v431 = vunpack.c.h.b16 %v269
      %v432 = vunpack.c.l.b16 %v270
      %v433 = vunpack.c.h.b16 %v270
      %v434 = vunpack.c.l.b16 %v271
      %v435 = vunpack.c.h.b16 %v271
      %v436 = vunpack.c.l.b16 %v272
      %v437 = vunpack.c.h.b16 %v272
      %v438 = vunpack.c.l.b16 %v273
      %v439 = vunpack.c.h.b16 %v273
      %v440 = vunpack.c.l.b16 %v274
      %v441 = vunpack.c.h.b16 %v274
      %v442 = vunpack.c.l.b16 %v275
      %v443 = vunpack.c.h.b16 %v275
      %v444 = vunpack.c.l.b16 %v276
      %v445 = vunpack.c.h.b16 %v276
      %v446 = vunpack.c.l.b16 %v277
      %v447 = vunpack.c.h.b16 %v277
      %v448 = vunpack.c.l.b16 %v278
      %v449 = vunpack.c.h.b16 %v278
      %v450 = vunpack.c.l.b16 %v279
      %v451 = vunpack.c.h.b16 %v279
      %v452 = vunpack.c.l.b16 %v280
      %v453 = vunpack.c.h.b16 %v280
      %v454 = vunpack.c.l.b16 %v281
      %v455 = vunpack.c.h.b16 %v281
      %v456 = vunpack.c.l.b16 %v282
      %v457 = vunpack.c.h.b16 %v282
      %v458 = vunpack.c.l.b16 %v283
      %v459 = vunpack.c.h.b16 %v283
      %v460 = vunpack.c.l.b16 %v284
      %v461 = vunpack.c.h.b16 %v284
      %v462 = vunpack.c.l.b16 %v285
      %v463 = vunpack.c.h.b16 %v285
      %v464 = vunpack.c.l.b16 %v286
      %v465 = vunpack.c.h.b16 %v286
      %v466 = vunpack.c.l.b16 %v287
      %v467 = vunpack.c.h.b16 %v287
      %v468 = vunpack.c.l.b16 %v288
      %v469 = vunpack.c.h.b16 %v288
      %v470 = vunpack.c.l.b16 %v289
      %v471 = vunpack.c.h.b16 %v289
      %v472 = vunpack.c.l.b16 %v290
      %v473 = vunpack.c.h.b16 %v290
      %v474 = vunpack.c.l.b16 %v291
      %v475 = vunpack.c.h.b16 %v291
      %v476 = vunpack.c.l.b16 %v292
      %v477 = vunpack.c.h.b16 %v292
      %v478 = vunpack.c.l.b16 %v293
      %v479 = vunpack.c.h.b16 %v293
      %v480 = vunpack.c.l.b16 %v294
      %v481 = vunpack.c.h.b16 %v294
      %v482 = vunpack.c.l.b16 %v295
      %v483 = vunpack.c.h.b16 %v295
      %v484 = vunpack.c.l.b16 %v296
      %v485 = vunpack.c.h.b16 %v296
      %v486 = vunpack.c.l.b16 %v297
      %v487 = vunpack.c.h.b16 %v297
      %v488 = vunpack.c.l.b16 %v298
      %v489 = vunpack.c.h.b16 %v298
      %v490 = vunpack.c.l.b16 %v299
      %v491 = vunpack.c.h.b16 %v299
      %v492 = vunpack.c.l.b16 %v300
      %v493 = vunpack.c.h.b16 %v300
      %v494 = vunpack.c.l.b16 %v301
      %v495 = vunpack.c.h.b16 %v301
      %v496 = vunpack.c.l.b16 %v302
      %v497 = vunpack.c.h.b16 %v302
      %v498 = vunpack.c.l.b16 %v303
      %v499 = vunpack.c.h.b16 %v303
      %v500 = vunpack.c.l.b16 %v304
      %v501 = vunpack.c.h.b16 %v304
      %v502 = vunpack.c.l.b16 %v305
      %v503 = vunpack.c.h.b16 %v305
      %v504 = vunpack.c.l.b16 %v306
      %v505 = vunpack.c.h.b16 %v306
      %v506 = vunpack.c.l.b16 %v307
      %v507 = vunpack.c.h.b16 %v307
      %v508 = vunpack.c.l.b16 %v308
      %v509 = vunpack.c.h.b16 %v308
      %v510 = vunpack.c.l.b16 %v309
      %v511 = vunpack.c.h.b16 %v309
      %v512 = vunpack.c.l.b16 %v310
      %v513 = vunpack.c.h.b16 %v310
      %v514 = vunpack.c.l.b16 %v311
      %v515 = vunpack.c.h.b16 %v311
      %v516 = vunpack.c.l.b16 %v312
      %v517 = vunpack.c.h.b16 %v312
      %v518 = vunpack.c.l.b16 %v313
      %v519 = vunpack.c.h.b16 %v313
      %v520 = vunpack.c.l.b16 %v314
      %v521 = vunpack.c.h.b16 %v314
      %v522 = vunpack.c.l.b16 %v315
      %v523 = vunpack.c.h.b16 %v315
      %v524 = vunpack.c.l.b16 %v316
      %v525 = vunpack.c.h.b16 %v316
      %v526 = vunpack.c.l.b16 %v317
      %v527 = vunpack.c.h.b16 %v317
      %v528 = vpack.c.b16 %v402, %v400
      %v529 = vpack.c.b16 %v403, %v401
      %v530 = vpack.c.b16 %v406, %v404
      %v531 = vpack.c.b16 %v407, %v405
      %v532 = vpack.c.b16 %v410, %v408
      %v533 = vpack.c.b16 %v411, %v409
      %v534 = vpack.c.b16 %v414, %v412
      %v535 = vpack.c.b16 %v415, %v413
      %v536 = vpack.c.b16 %v418, %v416
      %v537 = vpack.c.b16 %v419, %v417
      %v538 = vpack.c.b16 %v422, %v420
      %v539 = vpack.c.b16 %v423, %v421
      %v540 = vpack.c.b16 %v426, %v424
      %v541 = vpack.c.b16 %v427, %v425
      %v542 = vpack.c.b16 %v430, %v428
      %v543 = vpack.c.b16 %v431, %v429
      %v544 = vpack.c.b16 %v434, %v432
      %v545 = vpack.c.b16 %v435, %v433
      %v546 = vpack.c.b16 %v438, %v436
      %v547 = vpack.c.b16 %v439, %v437
      %v548 = vpack.c.b16 %v442, %v440
      %v549 = vpack.c.b16 %v443, %v441
      %v550 = vpack.c.b16 %v446, %v444
      %v551 = vpack.c.b16 %v447, %v445
      %v552 = vpack.c.b16 %v450, %v448
      %v553 = vpack.c.b16 %v451, %v449
      %v554 = vpack.c.b16 %v454, %v452
      %v555 = vpack.c.b16 %v455, %v453
      %v556 = vpack.c.b16 %v458, %v456
      %v557 = vpack.c.b16 %v459, %v457
      %v558 = vpack.c.b16 %v462, %v460
      %v559 = vpack.c.b16 %v463, %v461
      %v560 = vpack.c.b16 %v466, %v464
      %v561 = vpack.c.b16 %v467, %v465
      %v562 = vpack.c.b16 %v470, %v468
      %v563 = vpack.c.b16 %v471, %v469
      %v564 = vpack.c.b16 %v474, %v472
      %v565 = vpack.c.b16 %v475, %v473
      %v566 = vpack.c.b16 %v478, %v476
      %v567 = vpack.c.b16 %v479, %v477
      %v568 = vpack.c.b16 %v482, %v480
      %v569 = vpack.c.b16 %v483, %v481
      %v570 = vpack.c.b16 %v486, %v484
      %v571 = vpack.c.b16 %v487, %v485
      %v572 = vpack.c.b16 %v490, %v488
      %v573 = vpack.c.b16 %v491, %v489
      %v574 = vpack.c.b16 %v494, %v492
      %v575 = vpack.c.b16 %v495, %v493
      %v576 = vpack.c.b16 %v498, %v496
      %v577 = vpack.c.b16 %v499, %v497
      %v578 = vpack.c.b16 %v502, %v500
      %v579 = vpack.c.b16 %v503, %v501
      %v580 = vpack.c.b16 %v506, %v504
      %v581 = vpack.c.b16 %v507, %v505
      %v582 = vpack.c.b16 %v510, %v508
      %v583 = vpack.c.b16 %v511, %v509
      %v584 = vpack.c.b16 %v514, %v512
      %v585 = vpack.c.b16 %v515, %v513
      %v586 = vpack.c.b16 %v518, %v516
      %v587 = vpack.c.b16 %v519, %v517
      %v588 = vpack.c.b16 %v522, %v520
      %v589 = vpack.c.b16 %v523, %v521
      %v590 = vpack.c.b16 %v526, %v524
      %v591 = vpack.c.b16 %v527, %v525
      %v642 = vunpack.c.l.b16 %v318
      %v643 = vunpack.c.l.b16 %v319
      %v644 = vunpack.c.l.b16 %v320
      %v645 = vunpack.c.l.b16 %v321
      %v646 = vunpack.c.l.b16 %v322
      %v647 = vunpack.c.l.b16 %v323
      %v648 = vunpack.c.l.b16 %v324
      %v649 = vunpack.c.l.b16 %v325
      %v650 = vunpack.c.l.b16 %v326
      %v651 = vunpack.c.l.b16 %v327
      %v652 = vunpack.c.l.b16 %v328
      %v653 = vunpack.c.l.b16 %v329
      %v654 = vunpack.c.l.b16 %v330
      %v655 = vunpack.c.l.b16 %v331
      %v656 = vunpack.c.l.b16 %v332
      %v657 = vunpack.c.l.b16 %v333
      %v658 = vunpack.c.l.b16 %v334
      %v659 = vunpack.c.l.b16 %v335
      %v660 = vpack.c.b16 %v643, %v642
      %v661 = vpack.c.b16 %v645, %v644
      %v662 = vpack.c.b16 %v647, %v646
      %v663 = vpack.c.b16 %v649, %v648
      %v664 = vpack.c.b16 %v651, %v650
      %v665 = vpack.c.b16 %v653, %v652
      %v666 = vpack.c.b16 %v655, %v654
      %v667 = vpack.c.b16 %v657, %v656
      %v668 = vpack.c.b16 %v659, %v658
      %vm678 = vcmask 130048
      %v680 = vsel %vm678, %v529, 0
      %v683 = vsel %vm678, %v531, 0
      %v686 = vsel %vm678, %v533, 0
      %v689 = vsel %vm678, %v535, 0
      %v692 = vsel %vm678, %v537, 0
      %v695 = vsel %vm678, %v539, 0
      %v698 = vsel %vm678, %v541, 0
      %v701 = vsel %vm678, %v543, 0
      %v704 = vsel %vm678, %v545, 0
      %v707 = vsel %vm678, %v547, 0
      %v710 = vsel %vm678, %v549, 0
      %v713 = vsel %vm678, %v551, 0
      %v716 = vsel %vm678, %v553, 0
      %v719 = vsel %vm678, %v555, 0
      %v722 = vsel %vm678, %v557, 0
      %v725 = vsel %vm678, %v559, 0
      %v728 = vsel %vm678, %v561, 0
      %v731 = vsel %vm678, %v563, 0
      %v734 = vsel %vm678, %v565, 0
      %v737 = vsel %vm678, %v567, 0
      %v740 = vsel %vm678, %v569, 0
      %v743 = vsel %vm678, %v571, 0
      %v746 = vsel %vm678, %v573, 0
      %v749 = vsel %vm678, %v575, 0
      %v752 = vsel %vm678, %v577, 0
      %v755 = vsel %vm678, %v579, 0
      %v758 = vsel %vm678, %v581, 0
      %v761 = vsel %vm678, %v583, 0
      %v764 = vsel %vm678, %v585, 0
      %v767 = vsel %vm678, %v587, 0
      %v770 = vsel %vm678, %v589, 0
      %v773 = vsel %vm678, %v591, 0
      %775 = vmatpush.bf16.msra.mxu0 %v667
      %776 = vmatpush.bf16.msra.mxu0 %v666
      %777 = vmatpush.bf16.msra.mxu0 %v665
      %778 = vmatpush.bf16.msra.mxu0 %v664
      %779 = vmatpush.bf16.msra.mxu0 %v663
      %780 = vmatpush.bf16.msra.mxu0 %v662
      %781 = vmatpush.bf16.msra.mxu0 %v661
      %782 = vmatpush.bf16.msra.mxu0 %v660
      %783 = vmatmul.bf16.gmra.mxu0 %v528
      %v784 = vpop.f32.mrf.mxu0
      %v785 = vadd.f32 0.0, %v784
      %v786 = vpop.f32.mrf.mxu0
      %v787 = vadd.f32 0.0, %v786
      %788 = vmatmul.bf16.gmra.mxu0 %v530
      %v789 = vpop.f32.mrf.mxu0
      %v790 = vadd.f32 0.0, %v789
      %v791 = vpop.f32.mrf.mxu0
      %v792 = vadd.f32 0.0, %v791
      %793 = vmatmul.bf16.gmra.mxu0 %v532
      %v794 = vpop.f32.mrf.mxu0
      %v795 = vadd.f32 0.0, %v794
      %v796 = vpop.f32.mrf.mxu0
      %v797 = vadd.f32 0.0, %v796
      %798 = vmatmul.bf16.gmra.mxu0 %v534
      %v799 = vpop.f32.mrf.mxu0
      %v800 = vadd.f32 0.0, %v799
      %v801 = vpop.f32.mrf.mxu0
      %v802 = vadd.f32 0.0, %v801
      %803 = vmatmul.bf16.gmra.mxu0 %v536
      %v804 = vpop.f32.mrf.mxu0
      %v805 = vadd.f32 0.0, %v804
      %v806 = vpop.f32.mrf.mxu0
      %v807 = vadd.f32 0.0, %v806
      %808 = vmatmul.bf16.gmra.mxu0 %v538
      %v809 = vpop.f32.mrf.mxu0
      %v810 = vadd.f32 0.0, %v809
      %v811 = vpop.f32.mrf.mxu0
      %v812 = vadd.f32 0.0, %v811
      %813 = vmatmul.bf16.gmra.mxu0 %v540
      %v814 = vpop.f32.mrf.mxu0
      %v815 = vadd.f32 0.0, %v814
      %v816 = vpop.f32.mrf.mxu0
      %v817 = vadd.f32 0.0, %v816
      %818 = vmatmul.bf16.gmra.mxu0 %v542
      %v819 = vpop.f32.mrf.mxu0
      %v820 = vadd.f32 0.0, %v819
      %v821 = vpop.f32.mrf.mxu0
      %v822 = vadd.f32 0.0, %v821
      %823 = vmatmul.bf16.gmra.mxu0 %v544
      %v824 = vpop.f32.mrf.mxu0
      %v825 = vadd.f32 0.0, %v824
      %v826 = vpop.f32.mrf.mxu0
      %v827 = vadd.f32 0.0, %v826
      %828 = vmatmul.bf16.gmra.mxu0 %v546
      %v829 = vpop.f32.mrf.mxu0
      %v830 = vadd.f32 0.0, %v829
      %v831 = vpop.f32.mrf.mxu0
      %v832 = vadd.f32 0.0, %v831
      %833 = vmatmul.bf16.gmra.mxu0 %v548
      %v834 = vpop.f32.mrf.mxu0
      %v835 = vadd.f32 0.0, %v834
      %v836 = vpop.f32.mrf.mxu0
      %v837 = vadd.f32 0.0, %v836
      %838 = vmatmul.bf16.gmra.mxu0 %v550
      %v839 = vpop.f32.mrf.mxu0
      %v840 = vadd.f32 0.0, %v839
      %v841 = vpop.f32.mrf.mxu0
      %v842 = vadd.f32 0.0, %v841
      %843 = vmatmul.bf16.gmra.mxu0 %v552
      %v844 = vpop.f32.mrf.mxu0
      %v845 = vadd.f32 0.0, %v844
      %v846 = vpop.f32.mrf.mxu0
      %v847 = vadd.f32 0.0, %v846
      %848 = vmatmul.bf16.gmra.mxu0 %v554
      %v849 = vpop.f32.mrf.mxu0
      %v850 = vadd.f32 0.0, %v849
      %v851 = vpop.f32.mrf.mxu0
      %v852 = vadd.f32 0.0, %v851
      %853 = vmatmul.bf16.gmra.mxu0 %v556
      %v854 = vpop.f32.mrf.mxu0
      %v855 = vadd.f32 0.0, %v854
      %v856 = vpop.f32.mrf.mxu0
      %v857 = vadd.f32 0.0, %v856
      %858 = vmatmul.bf16.gmra.mxu0 %v558
      %v859 = vpop.f32.mrf.mxu0
      %v860 = vadd.f32 0.0, %v859
      %v861 = vpop.f32.mrf.mxu0
      %v862 = vadd.f32 0.0, %v861
      %863 = vmatmul.bf16.gmra.mxu0 %v560
      %v864 = vpop.f32.mrf.mxu0
      %v865 = vadd.f32 0.0, %v864
      %v866 = vpop.f32.mrf.mxu0
      %v867 = vadd.f32 0.0, %v866
      %868 = vmatmul.bf16.gmra.mxu0 %v562
      %v869 = vpop.f32.mrf.mxu0
      %v870 = vadd.f32 0.0, %v869
      %v871 = vpop.f32.mrf.mxu0
      %v872 = vadd.f32 0.0, %v871
      %873 = vmatmul.bf16.gmra.mxu0 %v564
      %v874 = vpop.f32.mrf.mxu0
      %v875 = vadd.f32 0.0, %v874
      %v876 = vpop.f32.mrf.mxu0
      %v877 = vadd.f32 0.0, %v876
      %878 = vmatmul.bf16.gmra.mxu0 %v566
      %v879 = vpop.f32.mrf.mxu0
      %v880 = vadd.f32 0.0, %v879
      %v881 = vpop.f32.mrf.mxu0
      %v882 = vadd.f32 0.0, %v881
      %883 = vmatmul.bf16.gmra.mxu0 %v568
      %v884 = vpop.f32.mrf.mxu0
      %v885 = vadd.f32 0.0, %v884
      %v886 = vpop.f32.mrf.mxu0
      %v887 = vadd.f32 0.0, %v886
      %888 = vmatmul.bf16.gmra.mxu0 %v570
      %v889 = vpop.f32.mrf.mxu0
      %v890 = vadd.f32 0.0, %v889
      %v891 = vpop.f32.mrf.mxu0
      %v892 = vadd.f32 0.0, %v891
      %893 = vmatmul.bf16.gmra.mxu0 %v572
      %v894 = vpop.f32.mrf.mxu0
      %v895 = vadd.f32 0.0, %v894
      %v896 = vpop.f32.mrf.mxu0
      %v897 = vadd.f32 0.0, %v896
      %898 = vmatmul.bf16.gmra.mxu0 %v574
      %v899 = vpop.f32.mrf.mxu0
      %v900 = vadd.f32 0.0, %v899
      %v901 = vpop.f32.mrf.mxu0
      %v902 = vadd.f32 0.0, %v901
      %903 = vmatmul.bf16.gmra.mxu0 %v576
      %v904 = vpop.f32.mrf.mxu0
      %v905 = vadd.f32 0.0, %v904
      %v906 = vpop.f32.mrf.mxu0
      %v907 = vadd.f32 0.0, %v906
      %908 = vmatmul.bf16.gmra.mxu0 %v578
      %v909 = vpop.f32.mrf.mxu0
      %v910 = vadd.f32 0.0, %v909
      %v911 = vpop.f32.mrf.mxu0
      %v912 = vadd.f32 0.0, %v911
      %913 = vmatmul.bf16.gmra.mxu0 %v580
      %v914 = vpop.f32.mrf.mxu0
      %v915 = vadd.f32 0.0, %v914
      %v916 = vpop.f32.mrf.mxu0
      %v917 = vadd.f32 0.0, %v916
      %918 = vmatmul.bf16.gmra.mxu0 %v582
      %v919 = vpop.f32.mrf.mxu0
      %v920 = vadd.f32 0.0, %v919
      %v921 = vpop.f32.mrf.mxu0
      %v922 = vadd.f32 0.0, %v921
      %923 = vmatmul.bf16.gmra.mxu0 %v584
      %v924 = vpop.f32.mrf.mxu0
      %v925 = vadd.f32 0.0, %v924
      %v926 = vpop.f32.mrf.mxu0
      %v927 = vadd.f32 0.0, %v926
      %928 = vmatmul.bf16.gmra.mxu0 %v586
      %v929 = vpop.f32.mrf.mxu0
      %v930 = vadd.f32 0.0, %v929
      %v931 = vpop.f32.mrf.mxu0
      %v932 = vadd.f32 0.0, %v931
      %933 = vmatmul.bf16.gmra.mxu0 %v588
      %v934 = vpop.f32.mrf.mxu0
      %v935 = vadd.f32 0.0, %v934
      %v936 = vpop.f32.mrf.mxu0
      %v937 = vadd.f32 0.0, %v936
      %938 = vmatmul.bf16.gmra.mxu0 %v590
      %v939 = vpop.f32.mrf.mxu0
      %v940 = vadd.f32 0.0, %v939
      %v941 = vpop.f32.mrf.mxu0
      %v942 = vadd.f32 0.0, %v941
      %943 = vdwg.mxu0
      %944 = vmatpush.bf16.msra.mxu0 0
      %945 = vmatpush.bf16.msra.mxu0 0
      %946 = vmatpush.bf16.msra.mxu0 0
      %947 = vmatpush.bf16.msra.mxu0 0
      %948 = vmatpush.bf16.msra.mxu0 0
      %949 = vmatpush.bf16.msra.mxu0 0
      %950 = vmatpush.bf16.msra.mxu0 0
      %951 = vmatpush.bf16.msra.mxu0 %v668
      %952 = vmatmul.bf16.gmra.mxu0 %v680
      %v953 = vpop.f32.mrf.mxu0
      %v954 = vadd.f32 %v785, %v953
      %v955 = vpop.f32.mrf.mxu0
      %v956 = vadd.f32 %v787, %v955
      %957 = vmatmul.bf16.gmra.mxu0 %v683
      %v958 = vpop.f32.mrf.mxu0
      %v959 = vadd.f32 %v790, %v958
      %v960 = vpop.f32.mrf.mxu0
      %v961 = vadd.f32 %v792, %v960
      %962 = vmatmul.bf16.gmra.mxu0 %v686
      %v963 = vpop.f32.mrf.mxu0
      %v964 = vadd.f32 %v795, %v963
      %v965 = vpop.f32.mrf.mxu0
      %v966 = vadd.f32 %v797, %v965
      %967 = vmatmul.bf16.gmra.mxu0 %v689
      %v968 = vpop.f32.mrf.mxu0
      %v969 = vadd.f32 %v800, %v968
      %v970 = vpop.f32.mrf.mxu0
      %v971 = vadd.f32 %v802, %v970
      %972 = vmatmul.bf16.gmra.mxu0 %v692
      %v973 = vpop.f32.mrf.mxu0
      %v974 = vadd.f32 %v805, %v973
      %v975 = vpop.f32.mrf.mxu0
      %v976 = vadd.f32 %v807, %v975
      %977 = vmatmul.bf16.gmra.mxu0 %v695
      %v978 = vpop.f32.mrf.mxu0
      %v979 = vadd.f32 %v810, %v978
      %v980 = vpop.f32.mrf.mxu0
      %v981 = vadd.f32 %v812, %v980
      %982 = vmatmul.bf16.gmra.mxu0 %v698
      %v983 = vpop.f32.mrf.mxu0
      %v984 = vadd.f32 %v815, %v983
      %v985 = vpop.f32.mrf.mxu0
      %v986 = vadd.f32 %v817, %v985
      %987 = vmatmul.bf16.gmra.mxu0 %v701
      %v988 = vpop.f32.mrf.mxu0
      %v989 = vadd.f32 %v820, %v988
      %v990 = vpop.f32.mrf.mxu0
      %v991 = vadd.f32 %v822, %v990
      %992 = vmatmul.bf16.gmra.mxu0 %v704
      %v993 = vpop.f32.mrf.mxu0
      %v994 = vadd.f32 %v825, %v993
      %v995 = vpop.f32.mrf.mxu0
      %v996 = vadd.f32 %v827, %v995
      %997 = vmatmul.bf16.gmra.mxu0 %v707
      %v998 = vpop.f32.mrf.mxu0
      %v999 = vadd.f32 %v830, %v998
      %v1000 = vpop.f32.mrf.mxu0
      %v1001 = vadd.f32 %v832, %v1000
      %1002 = vmatmul.bf16.gmra.mxu0 %v710
      %v1003 = vpop.f32.mrf.mxu0
      %v1004 = vadd.f32 %v835, %v1003
      %v1005 = vpop.f32.mrf.mxu0
      %v1006 = vadd.f32 %v837, %v1005
      %1007 = vmatmul.bf16.gmra.mxu0 %v713
      %v1008 = vpop.f32.mrf.mxu0
      %v1009 = vadd.f32 %v840, %v1008
      %v1010 = vpop.f32.mrf.mxu0
      %v1011 = vadd.f32 %v842, %v1010
      %1012 = vmatmul.bf16.gmra.mxu0 %v716
      %v1013 = vpop.f32.mrf.mxu0
      %v1014 = vadd.f32 %v845, %v1013
      %v1015 = vpop.f32.mrf.mxu0
      %v1016 = vadd.f32 %v847, %v1015
      %1017 = vmatmul.bf16.gmra.mxu0 %v719
      %v1018 = vpop.f32.mrf.mxu0
      %v1019 = vadd.f32 %v850, %v1018
      %v1020 = vpop.f32.mrf.mxu0
      %v1021 = vadd.f32 %v852, %v1020
      %1022 = vmatmul.bf16.gmra.mxu0 %v722
      %v1023 = vpop.f32.mrf.mxu0
      %v1024 = vadd.f32 %v855, %v1023
      %v1025 = vpop.f32.mrf.mxu0
      %v1026 = vadd.f32 %v857, %v1025
      %1027 = vmatmul.bf16.gmra.mxu0 %v725
      %v1028 = vpop.f32.mrf.mxu0
      %v1029 = vadd.f32 %v860, %v1028
      %v1030 = vpop.f32.mrf.mxu0
      %v1031 = vadd.f32 %v862, %v1030
      %1032 = vmatmul.bf16.gmra.mxu0 %v728
      %v1033 = vpop.f32.mrf.mxu0
      %v1034 = vadd.f32 %v865, %v1033
      %v1035 = vpop.f32.mrf.mxu0
      %v1036 = vadd.f32 %v867, %v1035
      %1037 = vmatmul.bf16.gmra.mxu0 %v731
      %v1038 = vpop.f32.mrf.mxu0
      %v1039 = vadd.f32 %v870, %v1038
      %v1040 = vpop.f32.mrf.mxu0
      %v1041 = vadd.f32 %v872, %v1040
      %1042 = vmatmul.bf16.gmra.mxu0 %v734
      %v1043 = vpop.f32.mrf.mxu0
      %v1044 = vadd.f32 %v875, %v1043
      %v1045 = vpop.f32.mrf.mxu0
      %v1046 = vadd.f32 %v877, %v1045
      %1047 = vmatmul.bf16.gmra.mxu0 %v737
      %v1048 = vpop.f32.mrf.mxu0
      %v1049 = vadd.f32 %v880, %v1048
      %v1050 = vpop.f32.mrf.mxu0
      %v1051 = vadd.f32 %v882, %v1050
      %1052 = vmatmul.bf16.gmra.mxu0 %v740
      %v1053 = vpop.f32.mrf.mxu0
      %v1054 = vadd.f32 %v885, %v1053
      %v1055 = vpop.f32.mrf.mxu0
      %v1056 = vadd.f32 %v887, %v1055
      %1057 = vmatmul.bf16.gmra.mxu0 %v743
      %v1058 = vpop.f32.mrf.mxu0
      %v1059 = vadd.f32 %v890, %v1058
      %v1060 = vpop.f32.mrf.mxu0
      %v1061 = vadd.f32 %v892, %v1060
      %1062 = vmatmul.bf16.gmra.mxu0 %v746
      %v1063 = vpop.f32.mrf.mxu0
      %v1064 = vadd.f32 %v895, %v1063
      %v1065 = vpop.f32.mrf.mxu0
      %v1066 = vadd.f32 %v897, %v1065
      %1067 = vmatmul.bf16.gmra.mxu0 %v749
      %v1068 = vpop.f32.mrf.mxu0
      %v1069 = vadd.f32 %v900, %v1068
      %v1070 = vpop.f32.mrf.mxu0
      %v1071 = vadd.f32 %v902, %v1070
      %1072 = vmatmul.bf16.gmra.mxu0 %v752
      %v1073 = vpop.f32.mrf.mxu0
      %v1074 = vadd.f32 %v905, %v1073
      %v1075 = vpop.f32.mrf.mxu0
      %v1076 = vadd.f32 %v907, %v1075
      %1077 = vmatmul.bf16.gmra.mxu0 %v755
      %v1078 = vpop.f32.mrf.mxu0
      %v1079 = vadd.f32 %v910, %v1078
      %v1080 = vpop.f32.mrf.mxu0
      %v1081 = vadd.f32 %v912, %v1080
      %1082 = vmatmul.bf16.gmra.mxu0 %v758
      %v1083 = vpop.f32.mrf.mxu0
      %v1084 = vadd.f32 %v915, %v1083
      %v1085 = vpop.f32.mrf.mxu0
      %v1086 = vadd.f32 %v917, %v1085
      %1087 = vmatmul.bf16.gmra.mxu0 %v761
      %v1088 = vpop.f32.mrf.mxu0
      %v1089 = vadd.f32 %v920, %v1088
      %v1090 = vpop.f32.mrf.mxu0
      %v1091 = vadd.f32 %v922, %v1090
      %1092 = vmatmul.bf16.gmra.mxu0 %v764
      %v1093 = vpop.f32.mrf.mxu0
      %v1094 = vadd.f32 %v925, %v1093
      %v1095 = vpop.f32.mrf.mxu0
      %v1096 = vadd.f32 %v927, %v1095
      %1097 = vmatmul.bf16.gmra.mxu0 %v767
      %v1098 = vpop.f32.mrf.mxu0
      %v1099 = vadd.f32 %v930, %v1098
      %v1100 = vpop.f32.mrf.mxu0
      %v1101 = vadd.f32 %v932, %v1100
      %1102 = vmatmul.bf16.gmra.mxu0 %v770
      %v1103 = vpop.f32.mrf.mxu0
      %v1104 = vadd.f32 %v935, %v1103
      %v1105 = vpop.f32.mrf.mxu0
      %v1106 = vadd.f32 %v937, %v1105
      %1107 = vmatmul.bf16.gmra.mxu0 %v773
      %v1108 = vpop.f32.mrf.mxu0
      %v1109 = vadd.f32 %v940, %v1108
      %v1110 = vpop.f32.mrf.mxu0
      %v1111 = vadd.f32 %v942, %v1110
      %1112 = vdwg.mxu0
      %v1113 = vld [vmem:[%s2] sm:$0x1]
      %v1115 = vperm.slane %v1113, 0
      %v1117 = vmul.f32 %v954, %v1115
      %v1118 = vmul.f32 %v956, %v1115
      %v1119 = vmul.f32 %v959, %v1115
      %v1120 = vmul.f32 %v961, %v1115
      %v1121 = vmul.f32 %v964, %v1115
      %v1122 = vmul.f32 %v966, %v1115
      %v1123 = vmul.f32 %v969, %v1115
      %v1124 = vmul.f32 %v971, %v1115
      %v1125 = vmul.f32 %v974, %v1115
      %v1126 = vmul.f32 %v976, %v1115
      %v1127 = vmul.f32 %v979, %v1115
      %v1128 = vmul.f32 %v981, %v1115
      %v1129 = vmul.f32 %v984, %v1115
      %v1130 = vmul.f32 %v986, %v1115
      %v1131 = vmul.f32 %v989, %v1115
      %v1132 = vmul.f32 %v991, %v1115
      %v1133 = vmul.f32 %v994, %v1115
      %v1134 = vmul.f32 %v996, %v1115
      %v1135 = vmul.f32 %v999, %v1115
      %v1136 = vmul.f32 %v1001, %v1115
      %v1137 = vmul.f32 %v1004, %v1115
      %v1138 = vmul.f32 %v1006, %v1115
      %v1139 = vmul.f32 %v1009, %v1115
      %v1140 = vmul.f32 %v1011, %v1115
      %v1141 = vmul.f32 %v1014, %v1115
      %v1142 = vmul.f32 %v1016, %v1115
      %v1143 = vmul.f32 %v1019, %v1115
      %v1144 = vmul.f32 %v1021, %v1115
      %v1145 = vmul.f32 %v1024, %v1115
      %v1146 = vmul.f32 %v1026, %v1115
      %v1147 = vmul.f32 %v1029, %v1115
      %v1148 = vmul.f32 %v1031, %v1115
      %v1149 = vmul.f32 %v1034, %v1115
      %v1150 = vmul.f32 %v1036, %v1115
      %v1151 = vmul.f32 %v1039, %v1115
      %v1152 = vmul.f32 %v1041, %v1115
      %v1153 = vmul.f32 %v1044, %v1115
      %v1154 = vmul.f32 %v1046, %v1115
      %v1155 = vmul.f32 %v1049, %v1115
      %v1156 = vmul.f32 %v1051, %v1115
      %v1157 = vmul.f32 %v1054, %v1115
      %v1158 = vmul.f32 %v1056, %v1115
      %v1159 = vmul.f32 %v1059, %v1115
      %v1160 = vmul.f32 %v1061, %v1115
      %v1161 = vmul.f32 %v1064, %v1115
      %v1162 = vmul.f32 %v1066, %v1115
      %v1163 = vmul.f32 %v1069, %v1115
      %v1164 = vmul.f32 %v1071, %v1115
      %v1165 = vmul.f32 %v1074, %v1115
      %v1166 = vmul.f32 %v1076, %v1115
      %v1167 = vmul.f32 %v1079, %v1115
      %v1168 = vmul.f32 %v1081, %v1115
      %v1169 = vmul.f32 %v1084, %v1115
      %v1170 = vmul.f32 %v1086, %v1115
      %v1171 = vmul.f32 %v1089, %v1115
      %v1172 = vmul.f32 %v1091, %v1115
      %v1173 = vmul.f32 %v1094, %v1115
      %v1174 = vmul.f32 %v1096, %v1115
      %v1175 = vmul.f32 %v1099, %v1115
      %v1176 = vmul.f32 %v1101, %v1115
      %v1177 = vmul.f32 %v1104, %v1115
      %v1178 = vmul.f32 %v1106, %v1115
      %v1179 = vmul.f32 %v1109, %v1115
      %v1180 = vmul.f32 %v1111, %v1115
      %v1181 = vld [vmem:[%s3] sm:$0x1]
      %v1183 = vperm.slane %v1181, 0
      %v1185 = vadd.f32 %v1117, %v1183
      %v1186 = vadd.f32 %v1118, %v1183
      %v1187 = vadd.f32 %v1119, %v1183
      %v1188 = vadd.f32 %v1120, %v1183
      %v1189 = vadd.f32 %v1121, %v1183
      %v1190 = vadd.f32 %v1122, %v1183
      %v1191 = vadd.f32 %v1123, %v1183
      %v1192 = vadd.f32 %v1124, %v1183
      %v1193 = vadd.f32 %v1125, %v1183
      %v1194 = vadd.f32 %v1126, %v1183
      %v1195 = vadd.f32 %v1127, %v1183
      %v1196 = vadd.f32 %v1128, %v1183
      %v1197 = vadd.f32 %v1129, %v1183
      %v1198 = vadd.f32 %v1130, %v1183
      %v1199 = vadd.f32 %v1131, %v1183
      %v1200 = vadd.f32 %v1132, %v1183
      %v1201 = vadd.f32 %v1133, %v1183
      %v1202 = vadd.f32 %v1134, %v1183
      %v1203 = vadd.f32 %v1135, %v1183
      %v1204 = vadd.f32 %v1136, %v1183
      %v1205 = vadd.f32 %v1137, %v1183
      %v1206 = vadd.f32 %v1138, %v1183
      %v1207 = vadd.f32 %v1139, %v1183
      %v1208 = vadd.f32 %v1140, %v1183
      %v1209 = vadd.f32 %v1141, %v1183
      %v1210 = vadd.f32 %v1142, %v1183
      %v1211 = vadd.f32 %v1143, %v1183
      %v1212 = vadd.f32 %v1144, %v1183
      %v1213 = vadd.f32 %v1145, %v1183
      %v1214 = vadd.f32 %v1146, %v1183
      %v1215 = vadd.f32 %v1147, %v1183
      %v1216 = vadd.f32 %v1148, %v1183
      %v1217 = vadd.f32 %v1149, %v1183
      %v1218 = vadd.f32 %v1150, %v1183
      %v1219 = vadd.f32 %v1151, %v1183
      %v1220 = vadd.f32 %v1152, %v1183
      %v1221 = vadd.f32 %v1153, %v1183
      %v1222 = vadd.f32 %v1154, %v1183
      %v1223 = vadd.f32 %v1155, %v1183
      %v1224 = vadd.f32 %v1156, %v1183
      %v1225 = vadd.f32 %v1157, %v1183
      %v1226 = vadd.f32 %v1158, %v1183
      %v1227 = vadd.f32 %v1159, %v1183
      %v1228 = vadd.f32 %v1160, %v1183
      %v1229 = vadd.f32 %v1161, %v1183
      %v1230 = vadd.f32 %v1162, %v1183
      %v1231 = vadd.f32 %v1163, %v1183
      %v1232 = vadd.f32 %v1164, %v1183
      %v1233 = vadd.f32 %v1165, %v1183
      %v1234 = vadd.f32 %v1166, %v1183
      %v1235 = vadd.f32 %v1167, %v1183
      %v1236 = vadd.f32 %v1168, %v1183
      %v1237 = vadd.f32 %v1169, %v1183
      %v1238 = vadd.f32 %v1170, %v1183
      %v1239 = vadd.f32 %v1171, %v1183
      %v1240 = vadd.f32 %v1172, %v1183
      %v1241 = vadd.f32 %v1173, %v1183
      %v1242 = vadd.f32 %v1174, %v1183
      %v1243 = vadd.f32 %v1175, %v1183
      %v1244 = vadd.f32 %v1176, %v1183
      %v1245 = vadd.f32 %v1177, %v1183
      %v1246 = vadd.f32 %v1178, %v1183
      %v1247 = vadd.f32 %v1179, %v1183
      %v1248 = vadd.f32 %v1180, %v1183
      %v1249 = vld [vmem:[%s245] sm:$0xf]
      %v1250 = vld [vmem:[%s245 + $0x4] sm:$0xf]
      %v1251 = vld [vmem:[%s245 + $0x8] sm:$0xf]
      %v1252 = vld [vmem:[%s245 + $0xc] sm:$0xf]
      %v1253 = vld [vmem:[%s245 + $0x10] sm:$0xf]
      %v1254 = vld [vmem:[%s245 + $0x14] sm:$0xf]
      %v1255 = vld [vmem:[%s245 + $0x18] sm:$0xf]
      %v1256 = vld [vmem:[%s245 + $0x1c] sm:$0xf]
      %v1257 = vld [vmem:[%s245 + $0x20] sm:$0xf]
      %v1258 = vld [vmem:[%s245 + $0x24] sm:$0xf]
      %v1259 = vld [vmem:[%s245 + $0x28] sm:$0xf]
      %v1260 = vld [vmem:[%s245 + $0x2c] sm:$0xf]
      %v1261 = vld [vmem:[%s245 + $0x30] sm:$0xf]
      %v1262 = vld [vmem:[%s245 + $0x34] sm:$0xf]
      %v1263 = vld [vmem:[%s245 + $0x38] sm:$0xf]
      %v1264 = vld [vmem:[%s245 + $0x3c] sm:$0xf]
      %v1265 = vld [vmem:[%s245 + $0x40] sm:$0xf]
      %v1266 = vld [vmem:[%s245 + $0x44] sm:$0xf]
      %v1267 = vld [vmem:[%s245 + $0x48] sm:$0xf]
      %v1268 = vld [vmem:[%s245 + $0x4c] sm:$0xf]
      %v1269 = vld [vmem:[%s245 + $0x50] sm:$0xf]
      %v1270 = vld [vmem:[%s245 + $0x54] sm:$0xf]
      %v1271 = vld [vmem:[%s245 + $0x58] sm:$0xf]
      %v1272 = vld [vmem:[%s245 + $0x5c] sm:$0xf]
      %v1273 = vld [vmem:[%s245 + $0x60] sm:$0xf]
      %v1274 = vld [vmem:[%s245 + $0x64] sm:$0xf]
      %v1275 = vld [vmem:[%s245 + $0x68] sm:$0xf]
      %v1276 = vld [vmem:[%s245 + $0x6c] sm:$0xf]
      %v1277 = vld [vmem:[%s245 + $0x70] sm:$0xf]
      %v1278 = vld [vmem:[%s245 + $0x74] sm:$0xf]
      %v1279 = vld [vmem:[%s245 + $0x78] sm:$0xf]
      %v1280 = vld [vmem:[%s245 + $0x7c] sm:$0xf]
      %v1281 = vld [vmem:[%s245 + $0x80] sm:$0xf]
      %v1282 = vld [vmem:[%s245 + $0x84] sm:$0xf]
      %v1283 = vld [vmem:[%s245 + $0x88] sm:$0xf]
      %v1284 = vld [vmem:[%s245 + $0x8c] sm:$0xf]
      %v1285 = vld [vmem:[%s245 + $0x90] sm:$0xf]
      %v1286 = vld [vmem:[%s245 + $0x94] sm:$0xf]
      %v1287 = vld [vmem:[%s245 + $0x98] sm:$0xf]
      %v1288 = vld [vmem:[%s245 + $0x9c] sm:$0xf]
      %v1289 = vld [vmem:[%s245 + $0xa0] sm:$0xf]
      %v1290 = vld [vmem:[%s245 + $0xa4] sm:$0xf]
      %v1291 = vld [vmem:[%s245 + $0xa8] sm:$0xf]
      %v1292 = vld [vmem:[%s245 + $0xac] sm:$0xf]
      %v1293 = vld [vmem:[%s245 + $0xb0] sm:$0xf]
      %v1294 = vld [vmem:[%s245 + $0xb4] sm:$0xf]
      %v1295 = vld [vmem:[%s245 + $0xb8] sm:$0xf]
      %v1296 = vld [vmem:[%s245 + $0xbc] sm:$0xf]
      %v1297 = vld [vmem:[%s245 + $0xc0] sm:$0xf]
      %v1298 = vld [vmem:[%s245 + $0xc4] sm:$0xf]
      %v1299 = vld [vmem:[%s245 + $0xc8] sm:$0xf]
      %v1300 = vld [vmem:[%s245 + $0xcc] sm:$0xf]
      %v1301 = vld [vmem:[%s245 + $0xd0] sm:$0xf]
      %v1302 = vld [vmem:[%s245 + $0xd4] sm:$0xf]
      %v1303 = vld [vmem:[%s245 + $0xd8] sm:$0xf]
      %v1304 = vld [vmem:[%s245 + $0xdc] sm:$0xf]
      %v1305 = vld [vmem:[%s245 + $0xe0] sm:$0xf]
      %v1306 = vld [vmem:[%s245 + $0xe4] sm:$0xf]
      %v1307 = vld [vmem:[%s245 + $0xe8] sm:$0xf]
      %v1308 = vld [vmem:[%s245 + $0xec] sm:$0xf]
      %v1309 = vld [vmem:[%s245 + $0xf0] sm:$0xf]
      %v1310 = vld [vmem:[%s245 + $0xf4] sm:$0xf]
      %v1311 = vld [vmem:[%s245 + $0xf8] sm:$0xf]
      %v1312 = vld [vmem:[%s245 + $0xfc] sm:$0xf]
      %v1313 = vunpack.c.l.bf16 %v1249
      %v1314 = vunpack.c.l.bf16 %v1250
      %v1315 = vunpack.c.l.bf16 %v1251
      %v1316 = vunpack.c.l.bf16 %v1252
      %v1317 = vunpack.c.l.bf16 %v1253
      %v1318 = vunpack.c.l.bf16 %v1254
      %v1319 = vunpack.c.l.bf16 %v1255
      %v1320 = vunpack.c.l.bf16 %v1256
      %v1321 = vunpack.c.l.bf16 %v1257
      %v1322 = vunpack.c.l.bf16 %v1258
      %v1323 = vunpack.c.l.bf16 %v1259
      %v1324 = vunpack.c.l.bf16 %v1260
      %v1325 = vunpack.c.l.bf16 %v1261
      %v1326 = vunpack.c.l.bf16 %v1262
      %v1327 = vunpack.c.l.bf16 %v1263
      %v1328 = vunpack.c.l.bf16 %v1264
      %v1329 = vunpack.c.l.bf16 %v1265
      %v1330 = vunpack.c.l.bf16 %v1266
      %v1331 = vunpack.c.l.bf16 %v1267
      %v1332 = vunpack.c.l.bf16 %v1268
      %v1333 = vunpack.c.l.bf16 %v1269
      %v1334 = vunpack.c.l.bf16 %v1270
      %v1335 = vunpack.c.l.bf16 %v1271
      %v1336 = vunpack.c.l.bf16 %v1272
      %v1337 = vunpack.c.l.bf16 %v1273
      %v1338 = vunpack.c.l.bf16 %v1274
      %v1339 = vunpack.c.l.bf16 %v1275
      %v1340 = vunpack.c.l.bf16 %v1276
      %v1341 = vunpack.c.l.bf16 %v1277
      %v1342 = vunpack.c.l.bf16 %v1278
      %v1343 = vunpack.c.l.bf16 %v1279
      %v1344 = vunpack.c.l.bf16 %v1280
      %v1345 = vunpack.c.l.bf16 %v1281
      %v1346 = vunpack.c.l.bf16 %v1282
      %v1347 = vunpack.c.l.bf16 %v1283
      %v1348 = vunpack.c.l.bf16 %v1284
      %v1349 = vunpack.c.l.bf16 %v1285
      %v1350 = vunpack.c.l.bf16 %v1286
      %v1351 = vunpack.c.l.bf16 %v1287
      %v1352 = vunpack.c.l.bf16 %v1288
      %v1353 = vunpack.c.l.bf16 %v1289
      %v1354 = vunpack.c.l.bf16 %v1290
      %v1355 = vunpack.c.l.bf16 %v1291
      %v1356 = vunpack.c.l.bf16 %v1292
      %v1357 = vunpack.c.l.bf16 %v1293
      %v1358 = vunpack.c.l.bf16 %v1294
      %v1359 = vunpack.c.l.bf16 %v1295
      %v1360 = vunpack.c.l.bf16 %v1296
      %v1361 = vunpack.c.l.bf16 %v1297
      %v1362 = vunpack.c.l.bf16 %v1298
      %v1363 = vunpack.c.l.bf16 %v1299
      %v1364 = vunpack.c.l.bf16 %v1300
      %v1365 = vunpack.c.l.bf16 %v1301
      %v1366 = vunpack.c.l.bf16 %v1302
      %v1367 = vunpack.c.l.bf16 %v1303
      %v1368 = vunpack.c.l.bf16 %v1304
      %v1369 = vunpack.c.l.bf16 %v1305
      %v1370 = vunpack.c.l.bf16 %v1306
      %v1371 = vunpack.c.l.bf16 %v1307
      %v1372 = vunpack.c.l.bf16 %v1308
      %v1373 = vunpack.c.l.bf16 %v1309
      %v1374 = vunpack.c.l.bf16 %v1310
      %v1375 = vunpack.c.l.bf16 %v1311
      %v1376 = vunpack.c.l.bf16 %v1312
      %v1377 = vadd.f32 %v1185, %v1313
      %v1378 = vadd.f32 %v1186, %v1314
      %v1379 = vadd.f32 %v1187, %v1315
      %v1380 = vadd.f32 %v1188, %v1316
      %v1381 = vadd.f32 %v1189, %v1317
      %v1382 = vadd.f32 %v1190, %v1318
      %v1383 = vadd.f32 %v1191, %v1319
      %v1384 = vadd.f32 %v1192, %v1320
      %v1385 = vadd.f32 %v1193, %v1321
      %v1386 = vadd.f32 %v1194, %v1322
      %v1387 = vadd.f32 %v1195, %v1323
      %v1388 = vadd.f32 %v1196, %v1324
      %v1389 = vadd.f32 %v1197, %v1325
      %v1390 = vadd.f32 %v1198, %v1326
      %v1391 = vadd.f32 %v1199, %v1327
      %v1392 = vadd.f32 %v1200, %v1328
      %v1393 = vadd.f32 %v1201, %v1329
      %v1394 = vadd.f32 %v1202, %v1330
      %v1395 = vadd.f32 %v1203, %v1331
      %v1396 = vadd.f32 %v1204, %v1332
      %v1397 = vadd.f32 %v1205, %v1333
      %v1398 = vadd.f32 %v1206, %v1334
      %v1399 = vadd.f32 %v1207, %v1335
      %v1400 = vadd.f32 %v1208, %v1336
      %v1401 = vadd.f32 %v1209, %v1337
      %v1402 = vadd.f32 %v1210, %v1338
      %v1403 = vadd.f32 %v1211, %v1339
      %v1404 = vadd.f32 %v1212, %v1340
      %v1405 = vadd.f32 %v1213, %v1341
      %v1406 = vadd.f32 %v1214, %v1342
      %v1407 = vadd.f32 %v1215, %v1343
      %v1408 = vadd.f32 %v1216, %v1344
      %v1409 = vadd.f32 %v1217, %v1345
      %v1410 = vadd.f32 %v1218, %v1346
      %v1411 = vadd.f32 %v1219, %v1347
      %v1412 = vadd.f32 %v1220, %v1348
      %v1413 = vadd.f32 %v1221, %v1349
      %v1414 = vadd.f32 %v1222, %v1350
      %v1415 = vadd.f32 %v1223, %v1351
      %v1416 = vadd.f32 %v1224, %v1352
      %v1417 = vadd.f32 %v1225, %v1353
      %v1418 = vadd.f32 %v1226, %v1354
      %v1419 = vadd.f32 %v1227, %v1355
      %v1420 = vadd.f32 %v1228, %v1356
      %v1421 = vadd.f32 %v1229, %v1357
      %v1422 = vadd.f32 %v1230, %v1358
      %v1423 = vadd.f32 %v1231, %v1359
      %v1424 = vadd.f32 %v1232, %v1360
      %v1425 = vadd.f32 %v1233, %v1361
      %v1426 = vadd.f32 %v1234, %v1362
      %v1427 = vadd.f32 %v1235, %v1363
      %v1428 = vadd.f32 %v1236, %v1364
      %v1429 = vadd.f32 %v1237, %v1365
      %v1430 = vadd.f32 %v1238, %v1366
      %v1431 = vadd.f32 %v1239, %v1367
      %v1432 = vadd.f32 %v1240, %v1368
      %v1433 = vadd.f32 %v1241, %v1369
      %v1434 = vadd.f32 %v1242, %v1370
      %v1435 = vadd.f32 %v1243, %v1371
      %v1436 = vadd.f32 %v1244, %v1372
      %v1437 = vadd.f32 %v1245, %v1373
      %v1438 = vadd.f32 %v1246, %v1374
      %v1439 = vadd.f32 %v1247, %v1375
      %v1440 = vadd.f32 %v1248, %v1376
      %v1441 = vmax.f32 %v1377, 0.0
      %v1442 = vmax.f32 %v1378, 0.0
      %v1443 = vmax.f32 %v1379, 0.0
      %v1444 = vmax.f32 %v1380, 0.0
      %v1445 = vmax.f32 %v1381, 0.0
      %v1446 = vmax.f32 %v1382, 0.0
      %v1447 = vmax.f32 %v1383, 0.0
      %v1448 = vmax.f32 %v1384, 0.0
      %v1449 = vmax.f32 %v1385, 0.0
      %v1450 = vmax.f32 %v1386, 0.0
      %v1451 = vmax.f32 %v1387, 0.0
      %v1452 = vmax.f32 %v1388, 0.0
      %v1453 = vmax.f32 %v1389, 0.0
      %v1454 = vmax.f32 %v1390, 0.0
      %v1455 = vmax.f32 %v1391, 0.0
      %v1456 = vmax.f32 %v1392, 0.0
      %v1457 = vmax.f32 %v1393, 0.0
      %v1458 = vmax.f32 %v1394, 0.0
      %v1459 = vmax.f32 %v1395, 0.0
      %v1460 = vmax.f32 %v1396, 0.0
      %v1461 = vmax.f32 %v1397, 0.0
      %v1462 = vmax.f32 %v1398, 0.0
      %v1463 = vmax.f32 %v1399, 0.0
      %v1464 = vmax.f32 %v1400, 0.0
      %v1465 = vmax.f32 %v1401, 0.0
      %v1466 = vmax.f32 %v1402, 0.0
      %v1467 = vmax.f32 %v1403, 0.0
      %v1468 = vmax.f32 %v1404, 0.0
      %v1469 = vmax.f32 %v1405, 0.0
      %v1470 = vmax.f32 %v1406, 0.0
      %v1471 = vmax.f32 %v1407, 0.0
      %v1472 = vmax.f32 %v1408, 0.0
      %v1473 = vmax.f32 %v1409, 0.0
      %v1474 = vmax.f32 %v1410, 0.0
      %v1475 = vmax.f32 %v1411, 0.0
      %v1476 = vmax.f32 %v1412, 0.0
      %v1477 = vmax.f32 %v1413, 0.0
      %v1478 = vmax.f32 %v1414, 0.0
      %v1479 = vmax.f32 %v1415, 0.0
      %v1480 = vmax.f32 %v1416, 0.0
      %v1481 = vmax.f32 %v1417, 0.0
      %v1482 = vmax.f32 %v1418, 0.0
      %v1483 = vmax.f32 %v1419, 0.0
      %v1484 = vmax.f32 %v1420, 0.0
      %v1485 = vmax.f32 %v1421, 0.0
      %v1486 = vmax.f32 %v1422, 0.0
      %v1487 = vmax.f32 %v1423, 0.0
      %v1488 = vmax.f32 %v1424, 0.0
      %v1489 = vmax.f32 %v1425, 0.0
      %v1490 = vmax.f32 %v1426, 0.0
      %v1491 = vmax.f32 %v1427, 0.0
      %v1492 = vmax.f32 %v1428, 0.0
      %v1493 = vmax.f32 %v1429, 0.0
      %v1494 = vmax.f32 %v1430, 0.0
      %v1495 = vmax.f32 %v1431, 0.0
      %v1496 = vmax.f32 %v1432, 0.0
      %v1497 = vmax.f32 %v1433, 0.0
      %v1498 = vmax.f32 %v1434, 0.0
      %v1499 = vmax.f32 %v1435, 0.0
      %v1500 = vmax.f32 %v1436, 0.0
      %v1501 = vmax.f32 %v1437, 0.0
      %v1502 = vmax.f32 %v1438, 0.0
      %v1503 = vmax.f32 %v1439, 0.0
      %v1504 = vmax.f32 %v1440, 0.0
      %v1505 = vpack.c.bf16 %v1441, %v1441
      %v1506 = vpack.c.bf16 %v1442, %v1442
      %v1507 = vpack.c.bf16 %v1443, %v1443
      %v1508 = vpack.c.bf16 %v1444, %v1444
      %v1509 = vpack.c.bf16 %v1445, %v1445
      %v1510 = vpack.c.bf16 %v1446, %v1446
      %v1511 = vpack.c.bf16 %v1447, %v1447
      %v1512 = vpack.c.bf16 %v1448, %v1448
      %v1513 = vpack.c.bf16 %v1449, %v1449
      %v1514 = vpack.c.bf16 %v1450, %v1450
      %v1515 = vpack.c.bf16 %v1451, %v1451
      %v1516 = vpack.c.bf16 %v1452, %v1452
      %v1517 = vpack.c.bf16 %v1453, %v1453
      %v1518 = vpack.c.bf16 %v1454, %v1454
      %v1519 = vpack.c.bf16 %v1455, %v1455
      %v1520 = vpack.c.bf16 %v1456, %v1456
      %v1521 = vpack.c.bf16 %v1457, %v1457
      %v1522 = vpack.c.bf16 %v1458, %v1458
      %v1523 = vpack.c.bf16 %v1459, %v1459
      %v1524 = vpack.c.bf16 %v1460, %v1460
      %v1525 = vpack.c.bf16 %v1461, %v1461
      %v1526 = vpack.c.bf16 %v1462, %v1462
      %v1527 = vpack.c.bf16 %v1463, %v1463
      %v1528 = vpack.c.bf16 %v1464, %v1464
      %v1529 = vpack.c.bf16 %v1465, %v1465
      %v1530 = vpack.c.bf16 %v1466, %v1466
      %v1531 = vpack.c.bf16 %v1467, %v1467
      %v1532 = vpack.c.bf16 %v1468, %v1468
      %v1533 = vpack.c.bf16 %v1469, %v1469
      %v1534 = vpack.c.bf16 %v1470, %v1470
      %v1535 = vpack.c.bf16 %v1471, %v1471
      %v1536 = vpack.c.bf16 %v1472, %v1472
      %v1537 = vpack.c.bf16 %v1473, %v1473
      %v1538 = vpack.c.bf16 %v1474, %v1474
      %v1539 = vpack.c.bf16 %v1475, %v1475
      %v1540 = vpack.c.bf16 %v1476, %v1476
      %v1541 = vpack.c.bf16 %v1477, %v1477
      %v1542 = vpack.c.bf16 %v1478, %v1478
      %v1543 = vpack.c.bf16 %v1479, %v1479
      %v1544 = vpack.c.bf16 %v1480, %v1480
      %v1545 = vpack.c.bf16 %v1481, %v1481
      %v1546 = vpack.c.bf16 %v1482, %v1482
      %v1547 = vpack.c.bf16 %v1483, %v1483
      %v1548 = vpack.c.bf16 %v1484, %v1484
      %v1549 = vpack.c.bf16 %v1485, %v1485
      %v1550 = vpack.c.bf16 %v1486, %v1486
      %v1551 = vpack.c.bf16 %v1487, %v1487
      %v1552 = vpack.c.bf16 %v1488, %v1488
      %v1553 = vpack.c.bf16 %v1489, %v1489
      %v1554 = vpack.c.bf16 %v1490, %v1490
      %v1555 = vpack.c.bf16 %v1491, %v1491
      %v1556 = vpack.c.bf16 %v1492, %v1492
      %v1557 = vpack.c.bf16 %v1493, %v1493
      %v1558 = vpack.c.bf16 %v1494, %v1494
      %v1559 = vpack.c.bf16 %v1495, %v1495
      %v1560 = vpack.c.bf16 %v1496, %v1496
      %v1561 = vpack.c.bf16 %v1497, %v1497
      %v1562 = vpack.c.bf16 %v1498, %v1498
      %v1563 = vpack.c.bf16 %v1499, %v1499
      %v1564 = vpack.c.bf16 %v1500, %v1500
      %v1565 = vpack.c.bf16 %v1501, %v1501
      %v1566 = vpack.c.bf16 %v1502, %v1502
      %v1567 = vpack.c.bf16 %v1503, %v1503
      %v1568 = vpack.c.bf16 %v1504, %v1504
      %vm1569 = vcmask 125952
      %1570 = vst.msk [vmem:[%s251] sm:$0xf] %vm1569, %v1505
      %1571 = vst.msk [vmem:[%s251 + $0x4] sm:$0xf] %vm1569, %v1506
      %1572 = vst.msk [vmem:[%s251 + $0x8] sm:$0xf] %vm1569, %v1507
      %1573 = vst.msk [vmem:[%s251 + $0xc] sm:$0xf] %vm1569, %v1508
      %1574 = vst.msk [vmem:[%s251 + $0x10] sm:$0xf] %vm1569, %v1509
      %1575 = vst.msk [vmem:[%s251 + $0x14] sm:$0xf] %vm1569, %v1510
      %1576 = vst.msk [vmem:[%s251 + $0x18] sm:$0xf] %vm1569, %v1511
      %1577 = vst.msk [vmem:[%s251 + $0x1c] sm:$0xf] %vm1569, %v1512
      %1578 = vst.msk [vmem:[%s251 + $0x20] sm:$0xf] %vm1569, %v1513
      %1579 = vst.msk [vmem:[%s251 + $0x24] sm:$0xf] %vm1569, %v1514
      %1580 = vst.msk [vmem:[%s251 + $0x28] sm:$0xf] %vm1569, %v1515
      %1581 = vst.msk [vmem:[%s251 + $0x2c] sm:$0xf] %vm1569, %v1516
      %1582 = vst.msk [vmem:[%s251 + $0x30] sm:$0xf] %vm1569, %v1517
      %1583 = vst.msk [vmem:[%s251 + $0x34] sm:$0xf] %vm1569, %v1518
      %1584 = vst.msk [vmem:[%s251 + $0x38] sm:$0xf] %vm1569, %v1519
      %1585 = vst.msk [vmem:[%s251 + $0x3c] sm:$0xf] %vm1569, %v1520
      %1586 = vst.msk [vmem:[%s251 + $0x40] sm:$0xf] %vm1569, %v1521
      %1587 = vst.msk [vmem:[%s251 + $0x44] sm:$0xf] %vm1569, %v1522
      %1588 = vst.msk [vmem:[%s251 + $0x48] sm:$0xf] %vm1569, %v1523
      %1589 = vst.msk [vmem:[%s251 + $0x4c] sm:$0xf] %vm1569, %v1524
      %1590 = vst.msk [vmem:[%s251 + $0x50] sm:$0xf] %vm1569, %v1525
      %1591 = vst.msk [vmem:[%s251 + $0x54] sm:$0xf] %vm1569, %v1526
      %1592 = vst.msk [vmem:[%s251 + $0x58] sm:$0xf] %vm1569, %v1527
      %1593 = vst.msk [vmem:[%s251 + $0x5c] sm:$0xf] %vm1569, %v1528
      %1594 = vst.msk [vmem:[%s251 + $0x60] sm:$0xf] %vm1569, %v1529
      %1595 = vst.msk [vmem:[%s251 + $0x64] sm:$0xf] %vm1569, %v1530
      %1596 = vst.msk [vmem:[%s251 + $0x68] sm:$0xf] %vm1569, %v1531
      %1597 = vst.msk [vmem:[%s251 + $0x6c] sm:$0xf] %vm1569, %v1532
      %1598 = vst.msk [vmem:[%s251 + $0x70] sm:$0xf] %vm1569, %v1533
      %1599 = vst.msk [vmem:[%s251 + $0x74] sm:$0xf] %vm1569, %v1534
      %1600 = vst.msk [vmem:[%s251 + $0x78] sm:$0xf] %vm1569, %v1535
      %1601 = vst.msk [vmem:[%s251 + $0x7c] sm:$0xf] %vm1569, %v1536
      %1602 = vst.msk [vmem:[%s251 + $0x80] sm:$0xf] %vm1569, %v1537
      %1603 = vst.msk [vmem:[%s251 + $0x84] sm:$0xf] %vm1569, %v1538
      %1604 = vst.msk [vmem:[%s251 + $0x88] sm:$0xf] %vm1569, %v1539
      %1605 = vst.msk [vmem:[%s251 + $0x8c] sm:$0xf] %vm1569, %v1540
      %1606 = vst.msk [vmem:[%s251 + $0x90] sm:$0xf] %vm1569, %v1541
      %1607 = vst.msk [vmem:[%s251 + $0x94] sm:$0xf] %vm1569, %v1542
      %1608 = vst.msk [vmem:[%s251 + $0x98] sm:$0xf] %vm1569, %v1543
      %1609 = vst.msk [vmem:[%s251 + $0x9c] sm:$0xf] %vm1569, %v1544
      %1610 = vst.msk [vmem:[%s251 + $0xa0] sm:$0xf] %vm1569, %v1545
      %1611 = vst.msk [vmem:[%s251 + $0xa4] sm:$0xf] %vm1569, %v1546
      %1612 = vst.msk [vmem:[%s251 + $0xa8] sm:$0xf] %vm1569, %v1547
      %1613 = vst.msk [vmem:[%s251 + $0xac] sm:$0xf] %vm1569, %v1548
      %1614 = vst.msk [vmem:[%s251 + $0xb0] sm:$0xf] %vm1569, %v1549
      %1615 = vst.msk [vmem:[%s251 + $0xb4] sm:$0xf] %vm1569, %v1550
      %1616 = vst.msk [vmem:[%s251 + $0xb8] sm:$0xf] %vm1569, %v1551
      %1617 = vst.msk [vmem:[%s251 + $0xbc] sm:$0xf] %vm1569, %v1552
      %1618 = vst.msk [vmem:[%s251 + $0xc0] sm:$0xf] %vm1569, %v1553
      %1619 = vst.msk [vmem:[%s251 + $0xc4] sm:$0xf] %vm1569, %v1554
      %1620 = vst.msk [vmem:[%s251 + $0xc8] sm:$0xf] %vm1569, %v1555
      %1621 = vst.msk [vmem:[%s251 + $0xcc] sm:$0xf] %vm1569, %v1556
      %1622 = vst.msk [vmem:[%s251 + $0xd0] sm:$0xf] %vm1569, %v1557
      %1623 = vst.msk [vmem:[%s251 + $0xd4] sm:$0xf] %vm1569, %v1558
      %1624 = vst.msk [vmem:[%s251 + $0xd8] sm:$0xf] %vm1569, %v1559
      %1625 = vst.msk [vmem:[%s251 + $0xdc] sm:$0xf] %vm1569, %v1560
      %1626 = vst.msk [vmem:[%s251 + $0xe0] sm:$0xf] %vm1569, %v1561
      %1627 = vst.msk [vmem:[%s251 + $0xe4] sm:$0xf] %vm1569, %v1562
      %1628 = vst.msk [vmem:[%s251 + $0xe8] sm:$0xf] %vm1569, %v1563
      %1629 = vst.msk [vmem:[%s251 + $0xec] sm:$0xf] %vm1569, %v1564
      %1630 = vst.msk [vmem:[%s251 + $0xf0] sm:$0xf] %vm1569, %v1565
      %1631 = vst.msk [vmem:[%s251 + $0xf4] sm:$0xf] %vm1569, %v1566
      %1632 = vst.msk [vmem:[%s251 + $0xf8] sm:$0xf] %vm1569, %v1567
      %1633 = vst.msk [vmem:[%s251 + $0xfc] sm:$0xf] %vm1569, %v1568
      %s1634 = smul.u32 64, %s16
      %p1635 = scmp.lt.s32.totalorder %s1634, 255
      %s1636 = scalar_select %p1635, %s1634, 255
      %s1637 = smul.addr %s1636, 4
      %s1638 = scalar_lea.vmem %s5, %s1637
      // Predicated region
      $region41: #{_lambda_.24} parent=39 // pred_check
        %p1639 = pneg %p149
      $region42: #{_lambda_.24} parent=39 // pred_check_branch
        %1641 = sbr.rel (%p1639) target = $region44
      $region43: #{_lambda_.24} parent=39 // pred_region
        %s1642 = smul.u32 64, %s16
      $region44: #{_lambda_.24} parent=39 // pred_fallthru
        _
    $region40: #{_lambda_.24} parent=5 // pred_fallthru
      _
    %p1643 = scmp.le.s32.totalorder 2, %s11
    // Predicated region
    $region45: #{_lambda_.24} parent=5 // pred_check
      %p1644 = pneg %p1643
    $region46: #{_lambda_.24} parent=5 // pred_check_branch
      %1646 = sbr.rel (%p1644) target = $region48
    $region47: #{_lambda_.24} parent=5 // pred_region
      %s1647 = ssub.s32 %s11, 2
      // Predicated region
      $region49: #{_lambda_.24} parent=47 // pred_check
        %p1648 = pneg %p155
      $region50: #{_lambda_.24} parent=47 // pred_check_branch
        %1650 = sbr.rel (%p1648) target = $region52
      $region51: #{_lambda_.24} parent=47 // pred_region
        %s1651 = smul.u32 64, %s17
        %p1652 = scmp.lt.s32.totalorder %s1651, 255
        %s1653 = scalar_select %p1652, %s1651, 255
        %s1654 = smul.addr %s1653, 4
        %s1655 = scalar_lea.vmem %s5, %s1654
      $region52: #{_lambda_.24} parent=47 // pred_fallthru
        _
    $region48: #{_lambda_.24} parent=5 // pred_fallthru
      _
  $region6: #{_lambda_.24} parent=0 // loop_footer
    %s15 = sadd.s32 1, %s11
  $region7: #{_lambda_.24} parent=0 // loop_footer_branch
    %10 = sbr.rel target = $region3
  $region8: #{_lambda_.24} parent=0 // loop_exit
    _

// kernel: _lambda_.29
$region0: #{_lambda_.29}
  #allocation0 [shape = 'u32[]', space=smem, size = 0x4, offset = 0x4, fixed_abs, tag = 'smem constant byte address 0x4 - core index']
  #allocation1 [shape = 'u32[72,128]{1,0:T(1,128)}', space=vmem, size = 0x9000, scoped, tag = 'internal scratch']
  %s0 = inlined_call_operand.vmem [shape: bf16[512,144], index: 0, kind: input, shape index: {}]
  %s1 = inlined_call_operand.vmem [shape: bf16[144,32], index: 1, kind: input, shape index: {}]
  %s2 = inlined_call_operand.vmem [shape: f32[1,32], index: 2, kind: input, shape index: {}]
  %s3 = inlined_call_operand.vmem [shape: f32[1,32], index: 3, kind: input, shape index: {}]
  %s4 = inlined_call_operand.vmem [shape: bf16[512,32], index: 4, kind: output, shape index: {}]
  %s5 = sld [smem:[#allocation0]]
  $region49: #{_lambda_.29} parent=0
    _
  %s7 = ssub.s32 1, %s5
  %s8 = scalar_select 0, %s7, %s5
  loop: start=0, step=1, limit=4
  $region2: #{_lambda_.29} parent=0 // loop_pre_header
    _
  $region3: #{_lambda_.29} parent=0 // loop_header
    %s10 = sphi 0, %s14
    %p11 = scmp.ge.s32.totalorder %s10, 4
    %s20 = sphi 0, %s22
    %s23 = sphi 0, %s20
    %s24 = sphi 0, %s23
    %s40 = sphi 0, %s24
    %s44 = sphi 0, %s44
    %s46 = sphi 0, %s44
    %s47 = sphi 0, %s46
    %s61 = sphi 0, %s47
    %s65 = sphi 0, %s65
    %s67 = sphi 0, %s65
    %s68 = sphi 0, %s67
    %s82 = sphi 0, %s68
    %s86 = sphi 0, %s86
    %s88 = sphi 0, %s86
    %s89 = sphi 0, %s88
    %s103 = sphi 0, %s89
    %s109 = sphi 0, %s111
    %s112 = sphi 0, %s109
    %s113 = sphi 0, %s112
    %s129 = sphi 0, %s113
  $region4: #{_lambda_.29} parent=0 // loop_header_branch
    %13 = sbr.rel (%p11) target = $region8
  $region5: #{_lambda_.29} parent=0 // loop_body
    %s15 = ssub.s32 %s10, 1
    %s16 = ssub.s32 %s10, 2
    %s17 = sadd.s32 %s10, 1
    %s18 = ssub.s32 %s10, %s17
    %p19 = scmp.eq.s32.totalorder %s18, 0
    %s21 = sadd.s32 %s20, 1
    %s22 = scalar_select %p19, %s20, %s21
    %p25 = pneg %p19
    %p26 = scmp.eq.s32.totalorder %s10, 1
    %p27 = por %p25, %p26
    %p28 = scmp.ne.s32.totalorder %s20, %s23
    %p29 = scmp.eq.s32.totalorder %s10, 0
    %p30 = por %p28, %p29
    %p31 = scmp.ne.s32.totalorder %s20, %s23
    %p32 = scmp.eq.s32.totalorder %s15, 1
    %p33 = por %p31, %p32
    %p34 = scmp.ne.s32.totalorder %s23, %s24
    %p35 = scmp.eq.s32.totalorder %s15, 0
    %p36 = por %p34, %p35
    %p37 = scmp.ne.s32.totalorder %s23, %s24
    %p38 = scmp.eq.s32.totalorder %s16, 1
    %p39 = por %p37, %p38
    %p41 = scmp.ne.s32.totalorder %s24, %s40
    %p42 = scmp.eq.s32.totalorder %s16, 0
    %p43 = por %p41, %p42
    %s45 = sadd.s32 %s44, 1
    %p48 = scmp.eq.s32.totalorder %s10, 1
    %p49 = scmp.ne.s32.totalorder %s44, %s46
    %p50 = scmp.eq.s32.totalorder %s10, 0
    %p51 = por %p49, %p50
    %p52 = scmp.ne.s32.totalorder %s44, %s46
    %p53 = scmp.eq.s32.totalorder %s15, 1
    %p54 = por %p52, %p53
    %p55 = scmp.ne.s32.totalorder %s46, %s47
    %p56 = scmp.eq.s32.totalorder %s15, 0
    %p57 = por %p55, %p56
    %p58 = scmp.ne.s32.totalorder %s46, %s47
    %p59 = scmp.eq.s32.totalorder %s16, 1
    %p60 = por %p58, %p59
    %p62 = scmp.ne.s32.totalorder %s47, %s61
    %p63 = scmp.eq.s32.totalorder %s16, 0
    %p64 = por %p62, %p63
    %s66 = sadd.s32 %s65, 1
    %p69 = scmp.eq.s32.totalorder %s10, 1
    %p70 = scmp.ne.s32.totalorder %s65, %s67
    %p71 = scmp.eq.s32.totalorder %s10, 0
    %p72 = por %p70, %p71
    %p73 = scmp.ne.s32.totalorder %s65, %s67
    %p74 = scmp.eq.s32.totalorder %s15, 1
    %p75 = por %p73, %p74
    %p76 = scmp.ne.s32.totalorder %s67, %s68
    %p77 = scmp.eq.s32.totalorder %s15, 0
    %p78 = por %p76, %p77
    %p79 = scmp.ne.s32.totalorder %s67, %s68
    %p80 = scmp.eq.s32.totalorder %s16, 1
    %p81 = por %p79, %p80
    %p83 = scmp.ne.s32.totalorder %s68, %s82
    %p84 = scmp.eq.s32.totalorder %s16, 0
    %p85 = por %p83, %p84
    %s87 = sadd.s32 %s86, 1
    %p90 = scmp.eq.s32.totalorder %s10, 1
    %p91 = scmp.ne.s32.totalorder %s86, %s88
    %p92 = scmp.eq.s32.totalorder %s10, 0
    %p93 = por %p91, %p92
    %p94 = scmp.ne.s32.totalorder %s86, %s88
    %p95 = scmp.eq.s32.totalorder %s15, 1
    %p96 = por %p94, %p95
    %p97 = scmp.ne.s32.totalorder %s88, %s89
    %p98 = scmp.eq.s32.totalorder %s15, 0
    %p99 = por %p97, %p98
    %p100 = scmp.ne.s32.totalorder %s88, %s89
    %p101 = scmp.eq.s32.totalorder %s16, 1
    %p102 = por %p100, %p101
    %p104 = scmp.ne.s32.totalorder %s89, %s103
    %p105 = scmp.eq.s32.totalorder %s16, 0
    %p106 = por %p104, %p105
    %s107 = ssub.s32 %s10, %s17
    %p108 = scmp.eq.s32.totalorder %s107, 0
    %s110 = sadd.s32 %s109, 1
    %s111 = scalar_select %p108, %s109, %s110
    %p114 = pneg %p108
    %p115 = scmp.eq.s32.totalorder %s10, 1
    %p116 = por %p114, %p115
    %p117 = scmp.ne.s32.totalorder %s109, %s112
    %p118 = scmp.eq.s32.totalorder %s10, 0
    %p119 = por %p117, %p118
    %p120 = scmp.ne.s32.totalorder %s109, %s112
    %p121 = scmp.eq.s32.totalorder %s15, 1
    %p122 = por %p120, %p121
    %p123 = scmp.ne.s32.totalorder %s112, %s113
    %p124 = scmp.eq.s32.totalorder %s15, 0
    %p125 = por %p123, %p124
    %p126 = scmp.ne.s32.totalorder %s112, %s113
    %p127 = scmp.eq.s32.totalorder %s16, 1
    %p128 = por %p126, %p127
    %p130 = scmp.ne.s32.totalorder %s113, %s129
    %p131 = scmp.eq.s32.totalorder %s16, 0
    %p132 = por %p130, %p131
    %p133 = scmp.le.s32.totalorder 1, %s10
    %p134 = scmp.lt.s32.totalorder %s10, 3
    %p135 = pnand %p133, %p134
    %p136 = pneg %p135
    // Predicated region
    $region9: #{_lambda_.29} parent=5 // pred_check
      _
    $region10: #{_lambda_.29} parent=5 // pred_check_branch
      %138 = sbr.rel (%p135) target = $region12
    $region11: #{_lambda_.29} parent=5 // pred_region
      %s139 = ssub.s32 %s10, 1
      // Predicated region
      $region13: #{_lambda_.29} parent=11 // pred_check
        %p140 = pneg %p57
      $region14: #{_lambda_.29} parent=11 // pred_check_branch
        %142 = sbr.rel (%p140) target = $region16
      $region15: #{_lambda_.29} parent=11 // pred_region
        _
      $region16: #{_lambda_.29} parent=11 // pred_fallthru
        _
      // Predicated region
      $region17: #{_lambda_.29} parent=11 // pred_check
        %p143 = pneg %p78
      $region18: #{_lambda_.29} parent=11 // pred_check_branch
        %145 = sbr.rel (%p143) target = $region20
      $region19: #{_lambda_.29} parent=11 // pred_region
        _
      $region20: #{_lambda_.29} parent=11 // pred_fallthru
        _
      // Predicated region
      $region21: #{_lambda_.29} parent=11 // pred_check
        %p146 = pneg %p99
      $region22: #{_lambda_.29} parent=11 // pred_check_branch
        %148 = sbr.rel (%p146) target = $region24
      $region23: #{_lambda_.29} parent=11 // pred_region
        _
      $region24: #{_lambda_.29} parent=11 // pred_fallthru
        _
    $region12: #{_lambda_.29} parent=5 // pred_fallthru
      _
    %p149 = scmp.lt.s32.totalorder %s10, 2
    // Predicated region
    $region25: #{_lambda_.29} parent=5 // pred_check
      %p150 = pneg %p149
    $region26: #{_lambda_.29} parent=5 // pred_check_branch
      %152 = sbr.rel (%p150) target = $region28
    $region27: #{_lambda_.29} parent=5 // pred_region
      // Predicated region
      $region29: #{_lambda_.29} parent=27 // pred_check
        %p153 = pneg %p30
      $region30: #{_lambda_.29} parent=27 // pred_check_branch
        %155 = sbr.rel (%p153) target = $region32
      $region31: #{_lambda_.29} parent=27 // pred_region
        %s156 = smul.u32 32, %s10
        %p157 = scmp.lt.s32.totalorder %s156, 63
        %s158 = scalar_select %p157, %s156, 63
        %s159 = smul.addr %s158, 2
        %s160 = smul.addr %s159, 4
        %s161 = scalar_lea.vmem %s0, %s160
        %s162 = smul.u32 32, %s10
      $region32: #{_lambda_.29} parent=27 // pred_fallthru
        _
    $region28: #{_lambda_.29} parent=5 // pred_fallthru
      _
    %p163 = scmp.le.s32.totalorder 1, %s10
    %p164 = scmp.lt.s32.totalorder %s10, 3
    %p165 = pnand %p163, %p164
    %p166 = pneg %p165
    // Predicated region
    $region33: #{_lambda_.29} parent=5 // pred_check
      _
    $region34: #{_lambda_.29} parent=5 // pred_check_branch
      %168 = sbr.rel (%p165) target = $region36
    $region35: #{_lambda_.29} parent=5 // pred_region
      %s169 = ssub.s32 %s10, 1
      %s170 = smul.u32 32, %s15
      %p171 = scmp.lt.s32.totalorder %s170, 63
      %s172 = scalar_select %p171, %s170, 63
      %s173 = smul.addr %s172, 2
      %s174 = smul.addr %s173, 4
      %s175 = scalar_lea.vmem %s0, %s174
      %p176 = pneg %p36
      %p177 = pneg %p33
      %p178 = pneg %p57
      %p179 = pneg %p54
      %p180 = pneg %p78
      %p181 = pneg %p75
      %p182 = pneg %p99
      %p183 = pneg %p96
      %p184 = pneg %p125
      %p185 = pneg %p122
      %s186 = smul.u32 32, %s15
      %p187 = scmp.lt.s32.totalorder %s186, 63
      %s188 = scalar_select %p187, %s186, 63
      %s189 = smul.addr %s188, 4
      %s190 = scalar_lea.vmem %s4, %s189
      %s191 = smul.u32 32, %s15
      %p192 = scmp.lt.s32.totalorder %s191, 63
      %s193 = scalar_select %p192, %s191, 63
      %s194 = smul.addr %s193, 2
      %s195 = smul.addr %s194, 4
      %s196 = scalar_lea.vmem %s0, %s195
      %s197 = smul.u32 32, %s15
      %s198 = smul.u32 32, %s15
      %p199 = scmp.lt.s32.totalorder %s198, 63
      %s200 = scalar_select %p199, %s198, 63
      %s201 = smul.addr %s200, 4
      %s202 = scalar_lea.vmem %s4, %s201
      %s203 = smul.u32 32, %s15
      %v205 = vld [vmem:[%s196] sm:$0xff]
      %v206 = vld [vmem:[%s196 + $0x8] sm:$0xff]
      %v207 = vld [vmem:[%s196 + $0x10] sm:$0xff]
      %v208 = vld [vmem:[%s196 + $0x18] sm:$0xff]
      %v209 = vld [vmem:[%s196 + $0x20] sm:$0xff]
      %v210 = vld [vmem:[%s196 + $0x28] sm:$0xff]
      %v211 = vld [vmem:[%s196 + $0x30] sm:$0xff]
      %v212 = vld [vmem:[%s196 + $0x38] sm:$0xff]
      %v213 = vld [vmem:[%s196 + $0x40] sm:$0xff]
      %v214 = vld [vmem:[%s196 + $0x48] sm:$0xff]
      %v215 = vld [vmem:[%s196 + $0x50] sm:$0xff]
      %v216 = vld [vmem:[%s196 + $0x58] sm:$0xff]
      %v217 = vld [vmem:[%s196 + $0x60] sm:$0xff]
      %v218 = vld [vmem:[%s196 + $0x68] sm:$0xff]
      %v219 = vld [vmem:[%s196 + $0x70] sm:$0xff]
      %v220 = vld [vmem:[%s196 + $0x78] sm:$0xff]
      %v221 = vld [vmem:[%s196 + $0x80] sm:$0xff]
      %v222 = vld [vmem:[%s196 + $0x88] sm:$0xff]
      %v223 = vld [vmem:[%s196 + $0x90] sm:$0xff]
      %v224 = vld [vmem:[%s196 + $0x98] sm:$0xff]
      %v225 = vld [vmem:[%s196 + $0xa0] sm:$0xff]
      %v226 = vld [vmem:[%s196 + $0xa8] sm:$0xff]
      %v227 = vld [vmem:[%s196 + $0xb0] sm:$0xff]
      %v228 = vld [vmem:[%s196 + $0xb8] sm:$0xff]
      %v229 = vld [vmem:[%s196 + $0xc0] sm:$0xff]
      %v230 = vld [vmem:[%s196 + $0xc8] sm:$0xff]
      %v231 = vld [vmem:[%s196 + $0xd0] sm:$0xff]
      %v232 = vld [vmem:[%s196 + $0xd8] sm:$0xff]
      %v233 = vld [vmem:[%s196 + $0xe0] sm:$0xff]
      %v234 = vld [vmem:[%s196 + $0xe8] sm:$0xff]
      %v235 = vld [vmem:[%s196 + $0xf0] sm:$0xff]
      %v236 = vld [vmem:[%s196 + $0xf8] sm:$0xff]
      %v237 = vld [vmem:[%s1] sm:$0xf]
      %v238 = vld [vmem:[%s1 + $0x4] sm:$0xf]
      %v239 = vld [vmem:[%s1 + $0x8] sm:$0xf]
      %v240 = vld [vmem:[%s1 + $0xc] sm:$0xf]
      %v241 = vld [vmem:[%s1 + $0x10] sm:$0xf]
      %v242 = vld [vmem:[%s1 + $0x14] sm:$0xf]
      %v243 = vld [vmem:[%s1 + $0x18] sm:$0xf]
      %v244 = vld [vmem:[%s1 + $0x1c] sm:$0xf]
      %v245 = vld [vmem:[%s1 + $0x20] sm:$0xf]
      %v246 = vld [vmem:[%s1 + $0x24] sm:$0xf]
      %v247 = vld [vmem:[%s1 + $0x28] sm:$0xf]
      %v248 = vld [vmem:[%s1 + $0x2c] sm:$0xf]
      %v249 = vld [vmem:[%s1 + $0x30] sm:$0xf]
      %v250 = vld [vmem:[%s1 + $0x34] sm:$0xf]
      %v251 = vld [vmem:[%s1 + $0x38] sm:$0xf]
      %v252 = vld [vmem:[%s1 + $0x3c] sm:$0xf]
      %v253 = vld [vmem:[%s1 + $0x40] sm:$0xf]
      %v254 = vld [vmem:[%s1 + $0x44] sm:$0xf]
      %v287 = vunpack.c.l.b16 %v205
      %v288 = vunpack.c.h.b16 %v205
      %v289 = vunpack.c.l.b16 %v206
      %v290 = vunpack.c.h.b16 %v206
      %v291 = vunpack.c.l.b16 %v207
      %v292 = vunpack.c.h.b16 %v207
      %v293 = vunpack.c.l.b16 %v208
      %v294 = vunpack.c.h.b16 %v208
      %v295 = vunpack.c.l.b16 %v209
      %v296 = vunpack.c.h.b16 %v209
      %v297 = vunpack.c.l.b16 %v210
      %v298 = vunpack.c.h.b16 %v210
      %v299 = vunpack.c.l.b16 %v211
      %v300 = vunpack.c.h.b16 %v211
      %v301 = vunpack.c.l.b16 %v212
      %v302 = vunpack.c.h.b16 %v212
      %v303 = vunpack.c.l.b16 %v213
      %v304 = vunpack.c.h.b16 %v213
      %v305 = vunpack.c.l.b16 %v214
      %v306 = vunpack.c.h.b16 %v214
      %v307 = vunpack.c.l.b16 %v215
      %v308 = vunpack.c.h.b16 %v215
      %v309 = vunpack.c.l.b16 %v216
      %v310 = vunpack.c.h.b16 %v216
      %v311 = vunpack.c.l.b16 %v217
      %v312 = vunpack.c.h.b16 %v217
      %v313 = vunpack.c.l.b16 %v218
      %v314 = vunpack.c.h.b16 %v218
      %v315 = vunpack.c.l.b16 %v219
      %v316 = vunpack.c.h.b16 %v219
      %v317 = vunpack.c.l.b16 %v220
      %v318 = vunpack.c.h.b16 %v220
      %v319 = vunpack.c.l.b16 %v221
      %v320 = vunpack.c.h.b16 %v221
      %v321 = vunpack.c.l.b16 %v222
      %v322 = vunpack.c.h.b16 %v222
      %v323 = vunpack.c.l.b16 %v223
      %v324 = vunpack.c.h.b16 %v223
      %v325 = vunpack.c.l.b16 %v224
      %v326 = vunpack.c.h.b16 %v224
      %v327 = vunpack.c.l.b16 %v225
      %v328 = vunpack.c.h.b16 %v225
      %v329 = vunpack.c.l.b16 %v226
      %v330 = vunpack.c.h.b16 %v226
      %v331 = vunpack.c.l.b16 %v227
      %v332 = vunpack.c.h.b16 %v227
      %v333 = vunpack.c.l.b16 %v228
      %v334 = vunpack.c.h.b16 %v228
      %v335 = vunpack.c.l.b16 %v229
      %v336 = vunpack.c.h.b16 %v229
      %v337 = vunpack.c.l.b16 %v230
      %v338 = vunpack.c.h.b16 %v230
      %v339 = vunpack.c.l.b16 %v231
      %v340 = vunpack.c.h.b16 %v231
      %v341 = vunpack.c.l.b16 %v232
      %v342 = vunpack.c.h.b16 %v232
      %v343 = vunpack.c.l.b16 %v233
      %v344 = vunpack.c.h.b16 %v233
      %v345 = vunpack.c.l.b16 %v234
      %v346 = vunpack.c.h.b16 %v234
      %v347 = vunpack.c.l.b16 %v235
      %v348 = vunpack.c.h.b16 %v235
      %v349 = vunpack.c.l.b16 %v236
      %v350 = vunpack.c.h.b16 %v236
      %v351 = vpack.c.b16 %v289, %v287
      %v352 = vpack.c.b16 %v290, %v288
      %v353 = vpack.c.b16 %v293, %v291
      %v354 = vpack.c.b16 %v294, %v292
      %v355 = vpack.c.b16 %v297, %v295
      %v356 = vpack.c.b16 %v298, %v296
      %v357 = vpack.c.b16 %v301, %v299
      %v358 = vpack.c.b16 %v302, %v300
      %v359 = vpack.c.b16 %v305, %v303
      %v360 = vpack.c.b16 %v306, %v304
      %v361 = vpack.c.b16 %v309, %v307
      %v362 = vpack.c.b16 %v310, %v308
      %v363 = vpack.c.b16 %v313, %v311
      %v364 = vpack.c.b16 %v314, %v312
      %v365 = vpack.c.b16 %v317, %v315
      %v366 = vpack.c.b16 %v318, %v316
      %v367 = vpack.c.b16 %v321, %v319
      %v368 = vpack.c.b16 %v322, %v320
      %v369 = vpack.c.b16 %v325, %v323
      %v370 = vpack.c.b16 %v326, %v324
      %v371 = vpack.c.b16 %v329, %v327
      %v372 = vpack.c.b16 %v330, %v328
      %v373 = vpack.c.b16 %v333, %v331
      %v374 = vpack.c.b16 %v334, %v332
      %v375 = vpack.c.b16 %v337, %v335
      %v376 = vpack.c.b16 %v338, %v336
      %v377 = vpack.c.b16 %v341, %v339
      %v378 = vpack.c.b16 %v342, %v340
      %v379 = vpack.c.b16 %v345, %v343
      %v380 = vpack.c.b16 %v346, %v344
      %v381 = vpack.c.b16 %v349, %v347
      %v382 = vpack.c.b16 %v350, %v348
      %v417 = vunpack.c.l.b16 %v237
      %v418 = vunpack.c.l.b16 %v238
      %v419 = vunpack.c.l.b16 %v239
      %v420 = vunpack.c.l.b16 %v240
      %v421 = vunpack.c.l.b16 %v241
      %v422 = vunpack.c.l.b16 %v242
      %v423 = vunpack.c.l.b16 %v243
      %v424 = vunpack.c.l.b16 %v244
      %v425 = vunpack.c.l.b16 %v245
      %v426 = vunpack.c.l.b16 %v246
      %v427 = vunpack.c.l.b16 %v247
      %v428 = vunpack.c.l.b16 %v248
      %v429 = vunpack.c.l.b16 %v249
      %v430 = vunpack.c.l.b16 %v250
      %v431 = vunpack.c.l.b16 %v251
      %v432 = vunpack.c.l.b16 %v252
      %v433 = vunpack.c.l.b16 %v253
      %v434 = vunpack.c.l.b16 %v254
      %v435 = vpack.c.b16 %v418, %v417
      %v436 = vpack.c.b16 %v420, %v419
      %v437 = vpack.c.b16 %v422, %v421
      %v438 = vpack.c.b16 %v424, %v423
      %v439 = vpack.c.b16 %v426, %v425
      %v440 = vpack.c.b16 %v428, %v427
      %v441 = vpack.c.b16 %v430, %v429
      %v442 = vpack.c.b16 %v432, %v431
      %v443 = vpack.c.b16 %v434, %v433
      %vm453 = vcmask 130048
      %v455 = vsel %vm453, %v352, 0
      %v458 = vsel %vm453, %v354, 0
      %v461 = vsel %vm453, %v356, 0
      %v464 = vsel %vm453, %v358, 0
      %v467 = vsel %vm453, %v360, 0
      %v470 = vsel %vm453, %v362, 0
      %v473 = vsel %vm453, %v364, 0
      %v476 = vsel %vm453, %v366, 0
      %v479 = vsel %vm453, %v368, 0
      %v482 = vsel %vm453, %v370, 0
      %v485 = vsel %vm453, %v372, 0
      %v488 = vsel %vm453, %v374, 0
      %v491 = vsel %vm453, %v376, 0
      %v494 = vsel %vm453, %v378, 0
      %v497 = vsel %vm453, %v380, 0
      %v500 = vsel %vm453, %v382, 0
      %502 = vmatpush.bf16.msra.mxu0 %v442
      %503 = vmatpush.bf16.msra.mxu0 %v441
      %504 = vmatpush.bf16.msra.mxu0 %v440
      %505 = vmatpush.bf16.msra.mxu0 %v439
      %506 = vmatpush.bf16.msra.mxu0 %v438
      %507 = vmatpush.bf16.msra.mxu0 %v437
      %508 = vmatpush.bf16.msra.mxu0 %v436
      %509 = vmatpush.bf16.msra.mxu0 %v435
      %510 = vmatmul.bf16.gmra.mxu0 %v351
      %v511 = vpop.f32.mrf.mxu0
      %v512 = vadd.f32 0.0, %v511
      %v513 = vpop.f32.mrf.mxu0
      %v514 = vadd.f32 0.0, %v513
      %515 = vmatmul.bf16.gmra.mxu0 %v353
      %v516 = vpop.f32.mrf.mxu0
      %v517 = vadd.f32 0.0, %v516
      %v518 = vpop.f32.mrf.mxu0
      %v519 = vadd.f32 0.0, %v518
      %520 = vmatmul.bf16.gmra.mxu0 %v355
      %v521 = vpop.f32.mrf.mxu0
      %v522 = vadd.f32 0.0, %v521
      %v523 = vpop.f32.mrf.mxu0
      %v524 = vadd.f32 0.0, %v523
      %525 = vmatmul.bf16.gmra.mxu0 %v357
      %v526 = vpop.f32.mrf.mxu0
      %v527 = vadd.f32 0.0, %v526
      %v528 = vpop.f32.mrf.mxu0
      %v529 = vadd.f32 0.0, %v528
      %530 = vmatmul.bf16.gmra.mxu0 %v359
      %v531 = vpop.f32.mrf.mxu0
      %v532 = vadd.f32 0.0, %v531
      %v533 = vpop.f32.mrf.mxu0
      %v534 = vadd.f32 0.0, %v533
      %535 = vmatmul.bf16.gmra.mxu0 %v361
      %v536 = vpop.f32.mrf.mxu0
      %v537 = vadd.f32 0.0, %v536
      %v538 = vpop.f32.mrf.mxu0
      %v539 = vadd.f32 0.0, %v538
      %540 = vmatmul.bf16.gmra.mxu0 %v363
      %v541 = vpop.f32.mrf.mxu0
      %v542 = vadd.f32 0.0, %v541
      %v543 = vpop.f32.mrf.mxu0
      %v544 = vadd.f32 0.0, %v543
      %545 = vmatmul.bf16.gmra.mxu0 %v365
      %v546 = vpop.f32.mrf.mxu0
      %v547 = vadd.f32 0.0, %v546
      %v548 = vpop.f32.mrf.mxu0
      %v549 = vadd.f32 0.0, %v548
      %550 = vmatmul.bf16.gmra.mxu0 %v367
      %v551 = vpop.f32.mrf.mxu0
      %v552 = vadd.f32 0.0, %v551
      %v553 = vpop.f32.mrf.mxu0
      %v554 = vadd.f32 0.0, %v553
      %555 = vmatmul.bf16.gmra.mxu0 %v369
      %v556 = vpop.f32.mrf.mxu0
      %v557 = vadd.f32 0.0, %v556
      %v558 = vpop.f32.mrf.mxu0
      %v559 = vadd.f32 0.0, %v558
      %560 = vmatmul.bf16.gmra.mxu0 %v371
      %v561 = vpop.f32.mrf.mxu0
      %v562 = vadd.f32 0.0, %v561
      %v563 = vpop.f32.mrf.mxu0
      %v564 = vadd.f32 0.0, %v563
      %565 = vmatmul.bf16.gmra.mxu0 %v373
      %v566 = vpop.f32.mrf.mxu0
      %v567 = vadd.f32 0.0, %v566
      %v568 = vpop.f32.mrf.mxu0
      %v569 = vadd.f32 0.0, %v568
      %570 = vmatmul.bf16.gmra.mxu0 %v375
      %v571 = vpop.f32.mrf.mxu0
      %v572 = vadd.f32 0.0, %v571
      %v573 = vpop.f32.mrf.mxu0
      %v574 = vadd.f32 0.0, %v573
      %575 = vmatmul.bf16.gmra.mxu0 %v377
      %v576 = vpop.f32.mrf.mxu0
      %v577 = vadd.f32 0.0, %v576
      %v578 = vpop.f32.mrf.mxu0
      %v579 = vadd.f32 0.0, %v578
      %580 = vmatmul.bf16.gmra.mxu0 %v379
      %v581 = vpop.f32.mrf.mxu0
      %v582 = vadd.f32 0.0, %v581
      %v583 = vpop.f32.mrf.mxu0
      %v584 = vadd.f32 0.0, %v583
      %585 = vmatmul.bf16.gmra.mxu0 %v381
      %v586 = vpop.f32.mrf.mxu0
      %v587 = vadd.f32 0.0, %v586
      %v588 = vpop.f32.mrf.mxu0
      %v589 = vadd.f32 0.0, %v588
      %590 = vdwg.mxu0
      %591 = vmatpush.bf16.msra.mxu0 0
      %592 = vmatpush.bf16.msra.mxu0 0
      %593 = vmatpush.bf16.msra.mxu0 0
      %594 = vmatpush.bf16.msra.mxu0 0
      %595 = vmatpush.bf16.msra.mxu0 0
      %596 = vmatpush.bf16.msra.mxu0 0
      %597 = vmatpush.bf16.msra.mxu0 0
      %598 = vmatpush.bf16.msra.mxu0 %v443
      %599 = vmatmul.bf16.gmra.mxu0 %v455
      %v600 = vpop.f32.mrf.mxu0
      %v601 = vadd.f32 %v512, %v600
      %v602 = vpop.f32.mrf.mxu0
      %v603 = vadd.f32 %v514, %v602
      %604 = vmatmul.bf16.gmra.mxu0 %v458
      %v605 = vpop.f32.mrf.mxu0
      %v606 = vadd.f32 %v517, %v605
      %v607 = vpop.f32.mrf.mxu0
      %v608 = vadd.f32 %v519, %v607
      %609 = vmatmul.bf16.gmra.mxu0 %v461
      %v610 = vpop.f32.mrf.mxu0
      %v611 = vadd.f32 %v522, %v610
      %v612 = vpop.f32.mrf.mxu0
      %v613 = vadd.f32 %v524, %v612
      %614 = vmatmul.bf16.gmra.mxu0 %v464
      %v615 = vpop.f32.mrf.mxu0
      %v616 = vadd.f32 %v527, %v615
      %v617 = vpop.f32.mrf.mxu0
      %v618 = vadd.f32 %v529, %v617
      %619 = vmatmul.bf16.gmra.mxu0 %v467
      %v620 = vpop.f32.mrf.mxu0
      %v621 = vadd.f32 %v532, %v620
      %v622 = vpop.f32.mrf.mxu0
      %v623 = vadd.f32 %v534, %v622
      %624 = vmatmul.bf16.gmra.mxu0 %v470
      %v625 = vpop.f32.mrf.mxu0
      %v626 = vadd.f32 %v537, %v625
      %v627 = vpop.f32.mrf.mxu0
      %v628 = vadd.f32 %v539, %v627
      %629 = vmatmul.bf16.gmra.mxu0 %v473
      %v630 = vpop.f32.mrf.mxu0
      %v631 = vadd.f32 %v542, %v630
      %v632 = vpop.f32.mrf.mxu0
      %v633 = vadd.f32 %v544, %v632
      %634 = vmatmul.bf16.gmra.mxu0 %v476
      %v635 = vpop.f32.mrf.mxu0
      %v636 = vadd.f32 %v547, %v635
      %v637 = vpop.f32.mrf.mxu0
      %v638 = vadd.f32 %v549, %v637
      %639 = vmatmul.bf16.gmra.mxu0 %v479
      %v640 = vpop.f32.mrf.mxu0
      %v641 = vadd.f32 %v552, %v640
      %v642 = vpop.f32.mrf.mxu0
      %v643 = vadd.f32 %v554, %v642
      %644 = vmatmul.bf16.gmra.mxu0 %v482
      %v645 = vpop.f32.mrf.mxu0
      %v646 = vadd.f32 %v557, %v645
      %v647 = vpop.f32.mrf.mxu0
      %v648 = vadd.f32 %v559, %v647
      %649 = vmatmul.bf16.gmra.mxu0 %v485
      %v650 = vpop.f32.mrf.mxu0
      %v651 = vadd.f32 %v562, %v650
      %v652 = vpop.f32.mrf.mxu0
      %v653 = vadd.f32 %v564, %v652
      %654 = vmatmul.bf16.gmra.mxu0 %v488
      %v655 = vpop.f32.mrf.mxu0
      %v656 = vadd.f32 %v567, %v655
      %v657 = vpop.f32.mrf.mxu0
      %v658 = vadd.f32 %v569, %v657
      %659 = vmatmul.bf16.gmra.mxu0 %v491
      %v660 = vpop.f32.mrf.mxu0
      %v661 = vadd.f32 %v572, %v660
      %v662 = vpop.f32.mrf.mxu0
      %v663 = vadd.f32 %v574, %v662
      %664 = vmatmul.bf16.gmra.mxu0 %v494
      %v665 = vpop.f32.mrf.mxu0
      %v666 = vadd.f32 %v577, %v665
      %v667 = vpop.f32.mrf.mxu0
      %v668 = vadd.f32 %v579, %v667
      %669 = vmatmul.bf16.gmra.mxu0 %v497
      %v670 = vpop.f32.mrf.mxu0
      %v671 = vadd.f32 %v582, %v670
      %v672 = vpop.f32.mrf.mxu0
      %v673 = vadd.f32 %v584, %v672
      %674 = vmatmul.bf16.gmra.mxu0 %v500
      %v675 = vpop.f32.mrf.mxu0
      %v676 = vadd.f32 %v587, %v675
      %v677 = vpop.f32.mrf.mxu0
      %v678 = vadd.f32 %v589, %v677
      %679 = vdwg.mxu0
      %v680 = vld [vmem:[%s2] sm:$0x1]
      %v682 = vperm.slane %v680, 0
      %v684 = vmul.f32 %v601, %v682
      %v685 = vmul.f32 %v603, %v682
      %v686 = vmul.f32 %v606, %v682
      %v687 = vmul.f32 %v608, %v682
      %v688 = vmul.f32 %v611, %v682
      %v689 = vmul.f32 %v613, %v682
      %v690 = vmul.f32 %v616, %v682
      %v691 = vmul.f32 %v618, %v682
      %v692 = vmul.f32 %v621, %v682
      %v693 = vmul.f32 %v623, %v682
      %v694 = vmul.f32 %v626, %v682
      %v695 = vmul.f32 %v628, %v682
      %v696 = vmul.f32 %v631, %v682
      %v697 = vmul.f32 %v633, %v682
      %v698 = vmul.f32 %v636, %v682
      %v699 = vmul.f32 %v638, %v682
      %v700 = vmul.f32 %v641, %v682
      %v701 = vmul.f32 %v643, %v682
      %v702 = vmul.f32 %v646, %v682
      %v703 = vmul.f32 %v648, %v682
      %v704 = vmul.f32 %v651, %v682
      %v705 = vmul.f32 %v653, %v682
      %v706 = vmul.f32 %v656, %v682
      %v707 = vmul.f32 %v658, %v682
      %v708 = vmul.f32 %v661, %v682
      %v709 = vmul.f32 %v663, %v682
      %v710 = vmul.f32 %v666, %v682
      %v711 = vmul.f32 %v668, %v682
      %v712 = vmul.f32 %v671, %v682
      %v713 = vmul.f32 %v673, %v682
      %v714 = vmul.f32 %v676, %v682
      %v715 = vmul.f32 %v678, %v682
      %v716 = vld [vmem:[%s3] sm:$0x1]
      %v718 = vperm.slane %v716, 0
      %v720 = vadd.f32 %v684, %v718
      %v721 = vadd.f32 %v685, %v718
      %v722 = vadd.f32 %v686, %v718
      %v723 = vadd.f32 %v687, %v718
      %v724 = vadd.f32 %v688, %v718
      %v725 = vadd.f32 %v689, %v718
      %v726 = vadd.f32 %v690, %v718
      %v727 = vadd.f32 %v691, %v718
      %v728 = vadd.f32 %v692, %v718
      %v729 = vadd.f32 %v693, %v718
      %v730 = vadd.f32 %v694, %v718
      %v731 = vadd.f32 %v695, %v718
      %v732 = vadd.f32 %v696, %v718
      %v733 = vadd.f32 %v697, %v718
      %v734 = vadd.f32 %v698, %v718
      %v735 = vadd.f32 %v699, %v718
      %v736 = vadd.f32 %v700, %v718
      %v737 = vadd.f32 %v701, %v718
      %v738 = vadd.f32 %v702, %v718
      %v739 = vadd.f32 %v703, %v718
      %v740 = vadd.f32 %v704, %v718
      %v741 = vadd.f32 %v705, %v718
      %v742 = vadd.f32 %v706, %v718
      %v743 = vadd.f32 %v707, %v718
      %v744 = vadd.f32 %v708, %v718
      %v745 = vadd.f32 %v709, %v718
      %v746 = vadd.f32 %v710, %v718
      %v747 = vadd.f32 %v711, %v718
      %v748 = vadd.f32 %v712, %v718
      %v749 = vadd.f32 %v713, %v718
      %v750 = vadd.f32 %v714, %v718
      %v751 = vadd.f32 %v715, %v718
      %v752 = vmax.f32 %v720, 0.0
      %v753 = vmax.f32 %v721, 0.0
      %v754 = vmax.f32 %v722, 0.0
      %v755 = vmax.f32 %v723, 0.0
      %v756 = vmax.f32 %v724, 0.0
      %v757 = vmax.f32 %v725, 0.0
      %v758 = vmax.f32 %v726, 0.0
      %v759 = vmax.f32 %v727, 0.0
      %v760 = vmax.f32 %v728, 0.0
      %v761 = vmax.f32 %v729, 0.0
      %v762 = vmax.f32 %v730, 0.0
      %v763 = vmax.f32 %v731, 0.0
      %v764 = vmax.f32 %v732, 0.0
      %v765 = vmax.f32 %v733, 0.0
      %v766 = vmax.f32 %v734, 0.0
      %v767 = vmax.f32 %v735, 0.0
      %v768 = vmax.f32 %v736, 0.0
      %v769 = vmax.f32 %v737, 0.0
      %v770 = vmax.f32 %v738, 0.0
      %v771 = vmax.f32 %v739, 0.0
      %v772 = vmax.f32 %v740, 0.0
      %v773 = vmax.f32 %v741, 0.0
      %v774 = vmax.f32 %v742, 0.0
      %v775 = vmax.f32 %v743, 0.0
      %v776 = vmax.f32 %v744, 0.0
      %v777 = vmax.f32 %v745, 0.0
      %v778 = vmax.f32 %v746, 0.0
      %v779 = vmax.f32 %v747, 0.0
      %v780 = vmax.f32 %v748, 0.0
      %v781 = vmax.f32 %v749, 0.0
      %v782 = vmax.f32 %v750, 0.0
      %v783 = vmax.f32 %v751, 0.0
      %v784 = vpack.c.bf16 %v752, %v752
      %v785 = vpack.c.bf16 %v753, %v753
      %v786 = vpack.c.bf16 %v754, %v754
      %v787 = vpack.c.bf16 %v755, %v755
      %v788 = vpack.c.bf16 %v756, %v756
      %v789 = vpack.c.bf16 %v757, %v757
      %v790 = vpack.c.bf16 %v758, %v758
      %v791 = vpack.c.bf16 %v759, %v759
      %v792 = vpack.c.bf16 %v760, %v760
      %v793 = vpack.c.bf16 %v761, %v761
      %v794 = vpack.c.bf16 %v762, %v762
      %v795 = vpack.c.bf16 %v763, %v763
      %v796 = vpack.c.bf16 %v764, %v764
      %v797 = vpack.c.bf16 %v765, %v765
      %v798 = vpack.c.bf16 %v766, %v766
      %v799 = vpack.c.bf16 %v767, %v767
      %v800 = vpack.c.bf16 %v768, %v768
      %v801 = vpack.c.bf16 %v769, %v769
      %v802 = vpack.c.bf16 %v770, %v770
      %v803 = vpack.c.bf16 %v771, %v771
      %v804 = vpack.c.bf16 %v772, %v772
      %v805 = vpack.c.bf16 %v773, %v773
      %v806 = vpack.c.bf16 %v774, %v774
      %v807 = vpack.c.bf16 %v775, %v775
      %v808 = vpack.c.bf16 %v776, %v776
      %v809 = vpack.c.bf16 %v777, %v777
      %v810 = vpack.c.bf16 %v778, %v778
      %v811 = vpack.c.bf16 %v779, %v779
      %v812 = vpack.c.bf16 %v780, %v780
      %v813 = vpack.c.bf16 %v781, %v781
      %v814 = vpack.c.bf16 %v782, %v782
      %v815 = vpack.c.bf16 %v783, %v783
      %vm816 = vcmask 257024
      %817 = vst.msk [vmem:[%s202] sm:$0xf] %vm816, %v784
      %818 = vst.msk [vmem:[%s202 + $0x4] sm:$0xf] %vm816, %v785
      %819 = vst.msk [vmem:[%s202 + $0x8] sm:$0xf] %vm816, %v786
      %820 = vst.msk [vmem:[%s202 + $0xc] sm:$0xf] %vm816, %v787
      %821 = vst.msk [vmem:[%s202 + $0x10] sm:$0xf] %vm816, %v788
      %822 = vst.msk [vmem:[%s202 + $0x14] sm:$0xf] %vm816, %v789
      %823 = vst.msk [vmem:[%s202 + $0x18] sm:$0xf] %vm816, %v790
      %824 = vst.msk [vmem:[%s202 + $0x1c] sm:$0xf] %vm816, %v791
      %825 = vst.msk [vmem:[%s202 + $0x20] sm:$0xf] %vm816, %v792
      %826 = vst.msk [vmem:[%s202 + $0x24] sm:$0xf] %vm816, %v793
      %827 = vst.msk [vmem:[%s202 + $0x28] sm:$0xf] %vm816, %v794
      %828 = vst.msk [vmem:[%s202 + $0x2c] sm:$0xf] %vm816, %v795
      %829 = vst.msk [vmem:[%s202 + $0x30] sm:$0xf] %vm816, %v796
      %830 = vst.msk [vmem:[%s202 + $0x34] sm:$0xf] %vm816, %v797
      %831 = vst.msk [vmem:[%s202 + $0x38] sm:$0xf] %vm816, %v798
      %832 = vst.msk [vmem:[%s202 + $0x3c] sm:$0xf] %vm816, %v799
      %833 = vst.msk [vmem:[%s202 + $0x40] sm:$0xf] %vm816, %v800
      %834 = vst.msk [vmem:[%s202 + $0x44] sm:$0xf] %vm816, %v801
      %835 = vst.msk [vmem:[%s202 + $0x48] sm:$0xf] %vm816, %v802
      %836 = vst.msk [vmem:[%s202 + $0x4c] sm:$0xf] %vm816, %v803
      %837 = vst.msk [vmem:[%s202 + $0x50] sm:$0xf] %vm816, %v804
      %838 = vst.msk [vmem:[%s202 + $0x54] sm:$0xf] %vm816, %v805
      %839 = vst.msk [vmem:[%s202 + $0x58] sm:$0xf] %vm816, %v806
      %840 = vst.msk [vmem:[%s202 + $0x5c] sm:$0xf] %vm816, %v807
      %841 = vst.msk [vmem:[%s202 + $0x60] sm:$0xf] %vm816, %v808
      %842 = vst.msk [vmem:[%s202 + $0x64] sm:$0xf] %vm816, %v809
      %843 = vst.msk [vmem:[%s202 + $0x68] sm:$0xf] %vm816, %v810
      %844 = vst.msk [vmem:[%s202 + $0x6c] sm:$0xf] %vm816, %v811
      %845 = vst.msk [vmem:[%s202 + $0x70] sm:$0xf] %vm816, %v812
      %846 = vst.msk [vmem:[%s202 + $0x74] sm:$0xf] %vm816, %v813
      %847 = vst.msk [vmem:[%s202 + $0x78] sm:$0xf] %vm816, %v814
      %848 = vst.msk [vmem:[%s202 + $0x7c] sm:$0xf] %vm816, %v815
      %s849 = smul.u32 32, %s15
      %p850 = scmp.lt.s32.totalorder %s849, 63
      %s851 = scalar_select %p850, %s849, 63
      %s852 = smul.addr %s851, 4
      %s853 = scalar_lea.vmem %s4, %s852
      // Predicated region
      $region37: #{_lambda_.29} parent=35 // pred_check
        %p854 = pneg %p122
      $region38: #{_lambda_.29} parent=35 // pred_check_branch
        %856 = sbr.rel (%p854) target = $region40
      $region39: #{_lambda_.29} parent=35 // pred_region
        %s857 = smul.u32 32, %s15
      $region40: #{_lambda_.29} parent=35 // pred_fallthru
        _
    $region36: #{_lambda_.29} parent=5 // pred_fallthru
      _
    %p858 = scmp.le.s32.totalorder 2, %s10
    // Predicated region
    $region41: #{_lambda_.29} parent=5 // pred_check
      %p859 = pneg %p858
    $region42: #{_lambda_.29} parent=5 // pred_check_branch
      %861 = sbr.rel (%p859) target = $region44
    $region43: #{_lambda_.29} parent=5 // pred_region
      %s862 = ssub.s32 %s10, 2
      // Predicated region
      $region45: #{_lambda_.29} parent=43 // pred_check
        %p863 = pneg %p128
      $region46: #{_lambda_.29} parent=43 // pred_check_branch
        %865 = sbr.rel (%p863) target = $region48
      $region47: #{_lambda_.29} parent=43 // pred_region
        %s866 = smul.u32 32, %s16
        %p867 = scmp.lt.s32.totalorder %s866, 63
        %s868 = scalar_select %p867, %s866, 63
        %s869 = smul.addr %s868, 4
        %s870 = scalar_lea.vmem %s4, %s869
      $region48: #{_lambda_.29} parent=43 // pred_fallthru
        _
    $region44: #{_lambda_.29} parent=5 // pred_fallthru
      _
  $region6: #{_lambda_.29} parent=0 // loop_footer
    %s14 = sadd.s32 1, %s10
  $region7: #{_lambda_.29} parent=0 // loop_footer_branch
    %9 = sbr.rel target = $region3
  $region8: #{_lambda_.29} parent=0 // loop_exit
    _

// kernel: _lambda_.30
$region0: #{_lambda_.30}
  #allocation0 [shape = 'u32[]', space=smem, size = 0x4, offset = 0x4, fixed_abs, tag = 'smem constant byte address 0x4 - core index']
  #allocation1 [shape = 'u32[72,128]{1,0:T(1,128)}', space=vmem, size = 0x9000, scoped, tag = 'internal scratch']
  %s0 = inlined_call_operand.vmem [shape: bf16[512,16], index: 0, kind: input, shape index: {}]
  %s1 = inlined_call_operand.vmem [shape: bf16[16,32], index: 1, kind: input, shape index: {}]
  %s2 = inlined_call_operand.vmem [shape: f32[1,32], index: 2, kind: input, shape index: {}]
  %s3 = inlined_call_operand.vmem [shape: f32[1,32], index: 3, kind: input, shape index: {}]
  %s4 = inlined_call_operand.vmem [shape: bf16[512,32], index: 4, kind: output, shape index: {}]
  %s5 = sld [smem:[#allocation0]]
  $region49: #{_lambda_.30} parent=0
    _
  %s7 = ssub.s32 1, %s5
  %s8 = scalar_select 0, %s7, %s5
  loop: start=0, step=1, limit=4
  $region2: #{_lambda_.30} parent=0 // loop_pre_header
    _
  $region3: #{_lambda_.30} parent=0 // loop_header
    %s10 = sphi 0, %s14
    %p11 = scmp.ge.s32.totalorder %s10, 4
    %s20 = sphi 0, %s22
    %s23 = sphi 0, %s20
    %s24 = sphi 0, %s23
    %s40 = sphi 0, %s24
    %s44 = sphi 0, %s44
    %s46 = sphi 0, %s44
    %s47 = sphi 0, %s46
    %s61 = sphi 0, %s47
    %s65 = sphi 0, %s65
    %s67 = sphi 0, %s65
    %s68 = sphi 0, %s67
    %s82 = sphi 0, %s68
    %s86 = sphi 0, %s86
    %s88 = sphi 0, %s86
    %s89 = sphi 0, %s88
    %s103 = sphi 0, %s89
    %s109 = sphi 0, %s111
    %s112 = sphi 0, %s109
    %s113 = sphi 0, %s112
    %s129 = sphi 0, %s113
  $region4: #{_lambda_.30} parent=0 // loop_header_branch
    %13 = sbr.rel (%p11) target = $region8
  $region5: #{_lambda_.30} parent=0 // loop_body
    %s15 = ssub.s32 %s10, 1
    %s16 = ssub.s32 %s10, 2
    %s17 = sadd.s32 %s10, 1
    %s18 = ssub.s32 %s10, %s17
    %p19 = scmp.eq.s32.totalorder %s18, 0
    %s21 = sadd.s32 %s20, 1
    %s22 = scalar_select %p19, %s20, %s21
    %p25 = pneg %p19
    %p26 = scmp.eq.s32.totalorder %s10, 1
    %p27 = por %p25, %p26
    %p28 = scmp.ne.s32.totalorder %s20, %s23
    %p29 = scmp.eq.s32.totalorder %s10, 0
    %p30 = por %p28, %p29
    %p31 = scmp.ne.s32.totalorder %s20, %s23
    %p32 = scmp.eq.s32.totalorder %s15, 1
    %p33 = por %p31, %p32
    %p34 = scmp.ne.s32.totalorder %s23, %s24
    %p35 = scmp.eq.s32.totalorder %s15, 0
    %p36 = por %p34, %p35
    %p37 = scmp.ne.s32.totalorder %s23, %s24
    %p38 = scmp.eq.s32.totalorder %s16, 1
    %p39 = por %p37, %p38
    %p41 = scmp.ne.s32.totalorder %s24, %s40
    %p42 = scmp.eq.s32.totalorder %s16, 0
    %p43 = por %p41, %p42
    %s45 = sadd.s32 %s44, 1
    %p48 = scmp.eq.s32.totalorder %s10, 1
    %p49 = scmp.ne.s32.totalorder %s44, %s46
    %p50 = scmp.eq.s32.totalorder %s10, 0
    %p51 = por %p49, %p50
    %p52 = scmp.ne.s32.totalorder %s44, %s46
    %p53 = scmp.eq.s32.totalorder %s15, 1
    %p54 = por %p52, %p53
    %p55 = scmp.ne.s32.totalorder %s46, %s47
    %p56 = scmp.eq.s32.totalorder %s15, 0
    %p57 = por %p55, %p56
    %p58 = scmp.ne.s32.totalorder %s46, %s47
    %p59 = scmp.eq.s32.totalorder %s16, 1
    %p60 = por %p58, %p59
    %p62 = scmp.ne.s32.totalorder %s47, %s61
    %p63 = scmp.eq.s32.totalorder %s16, 0
    %p64 = por %p62, %p63
    %s66 = sadd.s32 %s65, 1
    %p69 = scmp.eq.s32.totalorder %s10, 1
    %p70 = scmp.ne.s32.totalorder %s65, %s67
    %p71 = scmp.eq.s32.totalorder %s10, 0
    %p72 = por %p70, %p71
    %p73 = scmp.ne.s32.totalorder %s65, %s67
    %p74 = scmp.eq.s32.totalorder %s15, 1
    %p75 = por %p73, %p74
    %p76 = scmp.ne.s32.totalorder %s67, %s68
    %p77 = scmp.eq.s32.totalorder %s15, 0
    %p78 = por %p76, %p77
    %p79 = scmp.ne.s32.totalorder %s67, %s68
    %p80 = scmp.eq.s32.totalorder %s16, 1
    %p81 = por %p79, %p80
    %p83 = scmp.ne.s32.totalorder %s68, %s82
    %p84 = scmp.eq.s32.totalorder %s16, 0
    %p85 = por %p83, %p84
    %s87 = sadd.s32 %s86, 1
    %p90 = scmp.eq.s32.totalorder %s10, 1
    %p91 = scmp.ne.s32.totalorder %s86, %s88
    %p92 = scmp.eq.s32.totalorder %s10, 0
    %p93 = por %p91, %p92
    %p94 = scmp.ne.s32.totalorder %s86, %s88
    %p95 = scmp.eq.s32.totalorder %s15, 1
    %p96 = por %p94, %p95
    %p97 = scmp.ne.s32.totalorder %s88, %s89
    %p98 = scmp.eq.s32.totalorder %s15, 0
    %p99 = por %p97, %p98
    %p100 = scmp.ne.s32.totalorder %s88, %s89
    %p101 = scmp.eq.s32.totalorder %s16, 1
    %p102 = por %p100, %p101
    %p104 = scmp.ne.s32.totalorder %s89, %s103
    %p105 = scmp.eq.s32.totalorder %s16, 0
    %p106 = por %p104, %p105
    %s107 = ssub.s32 %s10, %s17
    %p108 = scmp.eq.s32.totalorder %s107, 0
    %s110 = sadd.s32 %s109, 1
    %s111 = scalar_select %p108, %s109, %s110
    %p114 = pneg %p108
    %p115 = scmp.eq.s32.totalorder %s10, 1
    %p116 = por %p114, %p115
    %p117 = scmp.ne.s32.totalorder %s109, %s112
    %p118 = scmp.eq.s32.totalorder %s10, 0
    %p119 = por %p117, %p118
    %p120 = scmp.ne.s32.totalorder %s109, %s112
    %p121 = scmp.eq.s32.totalorder %s15, 1
    %p122 = por %p120, %p121
    %p123 = scmp.ne.s32.totalorder %s112, %s113
    %p124 = scmp.eq.s32.totalorder %s15, 0
    %p125 = por %p123, %p124
    %p126 = scmp.ne.s32.totalorder %s112, %s113
    %p127 = scmp.eq.s32.totalorder %s16, 1
    %p128 = por %p126, %p127
    %p130 = scmp.ne.s32.totalorder %s113, %s129
    %p131 = scmp.eq.s32.totalorder %s16, 0
    %p132 = por %p130, %p131
    %p133 = scmp.le.s32.totalorder 1, %s10
    %p134 = scmp.lt.s32.totalorder %s10, 3
    %p135 = pnand %p133, %p134
    %p136 = pneg %p135
    // Predicated region
    $region9: #{_lambda_.30} parent=5 // pred_check
      _
    $region10: #{_lambda_.30} parent=5 // pred_check_branch
      %138 = sbr.rel (%p135) target = $region12
    $region11: #{_lambda_.30} parent=5 // pred_region
      %s139 = ssub.s32 %s10, 1
      // Predicated region
      $region13: #{_lambda_.30} parent=11 // pred_check
        %p140 = pneg %p57
      $region14: #{_lambda_.30} parent=11 // pred_check_branch
        %142 = sbr.rel (%p140) target = $region16
      $region15: #{_lambda_.30} parent=11 // pred_region
        _
      $region16: #{_lambda_.30} parent=11 // pred_fallthru
        _
      // Predicated region
      $region17: #{_lambda_.30} parent=11 // pred_check
        %p143 = pneg %p78
      $region18: #{_lambda_.30} parent=11 // pred_check_branch
        %145 = sbr.rel (%p143) target = $region20
      $region19: #{_lambda_.30} parent=11 // pred_region
        _
      $region20: #{_lambda_.30} parent=11 // pred_fallthru
        _
      // Predicated region
      $region21: #{_lambda_.30} parent=11 // pred_check
        %p146 = pneg %p99
      $region22: #{_lambda_.30} parent=11 // pred_check_branch
        %148 = sbr.rel (%p146) target = $region24
      $region23: #{_lambda_.30} parent=11 // pred_region
        _
      $region24: #{_lambda_.30} parent=11 // pred_fallthru
        _
    $region12: #{_lambda_.30} parent=5 // pred_fallthru
      _
    %p149 = scmp.lt.s32.totalorder %s10, 2
    // Predicated region
    $region25: #{_lambda_.30} parent=5 // pred_check
      %p150 = pneg %p149
    $region26: #{_lambda_.30} parent=5 // pred_check_branch
      %152 = sbr.rel (%p150) target = $region28
    $region27: #{_lambda_.30} parent=5 // pred_region
      // Predicated region
      $region29: #{_lambda_.30} parent=27 // pred_check
        %p153 = pneg %p30
      $region30: #{_lambda_.30} parent=27 // pred_check_branch
        %155 = sbr.rel (%p153) target = $region32
      $region31: #{_lambda_.30} parent=27 // pred_region
        %s156 = smul.u32 32, %s10
        %p157 = scmp.lt.s32.totalorder %s156, 63
        %s158 = scalar_select %p157, %s156, 63
        %s159 = smul.addr %s158, 4
        %s160 = scalar_lea.vmem %s0, %s159
        %s161 = smul.u32 32, %s10
      $region32: #{_lambda_.30} parent=27 // pred_fallthru
        _
    $region28: #{_lambda_.30} parent=5 // pred_fallthru
      _
    %p162 = scmp.le.s32.totalorder 1, %s10
    %p163 = scmp.lt.s32.totalorder %s10, 3
    %p164 = pnand %p162, %p163
    %p165 = pneg %p164
    // Predicated region
    $region33: #{_lambda_.30} parent=5 // pred_check
      _
    $region34: #{_lambda_.30} parent=5 // pred_check_branch
      %167 = sbr.rel (%p164) target = $region36
    $region35: #{_lambda_.30} parent=5 // pred_region
      %s168 = ssub.s32 %s10, 1
      %s169 = smul.u32 32, %s15
      %p170 = scmp.lt.s32.totalorder %s169, 63
      %s171 = scalar_select %p170, %s169, 63
      %s172 = smul.addr %s171, 4
      %s173 = scalar_lea.vmem %s0, %s172
      %p174 = pneg %p36
      %p175 = pneg %p33
      %p176 = pneg %p57
      %p177 = pneg %p54
      %p178 = pneg %p78
      %p179 = pneg %p75
      %p180 = pneg %p99
      %p181 = pneg %p96
      %p182 = pneg %p125
      %p183 = pneg %p122
      %s184 = smul.u32 32, %s15
      %p185 = scmp.lt.s32.totalorder %s184, 63
      %s186 = scalar_select %p185, %s184, 63
      %s187 = smul.addr %s186, 4
      %s188 = scalar_lea.vmem %s4, %s187
      %s189 = smul.u32 32, %s15
      %p190 = scmp.lt.s32.totalorder %s189, 63
      %s191 = scalar_select %p190, %s189, 63
      %s192 = smul.addr %s191, 4
      %s193 = scalar_lea.vmem %s0, %s192
      %s194 = smul.u32 32, %s15
      %s195 = smul.u32 32, %s15
      %p196 = scmp.lt.s32.totalorder %s195, 63
      %s197 = scalar_select %p196, %s195, 63
      %s198 = smul.addr %s197, 4
      %s199 = scalar_lea.vmem %s4, %s198
      %s200 = smul.u32 32, %s15
      %v202 = vld [vmem:[%s193] sm:$0xf]
      %v203 = vld [vmem:[%s193 + $0x4] sm:$0xf]
      %v204 = vld [vmem:[%s193 + $0x8] sm:$0xf]
      %v205 = vld [vmem:[%s193 + $0xc] sm:$0xf]
      %v206 = vld [vmem:[%s193 + $0x10] sm:$0xf]
      %v207 = vld [vmem:[%s193 + $0x14] sm:$0xf]
      %v208 = vld [vmem:[%s193 + $0x18] sm:$0xf]
      %v209 = vld [vmem:[%s193 + $0x1c] sm:$0xf]
      %v210 = vld [vmem:[%s193 + $0x20] sm:$0xf]
      %v211 = vld [vmem:[%s193 + $0x24] sm:$0xf]
      %v212 = vld [vmem:[%s193 + $0x28] sm:$0xf]
      %v213 = vld [vmem:[%s193 + $0x2c] sm:$0xf]
      %v214 = vld [vmem:[%s193 + $0x30] sm:$0xf]
      %v215 = vld [vmem:[%s193 + $0x34] sm:$0xf]
      %v216 = vld [vmem:[%s193 + $0x38] sm:$0xf]
      %v217 = vld [vmem:[%s193 + $0x3c] sm:$0xf]
      %v218 = vld [vmem:[%s193 + $0x40] sm:$0xf]
      %v219 = vld [vmem:[%s193 + $0x44] sm:$0xf]
      %v220 = vld [vmem:[%s193 + $0x48] sm:$0xf]
      %v221 = vld [vmem:[%s193 + $0x4c] sm:$0xf]
      %v222 = vld [vmem:[%s193 + $0x50] sm:$0xf]
      %v223 = vld [vmem:[%s193 + $0x54] sm:$0xf]
      %v224 = vld [vmem:[%s193 + $0x58] sm:$0xf]
      %v225 = vld [vmem:[%s193 + $0x5c] sm:$0xf]
      %v226 = vld [vmem:[%s193 + $0x60] sm:$0xf]
      %v227 = vld [vmem:[%s193 + $0x64] sm:$0xf]
      %v228 = vld [vmem:[%s193 + $0x68] sm:$0xf]
      %v229 = vld [vmem:[%s193 + $0x6c] sm:$0xf]
      %v230 = vld [vmem:[%s193 + $0x70] sm:$0xf]
      %v231 = vld [vmem:[%s193 + $0x74] sm:$0xf]
      %v232 = vld [vmem:[%s193 + $0x78] sm:$0xf]
      %v233 = vld [vmem:[%s193 + $0x7c] sm:$0xf]
      %v234 = vld [vmem:[%s1] sm:$0xf]
      %v235 = vld [vmem:[%s1 + $0x4] sm:$0xf]
      %v268 = vunpack.c.l.b16 %v202
      %v269 = vunpack.c.l.b16 %v203
      %v270 = vunpack.c.l.b16 %v204
      %v271 = vunpack.c.l.b16 %v205
      %v272 = vunpack.c.l.b16 %v206
      %v273 = vunpack.c.l.b16 %v207
      %v274 = vunpack.c.l.b16 %v208
      %v275 = vunpack.c.l.b16 %v209
      %v276 = vunpack.c.l.b16 %v210
      %v277 = vunpack.c.l.b16 %v211
      %v278 = vunpack.c.l.b16 %v212
      %v279 = vunpack.c.l.b16 %v213
      %v280 = vunpack.c.l.b16 %v214
      %v281 = vunpack.c.l.b16 %v215
      %v282 = vunpack.c.l.b16 %v216
      %v283 = vunpack.c.l.b16 %v217
      %v284 = vunpack.c.l.b16 %v218
      %v285 = vunpack.c.l.b16 %v219
      %v286 = vunpack.c.l.b16 %v220
      %v287 = vunpack.c.l.b16 %v221
      %v288 = vunpack.c.l.b16 %v222
      %v289 = vunpack.c.l.b16 %v223
      %v290 = vunpack.c.l.b16 %v224
      %v291 = vunpack.c.l.b16 %v225
      %v292 = vunpack.c.l.b16 %v226
      %v293 = vunpack.c.l.b16 %v227
      %v294 = vunpack.c.l.b16 %v228
      %v295 = vunpack.c.l.b16 %v229
      %v296 = vunpack.c.l.b16 %v230
      %v297 = vunpack.c.l.b16 %v231
      %v298 = vunpack.c.l.b16 %v232
      %v299 = vunpack.c.l.b16 %v233
      %v300 = vpack.c.b16 %v269, %v268
      %v301 = vpack.c.b16 %v271, %v270
      %v302 = vpack.c.b16 %v273, %v272
      %v303 = vpack.c.b16 %v275, %v274
      %v304 = vpack.c.b16 %v277, %v276
      %v305 = vpack.c.b16 %v279, %v278
      %v306 = vpack.c.b16 %v281, %v280
      %v307 = vpack.c.b16 %v283, %v282
      %v308 = vpack.c.b16 %v285, %v284
      %v309 = vpack.c.b16 %v287, %v286
      %v310 = vpack.c.b16 %v289, %v288
      %v311 = vpack.c.b16 %v291, %v290
      %v312 = vpack.c.b16 %v293, %v292
      %v313 = vpack.c.b16 %v295, %v294
      %v314 = vpack.c.b16 %v297, %v296
      %v315 = vpack.c.b16 %v299, %v298
      %v318 = vunpack.c.l.b16 %v234
      %v319 = vunpack.c.l.b16 %v235
      %v320 = vpack.c.b16 %v319, %v318
      %vm322 = vcmask 130048
      %v324 = vsel %vm322, %v300, 0
      %v327 = vsel %vm322, %v301, 0
      %v330 = vsel %vm322, %v302, 0
      %v333 = vsel %vm322, %v303, 0
      %v336 = vsel %vm322, %v304, 0
      %v339 = vsel %vm322, %v305, 0
      %v342 = vsel %vm322, %v306, 0
      %v345 = vsel %vm322, %v307, 0
      %v348 = vsel %vm322, %v308, 0
      %v351 = vsel %vm322, %v309, 0
      %v354 = vsel %vm322, %v310, 0
      %v357 = vsel %vm322, %v311, 0
      %v360 = vsel %vm322, %v312, 0
      %v363 = vsel %vm322, %v313, 0
      %v366 = vsel %vm322, %v314, 0
      %v369 = vsel %vm322, %v315, 0
      %371 = vmatpush.bf16.msra.mxu0 0
      %372 = vmatpush.bf16.msra.mxu0 0
      %373 = vmatpush.bf16.msra.mxu0 0
      %374 = vmatpush.bf16.msra.mxu0 0
      %375 = vmatpush.bf16.msra.mxu0 0
      %376 = vmatpush.bf16.msra.mxu0 0
      %377 = vmatpush.bf16.msra.mxu0 0
      %378 = vmatpush.bf16.msra.mxu0 %v320
      %379 = vmatmul.bf16.gmra.mxu0 %v324
      %v380 = vpop.f32.mrf.mxu0
      %v381 = vadd.f32 0.0, %v380
      %v382 = vpop.f32.mrf.mxu0
      %v383 = vadd.f32 0.0, %v382
      %384 = vmatmul.bf16.gmra.mxu0 %v327
      %v385 = vpop.f32.mrf.mxu0
      %v386 = vadd.f32 0.0, %v385
      %v387 = vpop.f32.mrf.mxu0
      %v388 = vadd.f32 0.0, %v387
      %389 = vmatmul.bf16.gmra.mxu0 %v330
      %v390 = vpop.f32.mrf.mxu0
      %v391 = vadd.f32 0.0, %v390
      %v392 = vpop.f32.mrf.mxu0
      %v393 = vadd.f32 0.0, %v392
      %394 = vmatmul.bf16.gmra.mxu0 %v333
      %v395 = vpop.f32.mrf.mxu0
      %v396 = vadd.f32 0.0, %v395
      %v397 = vpop.f32.mrf.mxu0
      %v398 = vadd.f32 0.0, %v397
      %399 = vmatmul.bf16.gmra.mxu0 %v336
      %v400 = vpop.f32.mrf.mxu0
      %v401 = vadd.f32 0.0, %v400
      %v402 = vpop.f32.mrf.mxu0
      %v403 = vadd.f32 0.0, %v402
      %404 = vmatmul.bf16.gmra.mxu0 %v339
      %v405 = vpop.f32.mrf.mxu0
      %v406 = vadd.f32 0.0, %v405
      %v407 = vpop.f32.mrf.mxu0
      %v408 = vadd.f32 0.0, %v407
      %409 = vmatmul.bf16.gmra.mxu0 %v342
      %v410 = vpop.f32.mrf.mxu0
      %v411 = vadd.f32 0.0, %v410
      %v412 = vpop.f32.mrf.mxu0
      %v413 = vadd.f32 0.0, %v412
      %414 = vmatmul.bf16.gmra.mxu0 %v345
      %v415 = vpop.f32.mrf.mxu0
      %v416 = vadd.f32 0.0, %v415
      %v417 = vpop.f32.mrf.mxu0
      %v418 = vadd.f32 0.0, %v417
      %419 = vmatmul.bf16.gmra.mxu0 %v348
      %v420 = vpop.f32.mrf.mxu0
      %v421 = vadd.f32 0.0, %v420
      %v422 = vpop.f32.mrf.mxu0
      %v423 = vadd.f32 0.0, %v422
      %424 = vmatmul.bf16.gmra.mxu0 %v351
      %v425 = vpop.f32.mrf.mxu0
      %v426 = vadd.f32 0.0, %v425
      %v427 = vpop.f32.mrf.mxu0
      %v428 = vadd.f32 0.0, %v427
      %429 = vmatmul.bf16.gmra.mxu0 %v354
      %v430 = vpop.f32.mrf.mxu0
      %v431 = vadd.f32 0.0, %v430
      %v432 = vpop.f32.mrf.mxu0
      %v433 = vadd.f32 0.0, %v432
      %434 = vmatmul.bf16.gmra.mxu0 %v357
      %v435 = vpop.f32.mrf.mxu0
      %v436 = vadd.f32 0.0, %v435
      %v437 = vpop.f32.mrf.mxu0
      %v438 = vadd.f32 0.0, %v437
      %439 = vmatmul.bf16.gmra.mxu0 %v360
      %v440 = vpop.f32.mrf.mxu0
      %v441 = vadd.f32 0.0, %v440
      %v442 = vpop.f32.mrf.mxu0
      %v443 = vadd.f32 0.0, %v442
      %444 = vmatmul.bf16.gmra.mxu0 %v363
      %v445 = vpop.f32.mrf.mxu0
      %v446 = vadd.f32 0.0, %v445
      %v447 = vpop.f32.mrf.mxu0
      %v448 = vadd.f32 0.0, %v447
      %449 = vmatmul.bf16.gmra.mxu0 %v366
      %v450 = vpop.f32.mrf.mxu0
      %v451 = vadd.f32 0.0, %v450
      %v452 = vpop.f32.mrf.mxu0
      %v453 = vadd.f32 0.0, %v452
      %454 = vmatmul.bf16.gmra.mxu0 %v369
      %v455 = vpop.f32.mrf.mxu0
      %v456 = vadd.f32 0.0, %v455
      %v457 = vpop.f32.mrf.mxu0
      %v458 = vadd.f32 0.0, %v457
      %459 = vdwg.mxu0
      %v460 = vld [vmem:[%s2] sm:$0x1]
      %v462 = vperm.slane %v460, 0
      %v464 = vmul.f32 %v381, %v462
      %v465 = vmul.f32 %v383, %v462
      %v466 = vmul.f32 %v386, %v462
      %v467 = vmul.f32 %v388, %v462
      %v468 = vmul.f32 %v391, %v462
      %v469 = vmul.f32 %v393, %v462
      %v470 = vmul.f32 %v396, %v462
      %v471 = vmul.f32 %v398, %v462
      %v472 = vmul.f32 %v401, %v462
      %v473 = vmul.f32 %v403, %v462
      %v474 = vmul.f32 %v406, %v462
      %v475 = vmul.f32 %v408, %v462
      %v476 = vmul.f32 %v411, %v462
      %v477 = vmul.f32 %v413, %v462
      %v478 = vmul.f32 %v416, %v462
      %v479 = vmul.f32 %v418, %v462
      %v480 = vmul.f32 %v421, %v462
      %v481 = vmul.f32 %v423, %v462
      %v482 = vmul.f32 %v426, %v462
      %v483 = vmul.f32 %v428, %v462
      %v484 = vmul.f32 %v431, %v462
      %v485 = vmul.f32 %v433, %v462
      %v486 = vmul.f32 %v436, %v462
      %v487 = vmul.f32 %v438, %v462
      %v488 = vmul.f32 %v441, %v462
      %v489 = vmul.f32 %v443, %v462
      %v490 = vmul.f32 %v446, %v462
      %v491 = vmul.f32 %v448, %v462
      %v492 = vmul.f32 %v451, %v462
      %v493 = vmul.f32 %v453, %v462
      %v494 = vmul.f32 %v456, %v462
      %v495 = vmul.f32 %v458, %v462
      %v496 = vld [vmem:[%s3] sm:$0x1]
      %v498 = vperm.slane %v496, 0
      %v500 = vadd.f32 %v464, %v498
      %v501 = vadd.f32 %v465, %v498
      %v502 = vadd.f32 %v466, %v498
      %v503 = vadd.f32 %v467, %v498
      %v504 = vadd.f32 %v468, %v498
      %v505 = vadd.f32 %v469, %v498
      %v506 = vadd.f32 %v470, %v498
      %v507 = vadd.f32 %v471, %v498
      %v508 = vadd.f32 %v472, %v498
      %v509 = vadd.f32 %v473, %v498
      %v510 = vadd.f32 %v474, %v498
      %v511 = vadd.f32 %v475, %v498
      %v512 = vadd.f32 %v476, %v498
      %v513 = vadd.f32 %v477, %v498
      %v514 = vadd.f32 %v478, %v498
      %v515 = vadd.f32 %v479, %v498
      %v516 = vadd.f32 %v480, %v498
      %v517 = vadd.f32 %v481, %v498
      %v518 = vadd.f32 %v482, %v498
      %v519 = vadd.f32 %v483, %v498
      %v520 = vadd.f32 %v484, %v498
      %v521 = vadd.f32 %v485, %v498
      %v522 = vadd.f32 %v486, %v498
      %v523 = vadd.f32 %v487, %v498
      %v524 = vadd.f32 %v488, %v498
      %v525 = vadd.f32 %v489, %v498
      %v526 = vadd.f32 %v490, %v498
      %v527 = vadd.f32 %v491, %v498
      %v528 = vadd.f32 %v492, %v498
      %v529 = vadd.f32 %v493, %v498
      %v530 = vadd.f32 %v494, %v498
      %v531 = vadd.f32 %v495, %v498
      %v532 = vpack.c.bf16 %v500, %v500
      %v533 = vpack.c.bf16 %v501, %v501
      %v534 = vpack.c.bf16 %v502, %v502
      %v535 = vpack.c.bf16 %v503, %v503
      %v536 = vpack.c.bf16 %v504, %v504
      %v537 = vpack.c.bf16 %v505, %v505
      %v538 = vpack.c.bf16 %v506, %v506
      %v539 = vpack.c.bf16 %v507, %v507
      %v540 = vpack.c.bf16 %v508, %v508
      %v541 = vpack.c.bf16 %v509, %v509
      %v542 = vpack.c.bf16 %v510, %v510
      %v543 = vpack.c.bf16 %v511, %v511
      %v544 = vpack.c.bf16 %v512, %v512
      %v545 = vpack.c.bf16 %v513, %v513
      %v546 = vpack.c.bf16 %v514, %v514
      %v547 = vpack.c.bf16 %v515, %v515
      %v548 = vpack.c.bf16 %v516, %v516
      %v549 = vpack.c.bf16 %v517, %v517
      %v550 = vpack.c.bf16 %v518, %v518
      %v551 = vpack.c.bf16 %v519, %v519
      %v552 = vpack.c.bf16 %v520, %v520
      %v553 = vpack.c.bf16 %v521, %v521
      %v554 = vpack.c.bf16 %v522, %v522
      %v555 = vpack.c.bf16 %v523, %v523
      %v556 = vpack.c.bf16 %v524, %v524
      %v557 = vpack.c.bf16 %v525, %v525
      %v558 = vpack.c.bf16 %v526, %v526
      %v559 = vpack.c.bf16 %v527, %v527
      %v560 = vpack.c.bf16 %v528, %v528
      %v561 = vpack.c.bf16 %v529, %v529
      %v562 = vpack.c.bf16 %v530, %v530
      %v563 = vpack.c.bf16 %v531, %v531
      %vm564 = vcmask 257024
      %565 = vst.msk [vmem:[%s199] sm:$0xf] %vm564, %v532
      %566 = vst.msk [vmem:[%s199 + $0x4] sm:$0xf] %vm564, %v533
      %567 = vst.msk [vmem:[%s199 + $0x8] sm:$0xf] %vm564, %v534
      %568 = vst.msk [vmem:[%s199 + $0xc] sm:$0xf] %vm564, %v535
      %569 = vst.msk [vmem:[%s199 + $0x10] sm:$0xf] %vm564, %v536
      %570 = vst.msk [vmem:[%s199 + $0x14] sm:$0xf] %vm564, %v537
      %571 = vst.msk [vmem:[%s199 + $0x18] sm:$0xf] %vm564, %v538
      %572 = vst.msk [vmem:[%s199 + $0x1c] sm:$0xf] %vm564, %v539
      %573 = vst.msk [vmem:[%s199 + $0x20] sm:$0xf] %vm564, %v540
      %574 = vst.msk [vmem:[%s199 + $0x24] sm:$0xf] %vm564, %v541
      %575 = vst.msk [vmem:[%s199 + $0x28] sm:$0xf] %vm564, %v542
      %576 = vst.msk [vmem:[%s199 + $0x2c] sm:$0xf] %vm564, %v543
      %577 = vst.msk [vmem:[%s199 + $0x30] sm:$0xf] %vm564, %v544
      %578 = vst.msk [vmem:[%s199 + $0x34] sm:$0xf] %vm564, %v545
      %579 = vst.msk [vmem:[%s199 + $0x38] sm:$0xf] %vm564, %v546
      %580 = vst.msk [vmem:[%s199 + $0x3c] sm:$0xf] %vm564, %v547
      %581 = vst.msk [vmem:[%s199 + $0x40] sm:$0xf] %vm564, %v548
      %582 = vst.msk [vmem:[%s199 + $0x44] sm:$0xf] %vm564, %v549
      %583 = vst.msk [vmem:[%s199 + $0x48] sm:$0xf] %vm564, %v550
      %584 = vst.msk [vmem:[%s199 + $0x4c] sm:$0xf] %vm564, %v551
      %585 = vst.msk [vmem:[%s199 + $0x50] sm:$0xf] %vm564, %v552
      %586 = vst.msk [vmem:[%s199 + $0x54] sm:$0xf] %vm564, %v553
      %587 = vst.msk [vmem:[%s199 + $0x58] sm:$0xf] %vm564, %v554
      %588 = vst.msk [vmem:[%s199 + $0x5c] sm:$0xf] %vm564, %v555
      %589 = vst.msk [vmem:[%s199 + $0x60] sm:$0xf] %vm564, %v556
      %590 = vst.msk [vmem:[%s199 + $0x64] sm:$0xf] %vm564, %v557
      %591 = vst.msk [vmem:[%s199 + $0x68] sm:$0xf] %vm564, %v558
      %592 = vst.msk [vmem:[%s199 + $0x6c] sm:$0xf] %vm564, %v559
      %593 = vst.msk [vmem:[%s199 + $0x70] sm:$0xf] %vm564, %v560
      %594 = vst.msk [vmem:[%s199 + $0x74] sm:$0xf] %vm564, %v561
      %595 = vst.msk [vmem:[%s199 + $0x78] sm:$0xf] %vm564, %v562
      %596 = vst.msk [vmem:[%s199 + $0x7c] sm:$0xf] %vm564, %v563
      %s597 = smul.u32 32, %s15
      %p598 = scmp.lt.s32.totalorder %s597, 63
      %s599 = scalar_select %p598, %s597, 63
      %s600 = smul.addr %s599, 4
      %s601 = scalar_lea.vmem %s4, %s600
      // Predicated region
      $region37: #{_lambda_.30} parent=35 // pred_check
        %p602 = pneg %p122
      $region38: #{_lambda_.30} parent=35 // pred_check_branch
        %604 = sbr.rel (%p602) target = $region40
      $region39: #{_lambda_.30} parent=35 // pred_region
        %s605 = smul.u32 32, %s15
      $region40: #{_lambda_.30} parent=35 // pred_fallthru
        _
    $region36: #{_lambda_.30} parent=5 // pred_fallthru
      _
    %p606 = scmp.le.s32.totalorder 2, %s10
    // Predicated region
    $region41: #{_lambda_.30} parent=5 // pred_check
      %p607 = pneg %p606
    $region42: #{_lambda_.30} parent=5 // pred_check_branch
      %609 = sbr.rel (%p607) target = $region44
    $region43: #{_lambda_.30} parent=5 // pred_region
      %s610 = ssub.s32 %s10, 2
      // Predicated region
      $region45: #{_lambda_.30} parent=43 // pred_check
        %p611 = pneg %p128
      $region46: #{_lambda_.30} parent=43 // pred_check_branch
        %613 = sbr.rel (%p611) target = $region48
      $region47: #{_lambda_.30} parent=43 // pred_region
        %s614 = smul.u32 32, %s16
        %p615 = scmp.lt.s32.totalorder %s614, 63
        %s616 = scalar_select %p615, %s614, 63
        %s617 = smul.addr %s616, 4
        %s618 = scalar_lea.vmem %s4, %s617
      $region48: #{_lambda_.30} parent=43 // pred_fallthru
        _
    $region44: #{_lambda_.30} parent=5 // pred_fallthru
      _
  $region6: #{_lambda_.30} parent=0 // loop_footer
    %s14 = sadd.s32 1, %s10
  $region7: #{_lambda_.30} parent=0 // loop_footer_branch
    %9 = sbr.rel target = $region3
  $region8: #{_lambda_.30} parent=0 // loop_exit
    _

// kernel: _lambda_.32
$region0: #{_lambda_.32}
  #allocation0 [shape = 'u32[]', space=smem, size = 0x4, offset = 0x4, fixed_abs, tag = 'smem constant byte address 0x4 - core index']
  #allocation1 [shape = 'u32[72,128]{1,0:T(1,128)}', space=vmem, size = 0x9000, scoped, tag = 'internal scratch']
  %s0 = inlined_call_operand.vmem [shape: bf16[512,288], index: 0, kind: input, shape index: {}]
  %s1 = inlined_call_operand.vmem [shape: bf16[288,32], index: 1, kind: input, shape index: {}]
  %s2 = inlined_call_operand.vmem [shape: f32[1,32], index: 2, kind: input, shape index: {}]
  %s3 = inlined_call_operand.vmem [shape: f32[1,32], index: 3, kind: input, shape index: {}]
  %s4 = inlined_call_operand.vmem [shape: bf16[512,32], index: 4, kind: output, shape index: {}]
  %s5 = sld [smem:[#allocation0]]
  $region49: #{_lambda_.32} parent=0
    _
  %s7 = ssub.s32 1, %s5
  %s8 = scalar_select 0, %s7, %s5
  loop: start=0, step=1, limit=4
  $region2: #{_lambda_.32} parent=0 // loop_pre_header
    _
  $region3: #{_lambda_.32} parent=0 // loop_header
    %s10 = sphi 0, %s14
    %p11 = scmp.ge.s32.totalorder %s10, 4
    %s20 = sphi 0, %s22
    %s23 = sphi 0, %s20
    %s24 = sphi 0, %s23
    %s40 = sphi 0, %s24
    %s44 = sphi 0, %s44
    %s46 = sphi 0, %s44
    %s47 = sphi 0, %s46
    %s61 = sphi 0, %s47
    %s65 = sphi 0, %s65
    %s67 = sphi 0, %s65
    %s68 = sphi 0, %s67
    %s82 = sphi 0, %s68
    %s86 = sphi 0, %s86
    %s88 = sphi 0, %s86
    %s89 = sphi 0, %s88
    %s103 = sphi 0, %s89
    %s109 = sphi 0, %s111
    %s112 = sphi 0, %s109
    %s113 = sphi 0, %s112
    %s129 = sphi 0, %s113
  $region4: #{_lambda_.32} parent=0 // loop_header_branch
    %13 = sbr.rel (%p11) target = $region8
  $region5: #{_lambda_.32} parent=0 // loop_body
    %s15 = ssub.s32 %s10, 1
    %s16 = ssub.s32 %s10, 2
    %s17 = sadd.s32 %s10, 1
    %s18 = ssub.s32 %s10, %s17
    %p19 = scmp.eq.s32.totalorder %s18, 0
    %s21 = sadd.s32 %s20, 1
    %s22 = scalar_select %p19, %s20, %s21
    %p25 = pneg %p19
    %p26 = scmp.eq.s32.totalorder %s10, 1
    %p27 = por %p25, %p26
    %p28 = scmp.ne.s32.totalorder %s20, %s23
    %p29 = scmp.eq.s32.totalorder %s10, 0
    %p30 = por %p28, %p29
    %p31 = scmp.ne.s32.totalorder %s20, %s23
    %p32 = scmp.eq.s32.totalorder %s15, 1
    %p33 = por %p31, %p32
    %p34 = scmp.ne.s32.totalorder %s23, %s24
    %p35 = scmp.eq.s32.totalorder %s15, 0
    %p36 = por %p34, %p35
    %p37 = scmp.ne.s32.totalorder %s23, %s24
    %p38 = scmp.eq.s32.totalorder %s16, 1
    %p39 = por %p37, %p38
    %p41 = scmp.ne.s32.totalorder %s24, %s40
    %p42 = scmp.eq.s32.totalorder %s16, 0
    %p43 = por %p41, %p42
    %s45 = sadd.s32 %s44, 1
    %p48 = scmp.eq.s32.totalorder %s10, 1
    %p49 = scmp.ne.s32.totalorder %s44, %s46
    %p50 = scmp.eq.s32.totalorder %s10, 0
    %p51 = por %p49, %p50
    %p52 = scmp.ne.s32.totalorder %s44, %s46
    %p53 = scmp.eq.s32.totalorder %s15, 1
    %p54 = por %p52, %p53
    %p55 = scmp.ne.s32.totalorder %s46, %s47
    %p56 = scmp.eq.s32.totalorder %s15, 0
    %p57 = por %p55, %p56
    %p58 = scmp.ne.s32.totalorder %s46, %s47
    %p59 = scmp.eq.s32.totalorder %s16, 1
    %p60 = por %p58, %p59
    %p62 = scmp.ne.s32.totalorder %s47, %s61
    %p63 = scmp.eq.s32.totalorder %s16, 0
    %p64 = por %p62, %p63
    %s66 = sadd.s32 %s65, 1
    %p69 = scmp.eq.s32.totalorder %s10, 1
    %p70 = scmp.ne.s32.totalorder %s65, %s67
    %p71 = scmp.eq.s32.totalorder %s10, 0
    %p72 = por %p70, %p71
    %p73 = scmp.ne.s32.totalorder %s65, %s67
    %p74 = scmp.eq.s32.totalorder %s15, 1
    %p75 = por %p73, %p74
    %p76 = scmp.ne.s32.totalorder %s67, %s68
    %p77 = scmp.eq.s32.totalorder %s15, 0
    %p78 = por %p76, %p77
    %p79 = scmp.ne.s32.totalorder %s67, %s68
    %p80 = scmp.eq.s32.totalorder %s16, 1
    %p81 = por %p79, %p80
    %p83 = scmp.ne.s32.totalorder %s68, %s82
    %p84 = scmp.eq.s32.totalorder %s16, 0
    %p85 = por %p83, %p84
    %s87 = sadd.s32 %s86, 1
    %p90 = scmp.eq.s32.totalorder %s10, 1
    %p91 = scmp.ne.s32.totalorder %s86, %s88
    %p92 = scmp.eq.s32.totalorder %s10, 0
    %p93 = por %p91, %p92
    %p94 = scmp.ne.s32.totalorder %s86, %s88
    %p95 = scmp.eq.s32.totalorder %s15, 1
    %p96 = por %p94, %p95
    %p97 = scmp.ne.s32.totalorder %s88, %s89
    %p98 = scmp.eq.s32.totalorder %s15, 0
    %p99 = por %p97, %p98
    %p100 = scmp.ne.s32.totalorder %s88, %s89
    %p101 = scmp.eq.s32.totalorder %s16, 1
    %p102 = por %p100, %p101
    %p104 = scmp.ne.s32.totalorder %s89, %s103
    %p105 = scmp.eq.s32.totalorder %s16, 0
    %p106 = por %p104, %p105
    %s107 = ssub.s32 %s10, %s17
    %p108 = scmp.eq.s32.totalorder %s107, 0
    %s110 = sadd.s32 %s109, 1
    %s111 = scalar_select %p108, %s109, %s110
    %p114 = pneg %p108
    %p115 = scmp.eq.s32.totalorder %s10, 1
    %p116 = por %p114, %p115
    %p117 = scmp.ne.s32.totalorder %s109, %s112
    %p118 = scmp.eq.s32.totalorder %s10, 0
    %p119 = por %p117, %p118
    %p120 = scmp.ne.s32.totalorder %s109, %s112
    %p121 = scmp.eq.s32.totalorder %s15, 1
    %p122 = por %p120, %p121
    %p123 = scmp.ne.s32.totalorder %s112, %s113
    %p124 = scmp.eq.s32.totalorder %s15, 0
    %p125 = por %p123, %p124
    %p126 = scmp.ne.s32.totalorder %s112, %s113
    %p127 = scmp.eq.s32.totalorder %s16, 1
    %p128 = por %p126, %p127
    %p130 = scmp.ne.s32.totalorder %s113, %s129
    %p131 = scmp.eq.s32.totalorder %s16, 0
    %p132 = por %p130, %p131
    %p133 = scmp.le.s32.totalorder 1, %s10
    %p134 = scmp.lt.s32.totalorder %s10, 3
    %p135 = pnand %p133, %p134
    %p136 = pneg %p135
    // Predicated region
    $region9: #{_lambda_.32} parent=5 // pred_check
      _
    $region10: #{_lambda_.32} parent=5 // pred_check_branch
      %138 = sbr.rel (%p135) target = $region12
    $region11: #{_lambda_.32} parent=5 // pred_region
      %s139 = ssub.s32 %s10, 1
      // Predicated region
      $region13: #{_lambda_.32} parent=11 // pred_check
        %p140 = pneg %p57
      $region14: #{_lambda_.32} parent=11 // pred_check_branch
        %142 = sbr.rel (%p140) target = $region16
      $region15: #{_lambda_.32} parent=11 // pred_region
        _
      $region16: #{_lambda_.32} parent=11 // pred_fallthru
        _
      // Predicated region
      $region17: #{_lambda_.32} parent=11 // pred_check
        %p143 = pneg %p78
      $region18: #{_lambda_.32} parent=11 // pred_check_branch
        %145 = sbr.rel (%p143) target = $region20
      $region19: #{_lambda_.32} parent=11 // pred_region
        _
      $region20: #{_lambda_.32} parent=11 // pred_fallthru
        _
      // Predicated region
      $region21: #{_lambda_.32} parent=11 // pred_check
        %p146 = pneg %p99
      $region22: #{_lambda_.32} parent=11 // pred_check_branch
        %148 = sbr.rel (%p146) target = $region24
      $region23: #{_lambda_.32} parent=11 // pred_region
        _
      $region24: #{_lambda_.32} parent=11 // pred_fallthru
        _
    $region12: #{_lambda_.32} parent=5 // pred_fallthru
      _
    %p149 = scmp.lt.s32.totalorder %s10, 2
    // Predicated region
    $region25: #{_lambda_.32} parent=5 // pred_check
      %p150 = pneg %p149
    $region26: #{_lambda_.32} parent=5 // pred_check_branch
      %152 = sbr.rel (%p150) target = $region28
    $region27: #{_lambda_.32} parent=5 // pred_region
      // Predicated region
      $region29: #{_lambda_.32} parent=27 // pred_check
        %p153 = pneg %p30
      $region30: #{_lambda_.32} parent=27 // pred_check_branch
        %155 = sbr.rel (%p153) target = $region32
      $region31: #{_lambda_.32} parent=27 // pred_region
        %s156 = smul.u32 32, %s10
        %p157 = scmp.lt.s32.totalorder %s156, 63
        %s158 = scalar_select %p157, %s156, 63
        %s159 = smul.addr %s158, 3
        %s160 = smul.addr %s159, 4
        %s161 = scalar_lea.vmem %s0, %s160
        %s162 = smul.u32 32, %s10
      $region32: #{_lambda_.32} parent=27 // pred_fallthru
        _
    $region28: #{_lambda_.32} parent=5 // pred_fallthru
      _
    %p163 = scmp.le.s32.totalorder 1, %s10
    %p164 = scmp.lt.s32.totalorder %s10, 3
    %p165 = pnand %p163, %p164
    %p166 = pneg %p165
    // Predicated region
    $region33: #{_lambda_.32} parent=5 // pred_check
      _
    $region34: #{_lambda_.32} parent=5 // pred_check_branch
      %168 = sbr.rel (%p165) target = $region36
    $region35: #{_lambda_.32} parent=5 // pred_region
      %s169 = ssub.s32 %s10, 1
      %s170 = smul.u32 32, %s15
      %p171 = scmp.lt.s32.totalorder %s170, 63
      %s172 = scalar_select %p171, %s170, 63
      %s173 = smul.addr %s172, 3
      %s174 = smul.addr %s173, 4
      %s175 = scalar_lea.vmem %s0, %s174
      %p176 = pneg %p36
      %p177 = pneg %p33
      %p178 = pneg %p57
      %p179 = pneg %p54
      %p180 = pneg %p78
      %p181 = pneg %p75
      %p182 = pneg %p99
      %p183 = pneg %p96
      %p184 = pneg %p125
      %p185 = pneg %p122
      %s186 = smul.u32 32, %s15
      %p187 = scmp.lt.s32.totalorder %s186, 63
      %s188 = scalar_select %p187, %s186, 63
      %s189 = smul.addr %s188, 4
      %s190 = scalar_lea.vmem %s4, %s189
      %s191 = smul.u32 32, %s15
      %p192 = scmp.lt.s32.totalorder %s191, 63
      %s193 = scalar_select %p192, %s191, 63
      %s194 = smul.addr %s193, 3
      %s195 = smul.addr %s194, 4
      %s196 = scalar_lea.vmem %s0, %s195
      %s197 = smul.u32 32, %s15
      %s198 = smul.u32 32, %s15
      %p199 = scmp.lt.s32.totalorder %s198, 63
      %s200 = scalar_select %p199, %s198, 63
      %s201 = smul.addr %s200, 4
      %s202 = scalar_lea.vmem %s4, %s201
      %s203 = smul.u32 32, %s15
      %v205 = vld [vmem:[%s196] sm:$0xff]
      %v206 = vld [vmem:[%s196 + $0x8] sm:$0xf]
      %v207 = vld [vmem:[%s196 + $0xc] sm:$0xff]
      %v208 = vld [vmem:[%s196 + $0x14] sm:$0xf]
      %v209 = vld [vmem:[%s196 + $0x18] sm:$0xff]
      %v210 = vld [vmem:[%s196 + $0x20] sm:$0xf]
      %v211 = vld [vmem:[%s196 + $0x24] sm:$0xff]
      %v212 = vld [vmem:[%s196 + $0x2c] sm:$0xf]
      %v213 = vld [vmem:[%s196 + $0x30] sm:$0xff]
      %v214 = vld [vmem:[%s196 + $0x38] sm:$0xf]
      %v215 = vld [vmem:[%s196 + $0x3c] sm:$0xff]
      %v216 = vld [vmem:[%s196 + $0x44] sm:$0xf]
      %v217 = vld [vmem:[%s196 + $0x48] sm:$0xff]
      %v218 = vld [vmem:[%s196 + $0x50] sm:$0xf]
      %v219 = vld [vmem:[%s196 + $0x54] sm:$0xff]
      %v220 = vld [vmem:[%s196 + $0x5c] sm:$0xf]
      %v221 = vld [vmem:[%s196 + $0x60] sm:$0xff]
      %v222 = vld [vmem:[%s196 + $0x68] sm:$0xf]
      %v223 = vld [vmem:[%s196 + $0x6c] sm:$0xff]
      %v224 = vld [vmem:[%s196 + $0x74] sm:$0xf]
      %v225 = vld [vmem:[%s196 + $0x78] sm:$0xff]
      %v226 = vld [vmem:[%s196 + $0x80] sm:$0xf]
      %v227 = vld [vmem:[%s196 + $0x84] sm:$0xff]
      %v228 = vld [vmem:[%s196 + $0x8c] sm:$0xf]
      %v229 = vld [vmem:[%s196 + $0x90] sm:$0xff]
      %v230 = vld [vmem:[%s196 + $0x98] sm:$0xf]
      %v231 = vld [vmem:[%s196 + $0x9c] sm:$0xff]
      %v232 = vld [vmem:[%s196 + $0xa4] sm:$0xf]
      %v233 = vld [vmem:[%s196 + $0xa8] sm:$0xff]
      %v234 = vld [vmem:[%s196 + $0xb0] sm:$0xf]
      %v235 = vld [vmem:[%s196 + $0xb4] sm:$0xff]
      %v236 = vld [vmem:[%s196 + $0xbc] sm:$0xf]
      %v237 = vld [vmem:[%s196 + $0xc0] sm:$0xff]
      %v238 = vld [vmem:[%s196 + $0xc8] sm:$0xf]
      %v239 = vld [vmem:[%s196 + $0xcc] sm:$0xff]
      %v240 = vld [vmem:[%s196 + $0xd4] sm:$0xf]
      %v241 = vld [vmem:[%s196 + $0xd8] sm:$0xff]
      %v242 = vld [vmem:[%s196 + $0xe0] sm:$0xf]
      %v243 = vld [vmem:[%s196 + $0xe4] sm:$0xff]
      %v244 = vld [vmem:[%s196 + $0xec] sm:$0xf]
      %v245 = vld [vmem:[%s196 + $0xf0] sm:$0xff]
      %v246 = vld [vmem:[%s196 + $0xf8] sm:$0xf]
      %v247 = vld [vmem:[%s196 + $0xfc] sm:$0xff]
      %v248 = vld [vmem:[%s196 + $0x104] sm:$0xf]
      %v249 = vld [vmem:[%s196 + $0x108] sm:$0xff]
      %v250 = vld [vmem:[%s196 + $0x110] sm:$0xf]
      %v251 = vld [vmem:[%s196 + $0x114] sm:$0xff]
      %v252 = vld [vmem:[%s196 + $0x11c] sm:$0xf]
      %v253 = vld [vmem:[%s196 + $0x120] sm:$0xff]
      %v254 = vld [vmem:[%s196 + $0x128] sm:$0xf]
      %v255 = vld [vmem:[%s196 + $0x12c] sm:$0xff]
      %v256 = vld [vmem:[%s196 + $0x134] sm:$0xf]
      %v257 = vld [vmem:[%s196 + $0x138] sm:$0xff]
      %v258 = vld [vmem:[%s196 + $0x140] sm:$0xf]
      %v259 = vld [vmem:[%s196 + $0x144] sm:$0xff]
      %v260 = vld [vmem:[%s196 + $0x14c] sm:$0xf]
      %v261 = vld [vmem:[%s196 + $0x150] sm:$0xff]
      %v262 = vld [vmem:[%s196 + $0x158] sm:$0xf]
      %v263 = vld [vmem:[%s196 + $0x15c] sm:$0xff]
      %v264 = vld [vmem:[%s196 + $0x164] sm:$0xf]
      %v265 = vld [vmem:[%s196 + $0x168] sm:$0xff]
      %v266 = vld [vmem:[%s196 + $0x170] sm:$0xf]
      %v267 = vld [vmem:[%s196 + $0x174] sm:$0xff]
      %v268 = vld [vmem:[%s196 + $0x17c] sm:$0xf]
      %v269 = vld [vmem:[%s1] sm:$0xf]
      %v270 = vld [vmem:[%s1 + $0x4] sm:$0xf]
      %v271 = vld [vmem:[%s1 + $0x8] sm:$0xf]
      %v272 = vld [vmem:[%s1 + $0xc] sm:$0xf]
      %v273 = vld [vmem:[%s1 + $0x10] sm:$0xf]
      %v274 = vld [vmem:[%s1 + $0x14] sm:$0xf]
      %v275 = vld [vmem:[%s1 + $0x18] sm:$0xf]
      %v276 = vld [vmem:[%s1 + $0x1c] sm:$0xf]
      %v277 = vld [vmem:[%s1 + $0x20] sm:$0xf]
      %v278 = vld [vmem:[%s1 + $0x24] sm:$0xf]
      %v279 = vld [vmem:[%s1 + $0x28] sm:$0xf]
      %v280 = vld [vmem:[%s1 + $0x2c] sm:$0xf]
      %v281 = vld [vmem:[%s1 + $0x30] sm:$0xf]
      %v282 = vld [vmem:[%s1 + $0x34] sm:$0xf]
      %v283 = vld [vmem:[%s1 + $0x38] sm:$0xf]
      %v284 = vld [vmem:[%s1 + $0x3c] sm:$0xf]
      %v285 = vld [vmem:[%s1 + $0x40] sm:$0xf]
      %v286 = vld [vmem:[%s1 + $0x44] sm:$0xf]
      %v287 = vld [vmem:[%s1 + $0x48] sm:$0xf]
      %v288 = vld [vmem:[%s1 + $0x4c] sm:$0xf]
      %v289 = vld [vmem:[%s1 + $0x50] sm:$0xf]
      %v290 = vld [vmem:[%s1 + $0x54] sm:$0xf]
      %v291 = vld [vmem:[%s1 + $0x58] sm:$0xf]
      %v292 = vld [vmem:[%s1 + $0x5c] sm:$0xf]
      %v293 = vld [vmem:[%s1 + $0x60] sm:$0xf]
      %v294 = vld [vmem:[%s1 + $0x64] sm:$0xf]
      %v295 = vld [vmem:[%s1 + $0x68] sm:$0xf]
      %v296 = vld [vmem:[%s1 + $0x6c] sm:$0xf]
      %v297 = vld [vmem:[%s1 + $0x70] sm:$0xf]
      %v298 = vld [vmem:[%s1 + $0x74] sm:$0xf]
      %v299 = vld [vmem:[%s1 + $0x78] sm:$0xf]
      %v300 = vld [vmem:[%s1 + $0x7c] sm:$0xf]
      %v301 = vld [vmem:[%s1 + $0x80] sm:$0xf]
      %v302 = vld [vmem:[%s1 + $0x84] sm:$0xf]
      %v303 = vld [vmem:[%s1 + $0x88] sm:$0xf]
      %v304 = vld [vmem:[%s1 + $0x8c] sm:$0xf]
      %v369 = vunpack.c.l.b16 %v205
      %v370 = vunpack.c.h.b16 %v205
      %v371 = vunpack.c.l.b16 %v206
      %v372 = vunpack.c.l.b16 %v207
      %v373 = vunpack.c.h.b16 %v207
      %v374 = vunpack.c.l.b16 %v208
      %v375 = vunpack.c.l.b16 %v209
      %v376 = vunpack.c.h.b16 %v209
      %v377 = vunpack.c.l.b16 %v210
      %v378 = vunpack.c.l.b16 %v211
      %v379 = vunpack.c.h.b16 %v211
      %v380 = vunpack.c.l.b16 %v212
      %v381 = vunpack.c.l.b16 %v213
      %v382 = vunpack.c.h.b16 %v213
      %v383 = vunpack.c.l.b16 %v214
      %v384 = vunpack.c.l.b16 %v215
      %v385 = vunpack.c.h.b16 %v215
      %v386 = vunpack.c.l.b16 %v216
      %v387 = vunpack.c.l.b16 %v217
      %v388 = vunpack.c.h.b16 %v217
      %v389 = vunpack.c.l.b16 %v218
      %v390 = vunpack.c.l.b16 %v219
      %v391 = vunpack.c.h.b16 %v219
      %v392 = vunpack.c.l.b16 %v220
      %v393 = vunpack.c.l.b16 %v221
      %v394 = vunpack.c.h.b16 %v221
      %v395 = vunpack.c.l.b16 %v222
      %v396 = vunpack.c.l.b16 %v223
      %v397 = vunpack.c.h.b16 %v223
      %v398 = vunpack.c.l.b16 %v224
      %v399 = vunpack.c.l.b16 %v225
      %v400 = vunpack.c.h.b16 %v225
      %v401 = vunpack.c.l.b16 %v226
      %v402 = vunpack.c.l.b16 %v227
      %v403 = vunpack.c.h.b16 %v227
      %v404 = vunpack.c.l.b16 %v228
      %v405 = vunpack.c.l.b16 %v229
      %v406 = vunpack.c.h.b16 %v229
      %v407 = vunpack.c.l.b16 %v230
      %v408 = vunpack.c.l.b16 %v231
      %v409 = vunpack.c.h.b16 %v231
      %v410 = vunpack.c.l.b16 %v232
      %v411 = vunpack.c.l.b16 %v233
      %v412 = vunpack.c.h.b16 %v233
      %v413 = vunpack.c.l.b16 %v234
      %v414 = vunpack.c.l.b16 %v235
      %v415 = vunpack.c.h.b16 %v235
      %v416 = vunpack.c.l.b16 %v236
      %v417 = vunpack.c.l.b16 %v237
      %v418 = vunpack.c.h.b16 %v237
      %v419 = vunpack.c.l.b16 %v238
      %v420 = vunpack.c.l.b16 %v239
      %v421 = vunpack.c.h.b16 %v239
      %v422 = vunpack.c.l.b16 %v240
      %v423 = vunpack.c.l.b16 %v241
      %v424 = vunpack.c.h.b16 %v241
      %v425 = vunpack.c.l.b16 %v242
      %v426 = vunpack.c.l.b16 %v243
      %v427 = vunpack.c.h.b16 %v243
      %v428 = vunpack.c.l.b16 %v244
      %v429 = vunpack.c.l.b16 %v245
      %v430 = vunpack.c.h.b16 %v245
      %v431 = vunpack.c.l.b16 %v246
      %v432 = vunpack.c.l.b16 %v247
      %v433 = vunpack.c.h.b16 %v247
      %v434 = vunpack.c.l.b16 %v248
      %v435 = vunpack.c.l.b16 %v249
      %v436 = vunpack.c.h.b16 %v249
      %v437 = vunpack.c.l.b16 %v250
      %v438 = vunpack.c.l.b16 %v251
      %v439 = vunpack.c.h.b16 %v251
      %v440 = vunpack.c.l.b16 %v252
      %v441 = vunpack.c.l.b16 %v253
      %v442 = vunpack.c.h.b16 %v253
      %v443 = vunpack.c.l.b16 %v254
      %v444 = vunpack.c.l.b16 %v255
      %v445 = vunpack.c.h.b16 %v255
      %v446 = vunpack.c.l.b16 %v256
      %v447 = vunpack.c.l.b16 %v257
      %v448 = vunpack.c.h.b16 %v257
      %v449 = vunpack.c.l.b16 %v258
      %v450 = vunpack.c.l.b16 %v259
      %v451 = vunpack.c.h.b16 %v259
      %v452 = vunpack.c.l.b16 %v260
      %v453 = vunpack.c.l.b16 %v261
      %v454 = vunpack.c.h.b16 %v261
      %v455 = vunpack.c.l.b16 %v262
      %v456 = vunpack.c.l.b16 %v263
      %v457 = vunpack.c.h.b16 %v263
      %v458 = vunpack.c.l.b16 %v264
      %v459 = vunpack.c.l.b16 %v265
      %v460 = vunpack.c.h.b16 %v265
      %v461 = vunpack.c.l.b16 %v266
      %v462 = vunpack.c.l.b16 %v267
      %v463 = vunpack.c.h.b16 %v267
      %v464 = vunpack.c.l.b16 %v268
      %v465 = vpack.c.b16 %v372, %v369
      %v466 = vpack.c.b16 %v373, %v370
      %v467 = vpack.c.b16 %v374, %v371
      %v468 = vpack.c.b16 %v378, %v375
      %v469 = vpack.c.b16 %v379, %v376
      %v470 = vpack.c.b16 %v380, %v377
      %v471 = vpack.c.b16 %v384, %v381
      %v472 = vpack.c.b16 %v385, %v382
      %v473 = vpack.c.b16 %v386, %v383
      %v474 = vpack.c.b16 %v390, %v387
      %v475 = vpack.c.b16 %v391, %v388
      %v476 = vpack.c.b16 %v392, %v389
      %v477 = vpack.c.b16 %v396, %v393
      %v478 = vpack.c.b16 %v397, %v394
      %v479 = vpack.c.b16 %v398, %v395
      %v480 = vpack.c.b16 %v402, %v399
      %v481 = vpack.c.b16 %v403, %v400
      %v482 = vpack.c.b16 %v404, %v401
      %v483 = vpack.c.b16 %v408, %v405
      %v484 = vpack.c.b16 %v409, %v406
      %v485 = vpack.c.b16 %v410, %v407
      %v486 = vpack.c.b16 %v414, %v411
      %v487 = vpack.c.b16 %v415, %v412
      %v488 = vpack.c.b16 %v416, %v413
      %v489 = vpack.c.b16 %v420, %v417
      %v490 = vpack.c.b16 %v421, %v418
      %v491 = vpack.c.b16 %v422, %v419
      %v492 = vpack.c.b16 %v426, %v423
      %v493 = vpack.c.b16 %v427, %v424
      %v494 = vpack.c.b16 %v428, %v425
      %v495 = vpack.c.b16 %v432, %v429
      %v496 = vpack.c.b16 %v433, %v430
      %v497 = vpack.c.b16 %v434, %v431
      %v498 = vpack.c.b16 %v438, %v435
      %v499 = vpack.c.b16 %v439, %v436
      %v500 = vpack.c.b16 %v440, %v437
      %v501 = vpack.c.b16 %v444, %v441
      %v502 = vpack.c.b16 %v445, %v442
      %v503 = vpack.c.b16 %v446, %v443
      %v504 = vpack.c.b16 %v450, %v447
      %v505 = vpack.c.b16 %v451, %v448
      %v506 = vpack.c.b16 %v452, %v449
      %v507 = vpack.c.b16 %v456, %v453
      %v508 = vpack.c.b16 %v457, %v454
      %v509 = vpack.c.b16 %v458, %v455
      %v510 = vpack.c.b16 %v462, %v459
      %v511 = vpack.c.b16 %v463, %v460
      %v512 = vpack.c.b16 %v464, %v461
      %v581 = vunpack.c.l.b16 %v269
      %v582 = vunpack.c.l.b16 %v270
      %v583 = vunpack.c.l.b16 %v271
      %v584 = vunpack.c.l.b16 %v272
      %v585 = vunpack.c.l.b16 %v273
      %v586 = vunpack.c.l.b16 %v274
      %v587 = vunpack.c.l.b16 %v275
      %v588 = vunpack.c.l.b16 %v276
      %v589 = vunpack.c.l.b16 %v277
      %v590 = vunpack.c.l.b16 %v278
      %v591 = vunpack.c.l.b16 %v279
      %v592 = vunpack.c.l.b16 %v280
      %v593 = vunpack.c.l.b16 %v281
      %v594 = vunpack.c.l.b16 %v282
      %v595 = vunpack.c.l.b16 %v283
      %v596 = vunpack.c.l.b16 %v284
      %v597 = vunpack.c.l.b16 %v285
      %v598 = vunpack.c.l.b16 %v286
      %v599 = vunpack.c.l.b16 %v287
      %v600 = vunpack.c.l.b16 %v288
      %v601 = vunpack.c.l.b16 %v289
      %v602 = vunpack.c.l.b16 %v290
      %v603 = vunpack.c.l.b16 %v291
      %v604 = vunpack.c.l.b16 %v292
      %v605 = vunpack.c.l.b16 %v293
      %v606 = vunpack.c.l.b16 %v294
      %v607 = vunpack.c.l.b16 %v295
      %v608 = vunpack.c.l.b16 %v296
      %v609 = vunpack.c.l.b16 %v297
      %v610 = vunpack.c.l.b16 %v298
      %v611 = vunpack.c.l.b16 %v299
      %v612 = vunpack.c.l.b16 %v300
      %v613 = vunpack.c.l.b16 %v301
      %v614 = vunpack.c.l.b16 %v302
      %v615 = vunpack.c.l.b16 %v303
      %v616 = vunpack.c.l.b16 %v304
      %v617 = vpack.c.b16 %v582, %v581
      %v618 = vpack.c.b16 %v584, %v583
      %v619 = vpack.c.b16 %v586, %v585
      %v620 = vpack.c.b16 %v588, %v587
      %v621 = vpack.c.b16 %v590, %v589
      %v622 = vpack.c.b16 %v592, %v591
      %v623 = vpack.c.b16 %v594, %v593
      %v624 = vpack.c.b16 %v596, %v595
      %v625 = vpack.c.b16 %v598, %v597
      %v626 = vpack.c.b16 %v600, %v599
      %v627 = vpack.c.b16 %v602, %v601
      %v628 = vpack.c.b16 %v604, %v603
      %v629 = vpack.c.b16 %v606, %v605
      %v630 = vpack.c.b16 %v608, %v607
      %v631 = vpack.c.b16 %v610, %v609
      %v632 = vpack.c.b16 %v612, %v611
      %v633 = vpack.c.b16 %v614, %v613
      %v634 = vpack.c.b16 %v616, %v615
      %vm653 = vcmask 261120
      %v655 = vsel %vm653, %v467, 0
      %v658 = vsel %vm653, %v470, 0
      %v661 = vsel %vm653, %v473, 0
      %v664 = vsel %vm653, %v476, 0
      %v667 = vsel %vm653, %v479, 0
      %v670 = vsel %vm653, %v482, 0
      %v673 = vsel %vm653, %v485, 0
      %v676 = vsel %vm653, %v488, 0
      %v679 = vsel %vm653, %v491, 0
      %v682 = vsel %vm653, %v494, 0
      %v685 = vsel %vm653, %v497, 0
      %v688 = vsel %vm653, %v500, 0
      %v691 = vsel %vm653, %v503, 0
      %v694 = vsel %vm653, %v506, 0
      %v697 = vsel %vm653, %v509, 0
      %v700 = vsel %vm653, %v512, 0
      %702 = vmatpush.bf16.msra.mxu0 %v624
      %703 = vmatpush.bf16.msra.mxu0 %v623
      %704 = vmatpush.bf16.msra.mxu0 %v622
      %705 = vmatpush.bf16.msra.mxu0 %v621
      %706 = vmatpush.bf16.msra.mxu0 %v620
      %707 = vmatpush.bf16.msra.mxu0 %v619
      %708 = vmatpush.bf16.msra.mxu0 %v618
      %709 = vmatpush.bf16.msra.mxu0 %v617
      %710 = vmatmul.bf16.gmra.mxu0 %v465
      %v711 = vpop.f32.mrf.mxu0
      %v712 = vadd.f32 0.0, %v711
      %v713 = vpop.f32.mrf.mxu0
      %v714 = vadd.f32 0.0, %v713
      %715 = vmatmul.bf16.gmra.mxu0 %v468
      %v716 = vpop.f32.mrf.mxu0
      %v717 = vadd.f32 0.0, %v716
      %v718 = vpop.f32.mrf.mxu0
      %v719 = vadd.f32 0.0, %v718
      %720 = vmatmul.bf16.gmra.mxu0 %v471
      %v721 = vpop.f32.mrf.mxu0
      %v722 = vadd.f32 0.0, %v721
      %v723 = vpop.f32.mrf.mxu0
      %v724 = vadd.f32 0.0, %v723
      %725 = vmatmul.bf16.gmra.mxu0 %v474
      %v726 = vpop.f32.mrf.mxu0
      %v727 = vadd.f32 0.0, %v726
      %v728 = vpop.f32.mrf.mxu0
      %v729 = vadd.f32 0.0, %v728
      %730 = vmatmul.bf16.gmra.mxu0 %v477
      %v731 = vpop.f32.mrf.mxu0
      %v732 = vadd.f32 0.0, %v731
      %v733 = vpop.f32.mrf.mxu0
      %v734 = vadd.f32 0.0, %v733
      %735 = vmatmul.bf16.gmra.mxu0 %v480
      %v736 = vpop.f32.mrf.mxu0
      %v737 = vadd.f32 0.0, %v736
      %v738 = vpop.f32.mrf.mxu0
      %v739 = vadd.f32 0.0, %v738
      %740 = vmatmul.bf16.gmra.mxu0 %v483
      %v741 = vpop.f32.mrf.mxu0
      %v742 = vadd.f32 0.0, %v741
      %v743 = vpop.f32.mrf.mxu0
      %v744 = vadd.f32 0.0, %v743
      %745 = vmatmul.bf16.gmra.mxu0 %v486
      %v746 = vpop.f32.mrf.mxu0
      %v747 = vadd.f32 0.0, %v746
      %v748 = vpop.f32.mrf.mxu0
      %v749 = vadd.f32 0.0, %v748
      %750 = vmatmul.bf16.gmra.mxu0 %v489
      %v751 = vpop.f32.mrf.mxu0
      %v752 = vadd.f32 0.0, %v751
      %v753 = vpop.f32.mrf.mxu0
      %v754 = vadd.f32 0.0, %v753
      %755 = vmatmul.bf16.gmra.mxu0 %v492
      %v756 = vpop.f32.mrf.mxu0
      %v757 = vadd.f32 0.0, %v756
      %v758 = vpop.f32.mrf.mxu0
      %v759 = vadd.f32 0.0, %v758
      %760 = vmatmul.bf16.gmra.mxu0 %v495
      %v761 = vpop.f32.mrf.mxu0
      %v762 = vadd.f32 0.0, %v761
      %v763 = vpop.f32.mrf.mxu0
      %v764 = vadd.f32 0.0, %v763
      %765 = vmatmul.bf16.gmra.mxu0 %v498
      %v766 = vpop.f32.mrf.mxu0
      %v767 = vadd.f32 0.0, %v766
      %v768 = vpop.f32.mrf.mxu0
      %v769 = vadd.f32 0.0, %v768
      %770 = vmatmul.bf16.gmra.mxu0 %v501
      %v771 = vpop.f32.mrf.mxu0
      %v772 = vadd.f32 0.0, %v771
      %v773 = vpop.f32.mrf.mxu0
      %v774 = vadd.f32 0.0, %v773
      %775 = vmatmul.bf16.gmra.mxu0 %v504
      %v776 = vpop.f32.mrf.mxu0
      %v777 = vadd.f32 0.0, %v776
      %v778 = vpop.f32.mrf.mxu0
      %v779 = vadd.f32 0.0, %v778
      %780 = vmatmul.bf16.gmra.mxu0 %v507
      %v781 = vpop.f32.mrf.mxu0
      %v782 = vadd.f32 0.0, %v781
      %v783 = vpop.f32.mrf.mxu0
      %v784 = vadd.f32 0.0, %v783
      %785 = vmatmul.bf16.gmra.mxu0 %v510
      %v786 = vpop.f32.mrf.mxu0
      %v787 = vadd.f32 0.0, %v786
      %v788 = vpop.f32.mrf.mxu0
      %v789 = vadd.f32 0.0, %v788
      %790 = vdwg.mxu0
      %791 = vmatpush.bf16.msra.mxu0 %v632
      %792 = vmatpush.bf16.msra.mxu0 %v631
      %793 = vmatpush.bf16.msra.mxu0 %v630
      %794 = vmatpush.bf16.msra.mxu0 %v629
      %795 = vmatpush.bf16.msra.mxu0 %v628
      %796 = vmatpush.bf16.msra.mxu0 %v627
      %797 = vmatpush.bf16.msra.mxu0 %v626
      %798 = vmatpush.bf16.msra.mxu0 %v625
      %799 = vmatmul.bf16.gmra.mxu0 %v466
      %v800 = vpop.f32.mrf.mxu0
      %v801 = vadd.f32 %v712, %v800
      %v802 = vpop.f32.mrf.mxu0
      %v803 = vadd.f32 %v714, %v802
      %804 = vmatmul.bf16.gmra.mxu0 %v469
      %v805 = vpop.f32.mrf.mxu0
      %v806 = vadd.f32 %v717, %v805
      %v807 = vpop.f32.mrf.mxu0
      %v808 = vadd.f32 %v719, %v807
      %809 = vmatmul.bf16.gmra.mxu0 %v472
      %v810 = vpop.f32.mrf.mxu0
      %v811 = vadd.f32 %v722, %v810
      %v812 = vpop.f32.mrf.mxu0
      %v813 = vadd.f32 %v724, %v812
      %814 = vmatmul.bf16.gmra.mxu0 %v475
      %v815 = vpop.f32.mrf.mxu0
      %v816 = vadd.f32 %v727, %v815
      %v817 = vpop.f32.mrf.mxu0
      %v818 = vadd.f32 %v729, %v817
      %819 = vmatmul.bf16.gmra.mxu0 %v478
      %v820 = vpop.f32.mrf.mxu0
      %v821 = vadd.f32 %v732, %v820
      %v822 = vpop.f32.mrf.mxu0
      %v823 = vadd.f32 %v734, %v822
      %824 = vmatmul.bf16.gmra.mxu0 %v481
      %v825 = vpop.f32.mrf.mxu0
      %v826 = vadd.f32 %v737, %v825
      %v827 = vpop.f32.mrf.mxu0
      %v828 = vadd.f32 %v739, %v827
      %829 = vmatmul.bf16.gmra.mxu0 %v484
      %v830 = vpop.f32.mrf.mxu0
      %v831 = vadd.f32 %v742, %v830
      %v832 = vpop.f32.mrf.mxu0
      %v833 = vadd.f32 %v744, %v832
      %834 = vmatmul.bf16.gmra.mxu0 %v487
      %v835 = vpop.f32.mrf.mxu0
      %v836 = vadd.f32 %v747, %v835
      %v837 = vpop.f32.mrf.mxu0
      %v838 = vadd.f32 %v749, %v837
      %839 = vmatmul.bf16.gmra.mxu0 %v490
      %v840 = vpop.f32.mrf.mxu0
      %v841 = vadd.f32 %v752, %v840
      %v842 = vpop.f32.mrf.mxu0
      %v843 = vadd.f32 %v754, %v842
      %844 = vmatmul.bf16.gmra.mxu0 %v493
      %v845 = vpop.f32.mrf.mxu0
      %v846 = vadd.f32 %v757, %v845
      %v847 = vpop.f32.mrf.mxu0
      %v848 = vadd.f32 %v759, %v847
      %849 = vmatmul.bf16.gmra.mxu0 %v496
      %v850 = vpop.f32.mrf.mxu0
      %v851 = vadd.f32 %v762, %v850
      %v852 = vpop.f32.mrf.mxu0
      %v853 = vadd.f32 %v764, %v852
      %854 = vmatmul.bf16.gmra.mxu0 %v499
      %v855 = vpop.f32.mrf.mxu0
      %v856 = vadd.f32 %v767, %v855
      %v857 = vpop.f32.mrf.mxu0
      %v858 = vadd.f32 %v769, %v857
      %859 = vmatmul.bf16.gmra.mxu0 %v502
      %v860 = vpop.f32.mrf.mxu0
      %v861 = vadd.f32 %v772, %v860
      %v862 = vpop.f32.mrf.mxu0
      %v863 = vadd.f32 %v774, %v862
      %864 = vmatmul.bf16.gmra.mxu0 %v505
      %v865 = vpop.f32.mrf.mxu0
      %v866 = vadd.f32 %v777, %v865
      %v867 = vpop.f32.mrf.mxu0
      %v868 = vadd.f32 %v779, %v867
      %869 = vmatmul.bf16.gmra.mxu0 %v508
      %v870 = vpop.f32.mrf.mxu0
      %v871 = vadd.f32 %v782, %v870
      %v872 = vpop.f32.mrf.mxu0
      %v873 = vadd.f32 %v784, %v872
      %874 = vmatmul.bf16.gmra.mxu0 %v511
      %v875 = vpop.f32.mrf.mxu0
      %v876 = vadd.f32 %v787, %v875
      %v877 = vpop.f32.mrf.mxu0
      %v878 = vadd.f32 %v789, %v877
      %879 = vdwg.mxu0
      %880 = vmatpush.bf16.msra.mxu0 0
      %881 = vmatpush.bf16.msra.mxu0 0
      %882 = vmatpush.bf16.msra.mxu0 0
      %883 = vmatpush.bf16.msra.mxu0 0
      %884 = vmatpush.bf16.msra.mxu0 0
      %885 = vmatpush.bf16.msra.mxu0 0
      %886 = vmatpush.bf16.msra.mxu0 %v634
      %887 = vmatpush.bf16.msra.mxu0 %v633
      %888 = vmatmul.bf16.gmra.mxu0 %v655
      %v889 = vpop.f32.mrf.mxu0
      %v890 = vadd.f32 %v801, %v889
      %v891 = vpop.f32.mrf.mxu0
      %v892 = vadd.f32 %v803, %v891
      %893 = vmatmul.bf16.gmra.mxu0 %v658
      %v894 = vpop.f32.mrf.mxu0
      %v895 = vadd.f32 %v806, %v894
      %v896 = vpop.f32.mrf.mxu0
      %v897 = vadd.f32 %v808, %v896
      %898 = vmatmul.bf16.gmra.mxu0 %v661
      %v899 = vpop.f32.mrf.mxu0
      %v900 = vadd.f32 %v811, %v899
      %v901 = vpop.f32.mrf.mxu0
      %v902 = vadd.f32 %v813, %v901
      %903 = vmatmul.bf16.gmra.mxu0 %v664
      %v904 = vpop.f32.mrf.mxu0
      %v905 = vadd.f32 %v816, %v904
      %v906 = vpop.f32.mrf.mxu0
      %v907 = vadd.f32 %v818, %v906
      %908 = vmatmul.bf16.gmra.mxu0 %v667
      %v909 = vpop.f32.mrf.mxu0
      %v910 = vadd.f32 %v821, %v909
      %v911 = vpop.f32.mrf.mxu0
      %v912 = vadd.f32 %v823, %v911
      %913 = vmatmul.bf16.gmra.mxu0 %v670
      %v914 = vpop.f32.mrf.mxu0
      %v915 = vadd.f32 %v826, %v914
      %v916 = vpop.f32.mrf.mxu0
      %v917 = vadd.f32 %v828, %v916
      %918 = vmatmul.bf16.gmra.mxu0 %v673
      %v919 = vpop.f32.mrf.mxu0
      %v920 = vadd.f32 %v831, %v919
      %v921 = vpop.f32.mrf.mxu0
      %v922 = vadd.f32 %v833, %v921
      %923 = vmatmul.bf16.gmra.mxu0 %v676
      %v924 = vpop.f32.mrf.mxu0
      %v925 = vadd.f32 %v836, %v924
      %v926 = vpop.f32.mrf.mxu0
      %v927 = vadd.f32 %v838, %v926
      %928 = vmatmul.bf16.gmra.mxu0 %v679
      %v929 = vpop.f32.mrf.mxu0
      %v930 = vadd.f32 %v841, %v929
      %v931 = vpop.f32.mrf.mxu0
      %v932 = vadd.f32 %v843, %v931
      %933 = vmatmul.bf16.gmra.mxu0 %v682
      %v934 = vpop.f32.mrf.mxu0
      %v935 = vadd.f32 %v846, %v934
      %v936 = vpop.f32.mrf.mxu0
      %v937 = vadd.f32 %v848, %v936
      %938 = vmatmul.bf16.gmra.mxu0 %v685
      %v939 = vpop.f32.mrf.mxu0
      %v940 = vadd.f32 %v851, %v939
      %v941 = vpop.f32.mrf.mxu0
      %v942 = vadd.f32 %v853, %v941
      %943 = vmatmul.bf16.gmra.mxu0 %v688
      %v944 = vpop.f32.mrf.mxu0
      %v945 = vadd.f32 %v856, %v944
      %v946 = vpop.f32.mrf.mxu0
      %v947 = vadd.f32 %v858, %v946
      %948 = vmatmul.bf16.gmra.mxu0 %v691
      %v949 = vpop.f32.mrf.mxu0
      %v950 = vadd.f32 %v861, %v949
      %v951 = vpop.f32.mrf.mxu0
      %v952 = vadd.f32 %v863, %v951
      %953 = vmatmul.bf16.gmra.mxu0 %v694
      %v954 = vpop.f32.mrf.mxu0
      %v955 = vadd.f32 %v866, %v954
      %v956 = vpop.f32.mrf.mxu0
      %v957 = vadd.f32 %v868, %v956
      %958 = vmatmul.bf16.gmra.mxu0 %v697
      %v959 = vpop.f32.mrf.mxu0
      %v960 = vadd.f32 %v871, %v959
      %v961 = vpop.f32.mrf.mxu0
      %v962 = vadd.f32 %v873, %v961
      %963 = vmatmul.bf16.gmra.mxu0 %v700
      %v964 = vpop.f32.mrf.mxu0
      %v965 = vadd.f32 %v876, %v964
      %v966 = vpop.f32.mrf.mxu0
      %v967 = vadd.f32 %v878, %v966
      %968 = vdwg.mxu0
      %v969 = vld [vmem:[%s2] sm:$0x1]
      %v971 = vperm.slane %v969, 0
      %v973 = vmul.f32 %v890, %v971
      %v974 = vmul.f32 %v892, %v971
      %v975 = vmul.f32 %v895, %v971
      %v976 = vmul.f32 %v897, %v971
      %v977 = vmul.f32 %v900, %v971
      %v978 = vmul.f32 %v902, %v971
      %v979 = vmul.f32 %v905, %v971
      %v980 = vmul.f32 %v907, %v971
      %v981 = vmul.f32 %v910, %v971
      %v982 = vmul.f32 %v912, %v971
      %v983 = vmul.f32 %v915, %v971
      %v984 = vmul.f32 %v917, %v971
      %v985 = vmul.f32 %v920, %v971
      %v986 = vmul.f32 %v922, %v971
      %v987 = vmul.f32 %v925, %v971
      %v988 = vmul.f32 %v927, %v971
      %v989 = vmul.f32 %v930, %v971
      %v990 = vmul.f32 %v932, %v971
      %v991 = vmul.f32 %v935, %v971
      %v992 = vmul.f32 %v937, %v971
      %v993 = vmul.f32 %v940, %v971
      %v994 = vmul.f32 %v942, %v971
      %v995 = vmul.f32 %v945, %v971
      %v996 = vmul.f32 %v947, %v971
      %v997 = vmul.f32 %v950, %v971
      %v998 = vmul.f32 %v952, %v971
      %v999 = vmul.f32 %v955, %v971
      %v1000 = vmul.f32 %v957, %v971
      %v1001 = vmul.f32 %v960, %v971
      %v1002 = vmul.f32 %v962, %v971
      %v1003 = vmul.f32 %v965, %v971
      %v1004 = vmul.f32 %v967, %v971
      %v1005 = vld [vmem:[%s3] sm:$0x1]
      %v1007 = vperm.slane %v1005, 0
      %v1009 = vadd.f32 %v973, %v1007
      %v1010 = vadd.f32 %v974, %v1007
      %v1011 = vadd.f32 %v975, %v1007
      %v1012 = vadd.f32 %v976, %v1007
      %v1013 = vadd.f32 %v977, %v1007
      %v1014 = vadd.f32 %v978, %v1007
      %v1015 = vadd.f32 %v979, %v1007
      %v1016 = vadd.f32 %v980, %v1007
      %v1017 = vadd.f32 %v981, %v1007
      %v1018 = vadd.f32 %v982, %v1007
      %v1019 = vadd.f32 %v983, %v1007
      %v1020 = vadd.f32 %v984, %v1007
      %v1021 = vadd.f32 %v985, %v1007
      %v1022 = vadd.f32 %v986, %v1007
      %v1023 = vadd.f32 %v987, %v1007
      %v1024 = vadd.f32 %v988, %v1007
      %v1025 = vadd.f32 %v989, %v1007
      %v1026 = vadd.f32 %v990, %v1007
      %v1027 = vadd.f32 %v991, %v1007
      %v1028 = vadd.f32 %v992, %v1007
      %v1029 = vadd.f32 %v993, %v1007
      %v1030 = vadd.f32 %v994, %v1007
      %v1031 = vadd.f32 %v995, %v1007
      %v1032 = vadd.f32 %v996, %v1007
      %v1033 = vadd.f32 %v997, %v1007
      %v1034 = vadd.f32 %v998, %v1007
      %v1035 = vadd.f32 %v999, %v1007
      %v1036 = vadd.f32 %v1000, %v1007
      %v1037 = vadd.f32 %v1001, %v1007
      %v1038 = vadd.f32 %v1002, %v1007
      %v1039 = vadd.f32 %v1003, %v1007
      %v1040 = vadd.f32 %v1004, %v1007
      %v1041 = vmax.f32 %v1009, 0.0
      %v1042 = vmax.f32 %v1010, 0.0
      %v1043 = vmax.f32 %v1011, 0.0
      %v1044 = vmax.f32 %v1012, 0.0
      %v1045 = vmax.f32 %v1013, 0.0
      %v1046 = vmax.f32 %v1014, 0.0
      %v1047 = vmax.f32 %v1015, 0.0
      %v1048 = vmax.f32 %v1016, 0.0
      %v1049 = vmax.f32 %v1017, 0.0
      %v1050 = vmax.f32 %v1018, 0.0
      %v1051 = vmax.f32 %v1019, 0.0
      %v1052 = vmax.f32 %v1020, 0.0
      %v1053 = vmax.f32 %v1021, 0.0
      %v1054 = vmax.f32 %v1022, 0.0
      %v1055 = vmax.f32 %v1023, 0.0
      %v1056 = vmax.f32 %v1024, 0.0
      %v1057 = vmax.f32 %v1025, 0.0
      %v1058 = vmax.f32 %v1026, 0.0
      %v1059 = vmax.f32 %v1027, 0.0
      %v1060 = vmax.f32 %v1028, 0.0
      %v1061 = vmax.f32 %v1029, 0.0
      %v1062 = vmax.f32 %v1030, 0.0
      %v1063 = vmax.f32 %v1031, 0.0
      %v1064 = vmax.f32 %v1032, 0.0
      %v1065 = vmax.f32 %v1033, 0.0
      %v1066 = vmax.f32 %v1034, 0.0
      %v1067 = vmax.f32 %v1035, 0.0
      %v1068 = vmax.f32 %v1036, 0.0
      %v1069 = vmax.f32 %v1037, 0.0
      %v1070 = vmax.f32 %v1038, 0.0
      %v1071 = vmax.f32 %v1039, 0.0
      %v1072 = vmax.f32 %v1040, 0.0
      %v1073 = vpack.c.bf16 %v1041, %v1041
      %v1074 = vpack.c.bf16 %v1042, %v1042
      %v1075 = vpack.c.bf16 %v1043, %v1043
      %v1076 = vpack.c.bf16 %v1044, %v1044
      %v1077 = vpack.c.bf16 %v1045, %v1045
      %v1078 = vpack.c.bf16 %v1046, %v1046
      %v1079 = vpack.c.bf16 %v1047, %v1047
      %v1080 = vpack.c.bf16 %v1048, %v1048
      %v1081 = vpack.c.bf16 %v1049, %v1049
      %v1082 = vpack.c.bf16 %v1050, %v1050
      %v1083 = vpack.c.bf16 %v1051, %v1051
      %v1084 = vpack.c.bf16 %v1052, %v1052
      %v1085 = vpack.c.bf16 %v1053, %v1053
      %v1086 = vpack.c.bf16 %v1054, %v1054
      %v1087 = vpack.c.bf16 %v1055, %v1055
      %v1088 = vpack.c.bf16 %v1056, %v1056
      %v1089 = vpack.c.bf16 %v1057, %v1057
      %v1090 = vpack.c.bf16 %v1058, %v1058
      %v1091 = vpack.c.bf16 %v1059, %v1059
      %v1092 = vpack.c.bf16 %v1060, %v1060
      %v1093 = vpack.c.bf16 %v1061, %v1061
      %v1094 = vpack.c.bf16 %v1062, %v1062
      %v1095 = vpack.c.bf16 %v1063, %v1063
      %v1096 = vpack.c.bf16 %v1064, %v1064
      %v1097 = vpack.c.bf16 %v1065, %v1065
      %v1098 = vpack.c.bf16 %v1066, %v1066
      %v1099 = vpack.c.bf16 %v1067, %v1067
      %v1100 = vpack.c.bf16 %v1068, %v1068
      %v1101 = vpack.c.bf16 %v1069, %v1069
      %v1102 = vpack.c.bf16 %v1070, %v1070
      %v1103 = vpack.c.bf16 %v1071, %v1071
      %v1104 = vpack.c.bf16 %v1072, %v1072
      %vm1105 = vcmask 257024
      %1106 = vst.msk [vmem:[%s202] sm:$0xf] %vm1105, %v1073
      %1107 = vst.msk [vmem:[%s202 + $0x4] sm:$0xf] %vm1105, %v1074
      %1108 = vst.msk [vmem:[%s202 + $0x8] sm:$0xf] %vm1105, %v1075
      %1109 = vst.msk [vmem:[%s202 + $0xc] sm:$0xf] %vm1105, %v1076
      %1110 = vst.msk [vmem:[%s202 + $0x10] sm:$0xf] %vm1105, %v1077
      %1111 = vst.msk [vmem:[%s202 + $0x14] sm:$0xf] %vm1105, %v1078
      %1112 = vst.msk [vmem:[%s202 + $0x18] sm:$0xf] %vm1105, %v1079
      %1113 = vst.msk [vmem:[%s202 + $0x1c] sm:$0xf] %vm1105, %v1080
      %1114 = vst.msk [vmem:[%s202 + $0x20] sm:$0xf] %vm1105, %v1081
      %1115 = vst.msk [vmem:[%s202 + $0x24] sm:$0xf] %vm1105, %v1082
      %1116 = vst.msk [vmem:[%s202 + $0x28] sm:$0xf] %vm1105, %v1083
      %1117 = vst.msk [vmem:[%s202 + $0x2c] sm:$0xf] %vm1105, %v1084
      %1118 = vst.msk [vmem:[%s202 + $0x30] sm:$0xf] %vm1105, %v1085
      %1119 = vst.msk [vmem:[%s202 + $0x34] sm:$0xf] %vm1105, %v1086
      %1120 = vst.msk [vmem:[%s202 + $0x38] sm:$0xf] %vm1105, %v1087
      %1121 = vst.msk [vmem:[%s202 + $0x3c] sm:$0xf] %vm1105, %v1088
      %1122 = vst.msk [vmem:[%s202 + $0x40] sm:$0xf] %vm1105, %v1089
      %1123 = vst.msk [vmem:[%s202 + $0x44] sm:$0xf] %vm1105, %v1090
      %1124 = vst.msk [vmem:[%s202 + $0x48] sm:$0xf] %vm1105, %v1091
      %1125 = vst.msk [vmem:[%s202 + $0x4c] sm:$0xf] %vm1105, %v1092
      %1126 = vst.msk [vmem:[%s202 + $0x50] sm:$0xf] %vm1105, %v1093
      %1127 = vst.msk [vmem:[%s202 + $0x54] sm:$0xf] %vm1105, %v1094
      %1128 = vst.msk [vmem:[%s202 + $0x58] sm:$0xf] %vm1105, %v1095
      %1129 = vst.msk [vmem:[%s202 + $0x5c] sm:$0xf] %vm1105, %v1096
      %1130 = vst.msk [vmem:[%s202 + $0x60] sm:$0xf] %vm1105, %v1097
      %1131 = vst.msk [vmem:[%s202 + $0x64] sm:$0xf] %vm1105, %v1098
      %1132 = vst.msk [vmem:[%s202 + $0x68] sm:$0xf] %vm1105, %v1099
      %1133 = vst.msk [vmem:[%s202 + $0x6c] sm:$0xf] %vm1105, %v1100
      %1134 = vst.msk [vmem:[%s202 + $0x70] sm:$0xf] %vm1105, %v1101
      %1135 = vst.msk [vmem:[%s202 + $0x74] sm:$0xf] %vm1105, %v1102
      %1136 = vst.msk [vmem:[%s202 + $0x78] sm:$0xf] %vm1105, %v1103
      %1137 = vst.msk [vmem:[%s202 + $0x7c] sm:$0xf] %vm1105, %v1104
      %s1138 = smul.u32 32, %s15
      %p1139 = scmp.lt.s32.totalorder %s1138, 63
      %s1140 = scalar_select %p1139, %s1138, 63
      %s1141 = smul.addr %s1140, 4
      %s1142 = scalar_lea.vmem %s4, %s1141
      // Predicated region
      $region37: #{_lambda_.32} parent=35 // pred_check
        %p1143 = pneg %p122
      $region38: #{_lambda_.32} parent=35 // pred_check_branch
        %1145 = sbr.rel (%p1143) target = $region40
      $region39: #{_lambda_.32} parent=35 // pred_region
        %s1146 = smul.u32 32, %s15
      $region40: #{_lambda_.32} parent=35 // pred_fallthru
        _
    $region36: #{_lambda_.32} parent=5 // pred_fallthru
      _
    %p1147 = scmp.le.s32.totalorder 2, %s10
    // Predicated region
    $region41: #{_lambda_.32} parent=5 // pred_check
      %p1148 = pneg %p1147
    $region42: #{_lambda_.32} parent=5 // pred_check_branch
      %1150 = sbr.rel (%p1148) target = $region44
    $region43: #{_lambda_.32} parent=5 // pred_region
      %s1151 = ssub.s32 %s10, 2
      // Predicated region
      $region45: #{_lambda_.32} parent=43 // pred_check
        %p1152 = pneg %p128
      $region46: #{_lambda_.32} parent=43 // pred_check_branch
        %1154 = sbr.rel (%p1152) target = $region48
      $region47: #{_lambda_.32} parent=43 // pred_region
        %s1155 = smul.u32 32, %s16
        %p1156 = scmp.lt.s32.totalorder %s1155, 63
        %s1157 = scalar_select %p1156, %s1155, 63
        %s1158 = smul.addr %s1157, 4
        %s1159 = scalar_lea.vmem %s4, %s1158
      $region48: #{_lambda_.32} parent=43 // pred_fallthru
        _
    $region44: #{_lambda_.32} parent=5 // pred_fallthru
      _
  $region6: #{_lambda_.32} parent=0 // loop_footer
    %s14 = sadd.s32 1, %s10
  $region7: #{_lambda_.32} parent=0 // loop_footer_branch
    %9 = sbr.rel target = $region3
  $region8: #{_lambda_.32} parent=0 // loop_exit
    _

// kernel: _lambda_.31
$region0: #{_lambda_.31}
  #allocation0 [shape = 'u32[]', space=smem, size = 0x4, offset = 0x4, fixed_abs, tag = 'smem constant byte address 0x4 - core index']
  #allocation1 [shape = 'u32[72,128]{1,0:T(1,128)}', space=vmem, size = 0x9000, scoped, tag = 'internal scratch']
  %s0 = inlined_call_operand.vmem [shape: bf16[512,288], index: 0, kind: input, shape index: {}]
  %s1 = inlined_call_operand.vmem [shape: bf16[288,32], index: 1, kind: input, shape index: {}]
  %s2 = inlined_call_operand.vmem [shape: f32[1,32], index: 2, kind: input, shape index: {}]
  %s3 = inlined_call_operand.vmem [shape: f32[1,32], index: 3, kind: input, shape index: {}]
  %s4 = inlined_call_operand.vmem [shape: bf16[512,32], index: 4, kind: input, shape index: {}]
  %s5 = inlined_call_operand.vmem [shape: bf16[512,32], index: 5, kind: output, shape index: {}]
  %s6 = sld [smem:[#allocation0]]
  $region53: #{_lambda_.31} parent=0
    _
  %s8 = ssub.s32 1, %s6
  %s9 = scalar_select 0, %s8, %s6
  loop: start=0, step=1, limit=4
  $region2: #{_lambda_.31} parent=0 // loop_pre_header
    _
  $region3: #{_lambda_.31} parent=0 // loop_header
    %s11 = sphi 0, %s15
    %p12 = scmp.ge.s32.totalorder %s11, 4
    %s21 = sphi 0, %s23
    %s24 = sphi 0, %s21
    %s25 = sphi 0, %s24
    %s41 = sphi 0, %s25
    %s45 = sphi 0, %s45
    %s47 = sphi 0, %s45
    %s48 = sphi 0, %s47
    %s62 = sphi 0, %s48
    %s66 = sphi 0, %s66
    %s68 = sphi 0, %s66
    %s69 = sphi 0, %s68
    %s83 = sphi 0, %s69
    %s87 = sphi 0, %s87
    %s89 = sphi 0, %s87
    %s90 = sphi 0, %s89
    %s104 = sphi 0, %s90
    %s110 = sphi 0, %s112
    %s113 = sphi 0, %s110
    %s114 = sphi 0, %s113
    %s130 = sphi 0, %s114
    %s136 = sphi 0, %s138
    %s139 = sphi 0, %s136
    %s140 = sphi 0, %s139
    %s156 = sphi 0, %s140
  $region4: #{_lambda_.31} parent=0 // loop_header_branch
    %14 = sbr.rel (%p12) target = $region8
  $region5: #{_lambda_.31} parent=0 // loop_body
    %s16 = ssub.s32 %s11, 1
    %s17 = ssub.s32 %s11, 2
    %s18 = sadd.s32 %s11, 1
    %s19 = ssub.s32 %s11, %s18
    %p20 = scmp.eq.s32.totalorder %s19, 0
    %s22 = sadd.s32 %s21, 1
    %s23 = scalar_select %p20, %s21, %s22
    %p26 = pneg %p20
    %p27 = scmp.eq.s32.totalorder %s11, 1
    %p28 = por %p26, %p27
    %p29 = scmp.ne.s32.totalorder %s21, %s24
    %p30 = scmp.eq.s32.totalorder %s11, 0
    %p31 = por %p29, %p30
    %p32 = scmp.ne.s32.totalorder %s21, %s24
    %p33 = scmp.eq.s32.totalorder %s16, 1
    %p34 = por %p32, %p33
    %p35 = scmp.ne.s32.totalorder %s24, %s25
    %p36 = scmp.eq.s32.totalorder %s16, 0
    %p37 = por %p35, %p36
    %p38 = scmp.ne.s32.totalorder %s24, %s25
    %p39 = scmp.eq.s32.totalorder %s17, 1
    %p40 = por %p38, %p39
    %p42 = scmp.ne.s32.totalorder %s25, %s41
    %p43 = scmp.eq.s32.totalorder %s17, 0
    %p44 = por %p42, %p43
    %s46 = sadd.s32 %s45, 1
    %p49 = scmp.eq.s32.totalorder %s11, 1
    %p50 = scmp.ne.s32.totalorder %s45, %s47
    %p51 = scmp.eq.s32.totalorder %s11, 0
    %p52 = por %p50, %p51
    %p53 = scmp.ne.s32.totalorder %s45, %s47
    %p54 = scmp.eq.s32.totalorder %s16, 1
    %p55 = por %p53, %p54
    %p56 = scmp.ne.s32.totalorder %s47, %s48
    %p57 = scmp.eq.s32.totalorder %s16, 0
    %p58 = por %p56, %p57
    %p59 = scmp.ne.s32.totalorder %s47, %s48
    %p60 = scmp.eq.s32.totalorder %s17, 1
    %p61 = por %p59, %p60
    %p63 = scmp.ne.s32.totalorder %s48, %s62
    %p64 = scmp.eq.s32.totalorder %s17, 0
    %p65 = por %p63, %p64
    %s67 = sadd.s32 %s66, 1
    %p70 = scmp.eq.s32.totalorder %s11, 1
    %p71 = scmp.ne.s32.totalorder %s66, %s68
    %p72 = scmp.eq.s32.totalorder %s11, 0
    %p73 = por %p71, %p72
    %p74 = scmp.ne.s32.totalorder %s66, %s68
    %p75 = scmp.eq.s32.totalorder %s16, 1
    %p76 = por %p74, %p75
    %p77 = scmp.ne.s32.totalorder %s68, %s69
    %p78 = scmp.eq.s32.totalorder %s16, 0
    %p79 = por %p77, %p78
    %p80 = scmp.ne.s32.totalorder %s68, %s69
    %p81 = scmp.eq.s32.totalorder %s17, 1
    %p82 = por %p80, %p81
    %p84 = scmp.ne.s32.totalorder %s69, %s83
    %p85 = scmp.eq.s32.totalorder %s17, 0
    %p86 = por %p84, %p85
    %s88 = sadd.s32 %s87, 1
    %p91 = scmp.eq.s32.totalorder %s11, 1
    %p92 = scmp.ne.s32.totalorder %s87, %s89
    %p93 = scmp.eq.s32.totalorder %s11, 0
    %p94 = por %p92, %p93
    %p95 = scmp.ne.s32.totalorder %s87, %s89
    %p96 = scmp.eq.s32.totalorder %s16, 1
    %p97 = por %p95, %p96
    %p98 = scmp.ne.s32.totalorder %s89, %s90
    %p99 = scmp.eq.s32.totalorder %s16, 0
    %p100 = por %p98, %p99
    %p101 = scmp.ne.s32.totalorder %s89, %s90
    %p102 = scmp.eq.s32.totalorder %s17, 1
    %p103 = por %p101, %p102
    %p105 = scmp.ne.s32.totalorder %s90, %s104
    %p106 = scmp.eq.s32.totalorder %s17, 0
    %p107 = por %p105, %p106
    %s108 = ssub.s32 %s11, %s18
    %p109 = scmp.eq.s32.totalorder %s108, 0
    %s111 = sadd.s32 %s110, 1
    %s112 = scalar_select %p109, %s110, %s111
    %p115 = pneg %p109
    %p116 = scmp.eq.s32.totalorder %s11, 1
    %p117 = por %p115, %p116
    %p118 = scmp.ne.s32.totalorder %s110, %s113
    %p119 = scmp.eq.s32.totalorder %s11, 0
    %p120 = por %p118, %p119
    %p121 = scmp.ne.s32.totalorder %s110, %s113
    %p122 = scmp.eq.s32.totalorder %s16, 1
    %p123 = por %p121, %p122
    %p124 = scmp.ne.s32.totalorder %s113, %s114
    %p125 = scmp.eq.s32.totalorder %s16, 0
    %p126 = por %p124, %p125
    %p127 = scmp.ne.s32.totalorder %s113, %s114
    %p128 = scmp.eq.s32.totalorder %s17, 1
    %p129 = por %p127, %p128
    %p131 = scmp.ne.s32.totalorder %s114, %s130
    %p132 = scmp.eq.s32.totalorder %s17, 0
    %p133 = por %p131, %p132
    %s134 = ssub.s32 %s11, %s18
    %p135 = scmp.eq.s32.totalorder %s134, 0
    %s137 = sadd.s32 %s136, 1
    %s138 = scalar_select %p135, %s136, %s137
    %p141 = pneg %p135
    %p142 = scmp.eq.s32.totalorder %s11, 1
    %p143 = por %p141, %p142
    %p144 = scmp.ne.s32.totalorder %s136, %s139
    %p145 = scmp.eq.s32.totalorder %s11, 0
    %p146 = por %p144, %p145
    %p147 = scmp.ne.s32.totalorder %s136, %s139
    %p148 = scmp.eq.s32.totalorder %s16, 1
    %p149 = por %p147, %p148
    %p150 = scmp.ne.s32.totalorder %s139, %s140
    %p151 = scmp.eq.s32.totalorder %s16, 0
    %p152 = por %p150, %p151
    %p153 = scmp.ne.s32.totalorder %s139, %s140
    %p154 = scmp.eq.s32.totalorder %s17, 1
    %p155 = por %p153, %p154
    %p157 = scmp.ne.s32.totalorder %s140, %s156
    %p158 = scmp.eq.s32.totalorder %s17, 0
    %p159 = por %p157, %p158
    %p160 = scmp.le.s32.totalorder 1, %s11
    %p161 = scmp.lt.s32.totalorder %s11, 3
    %p162 = pnand %p160, %p161
    %p163 = pneg %p162
    // Predicated region
    $region9: #{_lambda_.31} parent=5 // pred_check
      _
    $region10: #{_lambda_.31} parent=5 // pred_check_branch
      %165 = sbr.rel (%p162) target = $region12
    $region11: #{_lambda_.31} parent=5 // pred_region
      %s166 = ssub.s32 %s11, 1
      // Predicated region
      $region13: #{_lambda_.31} parent=11 // pred_check
        %p167 = pneg %p58
      $region14: #{_lambda_.31} parent=11 // pred_check_branch
        %169 = sbr.rel (%p167) target = $region16
      $region15: #{_lambda_.31} parent=11 // pred_region
        _
      $region16: #{_lambda_.31} parent=11 // pred_fallthru
        _
      // Predicated region
      $region17: #{_lambda_.31} parent=11 // pred_check
        %p170 = pneg %p79
      $region18: #{_lambda_.31} parent=11 // pred_check_branch
        %172 = sbr.rel (%p170) target = $region20
      $region19: #{_lambda_.31} parent=11 // pred_region
        _
      $region20: #{_lambda_.31} parent=11 // pred_fallthru
        _
      // Predicated region
      $region21: #{_lambda_.31} parent=11 // pred_check
        %p173 = pneg %p100
      $region22: #{_lambda_.31} parent=11 // pred_check_branch
        %175 = sbr.rel (%p173) target = $region24
      $region23: #{_lambda_.31} parent=11 // pred_region
        _
      $region24: #{_lambda_.31} parent=11 // pred_fallthru
        _
    $region12: #{_lambda_.31} parent=5 // pred_fallthru
      _
    %p176 = scmp.lt.s32.totalorder %s11, 2
    // Predicated region
    $region25: #{_lambda_.31} parent=5 // pred_check
      %p177 = pneg %p176
    $region26: #{_lambda_.31} parent=5 // pred_check_branch
      %179 = sbr.rel (%p177) target = $region28
    $region27: #{_lambda_.31} parent=5 // pred_region
      // Predicated region
      $region29: #{_lambda_.31} parent=27 // pred_check
        %p180 = pneg %p31
      $region30: #{_lambda_.31} parent=27 // pred_check_branch
        %182 = sbr.rel (%p180) target = $region32
      $region31: #{_lambda_.31} parent=27 // pred_region
        %s183 = smul.u32 32, %s11
        %p184 = scmp.lt.s32.totalorder %s183, 63
        %s185 = scalar_select %p184, %s183, 63
        %s186 = smul.addr %s185, 3
        %s187 = smul.addr %s186, 4
        %s188 = scalar_lea.vmem %s0, %s187
        %s189 = smul.u32 32, %s11
      $region32: #{_lambda_.31} parent=27 // pred_fallthru
        _
      // Predicated region
      $region33: #{_lambda_.31} parent=27 // pred_check
        %p190 = pneg %p120
      $region34: #{_lambda_.31} parent=27 // pred_check_branch
        %192 = sbr.rel (%p190) target = $region36
      $region35: #{_lambda_.31} parent=27 // pred_region
        %s193 = smul.u32 32, %s11
        %p194 = scmp.lt.s32.totalorder %s193, 63
        %s195 = scalar_select %p194, %s193, 63
        %s196 = smul.addr %s195, 4
        %s197 = scalar_lea.vmem %s4, %s196
        %s198 = smul.u32 32, %s11
      $region36: #{_lambda_.31} parent=27 // pred_fallthru
        _
    $region28: #{_lambda_.31} parent=5 // pred_fallthru
      _
    %p199 = scmp.le.s32.totalorder 1, %s11
    %p200 = scmp.lt.s32.totalorder %s11, 3
    %p201 = pnand %p199, %p200
    %p202 = pneg %p201
    // Predicated region
    $region37: #{_lambda_.31} parent=5 // pred_check
      _
    $region38: #{_lambda_.31} parent=5 // pred_check_branch
      %204 = sbr.rel (%p201) target = $region40
    $region39: #{_lambda_.31} parent=5 // pred_region
      %s205 = ssub.s32 %s11, 1
      %s206 = smul.u32 32, %s16
      %p207 = scmp.lt.s32.totalorder %s206, 63
      %s208 = scalar_select %p207, %s206, 63
      %s209 = smul.addr %s208, 3
      %s210 = smul.addr %s209, 4
      %s211 = scalar_lea.vmem %s0, %s210
      %p212 = pneg %p37
      %p213 = pneg %p34
      %p214 = pneg %p58
      %p215 = pneg %p55
      %p216 = pneg %p79
      %p217 = pneg %p76
      %p218 = pneg %p100
      %p219 = pneg %p97
      %s220 = smul.u32 32, %s16
      %p221 = scmp.lt.s32.totalorder %s220, 63
      %s222 = scalar_select %p221, %s220, 63
      %s223 = smul.addr %s222, 4
      %s224 = scalar_lea.vmem %s4, %s223
      %p225 = pneg %p126
      %p226 = pneg %p123
      %p227 = pneg %p152
      %p228 = pneg %p149
      %s229 = smul.u32 32, %s16
      %p230 = scmp.lt.s32.totalorder %s229, 63
      %s231 = scalar_select %p230, %s229, 63
      %s232 = smul.addr %s231, 4
      %s233 = scalar_lea.vmem %s5, %s232
      %s234 = smul.u32 32, %s16
      %p235 = scmp.lt.s32.totalorder %s234, 63
      %s236 = scalar_select %p235, %s234, 63
      %s237 = smul.addr %s236, 3
      %s238 = smul.addr %s237, 4
      %s239 = scalar_lea.vmem %s0, %s238
      %s240 = smul.u32 32, %s16
      %s241 = smul.u32 32, %s16
      %p242 = scmp.lt.s32.totalorder %s241, 63
      %s243 = scalar_select %p242, %s241, 63
      %s244 = smul.addr %s243, 4
      %s245 = scalar_lea.vmem %s4, %s244
      %s246 = smul.u32 32, %s16
      %s247 = smul.u32 32, %s16
      %p248 = scmp.lt.s32.totalorder %s247, 63
      %s249 = scalar_select %p248, %s247, 63
      %s250 = smul.addr %s249, 4
      %s251 = scalar_lea.vmem %s5, %s250
      %s252 = smul.u32 32, %s16
      %v254 = vld [vmem:[%s239] sm:$0xff]
      %v255 = vld [vmem:[%s239 + $0x8] sm:$0xf]
      %v256 = vld [vmem:[%s239 + $0xc] sm:$0xff]
      %v257 = vld [vmem:[%s239 + $0x14] sm:$0xf]
      %v258 = vld [vmem:[%s239 + $0x18] sm:$0xff]
      %v259 = vld [vmem:[%s239 + $0x20] sm:$0xf]
      %v260 = vld [vmem:[%s239 + $0x24] sm:$0xff]
      %v261 = vld [vmem:[%s239 + $0x2c] sm:$0xf]
      %v262 = vld [vmem:[%s239 + $0x30] sm:$0xff]
      %v263 = vld [vmem:[%s239 + $0x38] sm:$0xf]
      %v264 = vld [vmem:[%s239 + $0x3c] sm:$0xff]
      %v265 = vld [vmem:[%s239 + $0x44] sm:$0xf]
      %v266 = vld [vmem:[%s239 + $0x48] sm:$0xff]
      %v267 = vld [vmem:[%s239 + $0x50] sm:$0xf]
      %v268 = vld [vmem:[%s239 + $0x54] sm:$0xff]
      %v269 = vld [vmem:[%s239 + $0x5c] sm:$0xf]
      %v270 = vld [vmem:[%s239 + $0x60] sm:$0xff]
      %v271 = vld [vmem:[%s239 + $0x68] sm:$0xf]
      %v272 = vld [vmem:[%s239 + $0x6c] sm:$0xff]
      %v273 = vld [vmem:[%s239 + $0x74] sm:$0xf]
      %v274 = vld [vmem:[%s239 + $0x78] sm:$0xff]
      %v275 = vld [vmem:[%s239 + $0x80] sm:$0xf]
      %v276 = vld [vmem:[%s239 + $0x84] sm:$0xff]
      %v277 = vld [vmem:[%s239 + $0x8c] sm:$0xf]
      %v278 = vld [vmem:[%s239 + $0x90] sm:$0xff]
      %v279 = vld [vmem:[%s239 + $0x98] sm:$0xf]
      %v280 = vld [vmem:[%s239 + $0x9c] sm:$0xff]
      %v281 = vld [vmem:[%s239 + $0xa4] sm:$0xf]
      %v282 = vld [vmem:[%s239 + $0xa8] sm:$0xff]
      %v283 = vld [vmem:[%s239 + $0xb0] sm:$0xf]
      %v284 = vld [vmem:[%s239 + $0xb4] sm:$0xff]
      %v285 = vld [vmem:[%s239 + $0xbc] sm:$0xf]
      %v286 = vld [vmem:[%s239 + $0xc0] sm:$0xff]
      %v287 = vld [vmem:[%s239 + $0xc8] sm:$0xf]
      %v288 = vld [vmem:[%s239 + $0xcc] sm:$0xff]
      %v289 = vld [vmem:[%s239 + $0xd4] sm:$0xf]
      %v290 = vld [vmem:[%s239 + $0xd8] sm:$0xff]
      %v291 = vld [vmem:[%s239 + $0xe0] sm:$0xf]
      %v292 = vld [vmem:[%s239 + $0xe4] sm:$0xff]
      %v293 = vld [vmem:[%s239 + $0xec] sm:$0xf]
      %v294 = vld [vmem:[%s239 + $0xf0] sm:$0xff]
      %v295 = vld [vmem:[%s239 + $0xf8] sm:$0xf]
      %v296 = vld [vmem:[%s239 + $0xfc] sm:$0xff]
      %v297 = vld [vmem:[%s239 + $0x104] sm:$0xf]
      %v298 = vld [vmem:[%s239 + $0x108] sm:$0xff]
      %v299 = vld [vmem:[%s239 + $0x110] sm:$0xf]
      %v300 = vld [vmem:[%s239 + $0x114] sm:$0xff]
      %v301 = vld [vmem:[%s239 + $0x11c] sm:$0xf]
      %v302 = vld [vmem:[%s239 + $0x120] sm:$0xff]
      %v303 = vld [vmem:[%s239 + $0x128] sm:$0xf]
      %v304 = vld [vmem:[%s239 + $0x12c] sm:$0xff]
      %v305 = vld [vmem:[%s239 + $0x134] sm:$0xf]
      %v306 = vld [vmem:[%s239 + $0x138] sm:$0xff]
      %v307 = vld [vmem:[%s239 + $0x140] sm:$0xf]
      %v308 = vld [vmem:[%s239 + $0x144] sm:$0xff]
      %v309 = vld [vmem:[%s239 + $0x14c] sm:$0xf]
      %v310 = vld [vmem:[%s239 + $0x150] sm:$0xff]
      %v311 = vld [vmem:[%s239 + $0x158] sm:$0xf]
      %v312 = vld [vmem:[%s239 + $0x15c] sm:$0xff]
      %v313 = vld [vmem:[%s239 + $0x164] sm:$0xf]
      %v314 = vld [vmem:[%s239 + $0x168] sm:$0xff]
      %v315 = vld [vmem:[%s239 + $0x170] sm:$0xf]
      %v316 = vld [vmem:[%s239 + $0x174] sm:$0xff]
      %v317 = vld [vmem:[%s239 + $0x17c] sm:$0xf]
      %v318 = vld [vmem:[%s1] sm:$0xf]
      %v319 = vld [vmem:[%s1 + $0x4] sm:$0xf]
      %v320 = vld [vmem:[%s1 + $0x8] sm:$0xf]
      %v321 = vld [vmem:[%s1 + $0xc] sm:$0xf]
      %v322 = vld [vmem:[%s1 + $0x10] sm:$0xf]
      %v323 = vld [vmem:[%s1 + $0x14] sm:$0xf]
      %v324 = vld [vmem:[%s1 + $0x18] sm:$0xf]
      %v325 = vld [vmem:[%s1 + $0x1c] sm:$0xf]
      %v326 = vld [vmem:[%s1 + $0x20] sm:$0xf]
      %v327 = vld [vmem:[%s1 + $0x24] sm:$0xf]
      %v328 = vld [vmem:[%s1 + $0x28] sm:$0xf]
      %v329 = vld [vmem:[%s1 + $0x2c] sm:$0xf]
      %v330 = vld [vmem:[%s1 + $0x30] sm:$0xf]
      %v331 = vld [vmem:[%s1 + $0x34] sm:$0xf]
      %v332 = vld [vmem:[%s1 + $0x38] sm:$0xf]
      %v333 = vld [vmem:[%s1 + $0x3c] sm:$0xf]
      %v334 = vld [vmem:[%s1 + $0x40] sm:$0xf]
      %v335 = vld [vmem:[%s1 + $0x44] sm:$0xf]
      %v336 = vld [vmem:[%s1 + $0x48] sm:$0xf]
      %v337 = vld [vmem:[%s1 + $0x4c] sm:$0xf]
      %v338 = vld [vmem:[%s1 + $0x50] sm:$0xf]
      %v339 = vld [vmem:[%s1 + $0x54] sm:$0xf]
      %v340 = vld [vmem:[%s1 + $0x58] sm:$0xf]
      %v341 = vld [vmem:[%s1 + $0x5c] sm:$0xf]
      %v342 = vld [vmem:[%s1 + $0x60] sm:$0xf]
      %v343 = vld [vmem:[%s1 + $0x64] sm:$0xf]
      %v344 = vld [vmem:[%s1 + $0x68] sm:$0xf]
      %v345 = vld [vmem:[%s1 + $0x6c] sm:$0xf]
      %v346 = vld [vmem:[%s1 + $0x70] sm:$0xf]
      %v347 = vld [vmem:[%s1 + $0x74] sm:$0xf]
      %v348 = vld [vmem:[%s1 + $0x78] sm:$0xf]
      %v349 = vld [vmem:[%s1 + $0x7c] sm:$0xf]
      %v350 = vld [vmem:[%s1 + $0x80] sm:$0xf]
      %v351 = vld [vmem:[%s1 + $0x84] sm:$0xf]
      %v352 = vld [vmem:[%s1 + $0x88] sm:$0xf]
      %v353 = vld [vmem:[%s1 + $0x8c] sm:$0xf]
      %v418 = vunpack.c.l.b16 %v254
      %v419 = vunpack.c.h.b16 %v254
      %v420 = vunpack.c.l.b16 %v255
      %v421 = vunpack.c.l.b16 %v256
      %v422 = vunpack.c.h.b16 %v256
      %v423 = vunpack.c.l.b16 %v257
      %v424 = vunpack.c.l.b16 %v258
      %v425 = vunpack.c.h.b16 %v258
      %v426 = vunpack.c.l.b16 %v259
      %v427 = vunpack.c.l.b16 %v260
      %v428 = vunpack.c.h.b16 %v260
      %v429 = vunpack.c.l.b16 %v261
      %v430 = vunpack.c.l.b16 %v262
      %v431 = vunpack.c.h.b16 %v262
      %v432 = vunpack.c.l.b16 %v263
      %v433 = vunpack.c.l.b16 %v264
      %v434 = vunpack.c.h.b16 %v264
      %v435 = vunpack.c.l.b16 %v265
      %v436 = vunpack.c.l.b16 %v266
      %v437 = vunpack.c.h.b16 %v266
      %v438 = vunpack.c.l.b16 %v267
      %v439 = vunpack.c.l.b16 %v268
      %v440 = vunpack.c.h.b16 %v268
      %v441 = vunpack.c.l.b16 %v269
      %v442 = vunpack.c.l.b16 %v270
      %v443 = vunpack.c.h.b16 %v270
      %v444 = vunpack.c.l.b16 %v271
      %v445 = vunpack.c.l.b16 %v272
      %v446 = vunpack.c.h.b16 %v272
      %v447 = vunpack.c.l.b16 %v273
      %v448 = vunpack.c.l.b16 %v274
      %v449 = vunpack.c.h.b16 %v274
      %v450 = vunpack.c.l.b16 %v275
      %v451 = vunpack.c.l.b16 %v276
      %v452 = vunpack.c.h.b16 %v276
      %v453 = vunpack.c.l.b16 %v277
      %v454 = vunpack.c.l.b16 %v278
      %v455 = vunpack.c.h.b16 %v278
      %v456 = vunpack.c.l.b16 %v279
      %v457 = vunpack.c.l.b16 %v280
      %v458 = vunpack.c.h.b16 %v280
      %v459 = vunpack.c.l.b16 %v281
      %v460 = vunpack.c.l.b16 %v282
      %v461 = vunpack.c.h.b16 %v282
      %v462 = vunpack.c.l.b16 %v283
      %v463 = vunpack.c.l.b16 %v284
      %v464 = vunpack.c.h.b16 %v284
      %v465 = vunpack.c.l.b16 %v285
      %v466 = vunpack.c.l.b16 %v286
      %v467 = vunpack.c.h.b16 %v286
      %v468 = vunpack.c.l.b16 %v287
      %v469 = vunpack.c.l.b16 %v288
      %v470 = vunpack.c.h.b16 %v288
      %v471 = vunpack.c.l.b16 %v289
      %v472 = vunpack.c.l.b16 %v290
      %v473 = vunpack.c.h.b16 %v290
      %v474 = vunpack.c.l.b16 %v291
      %v475 = vunpack.c.l.b16 %v292
      %v476 = vunpack.c.h.b16 %v292
      %v477 = vunpack.c.l.b16 %v293
      %v478 = vunpack.c.l.b16 %v294
      %v479 = vunpack.c.h.b16 %v294
      %v480 = vunpack.c.l.b16 %v295
      %v481 = vunpack.c.l.b16 %v296
      %v482 = vunpack.c.h.b16 %v296
      %v483 = vunpack.c.l.b16 %v297
      %v484 = vunpack.c.l.b16 %v298
      %v485 = vunpack.c.h.b16 %v298
      %v486 = vunpack.c.l.b16 %v299
      %v487 = vunpack.c.l.b16 %v300
      %v488 = vunpack.c.h.b16 %v300
      %v489 = vunpack.c.l.b16 %v301
      %v490 = vunpack.c.l.b16 %v302
      %v491 = vunpack.c.h.b16 %v302
      %v492 = vunpack.c.l.b16 %v303
      %v493 = vunpack.c.l.b16 %v304
      %v494 = vunpack.c.h.b16 %v304
      %v495 = vunpack.c.l.b16 %v305
      %v496 = vunpack.c.l.b16 %v306
      %v497 = vunpack.c.h.b16 %v306
      %v498 = vunpack.c.l.b16 %v307
      %v499 = vunpack.c.l.b16 %v308
      %v500 = vunpack.c.h.b16 %v308
      %v501 = vunpack.c.l.b16 %v309
      %v502 = vunpack.c.l.b16 %v310
      %v503 = vunpack.c.h.b16 %v310
      %v504 = vunpack.c.l.b16 %v311
      %v505 = vunpack.c.l.b16 %v312
      %v506 = vunpack.c.h.b16 %v312
      %v507 = vunpack.c.l.b16 %v313
      %v508 = vunpack.c.l.b16 %v314
      %v509 = vunpack.c.h.b16 %v314
      %v510 = vunpack.c.l.b16 %v315
      %v511 = vunpack.c.l.b16 %v316
      %v512 = vunpack.c.h.b16 %v316
      %v513 = vunpack.c.l.b16 %v317
      %v514 = vpack.c.b16 %v421, %v418
      %v515 = vpack.c.b16 %v422, %v419
      %v516 = vpack.c.b16 %v423, %v420
      %v517 = vpack.c.b16 %v427, %v424
      %v518 = vpack.c.b16 %v428, %v425
      %v519 = vpack.c.b16 %v429, %v426
      %v520 = vpack.c.b16 %v433, %v430
      %v521 = vpack.c.b16 %v434, %v431
      %v522 = vpack.c.b16 %v435, %v432
      %v523 = vpack.c.b16 %v439, %v436
      %v524 = vpack.c.b16 %v440, %v437
      %v525 = vpack.c.b16 %v441, %v438
      %v526 = vpack.c.b16 %v445, %v442
      %v527 = vpack.c.b16 %v446, %v443
      %v528 = vpack.c.b16 %v447, %v444
      %v529 = vpack.c.b16 %v451, %v448
      %v530 = vpack.c.b16 %v452, %v449
      %v531 = vpack.c.b16 %v453, %v450
      %v532 = vpack.c.b16 %v457, %v454
      %v533 = vpack.c.b16 %v458, %v455
      %v534 = vpack.c.b16 %v459, %v456
      %v535 = vpack.c.b16 %v463, %v460
      %v536 = vpack.c.b16 %v464, %v461
      %v537 = vpack.c.b16 %v465, %v462
      %v538 = vpack.c.b16 %v469, %v466
      %v539 = vpack.c.b16 %v470, %v467
      %v540 = vpack.c.b16 %v471, %v468
      %v541 = vpack.c.b16 %v475, %v472
      %v542 = vpack.c.b16 %v476, %v473
      %v543 = vpack.c.b16 %v477, %v474
      %v544 = vpack.c.b16 %v481, %v478
      %v545 = vpack.c.b16 %v482, %v479
      %v546 = vpack.c.b16 %v483, %v480
      %v547 = vpack.c.b16 %v487, %v484
      %v548 = vpack.c.b16 %v488, %v485
      %v549 = vpack.c.b16 %v489, %v486
      %v550 = vpack.c.b16 %v493, %v490
      %v551 = vpack.c.b16 %v494, %v491
      %v552 = vpack.c.b16 %v495, %v492
      %v553 = vpack.c.b16 %v499, %v496
      %v554 = vpack.c.b16 %v500, %v497
      %v555 = vpack.c.b16 %v501, %v498
      %v556 = vpack.c.b16 %v505, %v502
      %v557 = vpack.c.b16 %v506, %v503
      %v558 = vpack.c.b16 %v507, %v504
      %v559 = vpack.c.b16 %v511, %v508
      %v560 = vpack.c.b16 %v512, %v509
      %v561 = vpack.c.b16 %v513, %v510
      %v630 = vunpack.c.l.b16 %v318
      %v631 = vunpack.c.l.b16 %v319
      %v632 = vunpack.c.l.b16 %v320
      %v633 = vunpack.c.l.b16 %v321
      %v634 = vunpack.c.l.b16 %v322
      %v635 = vunpack.c.l.b16 %v323
      %v636 = vunpack.c.l.b16 %v324
      %v637 = vunpack.c.l.b16 %v325
      %v638 = vunpack.c.l.b16 %v326
      %v639 = vunpack.c.l.b16 %v327
      %v640 = vunpack.c.l.b16 %v328
      %v641 = vunpack.c.l.b16 %v329
      %v642 = vunpack.c.l.b16 %v330
      %v643 = vunpack.c.l.b16 %v331
      %v644 = vunpack.c.l.b16 %v332
      %v645 = vunpack.c.l.b16 %v333
      %v646 = vunpack.c.l.b16 %v334
      %v647 = vunpack.c.l.b16 %v335
      %v648 = vunpack.c.l.b16 %v336
      %v649 = vunpack.c.l.b16 %v337
      %v650 = vunpack.c.l.b16 %v338
      %v651 = vunpack.c.l.b16 %v339
      %v652 = vunpack.c.l.b16 %v340
      %v653 = vunpack.c.l.b16 %v341
      %v654 = vunpack.c.l.b16 %v342
      %v655 = vunpack.c.l.b16 %v343
      %v656 = vunpack.c.l.b16 %v344
      %v657 = vunpack.c.l.b16 %v345
      %v658 = vunpack.c.l.b16 %v346
      %v659 = vunpack.c.l.b16 %v347
      %v660 = vunpack.c.l.b16 %v348
      %v661 = vunpack.c.l.b16 %v349
      %v662 = vunpack.c.l.b16 %v350
      %v663 = vunpack.c.l.b16 %v351
      %v664 = vunpack.c.l.b16 %v352
      %v665 = vunpack.c.l.b16 %v353
      %v666 = vpack.c.b16 %v631, %v630
      %v667 = vpack.c.b16 %v633, %v632
      %v668 = vpack.c.b16 %v635, %v634
      %v669 = vpack.c.b16 %v637, %v636
      %v670 = vpack.c.b16 %v639, %v638
      %v671 = vpack.c.b16 %v641, %v640
      %v672 = vpack.c.b16 %v643, %v642
      %v673 = vpack.c.b16 %v645, %v644
      %v674 = vpack.c.b16 %v647, %v646
      %v675 = vpack.c.b16 %v649, %v648
      %v676 = vpack.c.b16 %v651, %v650
      %v677 = vpack.c.b16 %v653, %v652
      %v678 = vpack.c.b16 %v655, %v654
      %v679 = vpack.c.b16 %v657, %v656
      %v680 = vpack.c.b16 %v659, %v658
      %v681 = vpack.c.b16 %v661, %v660
      %v682 = vpack.c.b16 %v663, %v662
      %v683 = vpack.c.b16 %v665, %v664
      %vm702 = vcmask 261120
      %v704 = vsel %vm702, %v516, 0
      %v707 = vsel %vm702, %v519, 0
      %v710 = vsel %vm702, %v522, 0
      %v713 = vsel %vm702, %v525, 0
      %v716 = vsel %vm702, %v528, 0
      %v719 = vsel %vm702, %v531, 0
      %v722 = vsel %vm702, %v534, 0
      %v725 = vsel %vm702, %v537, 0
      %v728 = vsel %vm702, %v540, 0
      %v731 = vsel %vm702, %v543, 0
      %v734 = vsel %vm702, %v546, 0
      %v737 = vsel %vm702, %v549, 0
      %v740 = vsel %vm702, %v552, 0
      %v743 = vsel %vm702, %v555, 0
      %v746 = vsel %vm702, %v558, 0
      %v749 = vsel %vm702, %v561, 0
      %751 = vmatpush.bf16.msra.mxu0 %v673
      %752 = vmatpush.bf16.msra.mxu0 %v672
      %753 = vmatpush.bf16.msra.mxu0 %v671
      %754 = vmatpush.bf16.msra.mxu0 %v670
      %755 = vmatpush.bf16.msra.mxu0 %v669
      %756 = vmatpush.bf16.msra.mxu0 %v668
      %757 = vmatpush.bf16.msra.mxu0 %v667
      %758 = vmatpush.bf16.msra.mxu0 %v666
      %759 = vmatmul.bf16.gmra.mxu0 %v514
      %v760 = vpop.f32.mrf.mxu0
      %v761 = vadd.f32 0.0, %v760
      %v762 = vpop.f32.mrf.mxu0
      %v763 = vadd.f32 0.0, %v762
      %764 = vmatmul.bf16.gmra.mxu0 %v517
      %v765 = vpop.f32.mrf.mxu0
      %v766 = vadd.f32 0.0, %v765
      %v767 = vpop.f32.mrf.mxu0
      %v768 = vadd.f32 0.0, %v767
      %769 = vmatmul.bf16.gmra.mxu0 %v520
      %v770 = vpop.f32.mrf.mxu0
      %v771 = vadd.f32 0.0, %v770
      %v772 = vpop.f32.mrf.mxu0
      %v773 = vadd.f32 0.0, %v772
      %774 = vmatmul.bf16.gmra.mxu0 %v523
      %v775 = vpop.f32.mrf.mxu0
      %v776 = vadd.f32 0.0, %v775
      %v777 = vpop.f32.mrf.mxu0
      %v778 = vadd.f32 0.0, %v777
      %779 = vmatmul.bf16.gmra.mxu0 %v526
      %v780 = vpop.f32.mrf.mxu0
      %v781 = vadd.f32 0.0, %v780
      %v782 = vpop.f32.mrf.mxu0
      %v783 = vadd.f32 0.0, %v782
      %784 = vmatmul.bf16.gmra.mxu0 %v529
      %v785 = vpop.f32.mrf.mxu0
      %v786 = vadd.f32 0.0, %v785
      %v787 = vpop.f32.mrf.mxu0
      %v788 = vadd.f32 0.0, %v787
      %789 = vmatmul.bf16.gmra.mxu0 %v532
      %v790 = vpop.f32.mrf.mxu0
      %v791 = vadd.f32 0.0, %v790
      %v792 = vpop.f32.mrf.mxu0
      %v793 = vadd.f32 0.0, %v792
      %794 = vmatmul.bf16.gmra.mxu0 %v535
      %v795 = vpop.f32.mrf.mxu0
      %v796 = vadd.f32 0.0, %v795
      %v797 = vpop.f32.mrf.mxu0
      %v798 = vadd.f32 0.0, %v797
      %799 = vmatmul.bf16.gmra.mxu0 %v538
      %v800 = vpop.f32.mrf.mxu0
      %v801 = vadd.f32 0.0, %v800
      %v802 = vpop.f32.mrf.mxu0
      %v803 = vadd.f32 0.0, %v802
      %804 = vmatmul.bf16.gmra.mxu0 %v541
      %v805 = vpop.f32.mrf.mxu0
      %v806 = vadd.f32 0.0, %v805
      %v807 = vpop.f32.mrf.mxu0
      %v808 = vadd.f32 0.0, %v807
      %809 = vmatmul.bf16.gmra.mxu0 %v544
      %v810 = vpop.f32.mrf.mxu0
      %v811 = vadd.f32 0.0, %v810
      %v812 = vpop.f32.mrf.mxu0
      %v813 = vadd.f32 0.0, %v812
      %814 = vmatmul.bf16.gmra.mxu0 %v547
      %v815 = vpop.f32.mrf.mxu0
      %v816 = vadd.f32 0.0, %v815
      %v817 = vpop.f32.mrf.mxu0
      %v818 = vadd.f32 0.0, %v817
      %819 = vmatmul.bf16.gmra.mxu0 %v550
      %v820 = vpop.f32.mrf.mxu0
      %v821 = vadd.f32 0.0, %v820
      %v822 = vpop.f32.mrf.mxu0
      %v823 = vadd.f32 0.0, %v822
      %824 = vmatmul.bf16.gmra.mxu0 %v553
      %v825 = vpop.f32.mrf.mxu0
      %v826 = vadd.f32 0.0, %v825
      %v827 = vpop.f32.mrf.mxu0
      %v828 = vadd.f32 0.0, %v827
      %829 = vmatmul.bf16.gmra.mxu0 %v556
      %v830 = vpop.f32.mrf.mxu0
      %v831 = vadd.f32 0.0, %v830
      %v832 = vpop.f32.mrf.mxu0
      %v833 = vadd.f32 0.0, %v832
      %834 = vmatmul.bf16.gmra.mxu0 %v559
      %v835 = vpop.f32.mrf.mxu0
      %v836 = vadd.f32 0.0, %v835
      %v837 = vpop.f32.mrf.mxu0
      %v838 = vadd.f32 0.0, %v837
      %839 = vdwg.mxu0
      %840 = vmatpush.bf16.msra.mxu0 %v681
      %841 = vmatpush.bf16.msra.mxu0 %v680
      %842 = vmatpush.bf16.msra.mxu0 %v679
      %843 = vmatpush.bf16.msra.mxu0 %v678
      %844 = vmatpush.bf16.msra.mxu0 %v677
      %845 = vmatpush.bf16.msra.mxu0 %v676
      %846 = vmatpush.bf16.msra.mxu0 %v675
      %847 = vmatpush.bf16.msra.mxu0 %v674
      %848 = vmatmul.bf16.gmra.mxu0 %v515
      %v849 = vpop.f32.mrf.mxu0
      %v850 = vadd.f32 %v761, %v849
      %v851 = vpop.f32.mrf.mxu0
      %v852 = vadd.f32 %v763, %v851
      %853 = vmatmul.bf16.gmra.mxu0 %v518
      %v854 = vpop.f32.mrf.mxu0
      %v855 = vadd.f32 %v766, %v854
      %v856 = vpop.f32.mrf.mxu0
      %v857 = vadd.f32 %v768, %v856
      %858 = vmatmul.bf16.gmra.mxu0 %v521
      %v859 = vpop.f32.mrf.mxu0
      %v860 = vadd.f32 %v771, %v859
      %v861 = vpop.f32.mrf.mxu0
      %v862 = vadd.f32 %v773, %v861
      %863 = vmatmul.bf16.gmra.mxu0 %v524
      %v864 = vpop.f32.mrf.mxu0
      %v865 = vadd.f32 %v776, %v864
      %v866 = vpop.f32.mrf.mxu0
      %v867 = vadd.f32 %v778, %v866
      %868 = vmatmul.bf16.gmra.mxu0 %v527
      %v869 = vpop.f32.mrf.mxu0
      %v870 = vadd.f32 %v781, %v869
      %v871 = vpop.f32.mrf.mxu0
      %v872 = vadd.f32 %v783, %v871
      %873 = vmatmul.bf16.gmra.mxu0 %v530
      %v874 = vpop.f32.mrf.mxu0
      %v875 = vadd.f32 %v786, %v874
      %v876 = vpop.f32.mrf.mxu0
      %v877 = vadd.f32 %v788, %v876
      %878 = vmatmul.bf16.gmra.mxu0 %v533
      %v879 = vpop.f32.mrf.mxu0
      %v880 = vadd.f32 %v791, %v879
      %v881 = vpop.f32.mrf.mxu0
      %v882 = vadd.f32 %v793, %v881
      %883 = vmatmul.bf16.gmra.mxu0 %v536
      %v884 = vpop.f32.mrf.mxu0
      %v885 = vadd.f32 %v796, %v884
      %v886 = vpop.f32.mrf.mxu0
      %v887 = vadd.f32 %v798, %v886
      %888 = vmatmul.bf16.gmra.mxu0 %v539
      %v889 = vpop.f32.mrf.mxu0
      %v890 = vadd.f32 %v801, %v889
      %v891 = vpop.f32.mrf.mxu0
      %v892 = vadd.f32 %v803, %v891
      %893 = vmatmul.bf16.gmra.mxu0 %v542
      %v894 = vpop.f32.mrf.mxu0
      %v895 = vadd.f32 %v806, %v894
      %v896 = vpop.f32.mrf.mxu0
      %v897 = vadd.f32 %v808, %v896
      %898 = vmatmul.bf16.gmra.mxu0 %v545
      %v899 = vpop.f32.mrf.mxu0
      %v900 = vadd.f32 %v811, %v899
      %v901 = vpop.f32.mrf.mxu0
      %v902 = vadd.f32 %v813, %v901
      %903 = vmatmul.bf16.gmra.mxu0 %v548
      %v904 = vpop.f32.mrf.mxu0
      %v905 = vadd.f32 %v816, %v904
      %v906 = vpop.f32.mrf.mxu0
      %v907 = vadd.f32 %v818, %v906
      %908 = vmatmul.bf16.gmra.mxu0 %v551
      %v909 = vpop.f32.mrf.mxu0
      %v910 = vadd.f32 %v821, %v909
      %v911 = vpop.f32.mrf.mxu0
      %v912 = vadd.f32 %v823, %v911
      %913 = vmatmul.bf16.gmra.mxu0 %v554
      %v914 = vpop.f32.mrf.mxu0
      %v915 = vadd.f32 %v826, %v914
      %v916 = vpop.f32.mrf.mxu0
      %v917 = vadd.f32 %v828, %v916
      %918 = vmatmul.bf16.gmra.mxu0 %v557
      %v919 = vpop.f32.mrf.mxu0
      %v920 = vadd.f32 %v831, %v919
      %v921 = vpop.f32.mrf.mxu0
      %v922 = vadd.f32 %v833, %v921
      %923 = vmatmul.bf16.gmra.mxu0 %v560
      %v924 = vpop.f32.mrf.mxu0
      %v925 = vadd.f32 %v836, %v924
      %v926 = vpop.f32.mrf.mxu0
      %v927 = vadd.f32 %v838, %v926
      %928 = vdwg.mxu0
      %929 = vmatpush.bf16.msra.mxu0 0
      %930 = vmatpush.bf16.msra.mxu0 0
      %931 = vmatpush.bf16.msra.mxu0 0
      %932 = vmatpush.bf16.msra.mxu0 0
      %933 = vmatpush.bf16.msra.mxu0 0
      %934 = vmatpush.bf16.msra.mxu0 0
      %935 = vmatpush.bf16.msra.mxu0 %v683
      %936 = vmatpush.bf16.msra.mxu0 %v682
      %937 = vmatmul.bf16.gmra.mxu0 %v704
      %v938 = vpop.f32.mrf.mxu0
      %v939 = vadd.f32 %v850, %v938
      %v940 = vpop.f32.mrf.mxu0
      %v941 = vadd.f32 %v852, %v940
      %942 = vmatmul.bf16.gmra.mxu0 %v707
      %v943 = vpop.f32.mrf.mxu0
      %v944 = vadd.f32 %v855, %v943
      %v945 = vpop.f32.mrf.mxu0
      %v946 = vadd.f32 %v857, %v945
      %947 = vmatmul.bf16.gmra.mxu0 %v710
      %v948 = vpop.f32.mrf.mxu0
      %v949 = vadd.f32 %v860, %v948
      %v950 = vpop.f32.mrf.mxu0
      %v951 = vadd.f32 %v862, %v950
      %952 = vmatmul.bf16.gmra.mxu0 %v713
      %v953 = vpop.f32.mrf.mxu0
      %v954 = vadd.f32 %v865, %v953
      %v955 = vpop.f32.mrf.mxu0
      %v956 = vadd.f32 %v867, %v955
      %957 = vmatmul.bf16.gmra.mxu0 %v716
      %v958 = vpop.f32.mrf.mxu0
      %v959 = vadd.f32 %v870, %v958
      %v960 = vpop.f32.mrf.mxu0
      %v961 = vadd.f32 %v872, %v960
      %962 = vmatmul.bf16.gmra.mxu0 %v719
      %v963 = vpop.f32.mrf.mxu0
      %v964 = vadd.f32 %v875, %v963
      %v965 = vpop.f32.mrf.mxu0
      %v966 = vadd.f32 %v877, %v965
      %967 = vmatmul.bf16.gmra.mxu0 %v722
      %v968 = vpop.f32.mrf.mxu0
      %v969 = vadd.f32 %v880, %v968
      %v970 = vpop.f32.mrf.mxu0
      %v971 = vadd.f32 %v882, %v970
      %972 = vmatmul.bf16.gmra.mxu0 %v725
      %v973 = vpop.f32.mrf.mxu0
      %v974 = vadd.f32 %v885, %v973
      %v975 = vpop.f32.mrf.mxu0
      %v976 = vadd.f32 %v887, %v975
      %977 = vmatmul.bf16.gmra.mxu0 %v728
      %v978 = vpop.f32.mrf.mxu0
      %v979 = vadd.f32 %v890, %v978
      %v980 = vpop.f32.mrf.mxu0
      %v981 = vadd.f32 %v892, %v980
      %982 = vmatmul.bf16.gmra.mxu0 %v731
      %v983 = vpop.f32.mrf.mxu0
      %v984 = vadd.f32 %v895, %v983
      %v985 = vpop.f32.mrf.mxu0
      %v986 = vadd.f32 %v897, %v985
      %987 = vmatmul.bf16.gmra.mxu0 %v734
      %v988 = vpop.f32.mrf.mxu0
      %v989 = vadd.f32 %v900, %v988
      %v990 = vpop.f32.mrf.mxu0
      %v991 = vadd.f32 %v902, %v990
      %992 = vmatmul.bf16.gmra.mxu0 %v737
      %v993 = vpop.f32.mrf.mxu0
      %v994 = vadd.f32 %v905, %v993
      %v995 = vpop.f32.mrf.mxu0
      %v996 = vadd.f32 %v907, %v995
      %997 = vmatmul.bf16.gmra.mxu0 %v740
      %v998 = vpop.f32.mrf.mxu0
      %v999 = vadd.f32 %v910, %v998
      %v1000 = vpop.f32.mrf.mxu0
      %v1001 = vadd.f32 %v912, %v1000
      %1002 = vmatmul.bf16.gmra.mxu0 %v743
      %v1003 = vpop.f32.mrf.mxu0
      %v1004 = vadd.f32 %v915, %v1003
      %v1005 = vpop.f32.mrf.mxu0
      %v1006 = vadd.f32 %v917, %v1005
      %1007 = vmatmul.bf16.gmra.mxu0 %v746
      %v1008 = vpop.f32.mrf.mxu0
      %v1009 = vadd.f32 %v920, %v1008
      %v1010 = vpop.f32.mrf.mxu0
      %v1011 = vadd.f32 %v922, %v1010
      %1012 = vmatmul.bf16.gmra.mxu0 %v749
      %v1013 = vpop.f32.mrf.mxu0
      %v1014 = vadd.f32 %v925, %v1013
      %v1015 = vpop.f32.mrf.mxu0
      %v1016 = vadd.f32 %v927, %v1015
      %1017 = vdwg.mxu0
      %v1018 = vld [vmem:[%s2] sm:$0x1]
      %v1020 = vperm.slane %v1018, 0
      %v1022 = vmul.f32 %v939, %v1020
      %v1023 = vmul.f32 %v941, %v1020
      %v1024 = vmul.f32 %v944, %v1020
      %v1025 = vmul.f32 %v946, %v1020
      %v1026 = vmul.f32 %v949, %v1020
      %v1027 = vmul.f32 %v951, %v1020
      %v1028 = vmul.f32 %v954, %v1020
      %v1029 = vmul.f32 %v956, %v1020
      %v1030 = vmul.f32 %v959, %v1020
      %v1031 = vmul.f32 %v961, %v1020
      %v1032 = vmul.f32 %v964, %v1020
      %v1033 = vmul.f32 %v966, %v1020
      %v1034 = vmul.f32 %v969, %v1020
      %v1035 = vmul.f32 %v971, %v1020
      %v1036 = vmul.f32 %v974, %v1020
      %v1037 = vmul.f32 %v976, %v1020
      %v1038 = vmul.f32 %v979, %v1020
      %v1039 = vmul.f32 %v981, %v1020
      %v1040 = vmul.f32 %v984, %v1020
      %v1041 = vmul.f32 %v986, %v1020
      %v1042 = vmul.f32 %v989, %v1020
      %v1043 = vmul.f32 %v991, %v1020
      %v1044 = vmul.f32 %v994, %v1020
      %v1045 = vmul.f32 %v996, %v1020
      %v1046 = vmul.f32 %v999, %v1020
      %v1047 = vmul.f32 %v1001, %v1020
      %v1048 = vmul.f32 %v1004, %v1020
      %v1049 = vmul.f32 %v1006, %v1020
      %v1050 = vmul.f32 %v1009, %v1020
      %v1051 = vmul.f32 %v1011, %v1020
      %v1052 = vmul.f32 %v1014, %v1020
      %v1053 = vmul.f32 %v1016, %v1020
      %v1054 = vld [vmem:[%s3] sm:$0x1]
      %v1056 = vperm.slane %v1054, 0
      %v1058 = vadd.f32 %v1022, %v1056
      %v1059 = vadd.f32 %v1023, %v1056
      %v1060 = vadd.f32 %v1024, %v1056
      %v1061 = vadd.f32 %v1025, %v1056
      %v1062 = vadd.f32 %v1026, %v1056
      %v1063 = vadd.f32 %v1027, %v1056
      %v1064 = vadd.f32 %v1028, %v1056
      %v1065 = vadd.f32 %v1029, %v1056
      %v1066 = vadd.f32 %v1030, %v1056
      %v1067 = vadd.f32 %v1031, %v1056
      %v1068 = vadd.f32 %v1032, %v1056
      %v1069 = vadd.f32 %v1033, %v1056
      %v1070 = vadd.f32 %v1034, %v1056
      %v1071 = vadd.f32 %v1035, %v1056
      %v1072 = vadd.f32 %v1036, %v1056
      %v1073 = vadd.f32 %v1037, %v1056
      %v1074 = vadd.f32 %v1038, %v1056
      %v1075 = vadd.f32 %v1039, %v1056
      %v1076 = vadd.f32 %v1040, %v1056
      %v1077 = vadd.f32 %v1041, %v1056
      %v1078 = vadd.f32 %v1042, %v1056
      %v1079 = vadd.f32 %v1043, %v1056
      %v1080 = vadd.f32 %v1044, %v1056
      %v1081 = vadd.f32 %v1045, %v1056
      %v1082 = vadd.f32 %v1046, %v1056
      %v1083 = vadd.f32 %v1047, %v1056
      %v1084 = vadd.f32 %v1048, %v1056
      %v1085 = vadd.f32 %v1049, %v1056
      %v1086 = vadd.f32 %v1050, %v1056
      %v1087 = vadd.f32 %v1051, %v1056
      %v1088 = vadd.f32 %v1052, %v1056
      %v1089 = vadd.f32 %v1053, %v1056
      %v1090 = vld [vmem:[%s245] sm:$0xf]
      %v1091 = vld [vmem:[%s245 + $0x4] sm:$0xf]
      %v1092 = vld [vmem:[%s245 + $0x8] sm:$0xf]
      %v1093 = vld [vmem:[%s245 + $0xc] sm:$0xf]
      %v1094 = vld [vmem:[%s245 + $0x10] sm:$0xf]
      %v1095 = vld [vmem:[%s245 + $0x14] sm:$0xf]
      %v1096 = vld [vmem:[%s245 + $0x18] sm:$0xf]
      %v1097 = vld [vmem:[%s245 + $0x1c] sm:$0xf]
      %v1098 = vld [vmem:[%s245 + $0x20] sm:$0xf]
      %v1099 = vld [vmem:[%s245 + $0x24] sm:$0xf]
      %v1100 = vld [vmem:[%s245 + $0x28] sm:$0xf]
      %v1101 = vld [vmem:[%s245 + $0x2c] sm:$0xf]
      %v1102 = vld [vmem:[%s245 + $0x30] sm:$0xf]
      %v1103 = vld [vmem:[%s245 + $0x34] sm:$0xf]
      %v1104 = vld [vmem:[%s245 + $0x38] sm:$0xf]
      %v1105 = vld [vmem:[%s245 + $0x3c] sm:$0xf]
      %v1106 = vld [vmem:[%s245 + $0x40] sm:$0xf]
      %v1107 = vld [vmem:[%s245 + $0x44] sm:$0xf]
      %v1108 = vld [vmem:[%s245 + $0x48] sm:$0xf]
      %v1109 = vld [vmem:[%s245 + $0x4c] sm:$0xf]
      %v1110 = vld [vmem:[%s245 + $0x50] sm:$0xf]
      %v1111 = vld [vmem:[%s245 + $0x54] sm:$0xf]
      %v1112 = vld [vmem:[%s245 + $0x58] sm:$0xf]
      %v1113 = vld [vmem:[%s245 + $0x5c] sm:$0xf]
      %v1114 = vld [vmem:[%s245 + $0x60] sm:$0xf]
      %v1115 = vld [vmem:[%s245 + $0x64] sm:$0xf]
      %v1116 = vld [vmem:[%s245 + $0x68] sm:$0xf]
      %v1117 = vld [vmem:[%s245 + $0x6c] sm:$0xf]
      %v1118 = vld [vmem:[%s245 + $0x70] sm:$0xf]
      %v1119 = vld [vmem:[%s245 + $0x74] sm:$0xf]
      %v1120 = vld [vmem:[%s245 + $0x78] sm:$0xf]
      %v1121 = vld [vmem:[%s245 + $0x7c] sm:$0xf]
      %v1122 = vunpack.c.l.bf16 %v1090
      %v1123 = vunpack.c.l.bf16 %v1091
      %v1124 = vunpack.c.l.bf16 %v1092
      %v1125 = vunpack.c.l.bf16 %v1093
      %v1126 = vunpack.c.l.bf16 %v1094
      %v1127 = vunpack.c.l.bf16 %v1095
      %v1128 = vunpack.c.l.bf16 %v1096
      %v1129 = vunpack.c.l.bf16 %v1097
      %v1130 = vunpack.c.l.bf16 %v1098
      %v1131 = vunpack.c.l.bf16 %v1099
      %v1132 = vunpack.c.l.bf16 %v1100
      %v1133 = vunpack.c.l.bf16 %v1101
      %v1134 = vunpack.c.l.bf16 %v1102
      %v1135 = vunpack.c.l.bf16 %v1103
      %v1136 = vunpack.c.l.bf16 %v1104
      %v1137 = vunpack.c.l.bf16 %v1105
      %v1138 = vunpack.c.l.bf16 %v1106
      %v1139 = vunpack.c.l.bf16 %v1107
      %v1140 = vunpack.c.l.bf16 %v1108
      %v1141 = vunpack.c.l.bf16 %v1109
      %v1142 = vunpack.c.l.bf16 %v1110
      %v1143 = vunpack.c.l.bf16 %v1111
      %v1144 = vunpack.c.l.bf16 %v1112
      %v1145 = vunpack.c.l.bf16 %v1113
      %v1146 = vunpack.c.l.bf16 %v1114
      %v1147 = vunpack.c.l.bf16 %v1115
      %v1148 = vunpack.c.l.bf16 %v1116
      %v1149 = vunpack.c.l.bf16 %v1117
      %v1150 = vunpack.c.l.bf16 %v1118
      %v1151 = vunpack.c.l.bf16 %v1119
      %v1152 = vunpack.c.l.bf16 %v1120
      %v1153 = vunpack.c.l.bf16 %v1121
      %v1154 = vadd.f32 %v1058, %v1122
      %v1155 = vadd.f32 %v1059, %v1123
      %v1156 = vadd.f32 %v1060, %v1124
      %v1157 = vadd.f32 %v1061, %v1125
      %v1158 = vadd.f32 %v1062, %v1126
      %v1159 = vadd.f32 %v1063, %v1127
      %v1160 = vadd.f32 %v1064, %v1128
      %v1161 = vadd.f32 %v1065, %v1129
      %v1162 = vadd.f32 %v1066, %v1130
      %v1163 = vadd.f32 %v1067, %v1131
      %v1164 = vadd.f32 %v1068, %v1132
      %v1165 = vadd.f32 %v1069, %v1133
      %v1166 = vadd.f32 %v1070, %v1134
      %v1167 = vadd.f32 %v1071, %v1135
      %v1168 = vadd.f32 %v1072, %v1136
      %v1169 = vadd.f32 %v1073, %v1137
      %v1170 = vadd.f32 %v1074, %v1138
      %v1171 = vadd.f32 %v1075, %v1139
      %v1172 = vadd.f32 %v1076, %v1140
      %v1173 = vadd.f32 %v1077, %v1141
      %v1174 = vadd.f32 %v1078, %v1142
      %v1175 = vadd.f32 %v1079, %v1143
      %v1176 = vadd.f32 %v1080, %v1144
      %v1177 = vadd.f32 %v1081, %v1145
      %v1178 = vadd.f32 %v1082, %v1146
      %v1179 = vadd.f32 %v1083, %v1147
      %v1180 = vadd.f32 %v1084, %v1148
      %v1181 = vadd.f32 %v1085, %v1149
      %v1182 = vadd.f32 %v1086, %v1150
      %v1183 = vadd.f32 %v1087, %v1151
      %v1184 = vadd.f32 %v1088, %v1152
      %v1185 = vadd.f32 %v1089, %v1153
      %v1186 = vmax.f32 %v1154, 0.0
      %v1187 = vmax.f32 %v1155, 0.0
      %v1188 = vmax.f32 %v1156, 0.0
      %v1189 = vmax.f32 %v1157, 0.0
      %v1190 = vmax.f32 %v1158, 0.0
      %v1191 = vmax.f32 %v1159, 0.0
      %v1192 = vmax.f32 %v1160, 0.0
      %v1193 = vmax.f32 %v1161, 0.0
      %v1194 = vmax.f32 %v1162, 0.0
      %v1195 = vmax.f32 %v1163, 0.0
      %v1196 = vmax.f32 %v1164, 0.0
      %v1197 = vmax.f32 %v1165, 0.0
      %v1198 = vmax.f32 %v1166, 0.0
      %v1199 = vmax.f32 %v1167, 0.0
      %v1200 = vmax.f32 %v1168, 0.0
      %v1201 = vmax.f32 %v1169, 0.0
      %v1202 = vmax.f32 %v1170, 0.0
      %v1203 = vmax.f32 %v1171, 0.0
      %v1204 = vmax.f32 %v1172, 0.0
      %v1205 = vmax.f32 %v1173, 0.0
      %v1206 = vmax.f32 %v1174, 0.0
      %v1207 = vmax.f32 %v1175, 0.0
      %v1208 = vmax.f32 %v1176, 0.0
      %v1209 = vmax.f32 %v1177, 0.0
      %v1210 = vmax.f32 %v1178, 0.0
      %v1211 = vmax.f32 %v1179, 0.0
      %v1212 = vmax.f32 %v1180, 0.0
      %v1213 = vmax.f32 %v1181, 0.0
      %v1214 = vmax.f32 %v1182, 0.0
      %v1215 = vmax.f32 %v1183, 0.0
      %v1216 = vmax.f32 %v1184, 0.0
      %v1217 = vmax.f32 %v1185, 0.0
      %v1218 = vpack.c.bf16 %v1186, %v1186
      %v1219 = vpack.c.bf16 %v1187, %v1187
      %v1220 = vpack.c.bf16 %v1188, %v1188
      %v1221 = vpack.c.bf16 %v1189, %v1189
      %v1222 = vpack.c.bf16 %v1190, %v1190
      %v1223 = vpack.c.bf16 %v1191, %v1191
      %v1224 = vpack.c.bf16 %v1192, %v1192
      %v1225 = vpack.c.bf16 %v1193, %v1193
      %v1226 = vpack.c.bf16 %v1194, %v1194
      %v1227 = vpack.c.bf16 %v1195, %v1195
      %v1228 = vpack.c.bf16 %v1196, %v1196
      %v1229 = vpack.c.bf16 %v1197, %v1197
      %v1230 = vpack.c.bf16 %v1198, %v1198
      %v1231 = vpack.c.bf16 %v1199, %v1199
      %v1232 = vpack.c.bf16 %v1200, %v1200
      %v1233 = vpack.c.bf16 %v1201, %v1201
      %v1234 = vpack.c.bf16 %v1202, %v1202
      %v1235 = vpack.c.bf16 %v1203, %v1203
      %v1236 = vpack.c.bf16 %v1204, %v1204
      %v1237 = vpack.c.bf16 %v1205, %v1205
      %v1238 = vpack.c.bf16 %v1206, %v1206
      %v1239 = vpack.c.bf16 %v1207, %v1207
      %v1240 = vpack.c.bf16 %v1208, %v1208
      %v1241 = vpack.c.bf16 %v1209, %v1209
      %v1242 = vpack.c.bf16 %v1210, %v1210
      %v1243 = vpack.c.bf16 %v1211, %v1211
      %v1244 = vpack.c.bf16 %v1212, %v1212
      %v1245 = vpack.c.bf16 %v1213, %v1213
      %v1246 = vpack.c.bf16 %v1214, %v1214
      %v1247 = vpack.c.bf16 %v1215, %v1215
      %v1248 = vpack.c.bf16 %v1216, %v1216
      %v1249 = vpack.c.bf16 %v1217, %v1217
      %vm1250 = vcmask 257024
      %1251 = vst.msk [vmem:[%s251] sm:$0xf] %vm1250, %v1218
      %1252 = vst.msk [vmem:[%s251 + $0x4] sm:$0xf] %vm1250, %v1219
      %1253 = vst.msk [vmem:[%s251 + $0x8] sm:$0xf] %vm1250, %v1220
      %1254 = vst.msk [vmem:[%s251 + $0xc] sm:$0xf] %vm1250, %v1221
      %1255 = vst.msk [vmem:[%s251 + $0x10] sm:$0xf] %vm1250, %v1222
      %1256 = vst.msk [vmem:[%s251 + $0x14] sm:$0xf] %vm1250, %v1223
      %1257 = vst.msk [vmem:[%s251 + $0x18] sm:$0xf] %vm1250, %v1224
      %1258 = vst.msk [vmem:[%s251 + $0x1c] sm:$0xf] %vm1250, %v1225
      %1259 = vst.msk [vmem:[%s251 + $0x20] sm:$0xf] %vm1250, %v1226
      %1260 = vst.msk [vmem:[%s251 + $0x24] sm:$0xf] %vm1250, %v1227
      %1261 = vst.msk [vmem:[%s251 + $0x28] sm:$0xf] %vm1250, %v1228
      %1262 = vst.msk [vmem:[%s251 + $0x2c] sm:$0xf] %vm1250, %v1229
      %1263 = vst.msk [vmem:[%s251 + $0x30] sm:$0xf] %vm1250, %v1230
      %1264 = vst.msk [vmem:[%s251 + $0x34] sm:$0xf] %vm1250, %v1231
      %1265 = vst.msk [vmem:[%s251 + $0x38] sm:$0xf] %vm1250, %v1232
      %1266 = vst.msk [vmem:[%s251 + $0x3c] sm:$0xf] %vm1250, %v1233
      %1267 = vst.msk [vmem:[%s251 + $0x40] sm:$0xf] %vm1250, %v1234
      %1268 = vst.msk [vmem:[%s251 + $0x44] sm:$0xf] %vm1250, %v1235
      %1269 = vst.msk [vmem:[%s251 + $0x48] sm:$0xf] %vm1250, %v1236
      %1270 = vst.msk [vmem:[%s251 + $0x4c] sm:$0xf] %vm1250, %v1237
      %1271 = vst.msk [vmem:[%s251 + $0x50] sm:$0xf] %vm1250, %v1238
      %1272 = vst.msk [vmem:[%s251 + $0x54] sm:$0xf] %vm1250, %v1239
      %1273 = vst.msk [vmem:[%s251 + $0x58] sm:$0xf] %vm1250, %v1240
      %1274 = vst.msk [vmem:[%s251 + $0x5c] sm:$0xf] %vm1250, %v1241
      %1275 = vst.msk [vmem:[%s251 + $0x60] sm:$0xf] %vm1250, %v1242
      %1276 = vst.msk [vmem:[%s251 + $0x64] sm:$0xf] %vm1250, %v1243
      %1277 = vst.msk [vmem:[%s251 + $0x68] sm:$0xf] %vm1250, %v1244
      %1278 = vst.msk [vmem:[%s251 + $0x6c] sm:$0xf] %vm1250, %v1245
      %1279 = vst.msk [vmem:[%s251 + $0x70] sm:$0xf] %vm1250, %v1246
      %1280 = vst.msk [vmem:[%s251 + $0x74] sm:$0xf] %vm1250, %v1247
      %1281 = vst.msk [vmem:[%s251 + $0x78] sm:$0xf] %vm1250, %v1248
      %1282 = vst.msk [vmem:[%s251 + $0x7c] sm:$0xf] %vm1250, %v1249
      %s1283 = smul.u32 32, %s16
      %p1284 = scmp.lt.s32.totalorder %s1283, 63
      %s1285 = scalar_select %p1284, %s1283, 63
      %s1286 = smul.addr %s1285, 4
      %s1287 = scalar_lea.vmem %s5, %s1286
      // Predicated region
      $region41: #{_lambda_.31} parent=39 // pred_check
        %p1288 = pneg %p149
      $region42: #{_lambda_.31} parent=39 // pred_check_branch
        %1290 = sbr.rel (%p1288) target = $region44
      $region43: #{_lambda_.31} parent=39 // pred_region
        %s1291 = smul.u32 32, %s16
      $region44: #{_lambda_.31} parent=39 // pred_fallthru
        _
    $region40: #{_lambda_.31} parent=5 // pred_fallthru
      _
    %p1292 = scmp.le.s32.totalorder 2, %s11
    // Predicated region
    $region45: #{_lambda_.31} parent=5 // pred_check
      %p1293 = pneg %p1292
    $region46: #{_lambda_.31} parent=5 // pred_check_branch
      %1295 = sbr.rel (%p1293) target = $region48
    $region47: #{_lambda_.31} parent=5 // pred_region
      %s1296 = ssub.s32 %s11, 2
      // Predicated region
      $region49: #{_lambda_.31} parent=47 // pred_check
        %p1297 = pneg %p155
      $region50: #{_lambda_.31} parent=47 // pred_check_branch
        %1299 = sbr.rel (%p1297) target = $region52
      $region51: #{_lambda_.31} parent=47 // pred_region
        %s1300 = smul.u32 32, %s17
        %p1301 = scmp.lt.s32.totalorder %s1300, 63
        %s1302 = scalar_select %p1301, %s1300, 63
        %s1303 = smul.addr %s1302, 4
        %s1304 = scalar_lea.vmem %s5, %s1303
      $region52: #{_lambda_.31} parent=47 // pred_fallthru
        _
    $region48: #{_lambda_.31} parent=5 // pred_fallthru
      _
  $region6: #{_lambda_.31} parent=0 // loop_footer
    %s15 = sadd.s32 1, %s11
  $region7: #{_lambda_.31} parent=0 // loop_footer_branch
    %10 = sbr.rel target = $region3
  $region8: #{_lambda_.31} parent=0 // loop_exit
    _

// kernel: _lambda_.36
$region0: #{_lambda_.36}
  #allocation0 [shape = 'u32[]', space=smem, size = 0x4, offset = 0x4, fixed_abs, tag = 'smem constant byte address 0x4 - core index']
  #allocation1 [shape = 'u32[72,128]{1,0:T(1,128)}', space=vmem, size = 0x9000, scoped, tag = 'internal scratch']
  %s0 = inlined_call_operand.vmem [shape: bf16[128,288], index: 0, kind: input, shape index: {}]
  %s1 = inlined_call_operand.vmem [shape: bf16[288,64], index: 1, kind: input, shape index: {}]
  %s2 = inlined_call_operand.vmem [shape: f32[1,64], index: 2, kind: input, shape index: {}]
  %s3 = inlined_call_operand.vmem [shape: f32[1,64], index: 3, kind: input, shape index: {}]
  %s4 = inlined_call_operand.vmem [shape: bf16[128,64], index: 4, kind: output, shape index: {}]
  %s5 = sld [smem:[#allocation0]]
  $region49: #{_lambda_.36} parent=0
    _
  %s7 = ssub.s32 1, %s5
  %s8 = scalar_select 0, %s7, %s5
  loop: start=0, step=1, limit=4
  $region2: #{_lambda_.36} parent=0 // loop_pre_header
    _
  $region3: #{_lambda_.36} parent=0 // loop_header
    %s10 = sphi 0, %s14
    %p11 = scmp.ge.s32.totalorder %s10, 4
    %s20 = sphi 0, %s22
    %s23 = sphi 0, %s20
    %s24 = sphi 0, %s23
    %s40 = sphi 0, %s24
    %s44 = sphi 0, %s44
    %s46 = sphi 0, %s44
    %s47 = sphi 0, %s46
    %s61 = sphi 0, %s47
    %s65 = sphi 0, %s65
    %s67 = sphi 0, %s65
    %s68 = sphi 0, %s67
    %s82 = sphi 0, %s68
    %s86 = sphi 0, %s86
    %s88 = sphi 0, %s86
    %s89 = sphi 0, %s88
    %s103 = sphi 0, %s89
    %s109 = sphi 0, %s111
    %s112 = sphi 0, %s109
    %s113 = sphi 0, %s112
    %s129 = sphi 0, %s113
  $region4: #{_lambda_.36} parent=0 // loop_header_branch
    %13 = sbr.rel (%p11) target = $region8
  $region5: #{_lambda_.36} parent=0 // loop_body
    %s15 = ssub.s32 %s10, 1
    %s16 = ssub.s32 %s10, 2
    %s17 = sadd.s32 %s10, 1
    %s18 = ssub.s32 %s10, %s17
    %p19 = scmp.eq.s32.totalorder %s18, 0
    %s21 = sadd.s32 %s20, 1
    %s22 = scalar_select %p19, %s20, %s21
    %p25 = pneg %p19
    %p26 = scmp.eq.s32.totalorder %s10, 1
    %p27 = por %p25, %p26
    %p28 = scmp.ne.s32.totalorder %s20, %s23
    %p29 = scmp.eq.s32.totalorder %s10, 0
    %p30 = por %p28, %p29
    %p31 = scmp.ne.s32.totalorder %s20, %s23
    %p32 = scmp.eq.s32.totalorder %s15, 1
    %p33 = por %p31, %p32
    %p34 = scmp.ne.s32.totalorder %s23, %s24
    %p35 = scmp.eq.s32.totalorder %s15, 0
    %p36 = por %p34, %p35
    %p37 = scmp.ne.s32.totalorder %s23, %s24
    %p38 = scmp.eq.s32.totalorder %s16, 1
    %p39 = por %p37, %p38
    %p41 = scmp.ne.s32.totalorder %s24, %s40
    %p42 = scmp.eq.s32.totalorder %s16, 0
    %p43 = por %p41, %p42
    %s45 = sadd.s32 %s44, 1
    %p48 = scmp.eq.s32.totalorder %s10, 1
    %p49 = scmp.ne.s32.totalorder %s44, %s46
    %p50 = scmp.eq.s32.totalorder %s10, 0
    %p51 = por %p49, %p50
    %p52 = scmp.ne.s32.totalorder %s44, %s46
    %p53 = scmp.eq.s32.totalorder %s15, 1
    %p54 = por %p52, %p53
    %p55 = scmp.ne.s32.totalorder %s46, %s47
    %p56 = scmp.eq.s32.totalorder %s15, 0
    %p57 = por %p55, %p56
    %p58 = scmp.ne.s32.totalorder %s46, %s47
    %p59 = scmp.eq.s32.totalorder %s16, 1
    %p60 = por %p58, %p59
    %p62 = scmp.ne.s32.totalorder %s47, %s61
    %p63 = scmp.eq.s32.totalorder %s16, 0
    %p64 = por %p62, %p63
    %s66 = sadd.s32 %s65, 1
    %p69 = scmp.eq.s32.totalorder %s10, 1
    %p70 = scmp.ne.s32.totalorder %s65, %s67
    %p71 = scmp.eq.s32.totalorder %s10, 0
    %p72 = por %p70, %p71
    %p73 = scmp.ne.s32.totalorder %s65, %s67
    %p74 = scmp.eq.s32.totalorder %s15, 1
    %p75 = por %p73, %p74
    %p76 = scmp.ne.s32.totalorder %s67, %s68
    %p77 = scmp.eq.s32.totalorder %s15, 0
    %p78 = por %p76, %p77
    %p79 = scmp.ne.s32.totalorder %s67, %s68
    %p80 = scmp.eq.s32.totalorder %s16, 1
    %p81 = por %p79, %p80
    %p83 = scmp.ne.s32.totalorder %s68, %s82
    %p84 = scmp.eq.s32.totalorder %s16, 0
    %p85 = por %p83, %p84
    %s87 = sadd.s32 %s86, 1
    %p90 = scmp.eq.s32.totalorder %s10, 1
    %p91 = scmp.ne.s32.totalorder %s86, %s88
    %p92 = scmp.eq.s32.totalorder %s10, 0
    %p93 = por %p91, %p92
    %p94 = scmp.ne.s32.totalorder %s86, %s88
    %p95 = scmp.eq.s32.totalorder %s15, 1
    %p96 = por %p94, %p95
    %p97 = scmp.ne.s32.totalorder %s88, %s89
    %p98 = scmp.eq.s32.totalorder %s15, 0
    %p99 = por %p97, %p98
    %p100 = scmp.ne.s32.totalorder %s88, %s89
    %p101 = scmp.eq.s32.totalorder %s16, 1
    %p102 = por %p100, %p101
    %p104 = scmp.ne.s32.totalorder %s89, %s103
    %p105 = scmp.eq.s32.totalorder %s16, 0
    %p106 = por %p104, %p105
    %s107 = ssub.s32 %s10, %s17
    %p108 = scmp.eq.s32.totalorder %s107, 0
    %s110 = sadd.s32 %s109, 1
    %s111 = scalar_select %p108, %s109, %s110
    %p114 = pneg %p108
    %p115 = scmp.eq.s32.totalorder %s10, 1
    %p116 = por %p114, %p115
    %p117 = scmp.ne.s32.totalorder %s109, %s112
    %p118 = scmp.eq.s32.totalorder %s10, 0
    %p119 = por %p117, %p118
    %p120 = scmp.ne.s32.totalorder %s109, %s112
    %p121 = scmp.eq.s32.totalorder %s15, 1
    %p122 = por %p120, %p121
    %p123 = scmp.ne.s32.totalorder %s112, %s113
    %p124 = scmp.eq.s32.totalorder %s15, 0
    %p125 = por %p123, %p124
    %p126 = scmp.ne.s32.totalorder %s112, %s113
    %p127 = scmp.eq.s32.totalorder %s16, 1
    %p128 = por %p126, %p127
    %p130 = scmp.ne.s32.totalorder %s113, %s129
    %p131 = scmp.eq.s32.totalorder %s16, 0
    %p132 = por %p130, %p131
    %p133 = scmp.le.s32.totalorder 1, %s10
    %p134 = scmp.lt.s32.totalorder %s10, 3
    %p135 = pnand %p133, %p134
    %p136 = pneg %p135
    // Predicated region
    $region9: #{_lambda_.36} parent=5 // pred_check
      _
    $region10: #{_lambda_.36} parent=5 // pred_check_branch
      %138 = sbr.rel (%p135) target = $region12
    $region11: #{_lambda_.36} parent=5 // pred_region
      %s139 = ssub.s32 %s10, 1
      // Predicated region
      $region13: #{_lambda_.36} parent=11 // pred_check
        %p140 = pneg %p57
      $region14: #{_lambda_.36} parent=11 // pred_check_branch
        %142 = sbr.rel (%p140) target = $region16
      $region15: #{_lambda_.36} parent=11 // pred_region
        _
      $region16: #{_lambda_.36} parent=11 // pred_fallthru
        _
      // Predicated region
      $region17: #{_lambda_.36} parent=11 // pred_check
        %p143 = pneg %p78
      $region18: #{_lambda_.36} parent=11 // pred_check_branch
        %145 = sbr.rel (%p143) target = $region20
      $region19: #{_lambda_.36} parent=11 // pred_region
        _
      $region20: #{_lambda_.36} parent=11 // pred_fallthru
        _
      // Predicated region
      $region21: #{_lambda_.36} parent=11 // pred_check
        %p146 = pneg %p99
      $region22: #{_lambda_.36} parent=11 // pred_check_branch
        %148 = sbr.rel (%p146) target = $region24
      $region23: #{_lambda_.36} parent=11 // pred_region
        _
      $region24: #{_lambda_.36} parent=11 // pred_fallthru
        _
    $region12: #{_lambda_.36} parent=5 // pred_fallthru
      _
    %p149 = scmp.lt.s32.totalorder %s10, 2
    // Predicated region
    $region25: #{_lambda_.36} parent=5 // pred_check
      %p150 = pneg %p149
    $region26: #{_lambda_.36} parent=5 // pred_check_branch
      %152 = sbr.rel (%p150) target = $region28
    $region27: #{_lambda_.36} parent=5 // pred_region
      // Predicated region
      $region29: #{_lambda_.36} parent=27 // pred_check
        %p153 = pneg %p30
      $region30: #{_lambda_.36} parent=27 // pred_check_branch
        %155 = sbr.rel (%p153) target = $region32
      $region31: #{_lambda_.36} parent=27 // pred_region
        %s156 = smul.u32 8, %s10
        %p157 = scmp.lt.s32.totalorder %s156, 15
        %s158 = scalar_select %p157, %s156, 15
        %s159 = smul.addr %s158, 3
        %s160 = smul.addr %s159, 4
        %s161 = scalar_lea.vmem %s0, %s160
        %s162 = smul.u32 8, %s10
      $region32: #{_lambda_.36} parent=27 // pred_fallthru
        _
    $region28: #{_lambda_.36} parent=5 // pred_fallthru
      _
    %p163 = scmp.le.s32.totalorder 1, %s10
    %p164 = scmp.lt.s32.totalorder %s10, 3
    %p165 = pnand %p163, %p164
    %p166 = pneg %p165
    // Predicated region
    $region33: #{_lambda_.36} parent=5 // pred_check
      _
    $region34: #{_lambda_.36} parent=5 // pred_check_branch
      %168 = sbr.rel (%p165) target = $region36
    $region35: #{_lambda_.36} parent=5 // pred_region
      %s169 = ssub.s32 %s10, 1
      %s170 = smul.u32 8, %s15
      %p171 = scmp.lt.s32.totalorder %s170, 15
      %s172 = scalar_select %p171, %s170, 15
      %s173 = smul.addr %s172, 3
      %s174 = smul.addr %s173, 4
      %s175 = scalar_lea.vmem %s0, %s174
      %p176 = pneg %p36
      %p177 = pneg %p33
      %p178 = pneg %p57
      %p179 = pneg %p54
      %p180 = pneg %p78
      %p181 = pneg %p75
      %p182 = pneg %p99
      %p183 = pneg %p96
      %p184 = pneg %p125
      %p185 = pneg %p122
      %s186 = smul.u32 8, %s15
      %p187 = scmp.lt.s32.totalorder %s186, 15
      %s188 = scalar_select %p187, %s186, 15
      %s189 = smul.addr %s188, 4
      %s190 = scalar_lea.vmem %s4, %s189
      %s191 = smul.u32 8, %s15
      %p192 = scmp.lt.s32.totalorder %s191, 15
      %s193 = scalar_select %p192, %s191, 15
      %s194 = smul.addr %s193, 3
      %s195 = smul.addr %s194, 4
      %s196 = scalar_lea.vmem %s0, %s195
      %s197 = smul.u32 8, %s15
      %s198 = smul.u32 8, %s15
      %p199 = scmp.lt.s32.totalorder %s198, 15
      %s200 = scalar_select %p199, %s198, 15
      %s201 = smul.addr %s200, 4
      %s202 = scalar_lea.vmem %s4, %s201
      %s203 = smul.u32 8, %s15
      %v205 = vld [vmem:[%s196] sm:$0xff]
      %v206 = vld [vmem:[%s196 + $0x8] sm:$0xf]
      %v207 = vld [vmem:[%s196 + $0xc] sm:$0xff]
      %v208 = vld [vmem:[%s196 + $0x14] sm:$0xf]
      %v209 = vld [vmem:[%s196 + $0x18] sm:$0xff]
      %v210 = vld [vmem:[%s196 + $0x20] sm:$0xf]
      %v211 = vld [vmem:[%s196 + $0x24] sm:$0xff]
      %v212 = vld [vmem:[%s196 + $0x2c] sm:$0xf]
      %v213 = vld [vmem:[%s196 + $0x30] sm:$0xff]
      %v214 = vld [vmem:[%s196 + $0x38] sm:$0xf]
      %v215 = vld [vmem:[%s196 + $0x3c] sm:$0xff]
      %v216 = vld [vmem:[%s196 + $0x44] sm:$0xf]
      %v217 = vld [vmem:[%s196 + $0x48] sm:$0xff]
      %v218 = vld [vmem:[%s196 + $0x50] sm:$0xf]
      %v219 = vld [vmem:[%s196 + $0x54] sm:$0xff]
      %v220 = vld [vmem:[%s196 + $0x5c] sm:$0xf]
      %v221 = vld [vmem:[%s1] sm:$0xf]
      %v222 = vld [vmem:[%s1 + $0x4] sm:$0xf]
      %v223 = vld [vmem:[%s1 + $0x8] sm:$0xf]
      %v224 = vld [vmem:[%s1 + $0xc] sm:$0xf]
      %v225 = vld [vmem:[%s1 + $0x10] sm:$0xf]
      %v226 = vld [vmem:[%s1 + $0x14] sm:$0xf]
      %v227 = vld [vmem:[%s1 + $0x18] sm:$0xf]
      %v228 = vld [vmem:[%s1 + $0x1c] sm:$0xf]
      %v229 = vld [vmem:[%s1 + $0x20] sm:$0xf]
      %v230 = vld [vmem:[%s1 + $0x24] sm:$0xf]
      %v231 = vld [vmem:[%s1 + $0x28] sm:$0xf]
      %v232 = vld [vmem:[%s1 + $0x2c] sm:$0xf]
      %v233 = vld [vmem:[%s1 + $0x30] sm:$0xf]
      %v234 = vld [vmem:[%s1 + $0x34] sm:$0xf]
      %v235 = vld [vmem:[%s1 + $0x38] sm:$0xf]
      %v236 = vld [vmem:[%s1 + $0x3c] sm:$0xf]
      %v237 = vld [vmem:[%s1 + $0x40] sm:$0xf]
      %v238 = vld [vmem:[%s1 + $0x44] sm:$0xf]
      %v239 = vld [vmem:[%s1 + $0x48] sm:$0xf]
      %v240 = vld [vmem:[%s1 + $0x4c] sm:$0xf]
      %v241 = vld [vmem:[%s1 + $0x50] sm:$0xf]
      %v242 = vld [vmem:[%s1 + $0x54] sm:$0xf]
      %v243 = vld [vmem:[%s1 + $0x58] sm:$0xf]
      %v244 = vld [vmem:[%s1 + $0x5c] sm:$0xf]
      %v245 = vld [vmem:[%s1 + $0x60] sm:$0xf]
      %v246 = vld [vmem:[%s1 + $0x64] sm:$0xf]
      %v247 = vld [vmem:[%s1 + $0x68] sm:$0xf]
      %v248 = vld [vmem:[%s1 + $0x6c] sm:$0xf]
      %v249 = vld [vmem:[%s1 + $0x70] sm:$0xf]
      %v250 = vld [vmem:[%s1 + $0x74] sm:$0xf]
      %v251 = vld [vmem:[%s1 + $0x78] sm:$0xf]
      %v252 = vld [vmem:[%s1 + $0x7c] sm:$0xf]
      %v253 = vld [vmem:[%s1 + $0x80] sm:$0xf]
      %v254 = vld [vmem:[%s1 + $0x84] sm:$0xf]
      %v255 = vld [vmem:[%s1 + $0x88] sm:$0xf]
      %v256 = vld [vmem:[%s1 + $0x8c] sm:$0xf]
      %v273 = vunpack.c.l.b16 %v205
      %v274 = vunpack.c.h.b16 %v205
      %v275 = vunpack.c.l.b16 %v206
      %v276 = vunpack.c.l.b16 %v207
      %v277 = vunpack.c.h.b16 %v207
      %v278 = vunpack.c.l.b16 %v208
      %v279 = vunpack.c.l.b16 %v209
      %v280 = vunpack.c.h.b16 %v209
      %v281 = vunpack.c.l.b16 %v210
      %v282 = vunpack.c.l.b16 %v211
      %v283 = vunpack.c.h.b16 %v211
      %v284 = vunpack.c.l.b16 %v212
      %v285 = vunpack.c.l.b16 %v213
      %v286 = vunpack.c.h.b16 %v213
      %v287 = vunpack.c.l.b16 %v214
      %v288 = vunpack.c.l.b16 %v215
      %v289 = vunpack.c.h.b16 %v215
      %v290 = vunpack.c.l.b16 %v216
      %v291 = vunpack.c.l.b16 %v217
      %v292 = vunpack.c.h.b16 %v217
      %v293 = vunpack.c.l.b16 %v218
      %v294 = vunpack.c.l.b16 %v219
      %v295 = vunpack.c.h.b16 %v219
      %v296 = vunpack.c.l.b16 %v220
      %v297 = vpack.c.b16 %v276, %v273
      %v298 = vpack.c.b16 %v277, %v274
      %v299 = vpack.c.b16 %v278, %v275
      %v300 = vpack.c.b16 %v282, %v279
      %v301 = vpack.c.b16 %v283, %v280
      %v302 = vpack.c.b16 %v284, %v281
      %v303 = vpack.c.b16 %v288, %v285
      %v304 = vpack.c.b16 %v289, %v286
      %v305 = vpack.c.b16 %v290, %v287
      %v306 = vpack.c.b16 %v294, %v291
      %v307 = vpack.c.b16 %v295, %v292
      %v308 = vpack.c.b16 %v296, %v293
      %v353 = vunpack.c.l.b16 %v221
      %v354 = vunpack.c.l.b16 %v222
      %v355 = vunpack.c.l.b16 %v223
      %v356 = vunpack.c.l.b16 %v224
      %v357 = vunpack.c.l.b16 %v225
      %v358 = vunpack.c.l.b16 %v226
      %v359 = vunpack.c.l.b16 %v227
      %v360 = vunpack.c.l.b16 %v228
      %v361 = vunpack.c.l.b16 %v229
      %v362 = vunpack.c.l.b16 %v230
      %v363 = vunpack.c.l.b16 %v231
      %v364 = vunpack.c.l.b16 %v232
      %v365 = vunpack.c.l.b16 %v233
      %v366 = vunpack.c.l.b16 %v234
      %v367 = vunpack.c.l.b16 %v235
      %v368 = vunpack.c.l.b16 %v236
      %v369 = vunpack.c.l.b16 %v237
      %v370 = vunpack.c.l.b16 %v238
      %v371 = vunpack.c.l.b16 %v239
      %v372 = vunpack.c.l.b16 %v240
      %v373 = vunpack.c.l.b16 %v241
      %v374 = vunpack.c.l.b16 %v242
      %v375 = vunpack.c.l.b16 %v243
      %v376 = vunpack.c.l.b16 %v244
      %v377 = vunpack.c.l.b16 %v245
      %v378 = vunpack.c.l.b16 %v246
      %v379 = vunpack.c.l.b16 %v247
      %v380 = vunpack.c.l.b16 %v248
      %v381 = vunpack.c.l.b16 %v249
      %v382 = vunpack.c.l.b16 %v250
      %v383 = vunpack.c.l.b16 %v251
      %v384 = vunpack.c.l.b16 %v252
      %v385 = vunpack.c.l.b16 %v253
      %v386 = vunpack.c.l.b16 %v254
      %v387 = vunpack.c.l.b16 %v255
      %v388 = vunpack.c.l.b16 %v256
      %v389 = vpack.c.b16 %v354, %v353
      %v390 = vpack.c.b16 %v356, %v355
      %v391 = vpack.c.b16 %v358, %v357
      %v392 = vpack.c.b16 %v360, %v359
      %v393 = vpack.c.b16 %v362, %v361
      %v394 = vpack.c.b16 %v364, %v363
      %v395 = vpack.c.b16 %v366, %v365
      %v396 = vpack.c.b16 %v368, %v367
      %v397 = vpack.c.b16 %v370, %v369
      %v398 = vpack.c.b16 %v372, %v371
      %v399 = vpack.c.b16 %v374, %v373
      %v400 = vpack.c.b16 %v376, %v375
      %v401 = vpack.c.b16 %v378, %v377
      %v402 = vpack.c.b16 %v380, %v379
      %v403 = vpack.c.b16 %v382, %v381
      %v404 = vpack.c.b16 %v384, %v383
      %v405 = vpack.c.b16 %v386, %v385
      %v406 = vpack.c.b16 %v388, %v387
      %vm425 = vcmask 261120
      %v427 = vsel %vm425, %v299, 0
      %v430 = vsel %vm425, %v302, 0
      %v433 = vsel %vm425, %v305, 0
      %v436 = vsel %vm425, %v308, 0
      %438 = vmatpush.bf16.msra.mxu0 %v396
      %439 = vmatpush.bf16.msra.mxu0 %v395
      %440 = vmatpush.bf16.msra.mxu0 %v394
      %441 = vmatpush.bf16.msra.mxu0 %v393
      %442 = vmatpush.bf16.msra.mxu0 %v392
      %443 = vmatpush.bf16.msra.mxu0 %v391
      %444 = vmatpush.bf16.msra.mxu0 %v390
      %445 = vmatpush.bf16.msra.mxu0 %v389
      %446 = vmatmul.bf16.gmra.mxu0 %v297
      %v447 = vpop.f32.mrf.mxu0
      %v448 = vadd.f32 0.0, %v447
      %v449 = vpop.f32.mrf.mxu0
      %v450 = vadd.f32 0.0, %v449
      %451 = vmatmul.bf16.gmra.mxu0 %v300
      %v452 = vpop.f32.mrf.mxu0
      %v453 = vadd.f32 0.0, %v452
      %v454 = vpop.f32.mrf.mxu0
      %v455 = vadd.f32 0.0, %v454
      %456 = vmatmul.bf16.gmra.mxu0 %v303
      %v457 = vpop.f32.mrf.mxu0
      %v458 = vadd.f32 0.0, %v457
      %v459 = vpop.f32.mrf.mxu0
      %v460 = vadd.f32 0.0, %v459
      %461 = vmatmul.bf16.gmra.mxu0 %v306
      %v462 = vpop.f32.mrf.mxu0
      %v463 = vadd.f32 0.0, %v462
      %v464 = vpop.f32.mrf.mxu0
      %v465 = vadd.f32 0.0, %v464
      %466 = vdwg.mxu0
      %467 = vmatpush.bf16.msra.mxu0 %v404
      %468 = vmatpush.bf16.msra.mxu0 %v403
      %469 = vmatpush.bf16.msra.mxu0 %v402
      %470 = vmatpush.bf16.msra.mxu0 %v401
      %471 = vmatpush.bf16.msra.mxu0 %v400
      %472 = vmatpush.bf16.msra.mxu0 %v399
      %473 = vmatpush.bf16.msra.mxu0 %v398
      %474 = vmatpush.bf16.msra.mxu0 %v397
      %475 = vmatmul.bf16.gmra.mxu0 %v298
      %v476 = vpop.f32.mrf.mxu0
      %v477 = vadd.f32 %v448, %v476
      %v478 = vpop.f32.mrf.mxu0
      %v479 = vadd.f32 %v450, %v478
      %480 = vmatmul.bf16.gmra.mxu0 %v301
      %v481 = vpop.f32.mrf.mxu0
      %v482 = vadd.f32 %v453, %v481
      %v483 = vpop.f32.mrf.mxu0
      %v484 = vadd.f32 %v455, %v483
      %485 = vmatmul.bf16.gmra.mxu0 %v304
      %v486 = vpop.f32.mrf.mxu0
      %v487 = vadd.f32 %v458, %v486
      %v488 = vpop.f32.mrf.mxu0
      %v489 = vadd.f32 %v460, %v488
      %490 = vmatmul.bf16.gmra.mxu0 %v307
      %v491 = vpop.f32.mrf.mxu0
      %v492 = vadd.f32 %v463, %v491
      %v493 = vpop.f32.mrf.mxu0
      %v494 = vadd.f32 %v465, %v493
      %495 = vdwg.mxu0
      %496 = vmatpush.bf16.msra.mxu0 0
      %497 = vmatpush.bf16.msra.mxu0 0
      %498 = vmatpush.bf16.msra.mxu0 0
      %499 = vmatpush.bf16.msra.mxu0 0
      %500 = vmatpush.bf16.msra.mxu0 0
      %501 = vmatpush.bf16.msra.mxu0 0
      %502 = vmatpush.bf16.msra.mxu0 %v406
      %503 = vmatpush.bf16.msra.mxu0 %v405
      %504 = vmatmul.bf16.gmra.mxu0 %v427
      %v505 = vpop.f32.mrf.mxu0
      %v506 = vadd.f32 %v477, %v505
      %v507 = vpop.f32.mrf.mxu0
      %v508 = vadd.f32 %v479, %v507
      %509 = vmatmul.bf16.gmra.mxu0 %v430
      %v510 = vpop.f32.mrf.mxu0
      %v511 = vadd.f32 %v482, %v510
      %v512 = vpop.f32.mrf.mxu0
      %v513 = vadd.f32 %v484, %v512
      %514 = vmatmul.bf16.gmra.mxu0 %v433
      %v515 = vpop.f32.mrf.mxu0
      %v516 = vadd.f32 %v487, %v515
      %v517 = vpop.f32.mrf.mxu0
      %v518 = vadd.f32 %v489, %v517
      %519 = vmatmul.bf16.gmra.mxu0 %v436
      %v520 = vpop.f32.mrf.mxu0
      %v521 = vadd.f32 %v492, %v520
      %v522 = vpop.f32.mrf.mxu0
      %v523 = vadd.f32 %v494, %v522
      %524 = vdwg.mxu0
      %v525 = vld [vmem:[%s2] sm:$0x1]
      %v527 = vperm.slane %v525, 0
      %v529 = vmul.f32 %v506, %v527
      %v530 = vmul.f32 %v508, %v527
      %v531 = vmul.f32 %v511, %v527
      %v532 = vmul.f32 %v513, %v527
      %v533 = vmul.f32 %v516, %v527
      %v534 = vmul.f32 %v518, %v527
      %v535 = vmul.f32 %v521, %v527
      %v536 = vmul.f32 %v523, %v527
      %v537 = vld [vmem:[%s3] sm:$0x1]
      %v539 = vperm.slane %v537, 0
      %v541 = vadd.f32 %v529, %v539
      %v542 = vadd.f32 %v530, %v539
      %v543 = vadd.f32 %v531, %v539
      %v544 = vadd.f32 %v532, %v539
      %v545 = vadd.f32 %v533, %v539
      %v546 = vadd.f32 %v534, %v539
      %v547 = vadd.f32 %v535, %v539
      %v548 = vadd.f32 %v536, %v539
      %v549 = vmax.f32 %v541, 0.0
      %v550 = vmax.f32 %v542, 0.0
      %v551 = vmax.f32 %v543, 0.0
      %v552 = vmax.f32 %v544, 0.0
      %v553 = vmax.f32 %v545, 0.0
      %v554 = vmax.f32 %v546, 0.0
      %v555 = vmax.f32 %v547, 0.0
      %v556 = vmax.f32 %v548, 0.0
      %v557 = vpack.c.bf16 %v549, %v549
      %v558 = vpack.c.bf16 %v550, %v550
      %v559 = vpack.c.bf16 %v551, %v551
      %v560 = vpack.c.bf16 %v552, %v552
      %v561 = vpack.c.bf16 %v553, %v553
      %v562 = vpack.c.bf16 %v554, %v554
      %v563 = vpack.c.bf16 %v555, %v555
      %v564 = vpack.c.bf16 %v556, %v556
      %vm565 = vcmask 519168
      %566 = vst.msk [vmem:[%s202] sm:$0xf] %vm565, %v557
      %567 = vst.msk [vmem:[%s202 + $0x4] sm:$0xf] %vm565, %v558
      %568 = vst.msk [vmem:[%s202 + $0x8] sm:$0xf] %vm565, %v559
      %569 = vst.msk [vmem:[%s202 + $0xc] sm:$0xf] %vm565, %v560
      %570 = vst.msk [vmem:[%s202 + $0x10] sm:$0xf] %vm565, %v561
      %571 = vst.msk [vmem:[%s202 + $0x14] sm:$0xf] %vm565, %v562
      %572 = vst.msk [vmem:[%s202 + $0x18] sm:$0xf] %vm565, %v563
      %573 = vst.msk [vmem:[%s202 + $0x1c] sm:$0xf] %vm565, %v564
      %s574 = smul.u32 8, %s15
      %p575 = scmp.lt.s32.totalorder %s574, 15
      %s576 = scalar_select %p575, %s574, 15
      %s577 = smul.addr %s576, 4
      %s578 = scalar_lea.vmem %s4, %s577
      // Predicated region
      $region37: #{_lambda_.36} parent=35 // pred_check
        %p579 = pneg %p122
      $region38: #{_lambda_.36} parent=35 // pred_check_branch
        %581 = sbr.rel (%p579) target = $region40
      $region39: #{_lambda_.36} parent=35 // pred_region
        %s582 = smul.u32 8, %s15
      $region40: #{_lambda_.36} parent=35 // pred_fallthru
        _
    $region36: #{_lambda_.36} parent=5 // pred_fallthru
      _
    %p583 = scmp.le.s32.totalorder 2, %s10
    // Predicated region
    $region41: #{_lambda_.36} parent=5 // pred_check
      %p584 = pneg %p583
    $region42: #{_lambda_.36} parent=5 // pred_check_branch
      %586 = sbr.rel (%p584) target = $region44
    $region43: #{_lambda_.36} parent=5 // pred_region
      %s587 = ssub.s32 %s10, 2
      // Predicated region
      $region45: #{_lambda_.36} parent=43 // pred_check
        %p588 = pneg %p128
      $region46: #{_lambda_.36} parent=43 // pred_check_branch
        %590 = sbr.rel (%p588) target = $region48
      $region47: #{_lambda_.36} parent=43 // pred_region
        %s591 = smul.u32 8, %s16
        %p592 = scmp.lt.s32.totalorder %s591, 15
        %s593 = scalar_select %p592, %s591, 15
        %s594 = smul.addr %s593, 4
        %s595 = scalar_lea.vmem %s4, %s594
      $region48: #{_lambda_.36} parent=43 // pred_fallthru
        _
    $region44: #{_lambda_.36} parent=5 // pred_fallthru
      _
  $region6: #{_lambda_.36} parent=0 // loop_footer
    %s14 = sadd.s32 1, %s10
  $region7: #{_lambda_.36} parent=0 // loop_footer_branch
    %9 = sbr.rel target = $region3
  $region8: #{_lambda_.36} parent=0 // loop_exit
    _

// kernel: _lambda_.37
$region0: #{_lambda_.37}
  #allocation0 [shape = 'u32[]', space=smem, size = 0x4, offset = 0x4, fixed_abs, tag = 'smem constant byte address 0x4 - core index']
  #allocation1 [shape = 'u32[72,128]{1,0:T(1,128)}', space=vmem, size = 0x9000, scoped, tag = 'internal scratch']
  %s0 = inlined_call_operand.vmem [shape: bf16[128,32], index: 0, kind: input, shape index: {}]
  %s1 = inlined_call_operand.vmem [shape: bf16[32,64], index: 1, kind: input, shape index: {}]
  %s2 = inlined_call_operand.vmem [shape: f32[1,64], index: 2, kind: input, shape index: {}]
  %s3 = inlined_call_operand.vmem [shape: f32[1,64], index: 3, kind: input, shape index: {}]
  %s4 = inlined_call_operand.vmem [shape: bf16[128,64], index: 4, kind: output, shape index: {}]
  %s5 = sld [smem:[#allocation0]]
  $region49: #{_lambda_.37} parent=0
    _
  %s7 = ssub.s32 1, %s5
  %s8 = scalar_select 0, %s7, %s5
  loop: start=0, step=1, limit=4
  $region2: #{_lambda_.37} parent=0 // loop_pre_header
    _
  $region3: #{_lambda_.37} parent=0 // loop_header
    %s10 = sphi 0, %s14
    %p11 = scmp.ge.s32.totalorder %s10, 4
    %s20 = sphi 0, %s22
    %s23 = sphi 0, %s20
    %s24 = sphi 0, %s23
    %s40 = sphi 0, %s24
    %s44 = sphi 0, %s44
    %s46 = sphi 0, %s44
    %s47 = sphi 0, %s46
    %s61 = sphi 0, %s47
    %s65 = sphi 0, %s65
    %s67 = sphi 0, %s65
    %s68 = sphi 0, %s67
    %s82 = sphi 0, %s68
    %s86 = sphi 0, %s86
    %s88 = sphi 0, %s86
    %s89 = sphi 0, %s88
    %s103 = sphi 0, %s89
    %s109 = sphi 0, %s111
    %s112 = sphi 0, %s109
    %s113 = sphi 0, %s112
    %s129 = sphi 0, %s113
  $region4: #{_lambda_.37} parent=0 // loop_header_branch
    %13 = sbr.rel (%p11) target = $region8
  $region5: #{_lambda_.37} parent=0 // loop_body
    %s15 = ssub.s32 %s10, 1
    %s16 = ssub.s32 %s10, 2
    %s17 = sadd.s32 %s10, 1
    %s18 = ssub.s32 %s10, %s17
    %p19 = scmp.eq.s32.totalorder %s18, 0
    %s21 = sadd.s32 %s20, 1
    %s22 = scalar_select %p19, %s20, %s21
    %p25 = pneg %p19
    %p26 = scmp.eq.s32.totalorder %s10, 1
    %p27 = por %p25, %p26
    %p28 = scmp.ne.s32.totalorder %s20, %s23
    %p29 = scmp.eq.s32.totalorder %s10, 0
    %p30 = por %p28, %p29
    %p31 = scmp.ne.s32.totalorder %s20, %s23
    %p32 = scmp.eq.s32.totalorder %s15, 1
    %p33 = por %p31, %p32
    %p34 = scmp.ne.s32.totalorder %s23, %s24
    %p35 = scmp.eq.s32.totalorder %s15, 0
    %p36 = por %p34, %p35
    %p37 = scmp.ne.s32.totalorder %s23, %s24
    %p38 = scmp.eq.s32.totalorder %s16, 1
    %p39 = por %p37, %p38
    %p41 = scmp.ne.s32.totalorder %s24, %s40
    %p42 = scmp.eq.s32.totalorder %s16, 0
    %p43 = por %p41, %p42
    %s45 = sadd.s32 %s44, 1
    %p48 = scmp.eq.s32.totalorder %s10, 1
    %p49 = scmp.ne.s32.totalorder %s44, %s46
    %p50 = scmp.eq.s32.totalorder %s10, 0
    %p51 = por %p49, %p50
    %p52 = scmp.ne.s32.totalorder %s44, %s46
    %p53 = scmp.eq.s32.totalorder %s15, 1
    %p54 = por %p52, %p53
    %p55 = scmp.ne.s32.totalorder %s46, %s47
    %p56 = scmp.eq.s32.totalorder %s15, 0
    %p57 = por %p55, %p56
    %p58 = scmp.ne.s32.totalorder %s46, %s47
    %p59 = scmp.eq.s32.totalorder %s16, 1
    %p60 = por %p58, %p59
    %p62 = scmp.ne.s32.totalorder %s47, %s61
    %p63 = scmp.eq.s32.totalorder %s16, 0
    %p64 = por %p62, %p63
    %s66 = sadd.s32 %s65, 1
    %p69 = scmp.eq.s32.totalorder %s10, 1
    %p70 = scmp.ne.s32.totalorder %s65, %s67
    %p71 = scmp.eq.s32.totalorder %s10, 0
    %p72 = por %p70, %p71
    %p73 = scmp.ne.s32.totalorder %s65, %s67
    %p74 = scmp.eq.s32.totalorder %s15, 1
    %p75 = por %p73, %p74
    %p76 = scmp.ne.s32.totalorder %s67, %s68
    %p77 = scmp.eq.s32.totalorder %s15, 0
    %p78 = por %p76, %p77
    %p79 = scmp.ne.s32.totalorder %s67, %s68
    %p80 = scmp.eq.s32.totalorder %s16, 1
    %p81 = por %p79, %p80
    %p83 = scmp.ne.s32.totalorder %s68, %s82
    %p84 = scmp.eq.s32.totalorder %s16, 0
    %p85 = por %p83, %p84
    %s87 = sadd.s32 %s86, 1
    %p90 = scmp.eq.s32.totalorder %s10, 1
    %p91 = scmp.ne.s32.totalorder %s86, %s88
    %p92 = scmp.eq.s32.totalorder %s10, 0
    %p93 = por %p91, %p92
    %p94 = scmp.ne.s32.totalorder %s86, %s88
    %p95 = scmp.eq.s32.totalorder %s15, 1
    %p96 = por %p94, %p95
    %p97 = scmp.ne.s32.totalorder %s88, %s89
    %p98 = scmp.eq.s32.totalorder %s15, 0
    %p99 = por %p97, %p98
    %p100 = scmp.ne.s32.totalorder %s88, %s89
    %p101 = scmp.eq.s32.totalorder %s16, 1
    %p102 = por %p100, %p101
    %p104 = scmp.ne.s32.totalorder %s89, %s103
    %p105 = scmp.eq.s32.totalorder %s16, 0
    %p106 = por %p104, %p105
    %s107 = ssub.s32 %s10, %s17
    %p108 = scmp.eq.s32.totalorder %s107, 0
    %s110 = sadd.s32 %s109, 1
    %s111 = scalar_select %p108, %s109, %s110
    %p114 = pneg %p108
    %p115 = scmp.eq.s32.totalorder %s10, 1
    %p116 = por %p114, %p115
    %p117 = scmp.ne.s32.totalorder %s109, %s112
    %p118 = scmp.eq.s32.totalorder %s10, 0
    %p119 = por %p117, %p118
    %p120 = scmp.ne.s32.totalorder %s109, %s112
    %p121 = scmp.eq.s32.totalorder %s15, 1
    %p122 = por %p120, %p121
    %p123 = scmp.ne.s32.totalorder %s112, %s113
    %p124 = scmp.eq.s32.totalorder %s15, 0
    %p125 = por %p123, %p124
    %p126 = scmp.ne.s32.totalorder %s112, %s113
    %p127 = scmp.eq.s32.totalorder %s16, 1
    %p128 = por %p126, %p127
    %p130 = scmp.ne.s32.totalorder %s113, %s129
    %p131 = scmp.eq.s32.totalorder %s16, 0
    %p132 = por %p130, %p131
    %p133 = scmp.le.s32.totalorder 1, %s10
    %p134 = scmp.lt.s32.totalorder %s10, 3
    %p135 = pnand %p133, %p134
    %p136 = pneg %p135
    // Predicated region
    $region9: #{_lambda_.37} parent=5 // pred_check
      _
    $region10: #{_lambda_.37} parent=5 // pred_check_branch
      %138 = sbr.rel (%p135) target = $region12
    $region11: #{_lambda_.37} parent=5 // pred_region
      %s139 = ssub.s32 %s10, 1
      // Predicated region
      $region13: #{_lambda_.37} parent=11 // pred_check
        %p140 = pneg %p57
      $region14: #{_lambda_.37} parent=11 // pred_check_branch
        %142 = sbr.rel (%p140) target = $region16
      $region15: #{_lambda_.37} parent=11 // pred_region
        _
      $region16: #{_lambda_.37} parent=11 // pred_fallthru
        _
      // Predicated region
      $region17: #{_lambda_.37} parent=11 // pred_check
        %p143 = pneg %p78
      $region18: #{_lambda_.37} parent=11 // pred_check_branch
        %145 = sbr.rel (%p143) target = $region20
      $region19: #{_lambda_.37} parent=11 // pred_region
        _
      $region20: #{_lambda_.37} parent=11 // pred_fallthru
        _
      // Predicated region
      $region21: #{_lambda_.37} parent=11 // pred_check
        %p146 = pneg %p99
      $region22: #{_lambda_.37} parent=11 // pred_check_branch
        %148 = sbr.rel (%p146) target = $region24
      $region23: #{_lambda_.37} parent=11 // pred_region
        _
      $region24: #{_lambda_.37} parent=11 // pred_fallthru
        _
    $region12: #{_lambda_.37} parent=5 // pred_fallthru
      _
    %p149 = scmp.lt.s32.totalorder %s10, 2
    // Predicated region
    $region25: #{_lambda_.37} parent=5 // pred_check
      %p150 = pneg %p149
    $region26: #{_lambda_.37} parent=5 // pred_check_branch
      %152 = sbr.rel (%p150) target = $region28
    $region27: #{_lambda_.37} parent=5 // pred_region
      // Predicated region
      $region29: #{_lambda_.37} parent=27 // pred_check
        %p153 = pneg %p30
      $region30: #{_lambda_.37} parent=27 // pred_check_branch
        %155 = sbr.rel (%p153) target = $region32
      $region31: #{_lambda_.37} parent=27 // pred_region
        %s156 = smul.u32 8, %s10
        %p157 = scmp.lt.s32.totalorder %s156, 15
        %s158 = scalar_select %p157, %s156, 15
        %s159 = smul.addr %s158, 4
        %s160 = scalar_lea.vmem %s0, %s159
        %s161 = smul.u32 8, %s10
      $region32: #{_lambda_.37} parent=27 // pred_fallthru
        _
    $region28: #{_lambda_.37} parent=5 // pred_fallthru
      _
    %p162 = scmp.le.s32.totalorder 1, %s10
    %p163 = scmp.lt.s32.totalorder %s10, 3
    %p164 = pnand %p162, %p163
    %p165 = pneg %p164
    // Predicated region
    $region33: #{_lambda_.37} parent=5 // pred_check
      _
    $region34: #{_lambda_.37} parent=5 // pred_check_branch
      %167 = sbr.rel (%p164) target = $region36
    $region35: #{_lambda_.37} parent=5 // pred_region
      %s168 = ssub.s32 %s10, 1
      %s169 = smul.u32 8, %s15
      %p170 = scmp.lt.s32.totalorder %s169, 15
      %s171 = scalar_select %p170, %s169, 15
      %s172 = smul.addr %s171, 4
      %s173 = scalar_lea.vmem %s0, %s172
      %p174 = pneg %p36
      %p175 = pneg %p33
      %p176 = pneg %p57
      %p177 = pneg %p54
      %p178 = pneg %p78
      %p179 = pneg %p75
      %p180 = pneg %p99
      %p181 = pneg %p96
      %p182 = pneg %p125
      %p183 = pneg %p122
      %s184 = smul.u32 8, %s15
      %p185 = scmp.lt.s32.totalorder %s184, 15
      %s186 = scalar_select %p185, %s184, 15
      %s187 = smul.addr %s186, 4
      %s188 = scalar_lea.vmem %s4, %s187
      %s189 = smul.u32 8, %s15
      %p190 = scmp.lt.s32.totalorder %s189, 15
      %s191 = scalar_select %p190, %s189, 15
      %s192 = smul.addr %s191, 4
      %s193 = scalar_lea.vmem %s0, %s192
      %s194 = smul.u32 8, %s15
      %s195 = smul.u32 8, %s15
      %p196 = scmp.lt.s32.totalorder %s195, 15
      %s197 = scalar_select %p196, %s195, 15
      %s198 = smul.addr %s197, 4
      %s199 = scalar_lea.vmem %s4, %s198
      %s200 = smul.u32 8, %s15
      %v202 = vld [vmem:[%s193] sm:$0xf]
      %v203 = vld [vmem:[%s193 + $0x4] sm:$0xf]
      %v204 = vld [vmem:[%s193 + $0x8] sm:$0xf]
      %v205 = vld [vmem:[%s193 + $0xc] sm:$0xf]
      %v206 = vld [vmem:[%s193 + $0x10] sm:$0xf]
      %v207 = vld [vmem:[%s193 + $0x14] sm:$0xf]
      %v208 = vld [vmem:[%s193 + $0x18] sm:$0xf]
      %v209 = vld [vmem:[%s193 + $0x1c] sm:$0xf]
      %v210 = vld [vmem:[%s1] sm:$0xf]
      %v211 = vld [vmem:[%s1 + $0x4] sm:$0xf]
      %v212 = vld [vmem:[%s1 + $0x8] sm:$0xf]
      %v213 = vld [vmem:[%s1 + $0xc] sm:$0xf]
      %v222 = vunpack.c.l.b16 %v202
      %v223 = vunpack.c.l.b16 %v203
      %v224 = vunpack.c.l.b16 %v204
      %v225 = vunpack.c.l.b16 %v205
      %v226 = vunpack.c.l.b16 %v206
      %v227 = vunpack.c.l.b16 %v207
      %v228 = vunpack.c.l.b16 %v208
      %v229 = vunpack.c.l.b16 %v209
      %v230 = vpack.c.b16 %v223, %v222
      %v231 = vpack.c.b16 %v225, %v224
      %v232 = vpack.c.b16 %v227, %v226
      %v233 = vpack.c.b16 %v229, %v228
      %v238 = vunpack.c.l.b16 %v210
      %v239 = vunpack.c.l.b16 %v211
      %v240 = vunpack.c.l.b16 %v212
      %v241 = vunpack.c.l.b16 %v213
      %v242 = vpack.c.b16 %v239, %v238
      %v243 = vpack.c.b16 %v241, %v240
      %vm246 = vcmask 261120
      %v248 = vsel %vm246, %v230, 0
      %v251 = vsel %vm246, %v231, 0
      %v254 = vsel %vm246, %v232, 0
      %v257 = vsel %vm246, %v233, 0
      %259 = vmatpush.bf16.msra.mxu0 0
      %260 = vmatpush.bf16.msra.mxu0 0
      %261 = vmatpush.bf16.msra.mxu0 0
      %262 = vmatpush.bf16.msra.mxu0 0
      %263 = vmatpush.bf16.msra.mxu0 0
      %264 = vmatpush.bf16.msra.mxu0 0
      %265 = vmatpush.bf16.msra.mxu0 %v243
      %266 = vmatpush.bf16.msra.mxu0 %v242
      %267 = vmatmul.bf16.gmra.mxu0 %v248
      %v268 = vpop.f32.mrf.mxu0
      %v269 = vadd.f32 0.0, %v268
      %v270 = vpop.f32.mrf.mxu0
      %v271 = vadd.f32 0.0, %v270
      %272 = vmatmul.bf16.gmra.mxu0 %v251
      %v273 = vpop.f32.mrf.mxu0
      %v274 = vadd.f32 0.0, %v273
      %v275 = vpop.f32.mrf.mxu0
      %v276 = vadd.f32 0.0, %v275
      %277 = vmatmul.bf16.gmra.mxu0 %v254
      %v278 = vpop.f32.mrf.mxu0
      %v279 = vadd.f32 0.0, %v278
      %v280 = vpop.f32.mrf.mxu0
      %v281 = vadd.f32 0.0, %v280
      %282 = vmatmul.bf16.gmra.mxu0 %v257
      %v283 = vpop.f32.mrf.mxu0
      %v284 = vadd.f32 0.0, %v283
      %v285 = vpop.f32.mrf.mxu0
      %v286 = vadd.f32 0.0, %v285
      %287 = vdwg.mxu0
      %v288 = vld [vmem:[%s2] sm:$0x1]
      %v290 = vperm.slane %v288, 0
      %v292 = vmul.f32 %v269, %v290
      %v293 = vmul.f32 %v271, %v290
      %v294 = vmul.f32 %v274, %v290
      %v295 = vmul.f32 %v276, %v290
      %v296 = vmul.f32 %v279, %v290
      %v297 = vmul.f32 %v281, %v290
      %v298 = vmul.f32 %v284, %v290
      %v299 = vmul.f32 %v286, %v290
      %v300 = vld [vmem:[%s3] sm:$0x1]
      %v302 = vperm.slane %v300, 0
      %v304 = vadd.f32 %v292, %v302
      %v305 = vadd.f32 %v293, %v302
      %v306 = vadd.f32 %v294, %v302
      %v307 = vadd.f32 %v295, %v302
      %v308 = vadd.f32 %v296, %v302
      %v309 = vadd.f32 %v297, %v302
      %v310 = vadd.f32 %v298, %v302
      %v311 = vadd.f32 %v299, %v302
      %v312 = vpack.c.bf16 %v304, %v304
      %v313 = vpack.c.bf16 %v305, %v305
      %v314 = vpack.c.bf16 %v306, %v306
      %v315 = vpack.c.bf16 %v307, %v307
      %v316 = vpack.c.bf16 %v308, %v308
      %v317 = vpack.c.bf16 %v309, %v309
      %v318 = vpack.c.bf16 %v310, %v310
      %v319 = vpack.c.bf16 %v311, %v311
      %vm320 = vcmask 519168
      %321 = vst.msk [vmem:[%s199] sm:$0xf] %vm320, %v312
      %322 = vst.msk [vmem:[%s199 + $0x4] sm:$0xf] %vm320, %v313
      %323 = vst.msk [vmem:[%s199 + $0x8] sm:$0xf] %vm320, %v314
      %324 = vst.msk [vmem:[%s199 + $0xc] sm:$0xf] %vm320, %v315
      %325 = vst.msk [vmem:[%s199 + $0x10] sm:$0xf] %vm320, %v316
      %326 = vst.msk [vmem:[%s199 + $0x14] sm:$0xf] %vm320, %v317
      %327 = vst.msk [vmem:[%s199 + $0x18] sm:$0xf] %vm320, %v318
      %328 = vst.msk [vmem:[%s199 + $0x1c] sm:$0xf] %vm320, %v319
      %s329 = smul.u32 8, %s15
      %p330 = scmp.lt.s32.totalorder %s329, 15
      %s331 = scalar_select %p330, %s329, 15
      %s332 = smul.addr %s331, 4
      %s333 = scalar_lea.vmem %s4, %s332
      // Predicated region
      $region37: #{_lambda_.37} parent=35 // pred_check
        %p334 = pneg %p122
      $region38: #{_lambda_.37} parent=35 // pred_check_branch
        %336 = sbr.rel (%p334) target = $region40
      $region39: #{_lambda_.37} parent=35 // pred_region
        %s337 = smul.u32 8, %s15
      $region40: #{_lambda_.37} parent=35 // pred_fallthru
        _
    $region36: #{_lambda_.37} parent=5 // pred_fallthru
      _
    %p338 = scmp.le.s32.totalorder 2, %s10
    // Predicated region
    $region41: #{_lambda_.37} parent=5 // pred_check
      %p339 = pneg %p338
    $region42: #{_lambda_.37} parent=5 // pred_check_branch
      %341 = sbr.rel (%p339) target = $region44
    $region43: #{_lambda_.37} parent=5 // pred_region
      %s342 = ssub.s32 %s10, 2
      // Predicated region
      $region45: #{_lambda_.37} parent=43 // pred_check
        %p343 = pneg %p128
      $region46: #{_lambda_.37} parent=43 // pred_check_branch
        %345 = sbr.rel (%p343) target = $region48
      $region47: #{_lambda_.37} parent=43 // pred_region
        %s346 = smul.u32 8, %s16
        %p347 = scmp.lt.s32.totalorder %s346, 15
        %s348 = scalar_select %p347, %s346, 15
        %s349 = smul.addr %s348, 4
        %s350 = scalar_lea.vmem %s4, %s349
      $region48: #{_lambda_.37} parent=43 // pred_fallthru
        _
    $region44: #{_lambda_.37} parent=5 // pred_fallthru
      _
  $region6: #{_lambda_.37} parent=0 // loop_footer
    %s14 = sadd.s32 1, %s10
  $region7: #{_lambda_.37} parent=0 // loop_footer_branch
    %9 = sbr.rel target = $region3
  $region8: #{_lambda_.37} parent=0 // loop_exit
    _

// kernel: _lambda_.43
$region0: #{_lambda_.43}
  #allocation0 [shape = 'u32[]', space=smem, size = 0x4, offset = 0x4, fixed_abs, tag = 'smem constant byte address 0x4 - core index']
  #allocation1 [shape = 'u32[72,128]{1,0:T(1,128)}', space=vmem, size = 0x9000, scoped, tag = 'internal scratch']
  %s0 = inlined_call_operand.vmem [shape: bf16[2,64,64], index: 0, kind: input, shape index: {}]
  %s1 = inlined_call_operand.vmem [shape: f32[64,10], index: 1, kind: input, shape index: {}]
  %s2 = inlined_call_operand.vmem [shape: f32[1,10], index: 2, kind: input, shape index: {}]
  %s3 = inlined_call_operand.hbm [shape: f32[2,10], index: 3, kind: output, shape index: {}]
  %s4 = sld [smem:[#allocation0]]
  $region22: #{_lambda_.43} parent=0
    _
  %s6 = ssub.s32 1, %s4
  %s7 = scalar_select 0, %s6, %s4
  $region1: #{_lambda_.43} parent=0
    #allocation2 [shape = 'u8[1024]{0}', space=vmem, size = 0x400, scoped, tag = 'output window, operand 0, single buffered']
    #allocation3 [shape = 's32[1]{0}', space=sflag, size = 0x4, scoped, tag = 'scoped memory for _lambda_.43']
    %8 = vsyncpa [#allocation3], 0
    // Predicated region
    $region2: #{_lambda_.43} parent=1 // pred_check
      _
    $region3: #{_lambda_.43} parent=1 // pred_check_branch
      %10 = sbr.rel (0) target = $region5
    $region4: #{_lambda_.43} parent=1 // pred_region
      _
    $region5: #{_lambda_.43} parent=1 // pred_fallthru
      _
    // Predicated region
    $region6: #{_lambda_.43} parent=1 // pred_check
      _
    $region7: #{_lambda_.43} parent=1 // pred_check_branch
      %12 = sbr.rel (0) target = $region9
    $region8: #{_lambda_.43} parent=1 // pred_region
      _
    $region9: #{_lambda_.43} parent=1 // pred_fallthru
      _
    // Predicated region
    $region10: #{_lambda_.43} parent=1 // pred_check
      _
    $region11: #{_lambda_.43} parent=1 // pred_check_branch
      %14 = sbr.rel (0) target = $region13
    $region12: #{_lambda_.43} parent=1 // pred_region
      _
    $region13: #{_lambda_.43} parent=1 // pred_fallthru
      _
    %v15 = vld [vmem:[%s0] sm:$0xf]
    %v16 = vld [vmem:[%s0 + $0x4] sm:$0xf]
    %v17 = vld [vmem:[%s0 + $0x8] sm:$0xf]
    %v18 = vld [vmem:[%s0 + $0xc] sm:$0xf]
    %v19 = vld [vmem:[%s0 + $0x10] sm:$0xf]
    %v20 = vld [vmem:[%s0 + $0x14] sm:$0xf]
    %v21 = vld [vmem:[%s0 + $0x18] sm:$0xf]
    %v22 = vld [vmem:[%s0 + $0x1c] sm:$0xf]
    %v23 = vld [vmem:[%s0 + $0x20] sm:$0xf]
    %v24 = vld [vmem:[%s0 + $0x24] sm:$0xf]
    %v25 = vld [vmem:[%s0 + $0x28] sm:$0xf]
    %v26 = vld [vmem:[%s0 + $0x2c] sm:$0xf]
    %v27 = vld [vmem:[%s0 + $0x30] sm:$0xf]
    %v28 = vld [vmem:[%s0 + $0x34] sm:$0xf]
    %v29 = vld [vmem:[%s0 + $0x38] sm:$0xf]
    %v30 = vld [vmem:[%s0 + $0x3c] sm:$0xf]
    %v31 = vunpack.c.l.bf16 %v15
    %v32 = vunpack.c.l.bf16 %v16
    %v33 = vunpack.c.l.bf16 %v17
    %v34 = vunpack.c.l.bf16 %v18
    %v35 = vunpack.c.l.bf16 %v19
    %v36 = vunpack.c.l.bf16 %v20
    %v37 = vunpack.c.l.bf16 %v21
    %v38 = vunpack.c.l.bf16 %v22
    %v39 = vunpack.c.l.bf16 %v23
    %v40 = vunpack.c.l.bf16 %v24
    %v41 = vunpack.c.l.bf16 %v25
    %v42 = vunpack.c.l.bf16 %v26
    %v43 = vunpack.c.l.bf16 %v27
    %v44 = vunpack.c.l.bf16 %v28
    %v45 = vunpack.c.l.bf16 %v29
    %v46 = vunpack.c.l.bf16 %v30
    %vm47 = vcmask 523264
    %v48 = vsel %vm47, %v31, 0.0
    %v49 = vsel %vm47, %v32, 0.0
    %v50 = vadd.f32 %v48, %v49
    %v51 = vsel %vm47, %v33, 0.0
    %v52 = vadd.f32 %v50, %v51
    %v53 = vsel %vm47, %v34, 0.0
    %v54 = vadd.f32 %v52, %v53
    %v55 = vsel %vm47, %v35, 0.0
    %v56 = vadd.f32 %v54, %v55
    %v57 = vsel %vm47, %v36, 0.0
    %v58 = vadd.f32 %v56, %v57
    %v59 = vsel %vm47, %v37, 0.0
    %v60 = vadd.f32 %v58, %v59
    %v61 = vsel %vm47, %v38, 0.0
    %v62 = vadd.f32 %v60, %v61
    %v63 = vrot.slane %v62, 4
    %v64 = vadd.f32 %v62, %v63
    %v65 = vrot.slane %v64, 2
    %v66 = vadd.f32 %v64, %v65
    %v67 = vrot.slane %v66, 1
    %v68 = vadd.f32 %v66, %v67
    %v69 = vsel %vm47, %v39, 0.0
    %v70 = vsel %vm47, %v40, 0.0
    %v71 = vadd.f32 %v69, %v70
    %v72 = vsel %vm47, %v41, 0.0
    %v73 = vadd.f32 %v71, %v72
    %v74 = vsel %vm47, %v42, 0.0
    %v75 = vadd.f32 %v73, %v74
    %v76 = vsel %vm47, %v43, 0.0
    %v77 = vadd.f32 %v75, %v76
    %v78 = vsel %vm47, %v44, 0.0
    %v79 = vadd.f32 %v77, %v78
    %v80 = vsel %vm47, %v45, 0.0
    %v81 = vadd.f32 %v79, %v80
    %v82 = vsel %vm47, %v46, 0.0
    %v83 = vadd.f32 %v81, %v82
    %v84 = vrot.slane %v83, 4
    %v85 = vadd.f32 %v83, %v84
    %v86 = vrot.slane %v85, 2
    %v87 = vadd.f32 %v85, %v86
    %v88 = vrot.slane %v87, 1
    %v89 = vadd.f32 %v87, %v88
    %v90 = vrcp.pop 64.0
    %v91 = vmul.f32 64.0, %v90
    %v92 = vsub.f32 1.0, %v91
    %v93 = vmul.f32 %v90, %v92
    %v94 = vadd.f32 %v90, %v93
    %vm95 = vweird.f32 %v90
    %v96 = vsel %vm95, %v90, %v94
    %v97 = vmul.f32 %v68, %v96
    %v98 = vmul.f32 %v89, %v96
    %v99 = vld [vmem:[%s1] sm:$0xff]
    %v100 = vld [vmem:[%s1 + $0x8] sm:$0xff]
    %v101 = vld [vmem:[%s1 + $0x10] sm:$0xff]
    %v102 = vld [vmem:[%s1 + $0x18] sm:$0xff]
    %v103 = vld [vmem:[%s1 + $0x20] sm:$0xff]
    %v104 = vld [vmem:[%s1 + $0x28] sm:$0xff]
    %v105 = vld [vmem:[%s1 + $0x30] sm:$0xff]
    %v106 = vld [vmem:[%s1 + $0x38] sm:$0xff]
    %v107 = vld [vmem:[%s2] sm:$0x1]
    %v109 = vperm.slane %v107, 0
    %vm113 = vcmask 1041409
    %v114 = vsel %vm113, %v98, %v97
    %v115 = vsel %vm47, %v114, 0
    %117 = vmatpush.msra.mxu0 0.0
    %118 = vmatpush.msra.mxu0 0.0
    %119 = vmatpush.msra.mxu0 0.0
    %120 = vmatpush.msra.mxu0 0.0
    %121 = vmatpush.msra.mxu0 0.0
    %122 = vmatpush.msra.mxu0 0.0
    %123 = vmatpush.msra.mxu0 0.0
    %124 = vmatpush.msra.mxu0 0.0
    %125 = vmatpush.msra.mxu0 %v106
    %126 = vmatpush.msra.mxu0 %v105
    %127 = vmatpush.msra.mxu0 %v104
    %128 = vmatpush.msra.mxu0 %v103
    %129 = vmatpush.msra.mxu0 %v102
    %130 = vmatpush.msra.mxu0 %v101
    %131 = vmatpush.msra.mxu0 %v100
    %132 = vmatpush.msra.mxu0 %v99
    %133 = vmatmul.f32.gmra.mxu0 %v115
    %v134 = vpop.f32.mrf.mxu0
    %v135 = vadd.f32 %v109, %v134
    %136 = vdwg.mxu0
    %vm137 = vcmask 74752
    %138 = vst.msk [vmem:[#allocation2] sm:$0x3] %vm137, %v135
    // Predicated region
    $region14: #{_lambda_.43} parent=1 // pred_check
      _
    $region15: #{_lambda_.43} parent=1 // pred_check_branch
      %140 = sbr.rel (0) target = $region17
    $region16: #{_lambda_.43} parent=1 // pred_region
      %142 = vsyncadd [#allocation3], 0
      %s144 = sshll.u32 [#allocation2], 4
      %s145 = int_to_ptr.vmem [resolvable:$true] %s144
      %s146 = sshll.u32 %s3, 4
      %s147 = int_to_ptr.hbm [resolvable:$true] %s146
      %149 = dma.vmem_to_hbm [thread:$0]  %s145, 32, %s147, [#allocation3]
    $region17: #{_lambda_.43} parent=1 // pred_fallthru
      _
    // Predicated region
    $region18: #{_lambda_.43} parent=1 // pred_check
      _
    $region19: #{_lambda_.43} parent=1 // pred_check_branch
      %151 = sbr.rel (0) target = $region21
    $region20: #{_lambda_.43} parent=1 // pred_region
      %153 = dma.done [#allocation3], 32
    $region21: #{_lambda_.43} parent=1 // pred_fallthru
      _
    %154 = vsyncpa [#allocation3], 1

// kernel: _lambda_.39
$region0: #{_lambda_.39}
  #allocation0 [shape = 'u32[]', space=smem, size = 0x4, offset = 0x4, fixed_abs, tag = 'smem constant byte address 0x4 - core index']
  #allocation1 [shape = 'u32[72,128]{1,0:T(1,128)}', space=vmem, size = 0x9000, scoped, tag = 'internal scratch']
  %s0 = inlined_call_operand.vmem [shape: bf16[128,576], index: 0, kind: input, shape index: {}]
  %s1 = inlined_call_operand.vmem [shape: bf16[576,64], index: 1, kind: input, shape index: {}]
  %s2 = inlined_call_operand.vmem [shape: f32[1,64], index: 2, kind: input, shape index: {}]
  %s3 = inlined_call_operand.vmem [shape: f32[1,64], index: 3, kind: input, shape index: {}]
  %s4 = inlined_call_operand.vmem [shape: bf16[128,64], index: 4, kind: output, shape index: {}]
  %s5 = sld [smem:[#allocation0]]
  $region49: #{_lambda_.39} parent=0
    _
  %s7 = ssub.s32 1, %s5
  %s8 = scalar_select 0, %s7, %s5
  loop: start=0, step=1, limit=4
  $region2: #{_lambda_.39} parent=0 // loop_pre_header
    _
  $region3: #{_lambda_.39} parent=0 // loop_header
    %s10 = sphi 0, %s14
    %p11 = scmp.ge.s32.totalorder %s10, 4
    %s20 = sphi 0, %s22
    %s23 = sphi 0, %s20
    %s24 = sphi 0, %s23
    %s40 = sphi 0, %s24
    %s44 = sphi 0, %s44
    %s46 = sphi 0, %s44
    %s47 = sphi 0, %s46
    %s61 = sphi 0, %s47
    %s65 = sphi 0, %s65
    %s67 = sphi 0, %s65
    %s68 = sphi 0, %s67
    %s82 = sphi 0, %s68
    %s86 = sphi 0, %s86
    %s88 = sphi 0, %s86
    %s89 = sphi 0, %s88
    %s103 = sphi 0, %s89
    %s109 = sphi 0, %s111
    %s112 = sphi 0, %s109
    %s113 = sphi 0, %s112
    %s129 = sphi 0, %s113
  $region4: #{_lambda_.39} parent=0 // loop_header_branch
    %13 = sbr.rel (%p11) target = $region8
  $region5: #{_lambda_.39} parent=0 // loop_body
    %s15 = ssub.s32 %s10, 1
    %s16 = ssub.s32 %s10, 2
    %s17 = sadd.s32 %s10, 1
    %s18 = ssub.s32 %s10, %s17
    %p19 = scmp.eq.s32.totalorder %s18, 0
    %s21 = sadd.s32 %s20, 1
    %s22 = scalar_select %p19, %s20, %s21
    %p25 = pneg %p19
    %p26 = scmp.eq.s32.totalorder %s10, 1
    %p27 = por %p25, %p26
    %p28 = scmp.ne.s32.totalorder %s20, %s23
    %p29 = scmp.eq.s32.totalorder %s10, 0
    %p30 = por %p28, %p29
    %p31 = scmp.ne.s32.totalorder %s20, %s23
    %p32 = scmp.eq.s32.totalorder %s15, 1
    %p33 = por %p31, %p32
    %p34 = scmp.ne.s32.totalorder %s23, %s24
    %p35 = scmp.eq.s32.totalorder %s15, 0
    %p36 = por %p34, %p35
    %p37 = scmp.ne.s32.totalorder %s23, %s24
    %p38 = scmp.eq.s32.totalorder %s16, 1
    %p39 = por %p37, %p38
    %p41 = scmp.ne.s32.totalorder %s24, %s40
    %p42 = scmp.eq.s32.totalorder %s16, 0
    %p43 = por %p41, %p42
    %s45 = sadd.s32 %s44, 1
    %p48 = scmp.eq.s32.totalorder %s10, 1
    %p49 = scmp.ne.s32.totalorder %s44, %s46
    %p50 = scmp.eq.s32.totalorder %s10, 0
    %p51 = por %p49, %p50
    %p52 = scmp.ne.s32.totalorder %s44, %s46
    %p53 = scmp.eq.s32.totalorder %s15, 1
    %p54 = por %p52, %p53
    %p55 = scmp.ne.s32.totalorder %s46, %s47
    %p56 = scmp.eq.s32.totalorder %s15, 0
    %p57 = por %p55, %p56
    %p58 = scmp.ne.s32.totalorder %s46, %s47
    %p59 = scmp.eq.s32.totalorder %s16, 1
    %p60 = por %p58, %p59
    %p62 = scmp.ne.s32.totalorder %s47, %s61
    %p63 = scmp.eq.s32.totalorder %s16, 0
    %p64 = por %p62, %p63
    %s66 = sadd.s32 %s65, 1
    %p69 = scmp.eq.s32.totalorder %s10, 1
    %p70 = scmp.ne.s32.totalorder %s65, %s67
    %p71 = scmp.eq.s32.totalorder %s10, 0
    %p72 = por %p70, %p71
    %p73 = scmp.ne.s32.totalorder %s65, %s67
    %p74 = scmp.eq.s32.totalorder %s15, 1
    %p75 = por %p73, %p74
    %p76 = scmp.ne.s32.totalorder %s67, %s68
    %p77 = scmp.eq.s32.totalorder %s15, 0
    %p78 = por %p76, %p77
    %p79 = scmp.ne.s32.totalorder %s67, %s68
    %p80 = scmp.eq.s32.totalorder %s16, 1
    %p81 = por %p79, %p80
    %p83 = scmp.ne.s32.totalorder %s68, %s82
    %p84 = scmp.eq.s32.totalorder %s16, 0
    %p85 = por %p83, %p84
    %s87 = sadd.s32 %s86, 1
    %p90 = scmp.eq.s32.totalorder %s10, 1
    %p91 = scmp.ne.s32.totalorder %s86, %s88
    %p92 = scmp.eq.s32.totalorder %s10, 0
    %p93 = por %p91, %p92
    %p94 = scmp.ne.s32.totalorder %s86, %s88
    %p95 = scmp.eq.s32.totalorder %s15, 1
    %p96 = por %p94, %p95
    %p97 = scmp.ne.s32.totalorder %s88, %s89
    %p98 = scmp.eq.s32.totalorder %s15, 0
    %p99 = por %p97, %p98
    %p100 = scmp.ne.s32.totalorder %s88, %s89
    %p101 = scmp.eq.s32.totalorder %s16, 1
    %p102 = por %p100, %p101
    %p104 = scmp.ne.s32.totalorder %s89, %s103
    %p105 = scmp.eq.s32.totalorder %s16, 0
    %p106 = por %p104, %p105
    %s107 = ssub.s32 %s10, %s17
    %p108 = scmp.eq.s32.totalorder %s107, 0
    %s110 = sadd.s32 %s109, 1
    %s111 = scalar_select %p108, %s109, %s110
    %p114 = pneg %p108
    %p115 = scmp.eq.s32.totalorder %s10, 1
    %p116 = por %p114, %p115
    %p117 = scmp.ne.s32.totalorder %s109, %s112
    %p118 = scmp.eq.s32.totalorder %s10, 0
    %p119 = por %p117, %p118
    %p120 = scmp.ne.s32.totalorder %s109, %s112
    %p121 = scmp.eq.s32.totalorder %s15, 1
    %p122 = por %p120, %p121
    %p123 = scmp.ne.s32.totalorder %s112, %s113
    %p124 = scmp.eq.s32.totalorder %s15, 0
    %p125 = por %p123, %p124
    %p126 = scmp.ne.s32.totalorder %s112, %s113
    %p127 = scmp.eq.s32.totalorder %s16, 1
    %p128 = por %p126, %p127
    %p130 = scmp.ne.s32.totalorder %s113, %s129
    %p131 = scmp.eq.s32.totalorder %s16, 0
    %p132 = por %p130, %p131
    %p133 = scmp.le.s32.totalorder 1, %s10
    %p134 = scmp.lt.s32.totalorder %s10, 3
    %p135 = pnand %p133, %p134
    %p136 = pneg %p135
    // Predicated region
    $region9: #{_lambda_.39} parent=5 // pred_check
      _
    $region10: #{_lambda_.39} parent=5 // pred_check_branch
      %138 = sbr.rel (%p135) target = $region12
    $region11: #{_lambda_.39} parent=5 // pred_region
      %s139 = ssub.s32 %s10, 1
      // Predicated region
      $region13: #{_lambda_.39} parent=11 // pred_check
        %p140 = pneg %p57
      $region14: #{_lambda_.39} parent=11 // pred_check_branch
        %142 = sbr.rel (%p140) target = $region16
      $region15: #{_lambda_.39} parent=11 // pred_region
        _
      $region16: #{_lambda_.39} parent=11 // pred_fallthru
        _
      // Predicated region
      $region17: #{_lambda_.39} parent=11 // pred_check
        %p143 = pneg %p78
      $region18: #{_lambda_.39} parent=11 // pred_check_branch
        %145 = sbr.rel (%p143) target = $region20
      $region19: #{_lambda_.39} parent=11 // pred_region
        _
      $region20: #{_lambda_.39} parent=11 // pred_fallthru
        _
      // Predicated region
      $region21: #{_lambda_.39} parent=11 // pred_check
        %p146 = pneg %p99
      $region22: #{_lambda_.39} parent=11 // pred_check_branch
        %148 = sbr.rel (%p146) target = $region24
      $region23: #{_lambda_.39} parent=11 // pred_region
        _
      $region24: #{_lambda_.39} parent=11 // pred_fallthru
        _
    $region12: #{_lambda_.39} parent=5 // pred_fallthru
      _
    %p149 = scmp.lt.s32.totalorder %s10, 2
    // Predicated region
    $region25: #{_lambda_.39} parent=5 // pred_check
      %p150 = pneg %p149
    $region26: #{_lambda_.39} parent=5 // pred_check_branch
      %152 = sbr.rel (%p150) target = $region28
    $region27: #{_lambda_.39} parent=5 // pred_region
      // Predicated region
      $region29: #{_lambda_.39} parent=27 // pred_check
        %p153 = pneg %p30
      $region30: #{_lambda_.39} parent=27 // pred_check_branch
        %155 = sbr.rel (%p153) target = $region32
      $region31: #{_lambda_.39} parent=27 // pred_region
        %s156 = smul.u32 8, %s10
        %p157 = scmp.lt.s32.totalorder %s156, 15
        %s158 = scalar_select %p157, %s156, 15
        %s159 = smul.addr %s158, 5
        %s160 = smul.addr %s159, 4
        %s161 = scalar_lea.vmem %s0, %s160
        %s162 = smul.u32 8, %s10
      $region32: #{_lambda_.39} parent=27 // pred_fallthru
        _
    $region28: #{_lambda_.39} parent=5 // pred_fallthru
      _
    %p163 = scmp.le.s32.totalorder 1, %s10
    %p164 = scmp.lt.s32.totalorder %s10, 3
    %p165 = pnand %p163, %p164
    %p166 = pneg %p165
    // Predicated region
    $region33: #{_lambda_.39} parent=5 // pred_check
      _
    $region34: #{_lambda_.39} parent=5 // pred_check_branch
      %168 = sbr.rel (%p165) target = $region36
    $region35: #{_lambda_.39} parent=5 // pred_region
      %s169 = ssub.s32 %s10, 1
      %s170 = smul.u32 8, %s15
      %p171 = scmp.lt.s32.totalorder %s170, 15
      %s172 = scalar_select %p171, %s170, 15
      %s173 = smul.addr %s172, 5
      %s174 = smul.addr %s173, 4
      %s175 = scalar_lea.vmem %s0, %s174
      %p176 = pneg %p36
      %p177 = pneg %p33
      %p178 = pneg %p57
      %p179 = pneg %p54
      %p180 = pneg %p78
      %p181 = pneg %p75
      %p182 = pneg %p99
      %p183 = pneg %p96
      %p184 = pneg %p125
      %p185 = pneg %p122
      %s186 = smul.u32 8, %s15
      %p187 = scmp.lt.s32.totalorder %s186, 15
      %s188 = scalar_select %p187, %s186, 15
      %s189 = smul.addr %s188, 4
      %s190 = scalar_lea.vmem %s4, %s189
      %s191 = smul.u32 8, %s15
      %p192 = scmp.lt.s32.totalorder %s191, 15
      %s193 = scalar_select %p192, %s191, 15
      %s194 = smul.addr %s193, 5
      %s195 = smul.addr %s194, 4
      %s196 = scalar_lea.vmem %s0, %s195
      %s197 = smul.u32 8, %s15
      %s198 = smul.u32 8, %s15
      %p199 = scmp.lt.s32.totalorder %s198, 15
      %s200 = scalar_select %p199, %s198, 15
      %s201 = smul.addr %s200, 4
      %s202 = scalar_lea.vmem %s4, %s201
      %s203 = smul.u32 8, %s15
      %v205 = vld [vmem:[%s196] sm:$0xff]
      %v206 = vld [vmem:[%s196 + $0x8] sm:$0xff]
      %v207 = vld [vmem:[%s196 + $0x10] sm:$0xf]
      %v208 = vld [vmem:[%s196 + $0x14] sm:$0xff]
      %v209 = vld [vmem:[%s196 + $0x1c] sm:$0xff]
      %v210 = vld [vmem:[%s196 + $0x24] sm:$0xf]
      %v211 = vld [vmem:[%s196 + $0x28] sm:$0xff]
      %v212 = vld [vmem:[%s196 + $0x30] sm:$0xff]
      %v213 = vld [vmem:[%s196 + $0x38] sm:$0xf]
      %v214 = vld [vmem:[%s196 + $0x3c] sm:$0xff]
      %v215 = vld [vmem:[%s196 + $0x44] sm:$0xff]
      %v216 = vld [vmem:[%s196 + $0x4c] sm:$0xf]
      %v217 = vld [vmem:[%s196 + $0x50] sm:$0xff]
      %v218 = vld [vmem:[%s196 + $0x58] sm:$0xff]
      %v219 = vld [vmem:[%s196 + $0x60] sm:$0xf]
      %v220 = vld [vmem:[%s196 + $0x64] sm:$0xff]
      %v221 = vld [vmem:[%s196 + $0x6c] sm:$0xff]
      %v222 = vld [vmem:[%s196 + $0x74] sm:$0xf]
      %v223 = vld [vmem:[%s196 + $0x78] sm:$0xff]
      %v224 = vld [vmem:[%s196 + $0x80] sm:$0xff]
      %v225 = vld [vmem:[%s196 + $0x88] sm:$0xf]
      %v226 = vld [vmem:[%s196 + $0x8c] sm:$0xff]
      %v227 = vld [vmem:[%s196 + $0x94] sm:$0xff]
      %v228 = vld [vmem:[%s196 + $0x9c] sm:$0xf]
      %v229 = vld [vmem:[%s1] sm:$0xf]
      %v230 = vld [vmem:[%s1 + $0x4] sm:$0xf]
      %v231 = vld [vmem:[%s1 + $0x8] sm:$0xf]
      %v232 = vld [vmem:[%s1 + $0xc] sm:$0xf]
      %v233 = vld [vmem:[%s1 + $0x10] sm:$0xf]
      %v234 = vld [vmem:[%s1 + $0x14] sm:$0xf]
      %v235 = vld [vmem:[%s1 + $0x18] sm:$0xf]
      %v236 = vld [vmem:[%s1 + $0x1c] sm:$0xf]
      %v237 = vld [vmem:[%s1 + $0x20] sm:$0xf]
      %v238 = vld [vmem:[%s1 + $0x24] sm:$0xf]
      %v239 = vld [vmem:[%s1 + $0x28] sm:$0xf]
      %v240 = vld [vmem:[%s1 + $0x2c] sm:$0xf]
      %v241 = vld [vmem:[%s1 + $0x30] sm:$0xf]
      %v242 = vld [vmem:[%s1 + $0x34] sm:$0xf]
      %v243 = vld [vmem:[%s1 + $0x38] sm:$0xf]
      %v244 = vld [vmem:[%s1 + $0x3c] sm:$0xf]
      %v245 = vld [vmem:[%s1 + $0x40] sm:$0xf]
      %v246 = vld [vmem:[%s1 + $0x44] sm:$0xf]
      %v247 = vld [vmem:[%s1 + $0x48] sm:$0xf]
      %v248 = vld [vmem:[%s1 + $0x4c] sm:$0xf]
      %v249 = vld [vmem:[%s1 + $0x50] sm:$0xf]
      %v250 = vld [vmem:[%s1 + $0x54] sm:$0xf]
      %v251 = vld [vmem:[%s1 + $0x58] sm:$0xf]
      %v252 = vld [vmem:[%s1 + $0x5c] sm:$0xf]
      %v253 = vld [vmem:[%s1 + $0x60] sm:$0xf]
      %v254 = vld [vmem:[%s1 + $0x64] sm:$0xf]
      %v255 = vld [vmem:[%s1 + $0x68] sm:$0xf]
      %v256 = vld [vmem:[%s1 + $0x6c] sm:$0xf]
      %v257 = vld [vmem:[%s1 + $0x70] sm:$0xf]
      %v258 = vld [vmem:[%s1 + $0x74] sm:$0xf]
      %v259 = vld [vmem:[%s1 + $0x78] sm:$0xf]
      %v260 = vld [vmem:[%s1 + $0x7c] sm:$0xf]
      %v261 = vld [vmem:[%s1 + $0x80] sm:$0xf]
      %v262 = vld [vmem:[%s1 + $0x84] sm:$0xf]
      %v263 = vld [vmem:[%s1 + $0x88] sm:$0xf]
      %v264 = vld [vmem:[%s1 + $0x8c] sm:$0xf]
      %v265 = vld [vmem:[%s1 + $0x90] sm:$0xf]
      %v266 = vld [vmem:[%s1 + $0x94] sm:$0xf]
      %v267 = vld [vmem:[%s1 + $0x98] sm:$0xf]
      %v268 = vld [vmem:[%s1 + $0x9c] sm:$0xf]
      %v269 = vld [vmem:[%s1 + $0xa0] sm:$0xf]
      %v270 = vld [vmem:[%s1 + $0xa4] sm:$0xf]
      %v271 = vld [vmem:[%s1 + $0xa8] sm:$0xf]
      %v272 = vld [vmem:[%s1 + $0xac] sm:$0xf]
      %v273 = vld [vmem:[%s1 + $0xb0] sm:$0xf]
      %v274 = vld [vmem:[%s1 + $0xb4] sm:$0xf]
      %v275 = vld [vmem:[%s1 + $0xb8] sm:$0xf]
      %v276 = vld [vmem:[%s1 + $0xbc] sm:$0xf]
      %v277 = vld [vmem:[%s1 + $0xc0] sm:$0xf]
      %v278 = vld [vmem:[%s1 + $0xc4] sm:$0xf]
      %v279 = vld [vmem:[%s1 + $0xc8] sm:$0xf]
      %v280 = vld [vmem:[%s1 + $0xcc] sm:$0xf]
      %v281 = vld [vmem:[%s1 + $0xd0] sm:$0xf]
      %v282 = vld [vmem:[%s1 + $0xd4] sm:$0xf]
      %v283 = vld [vmem:[%s1 + $0xd8] sm:$0xf]
      %v284 = vld [vmem:[%s1 + $0xdc] sm:$0xf]
      %v285 = vld [vmem:[%s1 + $0xe0] sm:$0xf]
      %v286 = vld [vmem:[%s1 + $0xe4] sm:$0xf]
      %v287 = vld [vmem:[%s1 + $0xe8] sm:$0xf]
      %v288 = vld [vmem:[%s1 + $0xec] sm:$0xf]
      %v289 = vld [vmem:[%s1 + $0xf0] sm:$0xf]
      %v290 = vld [vmem:[%s1 + $0xf4] sm:$0xf]
      %v291 = vld [vmem:[%s1 + $0xf8] sm:$0xf]
      %v292 = vld [vmem:[%s1 + $0xfc] sm:$0xf]
      %v293 = vld [vmem:[%s1 + $0x100] sm:$0xf]
      %v294 = vld [vmem:[%s1 + $0x104] sm:$0xf]
      %v295 = vld [vmem:[%s1 + $0x108] sm:$0xf]
      %v296 = vld [vmem:[%s1 + $0x10c] sm:$0xf]
      %v297 = vld [vmem:[%s1 + $0x110] sm:$0xf]
      %v298 = vld [vmem:[%s1 + $0x114] sm:$0xf]
      %v299 = vld [vmem:[%s1 + $0x118] sm:$0xf]
      %v300 = vld [vmem:[%s1 + $0x11c] sm:$0xf]
      %v325 = vunpack.c.l.b16 %v205
      %v326 = vunpack.c.h.b16 %v205
      %v327 = vunpack.c.l.b16 %v206
      %v328 = vunpack.c.h.b16 %v206
      %v329 = vunpack.c.l.b16 %v207
      %v330 = vunpack.c.l.b16 %v208
      %v331 = vunpack.c.h.b16 %v208
      %v332 = vunpack.c.l.b16 %v209
      %v333 = vunpack.c.h.b16 %v209
      %v334 = vunpack.c.l.b16 %v210
      %v335 = vunpack.c.l.b16 %v211
      %v336 = vunpack.c.h.b16 %v211
      %v337 = vunpack.c.l.b16 %v212
      %v338 = vunpack.c.h.b16 %v212
      %v339 = vunpack.c.l.b16 %v213
      %v340 = vunpack.c.l.b16 %v214
      %v341 = vunpack.c.h.b16 %v214
      %v342 = vunpack.c.l.b16 %v215
      %v343 = vunpack.c.h.b16 %v215
      %v344 = vunpack.c.l.b16 %v216
      %v345 = vunpack.c.l.b16 %v217
      %v346 = vunpack.c.h.b16 %v217
      %v347 = vunpack.c.l.b16 %v218
      %v348 = vunpack.c.h.b16 %v218
      %v349 = vunpack.c.l.b16 %v219
      %v350 = vunpack.c.l.b16 %v220
      %v351 = vunpack.c.h.b16 %v220
      %v352 = vunpack.c.l.b16 %v221
      %v353 = vunpack.c.h.b16 %v221
      %v354 = vunpack.c.l.b16 %v222
      %v355 = vunpack.c.l.b16 %v223
      %v356 = vunpack.c.h.b16 %v223
      %v357 = vunpack.c.l.b16 %v224
      %v358 = vunpack.c.h.b16 %v224
      %v359 = vunpack.c.l.b16 %v225
      %v360 = vunpack.c.l.b16 %v226
      %v361 = vunpack.c.h.b16 %v226
      %v362 = vunpack.c.l.b16 %v227
      %v363 = vunpack.c.h.b16 %v227
      %v364 = vunpack.c.l.b16 %v228
      %v365 = vpack.c.b16 %v330, %v325
      %v366 = vpack.c.b16 %v331, %v326
      %v367 = vpack.c.b16 %v332, %v327
      %v368 = vpack.c.b16 %v333, %v328
      %v369 = vpack.c.b16 %v334, %v329
      %v370 = vpack.c.b16 %v340, %v335
      %v371 = vpack.c.b16 %v341, %v336
      %v372 = vpack.c.b16 %v342, %v337
      %v373 = vpack.c.b16 %v343, %v338
      %v374 = vpack.c.b16 %v344, %v339
      %v375 = vpack.c.b16 %v350, %v345
      %v376 = vpack.c.b16 %v351, %v346
      %v377 = vpack.c.b16 %v352, %v347
      %v378 = vpack.c.b16 %v353, %v348
      %v379 = vpack.c.b16 %v354, %v349
      %v380 = vpack.c.b16 %v360, %v355
      %v381 = vpack.c.b16 %v361, %v356
      %v382 = vpack.c.b16 %v362, %v357
      %v383 = vpack.c.b16 %v363, %v358
      %v384 = vpack.c.b16 %v364, %v359
      %v473 = vunpack.c.l.b16 %v229
      %v474 = vunpack.c.l.b16 %v230
      %v475 = vunpack.c.l.b16 %v231
      %v476 = vunpack.c.l.b16 %v232
      %v477 = vunpack.c.l.b16 %v233
      %v478 = vunpack.c.l.b16 %v234
      %v479 = vunpack.c.l.b16 %v235
      %v480 = vunpack.c.l.b16 %v236
      %v481 = vunpack.c.l.b16 %v237
      %v482 = vunpack.c.l.b16 %v238
      %v483 = vunpack.c.l.b16 %v239
      %v484 = vunpack.c.l.b16 %v240
      %v485 = vunpack.c.l.b16 %v241
      %v486 = vunpack.c.l.b16 %v242
      %v487 = vunpack.c.l.b16 %v243
      %v488 = vunpack.c.l.b16 %v244
      %v489 = vunpack.c.l.b16 %v245
      %v490 = vunpack.c.l.b16 %v246
      %v491 = vunpack.c.l.b16 %v247
      %v492 = vunpack.c.l.b16 %v248
      %v493 = vunpack.c.l.b16 %v249
      %v494 = vunpack.c.l.b16 %v250
      %v495 = vunpack.c.l.b16 %v251
      %v496 = vunpack.c.l.b16 %v252
      %v497 = vunpack.c.l.b16 %v253
      %v498 = vunpack.c.l.b16 %v254
      %v499 = vunpack.c.l.b16 %v255
      %v500 = vunpack.c.l.b16 %v256
      %v501 = vunpack.c.l.b16 %v257
      %v502 = vunpack.c.l.b16 %v258
      %v503 = vunpack.c.l.b16 %v259
      %v504 = vunpack.c.l.b16 %v260
      %v505 = vunpack.c.l.b16 %v261
      %v506 = vunpack.c.l.b16 %v262
      %v507 = vunpack.c.l.b16 %v263
      %v508 = vunpack.c.l.b16 %v264
      %v509 = vunpack.c.l.b16 %v265
      %v510 = vunpack.c.l.b16 %v266
      %v511 = vunpack.c.l.b16 %v267
      %v512 = vunpack.c.l.b16 %v268
      %v513 = vunpack.c.l.b16 %v269
      %v514 = vunpack.c.l.b16 %v270
      %v515 = vunpack.c.l.b16 %v271
      %v516 = vunpack.c.l.b16 %v272
      %v517 = vunpack.c.l.b16 %v273
      %v518 = vunpack.c.l.b16 %v274
      %v519 = vunpack.c.l.b16 %v275
      %v520 = vunpack.c.l.b16 %v276
      %v521 = vunpack.c.l.b16 %v277
      %v522 = vunpack.c.l.b16 %v278
      %v523 = vunpack.c.l.b16 %v279
      %v524 = vunpack.c.l.b16 %v280
      %v525 = vunpack.c.l.b16 %v281
      %v526 = vunpack.c.l.b16 %v282
      %v527 = vunpack.c.l.b16 %v283
      %v528 = vunpack.c.l.b16 %v284
      %v529 = vunpack.c.l.b16 %v285
      %v530 = vunpack.c.l.b16 %v286
      %v531 = vunpack.c.l.b16 %v287
      %v532 = vunpack.c.l.b16 %v288
      %v533 = vunpack.c.l.b16 %v289
      %v534 = vunpack.c.l.b16 %v290
      %v535 = vunpack.c.l.b16 %v291
      %v536 = vunpack.c.l.b16 %v292
      %v537 = vunpack.c.l.b16 %v293
      %v538 = vunpack.c.l.b16 %v294
      %v539 = vunpack.c.l.b16 %v295
      %v540 = vunpack.c.l.b16 %v296
      %v541 = vunpack.c.l.b16 %v297
      %v542 = vunpack.c.l.b16 %v298
      %v543 = vunpack.c.l.b16 %v299
      %v544 = vunpack.c.l.b16 %v300
      %v545 = vpack.c.b16 %v474, %v473
      %v546 = vpack.c.b16 %v476, %v475
      %v547 = vpack.c.b16 %v478, %v477
      %v548 = vpack.c.b16 %v480, %v479
      %v549 = vpack.c.b16 %v482, %v481
      %v550 = vpack.c.b16 %v484, %v483
      %v551 = vpack.c.b16 %v486, %v485
      %v552 = vpack.c.b16 %v488, %v487
      %v553 = vpack.c.b16 %v490, %v489
      %v554 = vpack.c.b16 %v492, %v491
      %v555 = vpack.c.b16 %v494, %v493
      %v556 = vpack.c.b16 %v496, %v495
      %v557 = vpack.c.b16 %v498, %v497
      %v558 = vpack.c.b16 %v500, %v499
      %v559 = vpack.c.b16 %v502, %v501
      %v560 = vpack.c.b16 %v504, %v503
      %v561 = vpack.c.b16 %v506, %v505
      %v562 = vpack.c.b16 %v508, %v507
      %v563 = vpack.c.b16 %v510, %v509
      %v564 = vpack.c.b16 %v512, %v511
      %v565 = vpack.c.b16 %v514, %v513
      %v566 = vpack.c.b16 %v516, %v515
      %v567 = vpack.c.b16 %v518, %v517
      %v568 = vpack.c.b16 %v520, %v519
      %v569 = vpack.c.b16 %v522, %v521
      %v570 = vpack.c.b16 %v524, %v523
      %v571 = vpack.c.b16 %v526, %v525
      %v572 = vpack.c.b16 %v528, %v527
      %v573 = vpack.c.b16 %v530, %v529
      %v574 = vpack.c.b16 %v532, %v531
      %v575 = vpack.c.b16 %v534, %v533
      %v576 = vpack.c.b16 %v536, %v535
      %v577 = vpack.c.b16 %v538, %v537
      %v578 = vpack.c.b16 %v540, %v539
      %v579 = vpack.c.b16 %v542, %v541
      %v580 = vpack.c.b16 %v544, %v543
      %vm617 = vcmask 523264
      %v619 = vsel %vm617, %v369, 0
      %v622 = vsel %vm617, %v374, 0
      %v625 = vsel %vm617, %v379, 0
      %v628 = vsel %vm617, %v384, 0
      %630 = vmatpush.bf16.msra.mxu0 %v552
      %631 = vmatpush.bf16.msra.mxu0 %v551
      %632 = vmatpush.bf16.msra.mxu0 %v550
      %633 = vmatpush.bf16.msra.mxu0 %v549
      %634 = vmatpush.bf16.msra.mxu0 %v548
      %635 = vmatpush.bf16.msra.mxu0 %v547
      %636 = vmatpush.bf16.msra.mxu0 %v546
      %637 = vmatpush.bf16.msra.mxu0 %v545
      %638 = vmatmul.bf16.gmra.mxu0 %v365
      %v639 = vpop.f32.mrf.mxu0
      %v640 = vadd.f32 0.0, %v639
      %v641 = vpop.f32.mrf.mxu0
      %v642 = vadd.f32 0.0, %v641
      %643 = vmatmul.bf16.gmra.mxu0 %v370
      %v644 = vpop.f32.mrf.mxu0
      %v645 = vadd.f32 0.0, %v644
      %v646 = vpop.f32.mrf.mxu0
      %v647 = vadd.f32 0.0, %v646
      %648 = vmatmul.bf16.gmra.mxu0 %v375
      %v649 = vpop.f32.mrf.mxu0
      %v650 = vadd.f32 0.0, %v649
      %v651 = vpop.f32.mrf.mxu0
      %v652 = vadd.f32 0.0, %v651
      %653 = vmatmul.bf16.gmra.mxu0 %v380
      %v654 = vpop.f32.mrf.mxu0
      %v655 = vadd.f32 0.0, %v654
      %v656 = vpop.f32.mrf.mxu0
      %v657 = vadd.f32 0.0, %v656
      %658 = vdwg.mxu0
      %659 = vmatpush.bf16.msra.mxu0 %v560
      %660 = vmatpush.bf16.msra.mxu0 %v559
      %661 = vmatpush.bf16.msra.mxu0 %v558
      %662 = vmatpush.bf16.msra.mxu0 %v557
      %663 = vmatpush.bf16.msra.mxu0 %v556
      %664 = vmatpush.bf16.msra.mxu0 %v555
      %665 = vmatpush.bf16.msra.mxu0 %v554
      %666 = vmatpush.bf16.msra.mxu0 %v553
      %667 = vmatmul.bf16.gmra.mxu0 %v366
      %v668 = vpop.f32.mrf.mxu0
      %v669 = vadd.f32 %v640, %v668
      %v670 = vpop.f32.mrf.mxu0
      %v671 = vadd.f32 %v642, %v670
      %672 = vmatmul.bf16.gmra.mxu0 %v371
      %v673 = vpop.f32.mrf.mxu0
      %v674 = vadd.f32 %v645, %v673
      %v675 = vpop.f32.mrf.mxu0
      %v676 = vadd.f32 %v647, %v675
      %677 = vmatmul.bf16.gmra.mxu0 %v376
      %v678 = vpop.f32.mrf.mxu0
      %v679 = vadd.f32 %v650, %v678
      %v680 = vpop.f32.mrf.mxu0
      %v681 = vadd.f32 %v652, %v680
      %682 = vmatmul.bf16.gmra.mxu0 %v381
      %v683 = vpop.f32.mrf.mxu0
      %v684 = vadd.f32 %v655, %v683
      %v685 = vpop.f32.mrf.mxu0
      %v686 = vadd.f32 %v657, %v685
      %687 = vdwg.mxu0
      %688 = vmatpush.bf16.msra.mxu0 %v568
      %689 = vmatpush.bf16.msra.mxu0 %v567
      %690 = vmatpush.bf16.msra.mxu0 %v566
      %691 = vmatpush.bf16.msra.mxu0 %v565
      %692 = vmatpush.bf16.msra.mxu0 %v564
      %693 = vmatpush.bf16.msra.mxu0 %v563
      %694 = vmatpush.bf16.msra.mxu0 %v562
      %695 = vmatpush.bf16.msra.mxu0 %v561
      %696 = vmatmul.bf16.gmra.mxu0 %v367
      %v697 = vpop.f32.mrf.mxu0
      %v698 = vadd.f32 %v669, %v697
      %v699 = vpop.f32.mrf.mxu0
      %v700 = vadd.f32 %v671, %v699
      %701 = vmatmul.bf16.gmra.mxu0 %v372
      %v702 = vpop.f32.mrf.mxu0
      %v703 = vadd.f32 %v674, %v702
      %v704 = vpop.f32.mrf.mxu0
      %v705 = vadd.f32 %v676, %v704
      %706 = vmatmul.bf16.gmra.mxu0 %v377
      %v707 = vpop.f32.mrf.mxu0
      %v708 = vadd.f32 %v679, %v707
      %v709 = vpop.f32.mrf.mxu0
      %v710 = vadd.f32 %v681, %v709
      %711 = vmatmul.bf16.gmra.mxu0 %v382
      %v712 = vpop.f32.mrf.mxu0
      %v713 = vadd.f32 %v684, %v712
      %v714 = vpop.f32.mrf.mxu0
      %v715 = vadd.f32 %v686, %v714
      %716 = vdwg.mxu0
      %717 = vmatpush.bf16.msra.mxu0 %v576
      %718 = vmatpush.bf16.msra.mxu0 %v575
      %719 = vmatpush.bf16.msra.mxu0 %v574
      %720 = vmatpush.bf16.msra.mxu0 %v573
      %721 = vmatpush.bf16.msra.mxu0 %v572
      %722 = vmatpush.bf16.msra.mxu0 %v571
      %723 = vmatpush.bf16.msra.mxu0 %v570
      %724 = vmatpush.bf16.msra.mxu0 %v569
      %725 = vmatmul.bf16.gmra.mxu0 %v368
      %v726 = vpop.f32.mrf.mxu0
      %v727 = vadd.f32 %v698, %v726
      %v728 = vpop.f32.mrf.mxu0
      %v729 = vadd.f32 %v700, %v728
      %730 = vmatmul.bf16.gmra.mxu0 %v373
      %v731 = vpop.f32.mrf.mxu0
      %v732 = vadd.f32 %v703, %v731
      %v733 = vpop.f32.mrf.mxu0
      %v734 = vadd.f32 %v705, %v733
      %735 = vmatmul.bf16.gmra.mxu0 %v378
      %v736 = vpop.f32.mrf.mxu0
      %v737 = vadd.f32 %v708, %v736
      %v738 = vpop.f32.mrf.mxu0
      %v739 = vadd.f32 %v710, %v738
      %740 = vmatmul.bf16.gmra.mxu0 %v383
      %v741 = vpop.f32.mrf.mxu0
      %v742 = vadd.f32 %v713, %v741
      %v743 = vpop.f32.mrf.mxu0
      %v744 = vadd.f32 %v715, %v743
      %745 = vdwg.mxu0
      %746 = vmatpush.bf16.msra.mxu0 0
      %747 = vmatpush.bf16.msra.mxu0 0
      %748 = vmatpush.bf16.msra.mxu0 0
      %749 = vmatpush.bf16.msra.mxu0 0
      %750 = vmatpush.bf16.msra.mxu0 %v580
      %751 = vmatpush.bf16.msra.mxu0 %v579
      %752 = vmatpush.bf16.msra.mxu0 %v578
      %753 = vmatpush.bf16.msra.mxu0 %v577
      %754 = vmatmul.bf16.gmra.mxu0 %v619
      %v755 = vpop.f32.mrf.mxu0
      %v756 = vadd.f32 %v727, %v755
      %v757 = vpop.f32.mrf.mxu0
      %v758 = vadd.f32 %v729, %v757
      %759 = vmatmul.bf16.gmra.mxu0 %v622
      %v760 = vpop.f32.mrf.mxu0
      %v761 = vadd.f32 %v732, %v760
      %v762 = vpop.f32.mrf.mxu0
      %v763 = vadd.f32 %v734, %v762
      %764 = vmatmul.bf16.gmra.mxu0 %v625
      %v765 = vpop.f32.mrf.mxu0
      %v766 = vadd.f32 %v737, %v765
      %v767 = vpop.f32.mrf.mxu0
      %v768 = vadd.f32 %v739, %v767
      %769 = vmatmul.bf16.gmra.mxu0 %v628
      %v770 = vpop.f32.mrf.mxu0
      %v771 = vadd.f32 %v742, %v770
      %v772 = vpop.f32.mrf.mxu0
      %v773 = vadd.f32 %v744, %v772
      %774 = vdwg.mxu0
      %v775 = vld [vmem:[%s2] sm:$0x1]
      %v777 = vperm.slane %v775, 0
      %v779 = vmul.f32 %v756, %v777
      %v780 = vmul.f32 %v758, %v777
      %v781 = vmul.f32 %v761, %v777
      %v782 = vmul.f32 %v763, %v777
      %v783 = vmul.f32 %v766, %v777
      %v784 = vmul.f32 %v768, %v777
      %v785 = vmul.f32 %v771, %v777
      %v786 = vmul.f32 %v773, %v777
      %v787 = vld [vmem:[%s3] sm:$0x1]
      %v789 = vperm.slane %v787, 0
      %v791 = vadd.f32 %v779, %v789
      %v792 = vadd.f32 %v780, %v789
      %v793 = vadd.f32 %v781, %v789
      %v794 = vadd.f32 %v782, %v789
      %v795 = vadd.f32 %v783, %v789
      %v796 = vadd.f32 %v784, %v789
      %v797 = vadd.f32 %v785, %v789
      %v798 = vadd.f32 %v786, %v789
      %v799 = vmax.f32 %v791, 0.0
      %v800 = vmax.f32 %v792, 0.0
      %v801 = vmax.f32 %v793, 0.0
      %v802 = vmax.f32 %v794, 0.0
      %v803 = vmax.f32 %v795, 0.0
      %v804 = vmax.f32 %v796, 0.0
      %v805 = vmax.f32 %v797, 0.0
      %v806 = vmax.f32 %v798, 0.0
      %v807 = vpack.c.bf16 %v799, %v799
      %v808 = vpack.c.bf16 %v800, %v800
      %v809 = vpack.c.bf16 %v801, %v801
      %v810 = vpack.c.bf16 %v802, %v802
      %v811 = vpack.c.bf16 %v803, %v803
      %v812 = vpack.c.bf16 %v804, %v804
      %v813 = vpack.c.bf16 %v805, %v805
      %v814 = vpack.c.bf16 %v806, %v806
      %vm815 = vcmask 519168
      %816 = vst.msk [vmem:[%s202] sm:$0xf] %vm815, %v807
      %817 = vst.msk [vmem:[%s202 + $0x4] sm:$0xf] %vm815, %v808
      %818 = vst.msk [vmem:[%s202 + $0x8] sm:$0xf] %vm815, %v809
      %819 = vst.msk [vmem:[%s202 + $0xc] sm:$0xf] %vm815, %v810
      %820 = vst.msk [vmem:[%s202 + $0x10] sm:$0xf] %vm815, %v811
      %821 = vst.msk [vmem:[%s202 + $0x14] sm:$0xf] %vm815, %v812
      %822 = vst.msk [vmem:[%s202 + $0x18] sm:$0xf] %vm815, %v813
      %823 = vst.msk [vmem:[%s202 + $0x1c] sm:$0xf] %vm815, %v814
      %s824 = smul.u32 8, %s15
      %p825 = scmp.lt.s32.totalorder %s824, 15
      %s826 = scalar_select %p825, %s824, 15
      %s827 = smul.addr %s826, 4
      %s828 = scalar_lea.vmem %s4, %s827
      // Predicated region
      $region37: #{_lambda_.39} parent=35 // pred_check
        %p829 = pneg %p122
      $region38: #{_lambda_.39} parent=35 // pred_check_branch
        %831 = sbr.rel (%p829) target = $region40
      $region39: #{_lambda_.39} parent=35 // pred_region
        %s832 = smul.u32 8, %s15
      $region40: #{_lambda_.39} parent=35 // pred_fallthru
        _
    $region36: #{_lambda_.39} parent=5 // pred_fallthru
      _
    %p833 = scmp.le.s32.totalorder 2, %s10
    // Predicated region
    $region41: #{_lambda_.39} parent=5 // pred_check
      %p834 = pneg %p833
    $region42: #{_lambda_.39} parent=5 // pred_check_branch
      %836 = sbr.rel (%p834) target = $region44
    $region43: #{_lambda_.39} parent=5 // pred_region
      %s837 = ssub.s32 %s10, 2
      // Predicated region
      $region45: #{_lambda_.39} parent=43 // pred_check
        %p838 = pneg %p128
      $region46: #{_lambda_.39} parent=43 // pred_check_branch
        %840 = sbr.rel (%p838) target = $region48
      $region47: #{_lambda_.39} parent=43 // pred_region
        %s841 = smul.u32 8, %s16
        %p842 = scmp.lt.s32.totalorder %s841, 15
        %s843 = scalar_select %p842, %s841, 15
        %s844 = smul.addr %s843, 4
        %s845 = scalar_lea.vmem %s4, %s844
      $region48: #{_lambda_.39} parent=43 // pred_fallthru
        _
    $region44: #{_lambda_.39} parent=5 // pred_fallthru
      _
  $region6: #{_lambda_.39} parent=0 // loop_footer
    %s14 = sadd.s32 1, %s10
  $region7: #{_lambda_.39} parent=0 // loop_footer_branch
    %9 = sbr.rel target = $region3
  $region8: #{_lambda_.39} parent=0 // loop_exit
    _

// kernel: _lambda_.38
$region0: #{_lambda_.38}
  #allocation0 [shape = 'u32[]', space=smem, size = 0x4, offset = 0x4, fixed_abs, tag = 'smem constant byte address 0x4 - core index']
  #allocation1 [shape = 'u32[72,128]{1,0:T(1,128)}', space=vmem, size = 0x9000, scoped, tag = 'internal scratch']
  %s0 = inlined_call_operand.vmem [shape: bf16[128,576], index: 0, kind: input, shape index: {}]
  %s1 = inlined_call_operand.vmem [shape: bf16[576,64], index: 1, kind: input, shape index: {}]
  %s2 = inlined_call_operand.vmem [shape: f32[1,64], index: 2, kind: input, shape index: {}]
  %s3 = inlined_call_operand.vmem [shape: f32[1,64], index: 3, kind: input, shape index: {}]
  %s4 = inlined_call_operand.vmem [shape: bf16[128,64], index: 4, kind: input, shape index: {}]
  %s5 = inlined_call_operand.vmem [shape: bf16[128,64], index: 5, kind: output, shape index: {}]
  %s6 = sld [smem:[#allocation0]]
  $region53: #{_lambda_.38} parent=0
    _
  %s8 = ssub.s32 1, %s6
  %s9 = scalar_select 0, %s8, %s6
  loop: start=0, step=1, limit=4
  $region2: #{_lambda_.38} parent=0 // loop_pre_header
    _
  $region3: #{_lambda_.38} parent=0 // loop_header
    %s11 = sphi 0, %s15
    %p12 = scmp.ge.s32.totalorder %s11, 4
    %s21 = sphi 0, %s23
    %s24 = sphi 0, %s21
    %s25 = sphi 0, %s24
    %s41 = sphi 0, %s25
    %s45 = sphi 0, %s45
    %s47 = sphi 0, %s45
    %s48 = sphi 0, %s47
    %s62 = sphi 0, %s48
    %s66 = sphi 0, %s66
    %s68 = sphi 0, %s66
    %s69 = sphi 0, %s68
    %s83 = sphi 0, %s69
    %s87 = sphi 0, %s87
    %s89 = sphi 0, %s87
    %s90 = sphi 0, %s89
    %s104 = sphi 0, %s90
    %s110 = sphi 0, %s112
    %s113 = sphi 0, %s110
    %s114 = sphi 0, %s113
    %s130 = sphi 0, %s114
    %s136 = sphi 0, %s138
    %s139 = sphi 0, %s136
    %s140 = sphi 0, %s139
    %s156 = sphi 0, %s140
  $region4: #{_lambda_.38} parent=0 // loop_header_branch
    %14 = sbr.rel (%p12) target = $region8
  $region5: #{_lambda_.38} parent=0 // loop_body
    %s16 = ssub.s32 %s11, 1
    %s17 = ssub.s32 %s11, 2
    %s18 = sadd.s32 %s11, 1
    %s19 = ssub.s32 %s11, %s18
    %p20 = scmp.eq.s32.totalorder %s19, 0
    %s22 = sadd.s32 %s21, 1
    %s23 = scalar_select %p20, %s21, %s22
    %p26 = pneg %p20
    %p27 = scmp.eq.s32.totalorder %s11, 1
    %p28 = por %p26, %p27
    %p29 = scmp.ne.s32.totalorder %s21, %s24
    %p30 = scmp.eq.s32.totalorder %s11, 0
    %p31 = por %p29, %p30
    %p32 = scmp.ne.s32.totalorder %s21, %s24
    %p33 = scmp.eq.s32.totalorder %s16, 1
    %p34 = por %p32, %p33
    %p35 = scmp.ne.s32.totalorder %s24, %s25
    %p36 = scmp.eq.s32.totalorder %s16, 0
    %p37 = por %p35, %p36
    %p38 = scmp.ne.s32.totalorder %s24, %s25
    %p39 = scmp.eq.s32.totalorder %s17, 1
    %p40 = por %p38, %p39
    %p42 = scmp.ne.s32.totalorder %s25, %s41
    %p43 = scmp.eq.s32.totalorder %s17, 0
    %p44 = por %p42, %p43
    %s46 = sadd.s32 %s45, 1
    %p49 = scmp.eq.s32.totalorder %s11, 1
    %p50 = scmp.ne.s32.totalorder %s45, %s47
    %p51 = scmp.eq.s32.totalorder %s11, 0
    %p52 = por %p50, %p51
    %p53 = scmp.ne.s32.totalorder %s45, %s47
    %p54 = scmp.eq.s32.totalorder %s16, 1
    %p55 = por %p53, %p54
    %p56 = scmp.ne.s32.totalorder %s47, %s48
    %p57 = scmp.eq.s32.totalorder %s16, 0
    %p58 = por %p56, %p57
    %p59 = scmp.ne.s32.totalorder %s47, %s48
    %p60 = scmp.eq.s32.totalorder %s17, 1
    %p61 = por %p59, %p60
    %p63 = scmp.ne.s32.totalorder %s48, %s62
    %p64 = scmp.eq.s32.totalorder %s17, 0
    %p65 = por %p63, %p64
    %s67 = sadd.s32 %s66, 1
    %p70 = scmp.eq.s32.totalorder %s11, 1
    %p71 = scmp.ne.s32.totalorder %s66, %s68
    %p72 = scmp.eq.s32.totalorder %s11, 0
    %p73 = por %p71, %p72
    %p74 = scmp.ne.s32.totalorder %s66, %s68
    %p75 = scmp.eq.s32.totalorder %s16, 1
    %p76 = por %p74, %p75
    %p77 = scmp.ne.s32.totalorder %s68, %s69
    %p78 = scmp.eq.s32.totalorder %s16, 0
    %p79 = por %p77, %p78
    %p80 = scmp.ne.s32.totalorder %s68, %s69
    %p81 = scmp.eq.s32.totalorder %s17, 1
    %p82 = por %p80, %p81
    %p84 = scmp.ne.s32.totalorder %s69, %s83
    %p85 = scmp.eq.s32.totalorder %s17, 0
    %p86 = por %p84, %p85
    %s88 = sadd.s32 %s87, 1
    %p91 = scmp.eq.s32.totalorder %s11, 1
    %p92 = scmp.ne.s32.totalorder %s87, %s89
    %p93 = scmp.eq.s32.totalorder %s11, 0
    %p94 = por %p92, %p93
    %p95 = scmp.ne.s32.totalorder %s87, %s89
    %p96 = scmp.eq.s32.totalorder %s16, 1
    %p97 = por %p95, %p96
    %p98 = scmp.ne.s32.totalorder %s89, %s90
    %p99 = scmp.eq.s32.totalorder %s16, 0
    %p100 = por %p98, %p99
    %p101 = scmp.ne.s32.totalorder %s89, %s90
    %p102 = scmp.eq.s32.totalorder %s17, 1
    %p103 = por %p101, %p102
    %p105 = scmp.ne.s32.totalorder %s90, %s104
    %p106 = scmp.eq.s32.totalorder %s17, 0
    %p107 = por %p105, %p106
    %s108 = ssub.s32 %s11, %s18
    %p109 = scmp.eq.s32.totalorder %s108, 0
    %s111 = sadd.s32 %s110, 1
    %s112 = scalar_select %p109, %s110, %s111
    %p115 = pneg %p109
    %p116 = scmp.eq.s32.totalorder %s11, 1
    %p117 = por %p115, %p116
    %p118 = scmp.ne.s32.totalorder %s110, %s113
    %p119 = scmp.eq.s32.totalorder %s11, 0
    %p120 = por %p118, %p119
    %p121 = scmp.ne.s32.totalorder %s110, %s113
    %p122 = scmp.eq.s32.totalorder %s16, 1
    %p123 = por %p121, %p122
    %p124 = scmp.ne.s32.totalorder %s113, %s114
    %p125 = scmp.eq.s32.totalorder %s16, 0
    %p126 = por %p124, %p125
    %p127 = scmp.ne.s32.totalorder %s113, %s114
    %p128 = scmp.eq.s32.totalorder %s17, 1
    %p129 = por %p127, %p128
    %p131 = scmp.ne.s32.totalorder %s114, %s130
    %p132 = scmp.eq.s32.totalorder %s17, 0
    %p133 = por %p131, %p132
    %s134 = ssub.s32 %s11, %s18
    %p135 = scmp.eq.s32.totalorder %s134, 0
    %s137 = sadd.s32 %s136, 1
    %s138 = scalar_select %p135, %s136, %s137
    %p141 = pneg %p135
    %p142 = scmp.eq.s32.totalorder %s11, 1
    %p143 = por %p141, %p142
    %p144 = scmp.ne.s32.totalorder %s136, %s139
    %p145 = scmp.eq.s32.totalorder %s11, 0
    %p146 = por %p144, %p145
    %p147 = scmp.ne.s32.totalorder %s136, %s139
    %p148 = scmp.eq.s32.totalorder %s16, 1
    %p149 = por %p147, %p148
    %p150 = scmp.ne.s32.totalorder %s139, %s140
    %p151 = scmp.eq.s32.totalorder %s16, 0
    %p152 = por %p150, %p151
    %p153 = scmp.ne.s32.totalorder %s139, %s140
    %p154 = scmp.eq.s32.totalorder %s17, 1
    %p155 = por %p153, %p154
    %p157 = scmp.ne.s32.totalorder %s140, %s156
    %p158 = scmp.eq.s32.totalorder %s17, 0
    %p159 = por %p157, %p158
    %p160 = scmp.le.s32.totalorder 1, %s11
    %p161 = scmp.lt.s32.totalorder %s11, 3
    %p162 = pnand %p160, %p161
    %p163 = pneg %p162
    // Predicated region
    $region9: #{_lambda_.38} parent=5 // pred_check
      _
    $region10: #{_lambda_.38} parent=5 // pred_check_branch
      %165 = sbr.rel (%p162) target = $region12
    $region11: #{_lambda_.38} parent=5 // pred_region
      %s166 = ssub.s32 %s11, 1
      // Predicated region
      $region13: #{_lambda_.38} parent=11 // pred_check
        %p167 = pneg %p58
      $region14: #{_lambda_.38} parent=11 // pred_check_branch
        %169 = sbr.rel (%p167) target = $region16
      $region15: #{_lambda_.38} parent=11 // pred_region
        _
      $region16: #{_lambda_.38} parent=11 // pred_fallthru
        _
      // Predicated region
      $region17: #{_lambda_.38} parent=11 // pred_check
        %p170 = pneg %p79
      $region18: #{_lambda_.38} parent=11 // pred_check_branch
        %172 = sbr.rel (%p170) target = $region20
      $region19: #{_lambda_.38} parent=11 // pred_region
        _
      $region20: #{_lambda_.38} parent=11 // pred_fallthru
        _
      // Predicated region
      $region21: #{_lambda_.38} parent=11 // pred_check
        %p173 = pneg %p100
      $region22: #{_lambda_.38} parent=11 // pred_check_branch
        %175 = sbr.rel (%p173) target = $region24
      $region23: #{_lambda_.38} parent=11 // pred_region
        _
      $region24: #{_lambda_.38} parent=11 // pred_fallthru
        _
    $region12: #{_lambda_.38} parent=5 // pred_fallthru
      _
    %p176 = scmp.lt.s32.totalorder %s11, 2
    // Predicated region
    $region25: #{_lambda_.38} parent=5 // pred_check
      %p177 = pneg %p176
    $region26: #{_lambda_.38} parent=5 // pred_check_branch
      %179 = sbr.rel (%p177) target = $region28
    $region27: #{_lambda_.38} parent=5 // pred_region
      // Predicated region
      $region29: #{_lambda_.38} parent=27 // pred_check
        %p180 = pneg %p31
      $region30: #{_lambda_.38} parent=27 // pred_check_branch
        %182 = sbr.rel (%p180) target = $region32
      $region31: #{_lambda_.38} parent=27 // pred_region
        %s183 = smul.u32 8, %s11
        %p184 = scmp.lt.s32.totalorder %s183, 15
        %s185 = scalar_select %p184, %s183, 15
        %s186 = smul.addr %s185, 5
        %s187 = smul.addr %s186, 4
        %s188 = scalar_lea.vmem %s0, %s187
        %s189 = smul.u32 8, %s11
      $region32: #{_lambda_.38} parent=27 // pred_fallthru
        _
      // Predicated region
      $region33: #{_lambda_.38} parent=27 // pred_check
        %p190 = pneg %p120
      $region34: #{_lambda_.38} parent=27 // pred_check_branch
        %192 = sbr.rel (%p190) target = $region36
      $region35: #{_lambda_.38} parent=27 // pred_region
        %s193 = smul.u32 8, %s11
        %p194 = scmp.lt.s32.totalorder %s193, 15
        %s195 = scalar_select %p194, %s193, 15
        %s196 = smul.addr %s195, 4
        %s197 = scalar_lea.vmem %s4, %s196
        %s198 = smul.u32 8, %s11
      $region36: #{_lambda_.38} parent=27 // pred_fallthru
        _
    $region28: #{_lambda_.38} parent=5 // pred_fallthru
      _
    %p199 = scmp.le.s32.totalorder 1, %s11
    %p200 = scmp.lt.s32.totalorder %s11, 3
    %p201 = pnand %p199, %p200
    %p202 = pneg %p201
    // Predicated region
    $region37: #{_lambda_.38} parent=5 // pred_check
      _
    $region38: #{_lambda_.38} parent=5 // pred_check_branch
      %204 = sbr.rel (%p201) target = $region40
    $region39: #{_lambda_.38} parent=5 // pred_region
      %s205 = ssub.s32 %s11, 1
      %s206 = smul.u32 8, %s16
      %p207 = scmp.lt.s32.totalorder %s206, 15
      %s208 = scalar_select %p207, %s206, 15
      %s209 = smul.addr %s208, 5
      %s210 = smul.addr %s209, 4
      %s211 = scalar_lea.vmem %s0, %s210
      %p212 = pneg %p37
      %p213 = pneg %p34
      %p214 = pneg %p58
      %p215 = pneg %p55
      %p216 = pneg %p79
      %p217 = pneg %p76
      %p218 = pneg %p100
      %p219 = pneg %p97
      %s220 = smul.u32 8, %s16
      %p221 = scmp.lt.s32.totalorder %s220, 15
      %s222 = scalar_select %p221, %s220, 15
      %s223 = smul.addr %s222, 4
      %s224 = scalar_lea.vmem %s4, %s223
      %p225 = pneg %p126
      %p226 = pneg %p123
      %p227 = pneg %p152
      %p228 = pneg %p149
      %s229 = smul.u32 8, %s16
      %p230 = scmp.lt.s32.totalorder %s229, 15
      %s231 = scalar_select %p230, %s229, 15
      %s232 = smul.addr %s231, 4
      %s233 = scalar_lea.vmem %s5, %s232
      %s234 = smul.u32 8, %s16
      %p235 = scmp.lt.s32.totalorder %s234, 15
      %s236 = scalar_select %p235, %s234, 15
      %s237 = smul.addr %s236, 5
      %s238 = smul.addr %s237, 4
      %s239 = scalar_lea.vmem %s0, %s238
      %s240 = smul.u32 8, %s16
      %s241 = smul.u32 8, %s16
      %p242 = scmp.lt.s32.totalorder %s241, 15
      %s243 = scalar_select %p242, %s241, 15
      %s244 = smul.addr %s243, 4
      %s245 = scalar_lea.vmem %s4, %s244
      %s246 = smul.u32 8, %s16
      %s247 = smul.u32 8, %s16
      %p248 = scmp.lt.s32.totalorder %s247, 15
      %s249 = scalar_select %p248, %s247, 15
      %s250 = smul.addr %s249, 4
      %s251 = scalar_lea.vmem %s5, %s250
      %s252 = smul.u32 8, %s16
      %v254 = vld [vmem:[%s239] sm:$0xff]
      %v255 = vld [vmem:[%s239 + $0x8] sm:$0xff]
      %v256 = vld [vmem:[%s239 + $0x10] sm:$0xf]
      %v257 = vld [vmem:[%s239 + $0x14] sm:$0xff]
      %v258 = vld [vmem:[%s239 + $0x1c] sm:$0xff]
      %v259 = vld [vmem:[%s239 + $0x24] sm:$0xf]
      %v260 = vld [vmem:[%s239 + $0x28] sm:$0xff]
      %v261 = vld [vmem:[%s239 + $0x30] sm:$0xff]
      %v262 = vld [vmem:[%s239 + $0x38] sm:$0xf]
      %v263 = vld [vmem:[%s239 + $0x3c] sm:$0xff]
      %v264 = vld [vmem:[%s239 + $0x44] sm:$0xff]
      %v265 = vld [vmem:[%s239 + $0x4c] sm:$0xf]
      %v266 = vld [vmem:[%s239 + $0x50] sm:$0xff]
      %v267 = vld [vmem:[%s239 + $0x58] sm:$0xff]
      %v268 = vld [vmem:[%s239 + $0x60] sm:$0xf]
      %v269 = vld [vmem:[%s239 + $0x64] sm:$0xff]
      %v270 = vld [vmem:[%s239 + $0x6c] sm:$0xff]
      %v271 = vld [vmem:[%s239 + $0x74] sm:$0xf]
      %v272 = vld [vmem:[%s239 + $0x78] sm:$0xff]
      %v273 = vld [vmem:[%s239 + $0x80] sm:$0xff]
      %v274 = vld [vmem:[%s239 + $0x88] sm:$0xf]
      %v275 = vld [vmem:[%s239 + $0x8c] sm:$0xff]
      %v276 = vld [vmem:[%s239 + $0x94] sm:$0xff]
      %v277 = vld [vmem:[%s239 + $0x9c] sm:$0xf]
      %v278 = vld [vmem:[%s1] sm:$0xf]
      %v279 = vld [vmem:[%s1 + $0x4] sm:$0xf]
      %v280 = vld [vmem:[%s1 + $0x8] sm:$0xf]
      %v281 = vld [vmem:[%s1 + $0xc] sm:$0xf]
      %v282 = vld [vmem:[%s1 + $0x10] sm:$0xf]
      %v283 = vld [vmem:[%s1 + $0x14] sm:$0xf]
      %v284 = vld [vmem:[%s1 + $0x18] sm:$0xf]
      %v285 = vld [vmem:[%s1 + $0x1c] sm:$0xf]
      %v286 = vld [vmem:[%s1 + $0x20] sm:$0xf]
      %v287 = vld [vmem:[%s1 + $0x24] sm:$0xf]
      %v288 = vld [vmem:[%s1 + $0x28] sm:$0xf]
      %v289 = vld [vmem:[%s1 + $0x2c] sm:$0xf]
      %v290 = vld [vmem:[%s1 + $0x30] sm:$0xf]
      %v291 = vld [vmem:[%s1 + $0x34] sm:$0xf]
      %v292 = vld [vmem:[%s1 + $0x38] sm:$0xf]
      %v293 = vld [vmem:[%s1 + $0x3c] sm:$0xf]
      %v294 = vld [vmem:[%s1 + $0x40] sm:$0xf]
      %v295 = vld [vmem:[%s1 + $0x44] sm:$0xf]
      %v296 = vld [vmem:[%s1 + $0x48] sm:$0xf]
      %v297 = vld [vmem:[%s1 + $0x4c] sm:$0xf]
      %v298 = vld [vmem:[%s1 + $0x50] sm:$0xf]
      %v299 = vld [vmem:[%s1 + $0x54] sm:$0xf]
      %v300 = vld [vmem:[%s1 + $0x58] sm:$0xf]
      %v301 = vld [vmem:[%s1 + $0x5c] sm:$0xf]
      %v302 = vld [vmem:[%s1 + $0x60] sm:$0xf]
      %v303 = vld [vmem:[%s1 + $0x64] sm:$0xf]
      %v304 = vld [vmem:[%s1 + $0x68] sm:$0xf]
      %v305 = vld [vmem:[%s1 + $0x6c] sm:$0xf]
      %v306 = vld [vmem:[%s1 + $0x70] sm:$0xf]
      %v307 = vld [vmem:[%s1 + $0x74] sm:$0xf]
      %v308 = vld [vmem:[%s1 + $0x78] sm:$0xf]
      %v309 = vld [vmem:[%s1 + $0x7c] sm:$0xf]
      %v310 = vld [vmem:[%s1 + $0x80] sm:$0xf]
      %v311 = vld [vmem:[%s1 + $0x84] sm:$0xf]
      %v312 = vld [vmem:[%s1 + $0x88] sm:$0xf]
      %v313 = vld [vmem:[%s1 + $0x8c] sm:$0xf]
      %v314 = vld [vmem:[%s1 + $0x90] sm:$0xf]
      %v315 = vld [vmem:[%s1 + $0x94] sm:$0xf]
      %v316 = vld [vmem:[%s1 + $0x98] sm:$0xf]
      %v317 = vld [vmem:[%s1 + $0x9c] sm:$0xf]
      %v318 = vld [vmem:[%s1 + $0xa0] sm:$0xf]
      %v319 = vld [vmem:[%s1 + $0xa4] sm:$0xf]
      %v320 = vld [vmem:[%s1 + $0xa8] sm:$0xf]
      %v321 = vld [vmem:[%s1 + $0xac] sm:$0xf]
      %v322 = vld [vmem:[%s1 + $0xb0] sm:$0xf]
      %v323 = vld [vmem:[%s1 + $0xb4] sm:$0xf]
      %v324 = vld [vmem:[%s1 + $0xb8] sm:$0xf]
      %v325 = vld [vmem:[%s1 + $0xbc] sm:$0xf]
      %v326 = vld [vmem:[%s1 + $0xc0] sm:$0xf]
      %v327 = vld [vmem:[%s1 + $0xc4] sm:$0xf]
      %v328 = vld [vmem:[%s1 + $0xc8] sm:$0xf]
      %v329 = vld [vmem:[%s1 + $0xcc] sm:$0xf]
      %v330 = vld [vmem:[%s1 + $0xd0] sm:$0xf]
      %v331 = vld [vmem:[%s1 + $0xd4] sm:$0xf]
      %v332 = vld [vmem:[%s1 + $0xd8] sm:$0xf]
      %v333 = vld [vmem:[%s1 + $0xdc] sm:$0xf]
      %v334 = vld [vmem:[%s1 + $0xe0] sm:$0xf]
      %v335 = vld [vmem:[%s1 + $0xe4] sm:$0xf]
      %v336 = vld [vmem:[%s1 + $0xe8] sm:$0xf]
      %v337 = vld [vmem:[%s1 + $0xec] sm:$0xf]
      %v338 = vld [vmem:[%s1 + $0xf0] sm:$0xf]
      %v339 = vld [vmem:[%s1 + $0xf4] sm:$0xf]
      %v340 = vld [vmem:[%s1 + $0xf8] sm:$0xf]
      %v341 = vld [vmem:[%s1 + $0xfc] sm:$0xf]
      %v342 = vld [vmem:[%s1 + $0x100] sm:$0xf]
      %v343 = vld [vmem:[%s1 + $0x104] sm:$0xf]
      %v344 = vld [vmem:[%s1 + $0x108] sm:$0xf]
      %v345 = vld [vmem:[%s1 + $0x10c] sm:$0xf]
      %v346 = vld [vmem:[%s1 + $0x110] sm:$0xf]
      %v347 = vld [vmem:[%s1 + $0x114] sm:$0xf]
      %v348 = vld [vmem:[%s1 + $0x118] sm:$0xf]
      %v349 = vld [vmem:[%s1 + $0x11c] sm:$0xf]
      %v374 = vunpack.c.l.b16 %v254
      %v375 = vunpack.c.h.b16 %v254
      %v376 = vunpack.c.l.b16 %v255
      %v377 = vunpack.c.h.b16 %v255
      %v378 = vunpack.c.l.b16 %v256
      %v379 = vunpack.c.l.b16 %v257
      %v380 = vunpack.c.h.b16 %v257
      %v381 = vunpack.c.l.b16 %v258
      %v382 = vunpack.c.h.b16 %v258
      %v383 = vunpack.c.l.b16 %v259
      %v384 = vunpack.c.l.b16 %v260
      %v385 = vunpack.c.h.b16 %v260
      %v386 = vunpack.c.l.b16 %v261
      %v387 = vunpack.c.h.b16 %v261
      %v388 = vunpack.c.l.b16 %v262
      %v389 = vunpack.c.l.b16 %v263
      %v390 = vunpack.c.h.b16 %v263
      %v391 = vunpack.c.l.b16 %v264
      %v392 = vunpack.c.h.b16 %v264
      %v393 = vunpack.c.l.b16 %v265
      %v394 = vunpack.c.l.b16 %v266
      %v395 = vunpack.c.h.b16 %v266
      %v396 = vunpack.c.l.b16 %v267
      %v397 = vunpack.c.h.b16 %v267
      %v398 = vunpack.c.l.b16 %v268
      %v399 = vunpack.c.l.b16 %v269
      %v400 = vunpack.c.h.b16 %v269
      %v401 = vunpack.c.l.b16 %v270
      %v402 = vunpack.c.h.b16 %v270
      %v403 = vunpack.c.l.b16 %v271
      %v404 = vunpack.c.l.b16 %v272
      %v405 = vunpack.c.h.b16 %v272
      %v406 = vunpack.c.l.b16 %v273
      %v407 = vunpack.c.h.b16 %v273
      %v408 = vunpack.c.l.b16 %v274
      %v409 = vunpack.c.l.b16 %v275
      %v410 = vunpack.c.h.b16 %v275
      %v411 = vunpack.c.l.b16 %v276
      %v412 = vunpack.c.h.b16 %v276
      %v413 = vunpack.c.l.b16 %v277
      %v414 = vpack.c.b16 %v379, %v374
      %v415 = vpack.c.b16 %v380, %v375
      %v416 = vpack.c.b16 %v381, %v376
      %v417 = vpack.c.b16 %v382, %v377
      %v418 = vpack.c.b16 %v383, %v378
      %v419 = vpack.c.b16 %v389, %v384
      %v420 = vpack.c.b16 %v390, %v385
      %v421 = vpack.c.b16 %v391, %v386
      %v422 = vpack.c.b16 %v392, %v387
      %v423 = vpack.c.b16 %v393, %v388
      %v424 = vpack.c.b16 %v399, %v394
      %v425 = vpack.c.b16 %v400, %v395
      %v426 = vpack.c.b16 %v401, %v396
      %v427 = vpack.c.b16 %v402, %v397
      %v428 = vpack.c.b16 %v403, %v398
      %v429 = vpack.c.b16 %v409, %v404
      %v430 = vpack.c.b16 %v410, %v405
      %v431 = vpack.c.b16 %v411, %v406
      %v432 = vpack.c.b16 %v412, %v407
      %v433 = vpack.c.b16 %v413, %v408
      %v522 = vunpack.c.l.b16 %v278
      %v523 = vunpack.c.l.b16 %v279
      %v524 = vunpack.c.l.b16 %v280
      %v525 = vunpack.c.l.b16 %v281
      %v526 = vunpack.c.l.b16 %v282
      %v527 = vunpack.c.l.b16 %v283
      %v528 = vunpack.c.l.b16 %v284
      %v529 = vunpack.c.l.b16 %v285
      %v530 = vunpack.c.l.b16 %v286
      %v531 = vunpack.c.l.b16 %v287
      %v532 = vunpack.c.l.b16 %v288
      %v533 = vunpack.c.l.b16 %v289
      %v534 = vunpack.c.l.b16 %v290
      %v535 = vunpack.c.l.b16 %v291
      %v536 = vunpack.c.l.b16 %v292
      %v537 = vunpack.c.l.b16 %v293
      %v538 = vunpack.c.l.b16 %v294
      %v539 = vunpack.c.l.b16 %v295
      %v540 = vunpack.c.l.b16 %v296
      %v541 = vunpack.c.l.b16 %v297
      %v542 = vunpack.c.l.b16 %v298
      %v543 = vunpack.c.l.b16 %v299
      %v544 = vunpack.c.l.b16 %v300
      %v545 = vunpack.c.l.b16 %v301
      %v546 = vunpack.c.l.b16 %v302
      %v547 = vunpack.c.l.b16 %v303
      %v548 = vunpack.c.l.b16 %v304
      %v549 = vunpack.c.l.b16 %v305
      %v550 = vunpack.c.l.b16 %v306
      %v551 = vunpack.c.l.b16 %v307
      %v552 = vunpack.c.l.b16 %v308
      %v553 = vunpack.c.l.b16 %v309
      %v554 = vunpack.c.l.b16 %v310
      %v555 = vunpack.c.l.b16 %v311
      %v556 = vunpack.c.l.b16 %v312
      %v557 = vunpack.c.l.b16 %v313
      %v558 = vunpack.c.l.b16 %v314
      %v559 = vunpack.c.l.b16 %v315
      %v560 = vunpack.c.l.b16 %v316
      %v561 = vunpack.c.l.b16 %v317
      %v562 = vunpack.c.l.b16 %v318
      %v563 = vunpack.c.l.b16 %v319
      %v564 = vunpack.c.l.b16 %v320
      %v565 = vunpack.c.l.b16 %v321
      %v566 = vunpack.c.l.b16 %v322
      %v567 = vunpack.c.l.b16 %v323
      %v568 = vunpack.c.l.b16 %v324
      %v569 = vunpack.c.l.b16 %v325
      %v570 = vunpack.c.l.b16 %v326
      %v571 = vunpack.c.l.b16 %v327
      %v572 = vunpack.c.l.b16 %v328
      %v573 = vunpack.c.l.b16 %v329
      %v574 = vunpack.c.l.b16 %v330
      %v575 = vunpack.c.l.b16 %v331
      %v576 = vunpack.c.l.b16 %v332
      %v577 = vunpack.c.l.b16 %v333
      %v578 = vunpack.c.l.b16 %v334
      %v579 = vunpack.c.l.b16 %v335
      %v580 = vunpack.c.l.b16 %v336
      %v581 = vunpack.c.l.b16 %v337
      %v582 = vunpack.c.l.b16 %v338
      %v583 = vunpack.c.l.b16 %v339
      %v584 = vunpack.c.l.b16 %v340
      %v585 = vunpack.c.l.b16 %v341
      %v586 = vunpack.c.l.b16 %v342
      %v587 = vunpack.c.l.b16 %v343
      %v588 = vunpack.c.l.b16 %v344
      %v589 = vunpack.c.l.b16 %v345
      %v590 = vunpack.c.l.b16 %v346
      %v591 = vunpack.c.l.b16 %v347
      %v592 = vunpack.c.l.b16 %v348
      %v593 = vunpack.c.l.b16 %v349
      %v594 = vpack.c.b16 %v523, %v522
      %v595 = vpack.c.b16 %v525, %v524
      %v596 = vpack.c.b16 %v527, %v526
      %v597 = vpack.c.b16 %v529, %v528
      %v598 = vpack.c.b16 %v531, %v530
      %v599 = vpack.c.b16 %v533, %v532
      %v600 = vpack.c.b16 %v535, %v534
      %v601 = vpack.c.b16 %v537, %v536
      %v602 = vpack.c.b16 %v539, %v538
      %v603 = vpack.c.b16 %v541, %v540
      %v604 = vpack.c.b16 %v543, %v542
      %v605 = vpack.c.b16 %v545, %v544
      %v606 = vpack.c.b16 %v547, %v546
      %v607 = vpack.c.b16 %v549, %v548
      %v608 = vpack.c.b16 %v551, %v550
      %v609 = vpack.c.b16 %v553, %v552
      %v610 = vpack.c.b16 %v555, %v554
      %v611 = vpack.c.b16 %v557, %v556
      %v612 = vpack.c.b16 %v559, %v558
      %v613 = vpack.c.b16 %v561, %v560
      %v614 = vpack.c.b16 %v563, %v562
      %v615 = vpack.c.b16 %v565, %v564
      %v616 = vpack.c.b16 %v567, %v566
      %v617 = vpack.c.b16 %v569, %v568
      %v618 = vpack.c.b16 %v571, %v570
      %v619 = vpack.c.b16 %v573, %v572
      %v620 = vpack.c.b16 %v575, %v574
      %v621 = vpack.c.b16 %v577, %v576
      %v622 = vpack.c.b16 %v579, %v578
      %v623 = vpack.c.b16 %v581, %v580
      %v624 = vpack.c.b16 %v583, %v582
      %v625 = vpack.c.b16 %v585, %v584
      %v626 = vpack.c.b16 %v587, %v586
      %v627 = vpack.c.b16 %v589, %v588
      %v628 = vpack.c.b16 %v591, %v590
      %v629 = vpack.c.b16 %v593, %v592
      %vm666 = vcmask 523264
      %v668 = vsel %vm666, %v418, 0
      %v671 = vsel %vm666, %v423, 0
      %v674 = vsel %vm666, %v428, 0
      %v677 = vsel %vm666, %v433, 0
      %679 = vmatpush.bf16.msra.mxu0 %v601
      %680 = vmatpush.bf16.msra.mxu0 %v600
      %681 = vmatpush.bf16.msra.mxu0 %v599
      %682 = vmatpush.bf16.msra.mxu0 %v598
      %683 = vmatpush.bf16.msra.mxu0 %v597
      %684 = vmatpush.bf16.msra.mxu0 %v596
      %685 = vmatpush.bf16.msra.mxu0 %v595
      %686 = vmatpush.bf16.msra.mxu0 %v594
      %687 = vmatmul.bf16.gmra.mxu0 %v414
      %v688 = vpop.f32.mrf.mxu0
      %v689 = vadd.f32 0.0, %v688
      %v690 = vpop.f32.mrf.mxu0
      %v691 = vadd.f32 0.0, %v690
      %692 = vmatmul.bf16.gmra.mxu0 %v419
      %v693 = vpop.f32.mrf.mxu0
      %v694 = vadd.f32 0.0, %v693
      %v695 = vpop.f32.mrf.mxu0
      %v696 = vadd.f32 0.0, %v695
      %697 = vmatmul.bf16.gmra.mxu0 %v424
      %v698 = vpop.f32.mrf.mxu0
      %v699 = vadd.f32 0.0, %v698
      %v700 = vpop.f32.mrf.mxu0
      %v701 = vadd.f32 0.0, %v700
      %702 = vmatmul.bf16.gmra.mxu0 %v429
      %v703 = vpop.f32.mrf.mxu0
      %v704 = vadd.f32 0.0, %v703
      %v705 = vpop.f32.mrf.mxu0
      %v706 = vadd.f32 0.0, %v705
      %707 = vdwg.mxu0
      %708 = vmatpush.bf16.msra.mxu0 %v609
      %709 = vmatpush.bf16.msra.mxu0 %v608
      %710 = vmatpush.bf16.msra.mxu0 %v607
      %711 = vmatpush.bf16.msra.mxu0 %v606
      %712 = vmatpush.bf16.msra.mxu0 %v605
      %713 = vmatpush.bf16.msra.mxu0 %v604
      %714 = vmatpush.bf16.msra.mxu0 %v603
      %715 = vmatpush.bf16.msra.mxu0 %v602
      %716 = vmatmul.bf16.gmra.mxu0 %v415
      %v717 = vpop.f32.mrf.mxu0
      %v718 = vadd.f32 %v689, %v717
      %v719 = vpop.f32.mrf.mxu0
      %v720 = vadd.f32 %v691, %v719
      %721 = vmatmul.bf16.gmra.mxu0 %v420
      %v722 = vpop.f32.mrf.mxu0
      %v723 = vadd.f32 %v694, %v722
      %v724 = vpop.f32.mrf.mxu0
      %v725 = vadd.f32 %v696, %v724
      %726 = vmatmul.bf16.gmra.mxu0 %v425
      %v727 = vpop.f32.mrf.mxu0
      %v728 = vadd.f32 %v699, %v727
      %v729 = vpop.f32.mrf.mxu0
      %v730 = vadd.f32 %v701, %v729
      %731 = vmatmul.bf16.gmra.mxu0 %v430
      %v732 = vpop.f32.mrf.mxu0
      %v733 = vadd.f32 %v704, %v732
      %v734 = vpop.f32.mrf.mxu0
      %v735 = vadd.f32 %v706, %v734
      %736 = vdwg.mxu0
      %737 = vmatpush.bf16.msra.mxu0 %v617
      %738 = vmatpush.bf16.msra.mxu0 %v616
      %739 = vmatpush.bf16.msra.mxu0 %v615
      %740 = vmatpush.bf16.msra.mxu0 %v614
      %741 = vmatpush.bf16.msra.mxu0 %v613
      %742 = vmatpush.bf16.msra.mxu0 %v612
      %743 = vmatpush.bf16.msra.mxu0 %v611
      %744 = vmatpush.bf16.msra.mxu0 %v610
      %745 = vmatmul.bf16.gmra.mxu0 %v416
      %v746 = vpop.f32.mrf.mxu0
      %v747 = vadd.f32 %v718, %v746
      %v748 = vpop.f32.mrf.mxu0
      %v749 = vadd.f32 %v720, %v748
      %750 = vmatmul.bf16.gmra.mxu0 %v421
      %v751 = vpop.f32.mrf.mxu0
      %v752 = vadd.f32 %v723, %v751
      %v753 = vpop.f32.mrf.mxu0
      %v754 = vadd.f32 %v725, %v753
      %755 = vmatmul.bf16.gmra.mxu0 %v426
      %v756 = vpop.f32.mrf.mxu0
      %v757 = vadd.f32 %v728, %v756
      %v758 = vpop.f32.mrf.mxu0
      %v759 = vadd.f32 %v730, %v758
      %760 = vmatmul.bf16.gmra.mxu0 %v431
      %v761 = vpop.f32.mrf.mxu0
      %v762 = vadd.f32 %v733, %v761
      %v763 = vpop.f32.mrf.mxu0
      %v764 = vadd.f32 %v735, %v763
      %765 = vdwg.mxu0
      %766 = vmatpush.bf16.msra.mxu0 %v625
      %767 = vmatpush.bf16.msra.mxu0 %v624
      %768 = vmatpush.bf16.msra.mxu0 %v623
      %769 = vmatpush.bf16.msra.mxu0 %v622
      %770 = vmatpush.bf16.msra.mxu0 %v621
      %771 = vmatpush.bf16.msra.mxu0 %v620
      %772 = vmatpush.bf16.msra.mxu0 %v619
      %773 = vmatpush.bf16.msra.mxu0 %v618
      %774 = vmatmul.bf16.gmra.mxu0 %v417
      %v775 = vpop.f32.mrf.mxu0
      %v776 = vadd.f32 %v747, %v775
      %v777 = vpop.f32.mrf.mxu0
      %v778 = vadd.f32 %v749, %v777
      %779 = vmatmul.bf16.gmra.mxu0 %v422
      %v780 = vpop.f32.mrf.mxu0
      %v781 = vadd.f32 %v752, %v780
      %v782 = vpop.f32.mrf.mxu0
      %v783 = vadd.f32 %v754, %v782
      %784 = vmatmul.bf16.gmra.mxu0 %v427
      %v785 = vpop.f32.mrf.mxu0
      %v786 = vadd.f32 %v757, %v785
      %v787 = vpop.f32.mrf.mxu0
      %v788 = vadd.f32 %v759, %v787
      %789 = vmatmul.bf16.gmra.mxu0 %v432
      %v790 = vpop.f32.mrf.mxu0
      %v791 = vadd.f32 %v762, %v790
      %v792 = vpop.f32.mrf.mxu0
      %v793 = vadd.f32 %v764, %v792
      %794 = vdwg.mxu0
      %795 = vmatpush.bf16.msra.mxu0 0
      %796 = vmatpush.bf16.msra.mxu0 0
      %797 = vmatpush.bf16.msra.mxu0 0
      %798 = vmatpush.bf16.msra.mxu0 0
      %799 = vmatpush.bf16.msra.mxu0 %v629
      %800 = vmatpush.bf16.msra.mxu0 %v628
      %801 = vmatpush.bf16.msra.mxu0 %v627
      %802 = vmatpush.bf16.msra.mxu0 %v626
      %803 = vmatmul.bf16.gmra.mxu0 %v668
      %v804 = vpop.f32.mrf.mxu0
      %v805 = vadd.f32 %v776, %v804
      %v806 = vpop.f32.mrf.mxu0
      %v807 = vadd.f32 %v778, %v806
      %808 = vmatmul.bf16.gmra.mxu0 %v671
      %v809 = vpop.f32.mrf.mxu0
      %v810 = vadd.f32 %v781, %v809
      %v811 = vpop.f32.mrf.mxu0
      %v812 = vadd.f32 %v783, %v811
      %813 = vmatmul.bf16.gmra.mxu0 %v674
      %v814 = vpop.f32.mrf.mxu0
      %v815 = vadd.f32 %v786, %v814
      %v816 = vpop.f32.mrf.mxu0
      %v817 = vadd.f32 %v788, %v816
      %818 = vmatmul.bf16.gmra.mxu0 %v677
      %v819 = vpop.f32.mrf.mxu0
      %v820 = vadd.f32 %v791, %v819
      %v821 = vpop.f32.mrf.mxu0
      %v822 = vadd.f32 %v793, %v821
      %823 = vdwg.mxu0
      %v824 = vld [vmem:[%s2] sm:$0x1]
      %v826 = vperm.slane %v824, 0
      %v828 = vmul.f32 %v805, %v826
      %v829 = vmul.f32 %v807, %v826
      %v830 = vmul.f32 %v810, %v826
      %v831 = vmul.f32 %v812, %v826
      %v832 = vmul.f32 %v815, %v826
      %v833 = vmul.f32 %v817, %v826
      %v834 = vmul.f32 %v820, %v826
      %v835 = vmul.f32 %v822, %v826
      %v836 = vld [vmem:[%s3] sm:$0x1]
      %v838 = vperm.slane %v836, 0
      %v840 = vadd.f32 %v828, %v838
      %v841 = vadd.f32 %v829, %v838
      %v842 = vadd.f32 %v830, %v838
      %v843 = vadd.f32 %v831, %v838
      %v844 = vadd.f32 %v832, %v838
      %v845 = vadd.f32 %v833, %v838
      %v846 = vadd.f32 %v834, %v838
      %v847 = vadd.f32 %v835, %v838
      %v848 = vld [vmem:[%s245] sm:$0xf]
      %v849 = vld [vmem:[%s245 + $0x4] sm:$0xf]
      %v850 = vld [vmem:[%s245 + $0x8] sm:$0xf]
      %v851 = vld [vmem:[%s245 + $0xc] sm:$0xf]
      %v852 = vld [vmem:[%s245 + $0x10] sm:$0xf]
      %v853 = vld [vmem:[%s245 + $0x14] sm:$0xf]
      %v854 = vld [vmem:[%s245 + $0x18] sm:$0xf]
      %v855 = vld [vmem:[%s245 + $0x1c] sm:$0xf]
      %v856 = vunpack.c.l.bf16 %v848
      %v857 = vunpack.c.l.bf16 %v849
      %v858 = vunpack.c.l.bf16 %v850
      %v859 = vunpack.c.l.bf16 %v851
      %v860 = vunpack.c.l.bf16 %v852
      %v861 = vunpack.c.l.bf16 %v853
      %v862 = vunpack.c.l.bf16 %v854
      %v863 = vunpack.c.l.bf16 %v855
      %v864 = vadd.f32 %v840, %v856
      %v865 = vadd.f32 %v841, %v857
      %v866 = vadd.f32 %v842, %v858
      %v867 = vadd.f32 %v843, %v859
      %v868 = vadd.f32 %v844, %v860
      %v869 = vadd.f32 %v845, %v861
      %v870 = vadd.f32 %v846, %v862
      %v871 = vadd.f32 %v847, %v863
      %v872 = vmax.f32 %v864, 0.0
      %v873 = vmax.f32 %v865, 0.0
      %v874 = vmax.f32 %v866, 0.0
      %v875 = vmax.f32 %v867, 0.0
      %v876 = vmax.f32 %v868, 0.0
      %v877 = vmax.f32 %v869, 0.0
      %v878 = vmax.f32 %v870, 0.0
      %v879 = vmax.f32 %v871, 0.0
      %v880 = vpack.c.bf16 %v872, %v872
      %v881 = vpack.c.bf16 %v873, %v873
      %v882 = vpack.c.bf16 %v874, %v874
      %v883 = vpack.c.bf16 %v875, %v875
      %v884 = vpack.c.bf16 %v876, %v876
      %v885 = vpack.c.bf16 %v877, %v877
      %v886 = vpack.c.bf16 %v878, %v878
      %v887 = vpack.c.bf16 %v879, %v879
      %vm888 = vcmask 519168
      %889 = vst.msk [vmem:[%s251] sm:$0xf] %vm888, %v880
      %890 = vst.msk [vmem:[%s251 + $0x4] sm:$0xf] %vm888, %v881
      %891 = vst.msk [vmem:[%s251 + $0x8] sm:$0xf] %vm888, %v882
      %892 = vst.msk [vmem:[%s251 + $0xc] sm:$0xf] %vm888, %v883
      %893 = vst.msk [vmem:[%s251 + $0x10] sm:$0xf] %vm888, %v884
      %894 = vst.msk [vmem:[%s251 + $0x14] sm:$0xf] %vm888, %v885
      %895 = vst.msk [vmem:[%s251 + $0x18] sm:$0xf] %vm888, %v886
      %896 = vst.msk [vmem:[%s251 + $0x1c] sm:$0xf] %vm888, %v887
      %s897 = smul.u32 8, %s16
      %p898 = scmp.lt.s32.totalorder %s897, 15
      %s899 = scalar_select %p898, %s897, 15
      %s900 = smul.addr %s899, 4
      %s901 = scalar_lea.vmem %s5, %s900
      // Predicated region
      $region41: #{_lambda_.38} parent=39 // pred_check
        %p902 = pneg %p149
      $region42: #{_lambda_.38} parent=39 // pred_check_branch
        %904 = sbr.rel (%p902) target = $region44
      $region43: #{_lambda_.38} parent=39 // pred_region
        %s905 = smul.u32 8, %s16
      $region44: #{_lambda_.38} parent=39 // pred_fallthru
        _
    $region40: #{_lambda_.38} parent=5 // pred_fallthru
      _
    %p906 = scmp.le.s32.totalorder 2, %s11
    // Predicated region
    $region45: #{_lambda_.38} parent=5 // pred_check
      %p907 = pneg %p906
    $region46: #{_lambda_.38} parent=5 // pred_check_branch
      %909 = sbr.rel (%p907) target = $region48
    $region47: #{_lambda_.38} parent=5 // pred_region
      %s910 = ssub.s32 %s11, 2
      // Predicated region
      $region49: #{_lambda_.38} parent=47 // pred_check
        %p911 = pneg %p155
      $region50: #{_lambda_.38} parent=47 // pred_check_branch
        %913 = sbr.rel (%p911) target = $region52
      $region51: #{_lambda_.38} parent=47 // pred_region
        %s914 = smul.u32 8, %s17
        %p915 = scmp.lt.s32.totalorder %s914, 15
        %s916 = scalar_select %p915, %s914, 15
        %s917 = smul.addr %s916, 4
        %s918 = scalar_lea.vmem %s5, %s917
      $region52: #{_lambda_.38} parent=47 // pred_fallthru
        _
    $region48: #{_lambda_.38} parent=5 // pred_fallthru
      _
  $region6: #{_lambda_.38} parent=0 // loop_footer
    %s15 = sadd.s32 1, %s11
  $region7: #{_lambda_.38} parent=0 // loop_footer_branch
    %10 = sbr.rel target = $region3
  $region8: #{_lambda_.38} parent=0 // loop_exit
    _

</llo_original>
